<compile_context>
chip_gen: v7x
topology: tpu7x:2x2x1
jax: 0.10.0
libtpu: 0.0.40
codegen_flags: <defaults>
</compile_context>

<pallas_src>
import functools

import jax
import jax.numpy as jnp
from jax.experimental import pallas as pl
from jax.experimental.pallas import tpu as pltpu


def _make_kernel(*, T: int, B: int, D: int, H: int, L: int):
    f32 = jnp.float32

    def lstm_cell(gates, c_prev):
        # Gate order i, f, g, o (PyTorch convention).  With H a multiple of 128
        # these slices are lane-aligned.
        i_g = jax.nn.sigmoid(gates[:, 0 * H:1 * H])
        f_g = jax.nn.sigmoid(gates[:, 1 * H:2 * H])
        g_g = jnp.tanh(gates[:, 2 * H:3 * H])
        o_g = jax.nn.sigmoid(gates[:, 3 * H:4 * H])
        c_new = f_g * c_prev + i_g * g_g
        h_new = o_g * jnp.tanh(c_new)
        return h_new, c_new

    def kernel(x_ref, w0i_ref, whh0_ref, wcat_ref, bg_ref,
               w1_ref, b1_ref, w2_ref, b2_ref,
               y_ref, hn_ref, cn_ref,
               x0_sc, htop_sc):
        # Zero initial state (PyTorch default when h_0 / c_0 are None).
        # TODO(synk): optional user-supplied (h_0, c_0) initial state not wired.
        # State is carried directly in the resident output refs.
        hn_ref[...] = jnp.zeros_like(hn_ref)
        cn_ref[...] = jnp.zeros_like(cn_ref)

        # Hoisted layer-0 input projection for every timestep at once.
        p0 = jnp.dot(x_ref[...].reshape(B * T, D), w0i_ref[...],
                     preferred_element_type=f32).reshape(B, T, 4 * H)
        x0_sc[...] = jnp.transpose(p0, (1, 0, 2))        # time-major (T, B, 4H)

        def step(t, carry):
            # Layer 0: precomputed input projection + one recurrent matmul.
            gates = (x0_sc[t]
                     + jnp.dot(hn_ref[0], whh0_ref[...],
                               preferred_element_type=f32)
                     + bg_ref[0])
            h_new, c_new = lstm_cell(gates, cn_ref[0])
            hn_ref[0] = h_new
            cn_ref[0] = c_new
            inp = h_new

            # Layers 1..L-1: single fused (B, 2H) @ (2H, 4H) matmul per layer.
            for l in range(1, L):                        # static unroll
                cat = jnp.concatenate([inp, hn_ref[l]], axis=1)
                gates = (jnp.dot(cat, wcat_ref[l - 1],
                                 preferred_element_type=f32)
                         + bg_ref[l])
                h_new, c_new = lstm_cell(gates, cn_ref[l])
                hn_ref[l] = h_new
                cn_ref[l] = c_new
                inp = h_new

            htop_sc[t] = inp                             # top-layer output
            return carry

        jax.lax.fori_loop(0, T, step, 0, unroll=True)

        # FC head on all timesteps at once (M = B*T), batch-major so the
        # wrapper's final reshape is a free view.
        htop = jnp.transpose(htop_sc[...], (1, 0, 2)).reshape(B * T, H)
        z = jnp.maximum(
            jnp.dot(htop, w1_ref[...], preferred_element_type=f32)
            + b1_ref[...], 0.0)
        # TODO(synk): F.dropout(p=0.3, training=True) not implemented; this
        # matches eval-mode forward (dropout = identity).
        # fc2 has N=1: keep it off the MXU (VPU multiply + lane reduction).
        y = jnp.sum(z * w2_ref[...], axis=1, keepdims=True) + b2_ref[...]
        y_ref[...] = y                                   # (B*T, 1)

    return kernel


@functools.partial(jax.jit, static_argnames=("n_layers", "hidden", "fc_dim"))
def decoder_rnn_forward(x, w_ih0, w_hh0, w_ih_rest, w_hh_rest, bg,
                        w1, b1, w2, b2, *, n_layers, hidden, fc_dim):
    """x: (B, T, D) f32 (batch_first).  Returns (y (B,T,1), h_n (L,B,H), c_n (L,B,H))."""
    B, T, D = x.shape
    L, H, FC = n_layers, hidden, fc_dim

    # Pad batch to the f32 sublane multiple (8) for MXU/VPU occupancy; padded
    # rows are independent and sliced off afterwards.
    Bp = ((B + 7) // 8) * 8
    if Bp != B:
        x = jnp.pad(x, ((0, Bp - B), (0, 0), (0, 0)))

    # Fuse per-layer input & recurrent weights for layers 1..L-1.
    if L > 1:
        wcat = jnp.concatenate([w_ih_rest, w_hh_rest], axis=1)  # (L-1, 2H, 4H)
    else:
        wcat = jnp.zeros((1, 2 * H, 4 * H), jnp.float32)        # unused dummy

    bg3 = bg.reshape(L, 1, 4 * H)
    b1r = b1.reshape(1, FC)
    w2row = w2.reshape(1, FC)
    b2s = b2.reshape(1, 1)

    kernel = _make_kernel(T=T, B=Bp, D=D, H=H, L=L)

    # No grid: everything (x, weights, state, scratch) lives in VMEM for the
    # whole kernel; nothing to pipeline at these sizes.
    y_flat, h_n, c_n = pl.pallas_call(
        kernel,
        out_shape=[
            jax.ShapeDtypeStruct((Bp * T, 1), jnp.float32),   # y (batch-major rows)
            jax.ShapeDtypeStruct((L, Bp, H), jnp.float32),    # h_n (also state carry)
            jax.ShapeDtypeStruct((L, Bp, H), jnp.float32),    # c_n (also state carry)
        ],
        scratch_shapes=[
            pltpu.VMEM((T, Bp, 4 * H), jnp.float32),          # hoisted layer-0 proj
            pltpu.VMEM((T, Bp, H), jnp.float32),              # top-layer outputs
        ],
    )(x, w_ih0, w_hh0, wcat, bg3, w1, b1r, w2row, b2s)

    y = y_flat.reshape(Bp, T, 1)[:B]                          # free view + unpad
    return y, h_n[:, :B, :], c_n[:, :B, :]


def reference_forward(x, w_ih0, w_hh0, w_ih_rest, w_hh_rest, bg,
                      w1, b1, w2, b2, n_layers, hidden):
    """Pure-JAX reference (same math as torch nn.LSTM eval forward)."""
    B, T, D = x.shape
    L, H = n_layers, hidden
    h0 = jnp.zeros((L, B, H), jnp.float32)
    c0 = jnp.zeros((L, B, H), jnp.float32)

    def cell(inp, h_prev, c_prev, w_i, w_h, b):
        gates = inp @ w_i + h_prev @ w_h + b[None, :]
        i_g = jax.nn.sigmoid(gates[:, 0:H])
        f_g = jax.nn.sigmoid(gates[:, H:2 * H])
        g_g = jnp.tanh(gates[:, 2 * H:3 * H])
        o_g = jax.nn.sigmoid(gates[:, 3 * H:4 * H])
        c_new = f_g * c_prev + i_g * g_g
        h_new = o_g * jnp.tanh(c_new)
        return h_new, c_new

    def step(carry, xt):
        h, c = carry
        inp = xt
        hs, cs = [], []
        for l in range(L):
            w_i = w_ih0 if l == 0 else w_ih_rest[l - 1]
            w_h = w_hh0 if l == 0 else w_hh_rest[l - 1]
            hl, cl = cell(inp, h[l], c[l], w_i, w_h, bg[l])
            hs.append(hl)
            cs.append(cl)
            inp = hl
        h = jnp.stack(hs)
        c = jnp.stack(cs)
        z = jnp.maximum(inp @ w1 + b1, 0.0)
        y = z @ w2 + b2
        return (h, c), y

    (h_n, c_n), ys = jax.lax.scan(step, (h0, c0), jnp.transpose(x, (1, 0, 2)))
    return jnp.transpose(ys, (1, 0, 2)), h_n, c_n


if __name__ == "__main__":
    # Small shapes consistent with the module's forward (D != H is supported).
    B, T = 2, 8            # batch, sequence length
    D = 64                 # CNN_embed_dim
    H = 128                # h_RNN (lane-aligned gate slices)
    L = 3                  # h_RNN_layers
    FC = 128               # h_FC_dim

    key = jax.random.PRNGKey(0)
    ks = jax.random.split(key, 10)
    scale = 1.0 / jnp.sqrt(jnp.float32(H))

    x = jax.random.normal(ks[0], (B, T, D), jnp.float32)
    # LSTM weights, pre-transposed to (in_dim, 4H) / (H, 4H); gate order i,f,g,o.
    w_ih0 = jax.random.uniform(ks[1], (D, 4 * H), jnp.float32, -scale, scale)
    w_hh0 = jax.random.uniform(ks[2], (H, 4 * H), jnp.float32, -scale, scale)
    w_ih_rest = jax.random.uniform(ks[3], (L - 1, H, 4 * H), jnp.float32, -scale, scale)
    w_hh_rest = jax.random.uniform(ks[4], (L - 1, H, 4 * H), jnp.float32, -scale, scale)
    bg = jax.random.uniform(ks[5], (L, 4 * H), jnp.float32, -scale, scale)  # b_ih + b_hh
    w1 = jax.random.uniform(ks[6], (H, FC), jnp.float32, -scale, scale)
    b1 = jax.random.uniform(ks[7], (1, FC), jnp.float32, -scale, scale)
    w2 = jax.random.uniform(ks[8], (FC, 1), jnp.float32, -scale, scale)
    b2 = jax.random.uniform(ks[9], (1, 1), jnp.float32, -scale, scale)

    y, h_n, c_n = decoder_rnn_forward(
        x, w_ih0, w_hh0, w_ih_rest, w_hh_rest, bg, w1, b1, w2, b2,
        n_layers=L, hidden=H, fc_dim=FC)
    jax.block_until_ready((y, h_n, c_n))

    y_ref, h_ref, c_ref = reference_forward(
        x, w_ih0, w_hh0, w_ih_rest, w_hh_rest, bg, w1, b1, w2, b2, L, H)

    assert y.shape == (B, T, 1) and h_n.shape == (L, B, H) and c_n.shape == (L, B, H)
    assert jnp.allclose(y, y_ref, atol=1e-4, rtol=1e-4)
    assert jnp.allclose(h_n, h_ref, atol=1e-4, rtol=1e-4)
    assert jnp.allclose(c_n, c_ref, atol=1e-4, rtol=1e-4)

    print("KERNEL_OK")
</pallas_src>

<mosaic_0001>
module attributes {stable_mosaic.version = 11 : i64} {
  func.func @kernel(%arg0: memref<8x8x64xf32, #tpu.memory_space<vmem>>, %arg1: memref<64x512xf32, #tpu.memory_space<vmem>>, %arg2: memref<128x512xf32, #tpu.memory_space<vmem>>, %arg3: memref<2x256x512xf32, #tpu.memory_space<vmem>>, %arg4: memref<3x1x512xf32, #tpu.memory_space<vmem>>, %arg5: memref<128x128xf32, #tpu.memory_space<vmem>>, %arg6: memref<1x128xf32, #tpu.memory_space<vmem>>, %arg7: memref<1x128xf32, #tpu.memory_space<vmem>>, %arg8: memref<1x1xf32, #tpu.memory_space<vmem>>, %arg9: memref<64x1xf32, #tpu.memory_space<vmem>>, %arg10: memref<3x8x128xf32, #tpu.memory_space<vmem>>, %arg11: memref<3x8x128xf32, #tpu.memory_space<vmem>>, %arg12: memref<8x8x512xf32, #tpu.memory_space<vmem>>, %arg13: memref<8x8x128xf32, #tpu.memory_space<vmem>>) attributes {dimension_semantics = [], scalar_prefetch = 0 : i64, scratch_operands = 2 : i64, tpu.core_type = #tpu.core_type<tc>} {
    %cst = arith.constant 0.000000e+00 : f32
    %0 = vector.broadcast %cst : f32 to vector<3x8x128xf32>
    %c0 = arith.constant 0 : index
    %c0_0 = arith.constant 0 : index
    %c0_1 = arith.constant 0 : index
    %1 = vector.load %arg10[%c0, %c0_0, %c0_1] : memref<3x8x128xf32, #tpu.memory_space<vmem>>, vector<3x8x128xf32>
    tpu.vector_store %arg10[%c0, %c0_0, %c0_1], %0 {strides = array<i32>} : memref<3x8x128xf32, #tpu.memory_space<vmem>>, vector<3x8x128xf32>,
    %cst_2 = arith.constant 0.000000e+00 : f32
    %2 = vector.broadcast %cst_2 : f32 to vector<3x8x128xf32>
    %c0_3 = arith.constant 0 : index
    %c0_4 = arith.constant 0 : index
    %c0_5 = arith.constant 0 : index
    %3 = vector.load %arg11[%c0_3, %c0_4, %c0_5] : memref<3x8x128xf32, #tpu.memory_space<vmem>>, vector<3x8x128xf32>
    tpu.vector_store %arg11[%c0_3, %c0_4, %c0_5], %2 {strides = array<i32>} : memref<3x8x128xf32, #tpu.memory_space<vmem>>, vector<3x8x128xf32>,
    %c0_6 = arith.constant 0 : index
    %c0_7 = arith.constant 0 : index
    %c0_8 = arith.constant 0 : index
    %4 = vector.load %arg0[%c0_6, %c0_7, %c0_8] : memref<8x8x64xf32, #tpu.memory_space<vmem>>, vector<8x8x64xf32>
    %5 = vector.shape_cast %4 : vector<8x8x64xf32> to vector<64x64xf32>
    %c0_9 = arith.constant 0 : index
    %c0_10 = arith.constant 0 : index
    %6 = vector.load %arg1[%c0_9, %c0_10] : memref<64x512xf32, #tpu.memory_space<vmem>>, vector<64x512xf32>
    %cst_11 = arith.constant dense<0.000000e+00> : vector<64x512xf32>
    %7 = tpu.matmul %5, %6, %cst_11 {dimension_numbers = #tpu.dot_dimension_numbers<[1], [0], [0], [1], [0, 0, 1, 1], [], []>} : vector<64x64xf32>, vector<64x512xf32>, vector<64x512xf32> -> vector<64x512xf32>
    %8 = vector.shape_cast %7 : vector<64x512xf32> to vector<8x8x512xf32>
    %9 = tpu.transpose %8, [1, 0, 2] : vector<8x8x512xf32> -> vector<8x8x512xf32>
    %c0_12 = arith.constant 0 : index
    %c0_13 = arith.constant 0 : index
    %c0_14 = arith.constant 0 : index
    %10 = vector.load %arg12[%c0_12, %c0_13, %c0_14] : memref<8x8x512xf32, #tpu.memory_space<vmem>>, vector<8x8x512xf32>
    tpu.vector_store %arg12[%c0_12, %c0_13, %c0_14], %9 {strides = array<i32>} : memref<8x8x512xf32, #tpu.memory_space<vmem>>, vector<8x8x512xf32>,
    %c0_i32 = arith.constant 0 : i32
    %11 = arith.index_cast %c0_i32 : i32 to index
    %c0_15 = arith.constant 0 : index
    %c0_16 = arith.constant 0 : index
    %12 = vector.load %arg12[%11, %c0_15, %c0_16] : memref<8x8x512xf32, #tpu.memory_space<vmem>>, vector<1x8x512xf32>
    %13 = vector.shape_cast %12 : vector<1x8x512xf32> to vector<8x512xf32>
    %c0_17 = arith.constant 0 : index
    %c0_18 = arith.constant 0 : index
    %c0_19 = arith.constant 0 : index
    %14 = vector.load %arg10[%c0_17, %c0_18, %c0_19] : memref<3x8x128xf32, #tpu.memory_space<vmem>>, vector<1x8x128xf32>
    %15 = vector.shape_cast %14 : vector<1x8x128xf32> to vector<8x128xf32>
    %c0_20 = arith.constant 0 : index
    %c0_21 = arith.constant 0 : index
    %16 = vector.load %arg2[%c0_20, %c0_21] : memref<128x512xf32, #tpu.memory_space<vmem>>, vector<128x512xf32>
    %cst_22 = arith.constant dense<0.000000e+00> : vector<8x512xf32>
    %17 = tpu.matmul %15, %16, %cst_22 {dimension_numbers = #tpu.dot_dimension_numbers<[1], [0], [0], [1], [0, 0, 1, 1], [], []>} : vector<8x128xf32>, vector<128x512xf32>, vector<8x512xf32> -> vector<8x512xf32>
    %18 = arith.addf %13, %17 : vector<8x512xf32>
    %c0_23 = arith.constant 0 : index
    %c0_24 = arith.constant 0 : index
    %c0_25 = arith.constant 0 : index
    %19 = vector.load %arg4[%c0_23, %c0_24, %c0_25] : memref<3x1x512xf32, #tpu.memory_space<vmem>>, vector<1x1x512xf32>
    %20 = vector.shape_cast %19 : vector<1x1x512xf32> to vector<1x512xf32>
    %21 = vector.broadcast %20 : vector<1x512xf32> to vector<8x512xf32>
    %22 = arith.addf %18, %21 : vector<8x512xf32>
    %c0_26 = arith.constant 0 : index
    %c0_27 = arith.constant 0 : index
    %c0_28 = arith.constant 0 : index
    %23 = vector.load %arg11[%c0_26, %c0_27, %c0_28] : memref<3x8x128xf32, #tpu.memory_space<vmem>>, vector<1x8x128xf32>
    %24 = vector.shape_cast %23 : vector<1x8x128xf32> to vector<8x128xf32>
    %25 = vector.extract_strided_slice %22 {offsets = [0, 0], sizes = [8, 128], strides = [1, 1]} : vector<8x512xf32> to vector<8x128xf32>
    %26 = arith.negf %25 : vector<8x128xf32>
    %27 = math.exp %26 : vector<8x128xf32>
    %cst_29 = arith.constant 1.000000e+00 : f32
    %28 = vector.broadcast %cst_29 : f32 to vector<8x128xf32>
    %29 = arith.addf %28, %27 : vector<8x128xf32>
    %30 = arith.divf %28, %29 : vector<8x128xf32>
    %31 = vector.extract_strided_slice %22 {offsets = [0, 128], sizes = [8, 128], strides = [1, 1]} : vector<8x512xf32> to vector<8x128xf32>
    %32 = arith.negf %31 : vector<8x128xf32>
    %33 = math.exp %32 : vector<8x128xf32>
    %cst_30 = arith.constant 1.000000e+00 : f32
    %34 = vector.broadcast %cst_30 : f32 to vector<8x128xf32>
    %35 = arith.addf %34, %33 : vector<8x128xf32>
    %36 = arith.divf %34, %35 : vector<8x128xf32>
    %37 = vector.extract_strided_slice %22 {offsets = [0, 256], sizes = [8, 128], strides = [1, 1]} : vector<8x512xf32> to vector<8x128xf32>
    %38 = math.tanh %37 : vector<8x128xf32>
    %39 = vector.extract_strided_slice %22 {offsets = [0, 384], sizes = [8, 128], strides = [1, 1]} : vector<8x512xf32> to vector<8x128xf32>
    %40 = arith.negf %39 : vector<8x128xf32>
    %41 = math.exp %40 : vector<8x128xf32>
    %cst_31 = arith.constant 1.000000e+00 : f32
    %42 = vector.broadcast %cst_31 : f32 to vector<8x128xf32>
    %43 = arith.addf %42, %41 : vector<8x128xf32>
    %44 = arith.divf %42, %43 : vector<8x128xf32>
    %45 = arith.mulf %36, %24 : vector<8x128xf32>
    %46 = arith.mulf %30, %38 : vector<8x128xf32>
    %47 = arith.addf %45, %46 : vector<8x128xf32>
    %48 = math.tanh %47 : vector<8x128xf32>
    %49 = arith.mulf %44, %48 : vector<8x128xf32>
    %c0_32 = arith.constant 0 : index
    %c0_33 = arith.constant 0 : index
    %c0_34 = arith.constant 0 : index
    %50 = vector.load %arg10[%c0_32, %c0_33, %c0_34] : memref<3x8x128xf32, #tpu.memory_space<vmem>>, vector<1x8x128xf32>
    %51 = vector.shape_cast %50 : vector<1x8x128xf32> to vector<8x128xf32>
    %52 = vector.shape_cast %49 : vector<8x128xf32> to vector<1x8x128xf32>
    tpu.vector_store %arg10[%c0_32, %c0_33, %c0_34], %52 {strides = array<i32>} : memref<3x8x128xf32, #tpu.memory_space<vmem>>, vector<1x8x128xf32>,
    %c0_35 = arith.constant 0 : index
    %c0_36 = arith.constant 0 : index
    %c0_37 = arith.constant 0 : index
    %53 = vector.load %arg11[%c0_35, %c0_36, %c0_37] : memref<3x8x128xf32, #tpu.memory_space<vmem>>, vector<1x8x128xf32>
    %54 = vector.shape_cast %53 : vector<1x8x128xf32> to vector<8x128xf32>
    %55 = vector.shape_cast %47 : vector<8x128xf32> to vector<1x8x128xf32>
    tpu.vector_store %arg11[%c0_35, %c0_36, %c0_37], %55 {strides = array<i32>} : memref<3x8x128xf32, #tpu.memory_space<vmem>>, vector<1x8x128xf32>,
    %c1 = arith.constant 1 : index
    %c0_38 = arith.constant 0 : index
    %c0_39 = arith.constant 0 : index
    %56 = vector.load %arg10[%c1, %c0_38, %c0_39] : memref<3x8x128xf32, #tpu.memory_space<vmem>>, vector<1x8x128xf32>
    %57 = vector.shape_cast %56 : vector<1x8x128xf32> to vector<8x128xf32>
    %58 = tpu.concatenate %49, %57 in 1 : vector<8x128xf32>, vector<8x128xf32> -> vector<8x256xf32>
    %c0_40 = arith.constant 0 : index
    %c0_41 = arith.constant 0 : index
    %c0_42 = arith.constant 0 : index
    %59 = vector.load %arg3[%c0_40, %c0_41, %c0_42] : memref<2x256x512xf32, #tpu.memory_space<vmem>>, vector<1x256x512xf32>
    %60 = vector.shape_cast %59 : vector<1x256x512xf32> to vector<256x512xf32>
    %cst_43 = arith.constant dense<0.000000e+00> : vector<8x512xf32>
    %61 = tpu.matmul %58, %60, %cst_43 {dimension_numbers = #tpu.dot_dimension_numbers<[1], [0], [0], [1], [0, 0, 1, 1], [], []>} : vector<8x256xf32>, vector<256x512xf32>, vector<8x512xf32> -> vector<8x512xf32>
    %c1_44 = arith.constant 1 : index
    %c0_45 = arith.constant 0 : index
    %c0_46 = arith.constant 0 : index
    %62 = vector.load %arg4[%c1_44, %c0_45, %c0_46] : memref<3x1x512xf32, #tpu.memory_space<vmem>>, vector<1x1x512xf32>
    %63 = vector.shape_cast %62 : vector<1x1x512xf32> to vector<1x512xf32>
    %64 = vector.broadcast %63 : vector<1x512xf32> to vector<8x512xf32>
    %65 = arith.addf %61, %64 : vector<8x512xf32>
    %c1_47 = arith.constant 1 : index
    %c0_48 = arith.constant 0 : index
    %c0_49 = arith.constant 0 : index
    %66 = vector.load %arg11[%c1_47, %c0_48, %c0_49] : memref<3x8x128xf32, #tpu.memory_space<vmem>>, vector<1x8x128xf32>
    %67 = vector.shape_cast %66 : vector<1x8x128xf32> to vector<8x128xf32>
    %68 = vector.extract_strided_slice %65 {offsets = [0, 0], sizes = [8, 128], strides = [1, 1]} : vector<8x512xf32> to vector<8x128xf32>
    %69 = arith.negf %68 : vector<8x128xf32>
    %70 = math.exp %69 : vector<8x128xf32>
    %cst_50 = arith.constant 1.000000e+00 : f32
    %71 = vector.broadcast %cst_50 : f32 to vector<8x128xf32>
    %72 = arith.addf %71, %70 : vector<8x128xf32>
    %73 = arith.divf %71, %72 : vector<8x128xf32>
    %74 = vector.extract_strided_slice %65 {offsets = [0, 128], sizes = [8, 128], strides = [1, 1]} : vector<8x512xf32> to vector<8x128xf32>
    %75 = arith.negf %74 : vector<8x128xf32>
    %76 = math.exp %75 : vector<8x128xf32>
    %cst_51 = arith.constant 1.000000e+00 : f32
    %77 = vector.broadcast %cst_51 : f32 to vector<8x128xf32>
    %78 = arith.addf %77, %76 : vector<8x128xf32>
    %79 = arith.divf %77, %78 : vector<8x128xf32>
    %80 = vector.extract_strided_slice %65 {offsets = [0, 256], sizes = [8, 128], strides = [1, 1]} : vector<8x512xf32> to vector<8x128xf32>
    %81 = math.tanh %80 : vector<8x128xf32>
    %82 = vector.extract_strided_slice %65 {offsets = [0, 384], sizes = [8, 128], strides = [1, 1]} : vector<8x512xf32> to vector<8x128xf32>
    %83 = arith.negf %82 : vector<8x128xf32>
    %84 = math.exp %83 : vector<8x128xf32>
    %cst_52 = arith.constant 1.000000e+00 : f32
    %85 = vector.broadcast %cst_52 : f32 to vector<8x128xf32>
    %86 = arith.addf %85, %84 : vector<8x128xf32>
    %87 = arith.divf %85, %86 : vector<8x128xf32>
    %88 = arith.mulf %79, %67 : vector<8x128xf32>
    %89 = arith.mulf %73, %81 : vector<8x128xf32>
    %90 = arith.addf %88, %89 : vector<8x128xf32>
    %91 = math.tanh %90 : vector<8x128xf32>
    %92 = arith.mulf %87, %91 : vector<8x128xf32>
    %c1_53 = arith.constant 1 : index
    %c0_54 = arith.constant 0 : index
    %c0_55 = arith.constant 0 : index
    %93 = vector.load %arg10[%c1_53, %c0_54, %c0_55] : memref<3x8x128xf32, #tpu.memory_space<vmem>>, vector<1x8x128xf32>
    %94 = vector.shape_cast %93 : vector<1x8x128xf32> to vector<8x128xf32>
    %95 = vector.shape_cast %92 : vector<8x128xf32> to vector<1x8x128xf32>
    tpu.vector_store %arg10[%c1_53, %c0_54, %c0_55], %95 {strides = array<i32>} : memref<3x8x128xf32, #tpu.memory_space<vmem>>, vector<1x8x128xf32>,
    %c1_56 = arith.constant 1 : index
    %c0_57 = arith.constant 0 : index
    %c0_58 = arith.constant 0 : index
    %96 = vector.load %arg11[%c1_56, %c0_57, %c0_58] : memref<3x8x128xf32, #tpu.memory_space<vmem>>, vector<1x8x128xf32>
    %97 = vector.shape_cast %96 : vector<1x8x128xf32> to vector<8x128xf32>
    %98 = vector.shape_cast %90 : vector<8x128xf32> to vector<1x8x128xf32>
    tpu.vector_store %arg11[%c1_56, %c0_57, %c0_58], %98 {strides = array<i32>} : memref<3x8x128xf32, #tpu.memory_space<vmem>>, vector<1x8x128xf32>,
    %c2 = arith.constant 2 : index
    %c0_59 = arith.constant 0 : index
    %c0_60 = arith.constant 0 : index
    %99 = vector.load %arg10[%c2, %c0_59, %c0_60] : memref<3x8x128xf32, #tpu.memory_space<vmem>>, vector<1x8x128xf32>
    %100 = vector.shape_cast %99 : vector<1x8x128xf32> to vector<8x128xf32>
    %101 = tpu.concatenate %92, %100 in 1 : vector<8x128xf32>, vector<8x128xf32> -> vector<8x256xf32>
    %c1_61 = arith.constant 1 : index
    %c0_62 = arith.constant 0 : index
    %c0_63 = arith.constant 0 : index
    %102 = vector.load %arg3[%c1_61, %c0_62, %c0_63] : memref<2x256x512xf32, #tpu.memory_space<vmem>>, vector<1x256x512xf32>
    %103 = vector.shape_cast %102 : vector<1x256x512xf32> to vector<256x512xf32>
    %cst_64 = arith.constant dense<0.000000e+00> : vector<8x512xf32>
    %104 = tpu.matmul %101, %103, %cst_64 {dimension_numbers = #tpu.dot_dimension_numbers<[1], [0], [0], [1], [0, 0, 1, 1], [], []>} : vector<8x256xf32>, vector<256x512xf32>, vector<8x512xf32> -> vector<8x512xf32>
    %c2_65 = arith.constant 2 : index
    %c0_66 = arith.constant 0 : index
    %c0_67 = arith.constant 0 : index
    %105 = vector.load %arg4[%c2_65, %c0_66, %c0_67] : memref<3x1x512xf32, #tpu.memory_space<vmem>>, vector<1x1x512xf32>
    %106 = vector.shape_cast %105 : vector<1x1x512xf32> to vector<1x512xf32>
    %107 = vector.broadcast %106 : vector<1x512xf32> to vector<8x512xf32>
    %108 = arith.addf %104, %107 : vector<8x512xf32>
    %c2_68 = arith.constant 2 : index
    %c0_69 = arith.constant 0 : index
    %c0_70 = arith.constant 0 : index
    %109 = vector.load %arg11[%c2_68, %c0_69, %c0_70] : memref<3x8x128xf32, #tpu.memory_space<vmem>>, vector<1x8x128xf32>
    %110 = vector.shape_cast %109 : vector<1x8x128xf32> to vector<8x128xf32>
    %111 = vector.extract_strided_slice %108 {offsets = [0, 0], sizes = [8, 128], strides = [1, 1]} : vector<8x512xf32> to vector<8x128xf32>
    %112 = arith.negf %111 : vector<8x128xf32>
    %113 = math.exp %112 : vector<8x128xf32>
    %cst_71 = arith.constant 1.000000e+00 : f32
    %114 = vector.broadcast %cst_71 : f32 to vector<8x128xf32>
    %115 = arith.addf %114, %113 : vector<8x128xf32>
    %116 = arith.divf %114, %115 : vector<8x128xf32>
    %117 = vector.extract_strided_slice %108 {offsets = [0, 128], sizes = [8, 128], strides = [1, 1]} : vector<8x512xf32> to vector<8x128xf32>
    %118 = arith.negf %117 : vector<8x128xf32>
    %119 = math.exp %118 : vector<8x128xf32>
    %cst_72 = arith.constant 1.000000e+00 : f32
    %120 = vector.broadcast %cst_72 : f32 to vector<8x128xf32>
    %121 = arith.addf %120, %119 : vector<8x128xf32>
    %122 = arith.divf %120, %121 : vector<8x128xf32>
    %123 = vector.extract_strided_slice %108 {offsets = [0, 256], sizes = [8, 128], strides = [1, 1]} : vector<8x512xf32> to vector<8x128xf32>
    %124 = math.tanh %123 : vector<8x128xf32>
    %125 = vector.extract_strided_slice %108 {offsets = [0, 384], sizes = [8, 128], strides = [1, 1]} : vector<8x512xf32> to vector<8x128xf32>
    %126 = arith.negf %125 : vector<8x128xf32>
    %127 = math.exp %126 : vector<8x128xf32>
    %cst_73 = arith.constant 1.000000e+00 : f32
    %128 = vector.broadcast %cst_73 : f32 to vector<8x128xf32>
    %129 = arith.addf %128, %127 : vector<8x128xf32>
    %130 = arith.divf %128, %129 : vector<8x128xf32>
    %131 = arith.mulf %122, %110 : vector<8x128xf32>
    %132 = arith.mulf %116, %124 : vector<8x128xf32>
    %133 = arith.addf %131, %132 : vector<8x128xf32>
    %134 = math.tanh %133 : vector<8x128xf32>
    %135 = arith.mulf %130, %134 : vector<8x128xf32>
    %c2_74 = arith.constant 2 : index
    %c0_75 = arith.constant 0 : index
    %c0_76 = arith.constant 0 : index
    %136 = vector.load %arg10[%c2_74, %c0_75, %c0_76] : memref<3x8x128xf32, #tpu.memory_space<vmem>>, vector<1x8x128xf32>
    %137 = vector.shape_cast %136 : vector<1x8x128xf32> to vector<8x128xf32>
    %138 = vector.shape_cast %135 : vector<8x128xf32> to vector<1x8x128xf32>
    tpu.vector_store %arg10[%c2_74, %c0_75, %c0_76], %138 {strides = array<i32>} : memref<3x8x128xf32, #tpu.memory_space<vmem>>, vector<1x8x128xf32>,
    %c2_77 = arith.constant 2 : index
    %c0_78 = arith.constant 0 : index
    %c0_79 = arith.constant 0 : index
    %139 = vector.load %arg11[%c2_77, %c0_78, %c0_79] : memref<3x8x128xf32, #tpu.memory_space<vmem>>, vector<1x8x128xf32>
    %140 = vector.shape_cast %139 : vector<1x8x128xf32> to vector<8x128xf32>
    %141 = vector.shape_cast %133 : vector<8x128xf32> to vector<1x8x128xf32>
    tpu.vector_store %arg11[%c2_77, %c0_78, %c0_79], %141 {strides = array<i32>} : memref<3x8x128xf32, #tpu.memory_space<vmem>>, vector<1x8x128xf32>,
    %142 = arith.index_cast %c0_i32 : i32 to index
    %c0_80 = arith.constant 0 : index
    %c0_81 = arith.constant 0 : index
    %143 = vector.load %arg13[%142, %c0_80, %c0_81] : memref<8x8x128xf32, #tpu.memory_space<vmem>>, vector<1x8x128xf32>
    %144 = vector.shape_cast %143 : vector<1x8x128xf32> to vector<8x128xf32>
    %145 = vector.shape_cast %135 : vector<8x128xf32> to vector<1x8x128xf32>
    tpu.vector_store %arg13[%142, %c0_80, %c0_81], %145 {strides = array<i32>} : memref<8x8x128xf32, #tpu.memory_space<vmem>>, vector<1x8x128xf32>,
    %c1_i32 = arith.constant 1 : i32
    %146 = arith.index_cast %c1_i32 : i32 to index
    %c0_82 = arith.constant 0 : index
    %c0_83 = arith.constant 0 : index
    %147 = vector.load %arg12[%146, %c0_82, %c0_83] : memref<8x8x512xf32, #tpu.memory_space<vmem>>, vector<1x8x512xf32>
    %148 = vector.shape_cast %147 : vector<1x8x512xf32> to vector<8x512xf32>
    %c0_84 = arith.constant 0 : index
    %c0_85 = arith.constant 0 : index
    %c0_86 = arith.constant 0 : index
    %149 = vector.load %arg10[%c0_84, %c0_85, %c0_86] : memref<3x8x128xf32, #tpu.memory_space<vmem>>, vector<1x8x128xf32>
    %150 = vector.shape_cast %149 : vector<1x8x128xf32> to vector<8x128xf32>
    %c0_87 = arith.constant 0 : index
    %c0_88 = arith.constant 0 : index
    %151 = vector.load %arg2[%c0_87, %c0_88] : memref<128x512xf32, #tpu.memory_space<vmem>>, vector<128x512xf32>
    %cst_89 = arith.constant dense<0.000000e+00> : vector<8x512xf32>
    %152 = tpu.matmul %150, %151, %cst_89 {dimension_numbers = #tpu.dot_dimension_numbers<[1], [0], [0], [1], [0, 0, 1, 1], [], []>} : vector<8x128xf32>, vector<128x512xf32>, vector<8x512xf32> -> vector<8x512xf32>
    %153 = arith.addf %148, %152 : vector<8x512xf32>
    %c0_90 = arith.constant 0 : index
    %c0_91 = arith.constant 0 : index
    %c0_92 = arith.constant 0 : index
    %154 = vector.load %arg4[%c0_90, %c0_91, %c0_92] : memref<3x1x512xf32, #tpu.memory_space<vmem>>, vector<1x1x512xf32>
    %155 = vector.shape_cast %154 : vector<1x1x512xf32> to vector<1x512xf32>
    %156 = vector.broadcast %155 : vector<1x512xf32> to vector<8x512xf32>
    %157 = arith.addf %153, %156 : vector<8x512xf32>
    %c0_93 = arith.constant 0 : index
    %c0_94 = arith.constant 0 : index
    %c0_95 = arith.constant 0 : index
    %158 = vector.load %arg11[%c0_93, %c0_94, %c0_95] : memref<3x8x128xf32, #tpu.memory_space<vmem>>, vector<1x8x128xf32>
    %159 = vector.shape_cast %158 : vector<1x8x128xf32> to vector<8x128xf32>
    %160 = vector.extract_strided_slice %157 {offsets = [0, 0], sizes = [8, 128], strides = [1, 1]} : vector<8x512xf32> to vector<8x128xf32>
    %161 = arith.negf %160 : vector<8x128xf32>
    %162 = math.exp %161 : vector<8x128xf32>
    %cst_96 = arith.constant 1.000000e+00 : f32
    %163 = vector.broadcast %cst_96 : f32 to vector<8x128xf32>
    %164 = arith.addf %163, %162 : vector<8x128xf32>
    %165 = arith.divf %163, %164 : vector<8x128xf32>
    %166 = vector.extract_strided_slice %157 {offsets = [0, 128], sizes = [8, 128], strides = [1, 1]} : vector<8x512xf32> to vector<8x128xf32>
    %167 = arith.negf %166 : vector<8x128xf32>
    %168 = math.exp %167 : vector<8x128xf32>
    %cst_97 = arith.constant 1.000000e+00 : f32
    %169 = vector.broadcast %cst_97 : f32 to vector<8x128xf32>
    %170 = arith.addf %169, %168 : vector<8x128xf32>
    %171 = arith.divf %169, %170 : vector<8x128xf32>
    %172 = vector.extract_strided_slice %157 {offsets = [0, 256], sizes = [8, 128], strides = [1, 1]} : vector<8x512xf32> to vector<8x128xf32>
    %173 = math.tanh %172 : vector<8x128xf32>
    %174 = vector.extract_strided_slice %157 {offsets = [0, 384], sizes = [8, 128], strides = [1, 1]} : vector<8x512xf32> to vector<8x128xf32>
    %175 = arith.negf %174 : vector<8x128xf32>
    %176 = math.exp %175 : vector<8x128xf32>
    %cst_98 = arith.constant 1.000000e+00 : f32
    %177 = vector.broadcast %cst_98 : f32 to vector<8x128xf32>
    %178 = arith.addf %177, %176 : vector<8x128xf32>
    %179 = arith.divf %177, %178 : vector<8x128xf32>
    %180 = arith.mulf %171, %159 : vector<8x128xf32>
    %181 = arith.mulf %165, %173 : vector<8x128xf32>
    %182 = arith.addf %180, %181 : vector<8x128xf32>
    %183 = math.tanh %182 : vector<8x128xf32>
    %184 = arith.mulf %179, %183 : vector<8x128xf32>
    %c0_99 = arith.constant 0 : index
    %c0_100 = arith.constant 0 : index
    %c0_101 = arith.constant 0 : index
    %185 = vector.load %arg10[%c0_99, %c0_100, %c0_101] : memref<3x8x128xf32, #tpu.memory_space<vmem>>, vector<1x8x128xf32>
    %186 = vector.shape_cast %185 : vector<1x8x128xf32> to vector<8x128xf32>
    %187 = vector.shape_cast %184 : vector<8x128xf32> to vector<1x8x128xf32>
    tpu.vector_store %arg10[%c0_99, %c0_100, %c0_101], %187 {strides = array<i32>} : memref<3x8x128xf32, #tpu.memory_space<vmem>>, vector<1x8x128xf32>,
    %c0_102 = arith.constant 0 : index
    %c0_103 = arith.constant 0 : index
    %c0_104 = arith.constant 0 : index
    %188 = vector.load %arg11[%c0_102, %c0_103, %c0_104] : memref<3x8x128xf32, #tpu.memory_space<vmem>>, vector<1x8x128xf32>
    %189 = vector.shape_cast %188 : vector<1x8x128xf32> to vector<8x128xf32>
    %190 = vector.shape_cast %182 : vector<8x128xf32> to vector<1x8x128xf32>
    tpu.vector_store %arg11[%c0_102, %c0_103, %c0_104], %190 {strides = array<i32>} : memref<3x8x128xf32, #tpu.memory_space<vmem>>, vector<1x8x128xf32>,
    %c1_105 = arith.constant 1 : index
    %c0_106 = arith.constant 0 : index
    %c0_107 = arith.constant 0 : index
    %191 = vector.load %arg10[%c1_105, %c0_106, %c0_107] : memref<3x8x128xf32, #tpu.memory_space<vmem>>, vector<1x8x128xf32>
    %192 = vector.shape_cast %191 : vector<1x8x128xf32> to vector<8x128xf32>
    %193 = tpu.concatenate %184, %192 in 1 : vector<8x128xf32>, vector<8x128xf32> -> vector<8x256xf32>
    %c0_108 = arith.constant 0 : index
    %c0_109 = arith.constant 0 : index
    %c0_110 = arith.constant 0 : index
    %194 = vector.load %arg3[%c0_108, %c0_109, %c0_110] : memref<2x256x512xf32, #tpu.memory_space<vmem>>, vector<1x256x512xf32>
    %195 = vector.shape_cast %194 : vector<1x256x512xf32> to vector<256x512xf32>
    %cst_111 = arith.constant dense<0.000000e+00> : vector<8x512xf32>
    %196 = tpu.matmul %193, %195, %cst_111 {dimension_numbers = #tpu.dot_dimension_numbers<[1], [0], [0], [1], [0, 0, 1, 1], [], []>} : vector<8x256xf32>, vector<256x512xf32>, vector<8x512xf32> -> vector<8x512xf32>
    %c1_112 = arith.constant 1 : index
    %c0_113 = arith.constant 0 : index
    %c0_114 = arith.constant 0 : index
    %197 = vector.load %arg4[%c1_112, %c0_113, %c0_114] : memref<3x1x512xf32, #tpu.memory_space<vmem>>, vector<1x1x512xf32>
    %198 = vector.shape_cast %197 : vector<1x1x512xf32> to vector<1x512xf32>
    %199 = vector.broadcast %198 : vector<1x512xf32> to vector<8x512xf32>
    %200 = arith.addf %196, %199 : vector<8x512xf32>
    %c1_115 = arith.constant 1 : index
    %c0_116 = arith.constant 0 : index
    %c0_117 = arith.constant 0 : index
    %201 = vector.load %arg11[%c1_115, %c0_116, %c0_117] : memref<3x8x128xf32, #tpu.memory_space<vmem>>, vector<1x8x128xf32>
    %202 = vector.shape_cast %201 : vector<1x8x128xf32> to vector<8x128xf32>
    %203 = vector.extract_strided_slice %200 {offsets = [0, 0], sizes = [8, 128], strides = [1, 1]} : vector<8x512xf32> to vector<8x128xf32>
    %204 = arith.negf %203 : vector<8x128xf32>
    %205 = math.exp %204 : vector<8x128xf32>
    %cst_118 = arith.constant 1.000000e+00 : f32
    %206 = vector.broadcast %cst_118 : f32 to vector<8x128xf32>
    %207 = arith.addf %206, %205 : vector<8x128xf32>
    %208 = arith.divf %206, %207 : vector<8x128xf32>
    %209 = vector.extract_strided_slice %200 {offsets = [0, 128], sizes = [8, 128], strides = [1, 1]} : vector<8x512xf32> to vector<8x128xf32>
    %210 = arith.negf %209 : vector<8x128xf32>
    %211 = math.exp %210 : vector<8x128xf32>
    %cst_119 = arith.constant 1.000000e+00 : f32
    %212 = vector.broadcast %cst_119 : f32 to vector<8x128xf32>
    %213 = arith.addf %212, %211 : vector<8x128xf32>
    %214 = arith.divf %212, %213 : vector<8x128xf32>
    %215 = vector.extract_strided_slice %200 {offsets = [0, 256], sizes = [8, 128], strides = [1, 1]} : vector<8x512xf32> to vector<8x128xf32>
    %216 = math.tanh %215 : vector<8x128xf32>
    %217 = vector.extract_strided_slice %200 {offsets = [0, 384], sizes = [8, 128], strides = [1, 1]} : vector<8x512xf32> to vector<8x128xf32>
    %218 = arith.negf %217 : vector<8x128xf32>
    %219 = math.exp %218 : vector<8x128xf32>
    %cst_120 = arith.constant 1.000000e+00 : f32
    %220 = vector.broadcast %cst_120 : f32 to vector<8x128xf32>
    %221 = arith.addf %220, %219 : vector<8x128xf32>
    %222 = arith.divf %220, %221 : vector<8x128xf32>
    %223 = arith.mulf %214, %202 : vector<8x128xf32>
    %224 = arith.mulf %208, %216 : vector<8x128xf32>
    %225 = arith.addf %223, %224 : vector<8x128xf32>
    %226 = math.tanh %225 : vector<8x128xf32>
    %227 = arith.mulf %222, %226 : vector<8x128xf32>
    %c1_121 = arith.constant 1 : index
    %c0_122 = arith.constant 0 : index
    %c0_123 = arith.constant 0 : index
    %228 = vector.load %arg10[%c1_121, %c0_122, %c0_123] : memref<3x8x128xf32, #tpu.memory_space<vmem>>, vector<1x8x128xf32>
    %229 = vector.shape_cast %228 : vector<1x8x128xf32> to vector<8x128xf32>
    %230 = vector.shape_cast %227 : vector<8x128xf32> to vector<1x8x128xf32>
    tpu.vector_store %arg10[%c1_121, %c0_122, %c0_123], %230 {strides = array<i32>} : memref<3x8x128xf32, #tpu.memory_space<vmem>>, vector<1x8x128xf32>,
    %c1_124 = arith.constant 1 : index
    %c0_125 = arith.constant 0 : index
    %c0_126 = arith.constant 0 : index
    %231 = vector.load %arg11[%c1_124, %c0_125, %c0_126] : memref<3x8x128xf32, #tpu.memory_space<vmem>>, vector<1x8x128xf32>
    %232 = vector.shape_cast %231 : vector<1x8x128xf32> to vector<8x128xf32>
    %233 = vector.shape_cast %225 : vector<8x128xf32> to vector<1x8x128xf32>
    tpu.vector_store %arg11[%c1_124, %c0_125, %c0_126], %233 {strides = array<i32>} : memref<3x8x128xf32, #tpu.memory_space<vmem>>, vector<1x8x128xf32>,
    %c2_127 = arith.constant 2 : index
    %c0_128 = arith.constant 0 : index
    %c0_129 = arith.constant 0 : index
    %234 = vector.load %arg10[%c2_127, %c0_128, %c0_129] : memref<3x8x128xf32, #tpu.memory_space<vmem>>, vector<1x8x128xf32>
    %235 = vector.shape_cast %234 : vector<1x8x128xf32> to vector<8x128xf32>
    %236 = tpu.concatenate %227, %235 in 1 : vector<8x128xf32>, vector<8x128xf32> -> vector<8x256xf32>
    %c1_130 = arith.constant 1 : index
    %c0_131 = arith.constant 0 : index
    %c0_132 = arith.constant 0 : index
    %237 = vector.load %arg3[%c1_130, %c0_131, %c0_132] : memref<2x256x512xf32, #tpu.memory_space<vmem>>, vector<1x256x512xf32>
    %238 = vector.shape_cast %237 : vector<1x256x512xf32> to vector<256x512xf32>
    %cst_133 = arith.constant dense<0.000000e+00> : vector<8x512xf32>
    %239 = tpu.matmul %236, %238, %cst_133 {dimension_numbers = #tpu.dot_dimension_numbers<[1], [0], [0], [1], [0, 0, 1, 1], [], []>} : vector<8x256xf32>, vector<256x512xf32>, vector<8x512xf32> -> vector<8x512xf32>
    %c2_134 = arith.constant 2 : index
    %c0_135 = arith.constant 0 : index
    %c0_136 = arith.constant 0 : index
    %240 = vector.load %arg4[%c2_134, %c0_135, %c0_136] : memref<3x1x512xf32, #tpu.memory_space<vmem>>, vector<1x1x512xf32>
    %241 = vector.shape_cast %240 : vector<1x1x512xf32> to vector<1x512xf32>
    %242 = vector.broadcast %241 : vector<1x512xf32> to vector<8x512xf32>
    %243 = arith.addf %239, %242 : vector<8x512xf32>
    %c2_137 = arith.constant 2 : index
    %c0_138 = arith.constant 0 : index
    %c0_139 = arith.constant 0 : index
    %244 = vector.load %arg11[%c2_137, %c0_138, %c0_139] : memref<3x8x128xf32, #tpu.memory_space<vmem>>, vector<1x8x128xf32>
    %245 = vector.shape_cast %244 : vector<1x8x128xf32> to vector<8x128xf32>
    %246 = vector.extract_strided_slice %243 {offsets = [0, 0], sizes = [8, 128], strides = [1, 1]} : vector<8x512xf32> to vector<8x128xf32>
    %247 = arith.negf %246 : vector<8x128xf32>
    %248 = math.exp %247 : vector<8x128xf32>
    %cst_140 = arith.constant 1.000000e+00 : f32
    %249 = vector.broadcast %cst_140 : f32 to vector<8x128xf32>
    %250 = arith.addf %249, %248 : vector<8x128xf32>
    %251 = arith.divf %249, %250 : vector<8x128xf32>
    %252 = vector.extract_strided_slice %243 {offsets = [0, 128], sizes = [8, 128], strides = [1, 1]} : vector<8x512xf32> to vector<8x128xf32>
    %253 = arith.negf %252 : vector<8x128xf32>
    %254 = math.exp %253 : vector<8x128xf32>
    %cst_141 = arith.constant 1.000000e+00 : f32
    %255 = vector.broadcast %cst_141 : f32 to vector<8x128xf32>
    %256 = arith.addf %255, %254 : vector<8x128xf32>
    %257 = arith.divf %255, %256 : vector<8x128xf32>
    %258 = vector.extract_strided_slice %243 {offsets = [0, 256], sizes = [8, 128], strides = [1, 1]} : vector<8x512xf32> to vector<8x128xf32>
    %259 = math.tanh %258 : vector<8x128xf32>
    %260 = vector.extract_strided_slice %243 {offsets = [0, 384], sizes = [8, 128], strides = [1, 1]} : vector<8x512xf32> to vector<8x128xf32>
    %261 = arith.negf %260 : vector<8x128xf32>
    %262 = math.exp %261 : vector<8x128xf32>
    %cst_142 = arith.constant 1.000000e+00 : f32
    %263 = vector.broadcast %cst_142 : f32 to vector<8x128xf32>
    %264 = arith.addf %263, %262 : vector<8x128xf32>
    %265 = arith.divf %263, %264 : vector<8x128xf32>
    %266 = arith.mulf %257, %245 : vector<8x128xf32>
    %267 = arith.mulf %251, %259 : vector<8x128xf32>
    %268 = arith.addf %266, %267 : vector<8x128xf32>
    %269 = math.tanh %268 : vector<8x128xf32>
    %270 = arith.mulf %265, %269 : vector<8x128xf32>
    %c2_143 = arith.constant 2 : index
    %c0_144 = arith.constant 0 : index
    %c0_145 = arith.constant 0 : index
    %271 = vector.load %arg10[%c2_143, %c0_144, %c0_145] : memref<3x8x128xf32, #tpu.memory_space<vmem>>, vector<1x8x128xf32>
    %272 = vector.shape_cast %271 : vector<1x8x128xf32> to vector<8x128xf32>
    %273 = vector.shape_cast %270 : vector<8x128xf32> to vector<1x8x128xf32>
    tpu.vector_store %arg10[%c2_143, %c0_144, %c0_145], %273 {strides = array<i32>} : memref<3x8x128xf32, #tpu.memory_space<vmem>>, vector<1x8x128xf32>,
    %c2_146 = arith.constant 2 : index
    %c0_147 = arith.constant 0 : index
    %c0_148 = arith.constant 0 : index
    %274 = vector.load %arg11[%c2_146, %c0_147, %c0_148] : memref<3x8x128xf32, #tpu.memory_space<vmem>>, vector<1x8x128xf32>
    %275 = vector.shape_cast %274 : vector<1x8x128xf32> to vector<8x128xf32>
    %276 = vector.shape_cast %268 : vector<8x128xf32> to vector<1x8x128xf32>
    tpu.vector_store %arg11[%c2_146, %c0_147, %c0_148], %276 {strides = array<i32>} : memref<3x8x128xf32, #tpu.memory_space<vmem>>, vector<1x8x128xf32>,
    %277 = arith.index_cast %c1_i32 : i32 to index
    %c0_149 = arith.constant 0 : index
    %c0_150 = arith.constant 0 : index
    %278 = vector.load %arg13[%277, %c0_149, %c0_150] : memref<8x8x128xf32, #tpu.memory_space<vmem>>, vector<1x8x128xf32>
    %279 = vector.shape_cast %278 : vector<1x8x128xf32> to vector<8x128xf32>
    %280 = vector.shape_cast %270 : vector<8x128xf32> to vector<1x8x128xf32>
    tpu.vector_store %arg13[%277, %c0_149, %c0_150], %280 {strides = array<i32>} : memref<8x8x128xf32, #tpu.memory_space<vmem>>, vector<1x8x128xf32>,
    %c2_i32 = arith.constant 2 : i32
    %281 = arith.index_cast %c2_i32 : i32 to index
    %c0_151 = arith.constant 0 : index
    %c0_152 = arith.constant 0 : index
    %282 = vector.load %arg12[%281, %c0_151, %c0_152] : memref<8x8x512xf32, #tpu.memory_space<vmem>>, vector<1x8x512xf32>
    %283 = vector.shape_cast %282 : vector<1x8x512xf32> to vector<8x512xf32>
    %c0_153 = arith.constant 0 : index
    %c0_154 = arith.constant 0 : index
    %c0_155 = arith.constant 0 : index
    %284 = vector.load %arg10[%c0_153, %c0_154, %c0_155] : memref<3x8x128xf32, #tpu.memory_space<vmem>>, vector<1x8x128xf32>
    %285 = vector.shape_cast %284 : vector<1x8x128xf32> to vector<8x128xf32>
    %c0_156 = arith.constant 0 : index
    %c0_157 = arith.constant 0 : index
    %286 = vector.load %arg2[%c0_156, %c0_157] : memref<128x512xf32, #tpu.memory_space<vmem>>, vector<128x512xf32>
    %cst_158 = arith.constant dense<0.000000e+00> : vector<8x512xf32>
    %287 = tpu.matmul %285, %286, %cst_158 {dimension_numbers = #tpu.dot_dimension_numbers<[1], [0], [0], [1], [0, 0, 1, 1], [], []>} : vector<8x128xf32>, vector<128x512xf32>, vector<8x512xf32> -> vector<8x512xf32>
    %288 = arith.addf %283, %287 : vector<8x512xf32>
    %c0_159 = arith.constant 0 : index
    %c0_160 = arith.constant 0 : index
    %c0_161 = arith.constant 0 : index
    %289 = vector.load %arg4[%c0_159, %c0_160, %c0_161] : memref<3x1x512xf32, #tpu.memory_space<vmem>>, vector<1x1x512xf32>
    %290 = vector.shape_cast %289 : vector<1x1x512xf32> to vector<1x512xf32>
    %291 = vector.broadcast %290 : vector<1x512xf32> to vector<8x512xf32>
    %292 = arith.addf %288, %291 : vector<8x512xf32>
    %c0_162 = arith.constant 0 : index
    %c0_163 = arith.constant 0 : index
    %c0_164 = arith.constant 0 : index
    %293 = vector.load %arg11[%c0_162, %c0_163, %c0_164] : memref<3x8x128xf32, #tpu.memory_space<vmem>>, vector<1x8x128xf32>
    %294 = vector.shape_cast %293 : vector<1x8x128xf32> to vector<8x128xf32>
    %295 = vector.extract_strided_slice %292 {offsets = [0, 0], sizes = [8, 128], strides = [1, 1]} : vector<8x512xf32> to vector<8x128xf32>
    %296 = arith.negf %295 : vector<8x128xf32>
    %297 = math.exp %296 : vector<8x128xf32>
    %cst_165 = arith.constant 1.000000e+00 : f32
    %298 = vector.broadcast %cst_165 : f32 to vector<8x128xf32>
    %299 = arith.addf %298, %297 : vector<8x128xf32>
    %300 = arith.divf %298, %299 : vector<8x128xf32>
    %301 = vector.extract_strided_slice %292 {offsets = [0, 128], sizes = [8, 128], strides = [1, 1]} : vector<8x512xf32> to vector<8x128xf32>
    %302 = arith.negf %301 : vector<8x128xf32>
    %303 = math.exp %302 : vector<8x128xf32>
    %cst_166 = arith.constant 1.000000e+00 : f32
    %304 = vector.broadcast %cst_166 : f32 to vector<8x128xf32>
    %305 = arith.addf %304, %303 : vector<8x128xf32>
    %306 = arith.divf %304, %305 : vector<8x128xf32>
    %307 = vector.extract_strided_slice %292 {offsets = [0, 256], sizes = [8, 128], strides = [1, 1]} : vector<8x512xf32> to vector<8x128xf32>
    %308 = math.tanh %307 : vector<8x128xf32>
    %309 = vector.extract_strided_slice %292 {offsets = [0, 384], sizes = [8, 128], strides = [1, 1]} : vector<8x512xf32> to vector<8x128xf32>
    %310 = arith.negf %309 : vector<8x128xf32>
    %311 = math.exp %310 : vector<8x128xf32>
    %cst_167 = arith.constant 1.000000e+00 : f32
    %312 = vector.broadcast %cst_167 : f32 to vector<8x128xf32>
    %313 = arith.addf %312, %311 : vector<8x128xf32>
    %314 = arith.divf %312, %313 : vector<8x128xf32>
    %315 = arith.mulf %306, %294 : vector<8x128xf32>
    %316 = arith.mulf %300, %308 : vector<8x128xf32>
    %317 = arith.addf %315, %316 : vector<8x128xf32>
    %318 = math.tanh %317 : vector<8x128xf32>
    %319 = arith.mulf %314, %318 : vector<8x128xf32>
    %c0_168 = arith.constant 0 : index
    %c0_169 = arith.constant 0 : index
    %c0_170 = arith.constant 0 : index
    %320 = vector.load %arg10[%c0_168, %c0_169, %c0_170] : memref<3x8x128xf32, #tpu.memory_space<vmem>>, vector<1x8x128xf32>
    %321 = vector.shape_cast %320 : vector<1x8x128xf32> to vector<8x128xf32>
    %322 = vector.shape_cast %319 : vector<8x128xf32> to vector<1x8x128xf32>
    tpu.vector_store %arg10[%c0_168, %c0_169, %c0_170], %322 {strides = array<i32>} : memref<3x8x128xf32, #tpu.memory_space<vmem>>, vector<1x8x128xf32>,
    %c0_171 = arith.constant 0 : index
    %c0_172 = arith.constant 0 : index
    %c0_173 = arith.constant 0 : index
    %323 = vector.load %arg11[%c0_171, %c0_172, %c0_173] : memref<3x8x128xf32, #tpu.memory_space<vmem>>, vector<1x8x128xf32>
    %324 = vector.shape_cast %323 : vector<1x8x128xf32> to vector<8x128xf32>
    %325 = vector.shape_cast %317 : vector<8x128xf32> to vector<1x8x128xf32>
    tpu.vector_store %arg11[%c0_171, %c0_172, %c0_173], %325 {strides = array<i32>} : memref<3x8x128xf32, #tpu.memory_space<vmem>>, vector<1x8x128xf32>,
    %c1_174 = arith.constant 1 : index
    %c0_175 = arith.constant 0 : index
    %c0_176 = arith.constant 0 : index
    %326 = vector.load %arg10[%c1_174, %c0_175, %c0_176] : memref<3x8x128xf32, #tpu.memory_space<vmem>>, vector<1x8x128xf32>
    %327 = vector.shape_cast %326 : vector<1x8x128xf32> to vector<8x128xf32>
    %328 = tpu.concatenate %319, %327 in 1 : vector<8x128xf32>, vector<8x128xf32> -> vector<8x256xf32>
    %c0_177 = arith.constant 0 : index
    %c0_178 = arith.constant 0 : index
    %c0_179 = arith.constant 0 : index
    %329 = vector.load %arg3[%c0_177, %c0_178, %c0_179] : memref<2x256x512xf32, #tpu.memory_space<vmem>>, vector<1x256x512xf32>
    %330 = vector.shape_cast %329 : vector<1x256x512xf32> to vector<256x512xf32>
    %cst_180 = arith.constant dense<0.000000e+00> : vector<8x512xf32>
    %331 = tpu.matmul %328, %330, %cst_180 {dimension_numbers = #tpu.dot_dimension_numbers<[1], [0], [0], [1], [0, 0, 1, 1], [], []>} : vector<8x256xf32>, vector<256x512xf32>, vector<8x512xf32> -> vector<8x512xf32>
    %c1_181 = arith.constant 1 : index
    %c0_182 = arith.constant 0 : index
    %c0_183 = arith.constant 0 : index
    %332 = vector.load %arg4[%c1_181, %c0_182, %c0_183] : memref<3x1x512xf32, #tpu.memory_space<vmem>>, vector<1x1x512xf32>
    %333 = vector.shape_cast %332 : vector<1x1x512xf32> to vector<1x512xf32>
    %334 = vector.broadcast %333 : vector<1x512xf32> to vector<8x512xf32>
    %335 = arith.addf %331, %334 : vector<8x512xf32>
    %c1_184 = arith.constant 1 : index
    %c0_185 = arith.constant 0 : index
    %c0_186 = arith.constant 0 : index
    %336 = vector.load %arg11[%c1_184, %c0_185, %c0_186] : memref<3x8x128xf32, #tpu.memory_space<vmem>>, vector<1x8x128xf32>
    %337 = vector.shape_cast %336 : vector<1x8x128xf32> to vector<8x128xf32>
    %338 = vector.extract_strided_slice %335 {offsets = [0, 0], sizes = [8, 128], strides = [1, 1]} : vector<8x512xf32> to vector<8x128xf32>
    %339 = arith.negf %338 : vector<8x128xf32>
    %340 = math.exp %339 : vector<8x128xf32>
    %cst_187 = arith.constant 1.000000e+00 : f32
    %341 = vector.broadcast %cst_187 : f32 to vector<8x128xf32>
    %342 = arith.addf %341, %340 : vector<8x128xf32>
    %343 = arith.divf %341, %342 : vector<8x128xf32>
    %344 = vector.extract_strided_slice %335 {offsets = [0, 128], sizes = [8, 128], strides = [1, 1]} : vector<8x512xf32> to vector<8x128xf32>
    %345 = arith.negf %344 : vector<8x128xf32>
    %346 = math.exp %345 : vector<8x128xf32>
    %cst_188 = arith.constant 1.000000e+00 : f32
    %347 = vector.broadcast %cst_188 : f32 to vector<8x128xf32>
    %348 = arith.addf %347, %346 : vector<8x128xf32>
    %349 = arith.divf %347, %348 : vector<8x128xf32>
    %350 = vector.extract_strided_slice %335 {offsets = [0, 256], sizes = [8, 128], strides = [1, 1]} : vector<8x512xf32> to vector<8x128xf32>
    %351 = math.tanh %350 : vector<8x128xf32>
    %352 = vector.extract_strided_slice %335 {offsets = [0, 384], sizes = [8, 128], strides = [1, 1]} : vector<8x512xf32> to vector<8x128xf32>
    %353 = arith.negf %352 : vector<8x128xf32>
    %354 = math.exp %353 : vector<8x128xf32>
    %cst_189 = arith.constant 1.000000e+00 : f32
    %355 = vector.broadcast %cst_189 : f32 to vector<8x128xf32>
    %356 = arith.addf %355, %354 : vector<8x128xf32>
    %357 = arith.divf %355, %356 : vector<8x128xf32>
    %358 = arith.mulf %349, %337 : vector<8x128xf32>
    %359 = arith.mulf %343, %351 : vector<8x128xf32>
    %360 = arith.addf %358, %359 : vector<8x128xf32>
    %361 = math.tanh %360 : vector<8x128xf32>
    %362 = arith.mulf %357, %361 : vector<8x128xf32>
    %c1_190 = arith.constant 1 : index
    %c0_191 = arith.constant 0 : index
    %c0_192 = arith.constant 0 : index
    %363 = vector.load %arg10[%c1_190, %c0_191, %c0_192] : memref<3x8x128xf32, #tpu.memory_space<vmem>>, vector<1x8x128xf32>
    %364 = vector.shape_cast %363 : vector<1x8x128xf32> to vector<8x128xf32>
    %365 = vector.shape_cast %362 : vector<8x128xf32> to vector<1x8x128xf32>
    tpu.vector_store %arg10[%c1_190, %c0_191, %c0_192], %365 {strides = array<i32>} : memref<3x8x128xf32, #tpu.memory_space<vmem>>, vector<1x8x128xf32>,
    %c1_193 = arith.constant 1 : index
    %c0_194 = arith.constant 0 : index
    %c0_195 = arith.constant 0 : index
    %366 = vector.load %arg11[%c1_193, %c0_194, %c0_195] : memref<3x8x128xf32, #tpu.memory_space<vmem>>, vector<1x8x128xf32>
    %367 = vector.shape_cast %366 : vector<1x8x128xf32> to vector<8x128xf32>
    %368 = vector.shape_cast %360 : vector<8x128xf32> to vector<1x8x128xf32>
    tpu.vector_store %arg11[%c1_193, %c0_194, %c0_195], %368 {strides = array<i32>} : memref<3x8x128xf32, #tpu.memory_space<vmem>>, vector<1x8x128xf32>,
    %c2_196 = arith.constant 2 : index
    %c0_197 = arith.constant 0 : index
    %c0_198 = arith.constant 0 : index
    %369 = vector.load %arg10[%c2_196, %c0_197, %c0_198] : memref<3x8x128xf32, #tpu.memory_space<vmem>>, vector<1x8x128xf32>
    %370 = vector.shape_cast %369 : vector<1x8x128xf32> to vector<8x128xf32>
    %371 = tpu.concatenate %362, %370 in 1 : vector<8x128xf32>, vector<8x128xf32> -> vector<8x256xf32>
    %c1_199 = arith.constant 1 : index
    %c0_200 = arith.constant 0 : index
    %c0_201 = arith.constant 0 : index
    %372 = vector.load %arg3[%c1_199, %c0_200, %c0_201] : memref<2x256x512xf32, #tpu.memory_space<vmem>>, vector<1x256x512xf32>
    %373 = vector.shape_cast %372 : vector<1x256x512xf32> to vector<256x512xf32>
    %cst_202 = arith.constant dense<0.000000e+00> : vector<8x512xf32>
    %374 = tpu.matmul %371, %373, %cst_202 {dimension_numbers = #tpu.dot_dimension_numbers<[1], [0], [0], [1], [0, 0, 1, 1], [], []>} : vector<8x256xf32>, vector<256x512xf32>, vector<8x512xf32> -> vector<8x512xf32>
    %c2_203 = arith.constant 2 : index
    %c0_204 = arith.constant 0 : index
    %c0_205 = arith.constant 0 : index
    %375 = vector.load %arg4[%c2_203, %c0_204, %c0_205] : memref<3x1x512xf32, #tpu.memory_space<vmem>>, vector<1x1x512xf32>
    %376 = vector.shape_cast %375 : vector<1x1x512xf32> to vector<1x512xf32>
    %377 = vector.broadcast %376 : vector<1x512xf32> to vector<8x512xf32>
    %378 = arith.addf %374, %377 : vector<8x512xf32>
    %c2_206 = arith.constant 2 : index
    %c0_207 = arith.constant 0 : index
    %c0_208 = arith.constant 0 : index
    %379 = vector.load %arg11[%c2_206, %c0_207, %c0_208] : memref<3x8x128xf32, #tpu.memory_space<vmem>>, vector<1x8x128xf32>
    %380 = vector.shape_cast %379 : vector<1x8x128xf32> to vector<8x128xf32>
    %381 = vector.extract_strided_slice %378 {offsets = [0, 0], sizes = [8, 128], strides = [1, 1]} : vector<8x512xf32> to vector<8x128xf32>
    %382 = arith.negf %381 : vector<8x128xf32>
    %383 = math.exp %382 : vector<8x128xf32>
    %cst_209 = arith.constant 1.000000e+00 : f32
    %384 = vector.broadcast %cst_209 : f32 to vector<8x128xf32>
    %385 = arith.addf %384, %383 : vector<8x128xf32>
    %386 = arith.divf %384, %385 : vector<8x128xf32>
    %387 = vector.extract_strided_slice %378 {offsets = [0, 128], sizes = [8, 128], strides = [1, 1]} : vector<8x512xf32> to vector<8x128xf32>
    %388 = arith.negf %387 : vector<8x128xf32>
    %389 = math.exp %388 : vector<8x128xf32>
    %cst_210 = arith.constant 1.000000e+00 : f32
    %390 = vector.broadcast %cst_210 : f32 to vector<8x128xf32>
    %391 = arith.addf %390, %389 : vector<8x128xf32>
    %392 = arith.divf %390, %391 : vector<8x128xf32>
    %393 = vector.extract_strided_slice %378 {offsets = [0, 256], sizes = [8, 128], strides = [1, 1]} : vector<8x512xf32> to vector<8x128xf32>
    %394 = math.tanh %393 : vector<8x128xf32>
    %395 = vector.extract_strided_slice %378 {offsets = [0, 384], sizes = [8, 128], strides = [1, 1]} : vector<8x512xf32> to vector<8x128xf32>
    %396 = arith.negf %395 : vector<8x128xf32>
    %397 = math.exp %396 : vector<8x128xf32>
    %cst_211 = arith.constant 1.000000e+00 : f32
    %398 = vector.broadcast %cst_211 : f32 to vector<8x128xf32>
    %399 = arith.addf %398, %397 : vector<8x128xf32>
    %400 = arith.divf %398, %399 : vector<8x128xf32>
    %401 = arith.mulf %392, %380 : vector<8x128xf32>
    %402 = arith.mulf %386, %394 : vector<8x128xf32>
    %403 = arith.addf %401, %402 : vector<8x128xf32>
    %404 = math.tanh %403 : vector<8x128xf32>
    %405 = arith.mulf %400, %404 : vector<8x128xf32>
    %c2_212 = arith.constant 2 : index
    %c0_213 = arith.constant 0 : index
    %c0_214 = arith.constant 0 : index
    %406 = vector.load %arg10[%c2_212, %c0_213, %c0_214] : memref<3x8x128xf32, #tpu.memory_space<vmem>>, vector<1x8x128xf32>
    %407 = vector.shape_cast %406 : vector<1x8x128xf32> to vector<8x128xf32>
    %408 = vector.shape_cast %405 : vector<8x128xf32> to vector<1x8x128xf32>
    tpu.vector_store %arg10[%c2_212, %c0_213, %c0_214], %408 {strides = array<i32>} : memref<3x8x128xf32, #tpu.memory_space<vmem>>, vector<1x8x128xf32>,
    %c2_215 = arith.constant 2 : index
    %c0_216 = arith.constant 0 : index
    %c0_217 = arith.constant 0 : index
    %409 = vector.load %arg11[%c2_215, %c0_216, %c0_217] : memref<3x8x128xf32, #tpu.memory_space<vmem>>, vector<1x8x128xf32>
    %410 = vector.shape_cast %409 : vector<1x8x128xf32> to vector<8x128xf32>
    %411 = vector.shape_cast %403 : vector<8x128xf32> to vector<1x8x128xf32>
    tpu.vector_store %arg11[%c2_215, %c0_216, %c0_217], %411 {strides = array<i32>} : memref<3x8x128xf32, #tpu.memory_space<vmem>>, vector<1x8x128xf32>,
    %412 = arith.index_cast %c2_i32 : i32 to index
    %c0_218 = arith.constant 0 : index
    %c0_219 = arith.constant 0 : index
    %413 = vector.load %arg13[%412, %c0_218, %c0_219] : memref<8x8x128xf32, #tpu.memory_space<vmem>>, vector<1x8x128xf32>
    %414 = vector.shape_cast %413 : vector<1x8x128xf32> to vector<8x128xf32>
    %415 = vector.shape_cast %405 : vector<8x128xf32> to vector<1x8x128xf32>
    tpu.vector_store %arg13[%412, %c0_218, %c0_219], %415 {strides = array<i32>} : memref<8x8x128xf32, #tpu.memory_space<vmem>>, vector<1x8x128xf32>,
    %c3_i32 = arith.constant 3 : i32
    %416 = arith.index_cast %c3_i32 : i32 to index
    %c0_220 = arith.constant 0 : index
    %c0_221 = arith.constant 0 : index
    %417 = vector.load %arg12[%416, %c0_220, %c0_221] : memref<8x8x512xf32, #tpu.memory_space<vmem>>, vector<1x8x512xf32>
    %418 = vector.shape_cast %417 : vector<1x8x512xf32> to vector<8x512xf32>
    %c0_222 = arith.constant 0 : index
    %c0_223 = arith.constant 0 : index
    %c0_224 = arith.constant 0 : index
    %419 = vector.load %arg10[%c0_222, %c0_223, %c0_224] : memref<3x8x128xf32, #tpu.memory_space<vmem>>, vector<1x8x128xf32>
    %420 = vector.shape_cast %419 : vector<1x8x128xf32> to vector<8x128xf32>
    %c0_225 = arith.constant 0 : index
    %c0_226 = arith.constant 0 : index
    %421 = vector.load %arg2[%c0_225, %c0_226] : memref<128x512xf32, #tpu.memory_space<vmem>>, vector<128x512xf32>
    %cst_227 = arith.constant dense<0.000000e+00> : vector<8x512xf32>
    %422 = tpu.matmul %420, %421, %cst_227 {dimension_numbers = #tpu.dot_dimension_numbers<[1], [0], [0], [1], [0, 0, 1, 1], [], []>} : vector<8x128xf32>, vector<128x512xf32>, vector<8x512xf32> -> vector<8x512xf32>
    %423 = arith.addf %418, %422 : vector<8x512xf32>
    %c0_228 = arith.constant 0 : index
    %c0_229 = arith.constant 0 : index
    %c0_230 = arith.constant 0 : index
    %424 = vector.load %arg4[%c0_228, %c0_229, %c0_230] : memref<3x1x512xf32, #tpu.memory_space<vmem>>, vector<1x1x512xf32>
    %425 = vector.shape_cast %424 : vector<1x1x512xf32> to vector<1x512xf32>
    %426 = vector.broadcast %425 : vector<1x512xf32> to vector<8x512xf32>
    %427 = arith.addf %423, %426 : vector<8x512xf32>
    %c0_231 = arith.constant 0 : index
    %c0_232 = arith.constant 0 : index
    %c0_233 = arith.constant 0 : index
    %428 = vector.load %arg11[%c0_231, %c0_232, %c0_233] : memref<3x8x128xf32, #tpu.memory_space<vmem>>, vector<1x8x128xf32>
    %429 = vector.shape_cast %428 : vector<1x8x128xf32> to vector<8x128xf32>
    %430 = vector.extract_strided_slice %427 {offsets = [0, 0], sizes = [8, 128], strides = [1, 1]} : vector<8x512xf32> to vector<8x128xf32>
    %431 = arith.negf %430 : vector<8x128xf32>
    %432 = math.exp %431 : vector<8x128xf32>
    %cst_234 = arith.constant 1.000000e+00 : f32
    %433 = vector.broadcast %cst_234 : f32 to vector<8x128xf32>
    %434 = arith.addf %433, %432 : vector<8x128xf32>
    %435 = arith.divf %433, %434 : vector<8x128xf32>
    %436 = vector.extract_strided_slice %427 {offsets = [0, 128], sizes = [8, 128], strides = [1, 1]} : vector<8x512xf32> to vector<8x128xf32>
    %437 = arith.negf %436 : vector<8x128xf32>
    %438 = math.exp %437 : vector<8x128xf32>
    %cst_235 = arith.constant 1.000000e+00 : f32
    %439 = vector.broadcast %cst_235 : f32 to vector<8x128xf32>
    %440 = arith.addf %439, %438 : vector<8x128xf32>
    %441 = arith.divf %439, %440 : vector<8x128xf32>
    %442 = vector.extract_strided_slice %427 {offsets = [0, 256], sizes = [8, 128], strides = [1, 1]} : vector<8x512xf32> to vector<8x128xf32>
    %443 = math.tanh %442 : vector<8x128xf32>
    %444 = vector.extract_strided_slice %427 {offsets = [0, 384], sizes = [8, 128], strides = [1, 1]} : vector<8x512xf32> to vector<8x128xf32>
    %445 = arith.negf %444 : vector<8x128xf32>
    %446 = math.exp %445 : vector<8x128xf32>
    %cst_236 = arith.constant 1.000000e+00 : f32
    %447 = vector.broadcast %cst_236 : f32 to vector<8x128xf32>
    %448 = arith.addf %447, %446 : vector<8x128xf32>
    %449 = arith.divf %447, %448 : vector<8x128xf32>
    %450 = arith.mulf %441, %429 : vector<8x128xf32>
    %451 = arith.mulf %435, %443 : vector<8x128xf32>
    %452 = arith.addf %450, %451 : vector<8x128xf32>
    %453 = math.tanh %452 : vector<8x128xf32>
    %454 = arith.mulf %449, %453 : vector<8x128xf32>
    %c0_237 = arith.constant 0 : index
    %c0_238 = arith.constant 0 : index
    %c0_239 = arith.constant 0 : index
    %455 = vector.load %arg10[%c0_237, %c0_238, %c0_239] : memref<3x8x128xf32, #tpu.memory_space<vmem>>, vector<1x8x128xf32>
    %456 = vector.shape_cast %455 : vector<1x8x128xf32> to vector<8x128xf32>
    %457 = vector.shape_cast %454 : vector<8x128xf32> to vector<1x8x128xf32>
    tpu.vector_store %arg10[%c0_237, %c0_238, %c0_239], %457 {strides = array<i32>} : memref<3x8x128xf32, #tpu.memory_space<vmem>>, vector<1x8x128xf32>,
    %c0_240 = arith.constant 0 : index
    %c0_241 = arith.constant 0 : index
    %c0_242 = arith.constant 0 : index
    %458 = vector.load %arg11[%c0_240, %c0_241, %c0_242] : memref<3x8x128xf32, #tpu.memory_space<vmem>>, vector<1x8x128xf32>
    %459 = vector.shape_cast %458 : vector<1x8x128xf32> to vector<8x128xf32>
    %460 = vector.shape_cast %452 : vector<8x128xf32> to vector<1x8x128xf32>
    tpu.vector_store %arg11[%c0_240, %c0_241, %c0_242], %460 {strides = array<i32>} : memref<3x8x128xf32, #tpu.memory_space<vmem>>, vector<1x8x128xf32>,
    %c1_243 = arith.constant 1 : index
    %c0_244 = arith.constant 0 : index
    %c0_245 = arith.constant 0 : index
    %461 = vector.load %arg10[%c1_243, %c0_244, %c0_245] : memref<3x8x128xf32, #tpu.memory_space<vmem>>, vector<1x8x128xf32>
    %462 = vector.shape_cast %461 : vector<1x8x128xf32> to vector<8x128xf32>
    %463 = tpu.concatenate %454, %462 in 1 : vector<8x128xf32>, vector<8x128xf32> -> vector<8x256xf32>
    %c0_246 = arith.constant 0 : index
    %c0_247 = arith.constant 0 : index
    %c0_248 = arith.constant 0 : index
    %464 = vector.load %arg3[%c0_246, %c0_247, %c0_248] : memref<2x256x512xf32, #tpu.memory_space<vmem>>, vector<1x256x512xf32>
    %465 = vector.shape_cast %464 : vector<1x256x512xf32> to vector<256x512xf32>
    %cst_249 = arith.constant dense<0.000000e+00> : vector<8x512xf32>
    %466 = tpu.matmul %463, %465, %cst_249 {dimension_numbers = #tpu.dot_dimension_numbers<[1], [0], [0], [1], [0, 0, 1, 1], [], []>} : vector<8x256xf32>, vector<256x512xf32>, vector<8x512xf32> -> vector<8x512xf32>
    %c1_250 = arith.constant 1 : index
    %c0_251 = arith.constant 0 : index
    %c0_252 = arith.constant 0 : index
    %467 = vector.load %arg4[%c1_250, %c0_251, %c0_252] : memref<3x1x512xf32, #tpu.memory_space<vmem>>, vector<1x1x512xf32>
    %468 = vector.shape_cast %467 : vector<1x1x512xf32> to vector<1x512xf32>
    %469 = vector.broadcast %468 : vector<1x512xf32> to vector<8x512xf32>
    %470 = arith.addf %466, %469 : vector<8x512xf32>
    %c1_253 = arith.constant 1 : index
    %c0_254 = arith.constant 0 : index
    %c0_255 = arith.constant 0 : index
    %471 = vector.load %arg11[%c1_253, %c0_254, %c0_255] : memref<3x8x128xf32, #tpu.memory_space<vmem>>, vector<1x8x128xf32>
    %472 = vector.shape_cast %471 : vector<1x8x128xf32> to vector<8x128xf32>
    %473 = vector.extract_strided_slice %470 {offsets = [0, 0], sizes = [8, 128], strides = [1, 1]} : vector<8x512xf32> to vector<8x128xf32>
    %474 = arith.negf %473 : vector<8x128xf32>
    %475 = math.exp %474 : vector<8x128xf32>
    %cst_256 = arith.constant 1.000000e+00 : f32
    %476 = vector.broadcast %cst_256 : f32 to vector<8x128xf32>
    %477 = arith.addf %476, %475 : vector<8x128xf32>
    %478 = arith.divf %476, %477 : vector<8x128xf32>
    %479 = vector.extract_strided_slice %470 {offsets = [0, 128], sizes = [8, 128], strides = [1, 1]} : vector<8x512xf32> to vector<8x128xf32>
    %480 = arith.negf %479 : vector<8x128xf32>
    %481 = math.exp %480 : vector<8x128xf32>
    %cst_257 = arith.constant 1.000000e+00 : f32
    %482 = vector.broadcast %cst_257 : f32 to vector<8x128xf32>
    %483 = arith.addf %482, %481 : vector<8x128xf32>
    %484 = arith.divf %482, %483 : vector<8x128xf32>
    %485 = vector.extract_strided_slice %470 {offsets = [0, 256], sizes = [8, 128], strides = [1, 1]} : vector<8x512xf32> to vector<8x128xf32>
    %486 = math.tanh %485 : vector<8x128xf32>
    %487 = vector.extract_strided_slice %470 {offsets = [0, 384], sizes = [8, 128], strides = [1, 1]} : vector<8x512xf32> to vector<8x128xf32>
    %488 = arith.negf %487 : vector<8x128xf32>
    %489 = math.exp %488 : vector<8x128xf32>
    %cst_258 = arith.constant 1.000000e+00 : f32
    %490 = vector.broadcast %cst_258 : f32 to vector<8x128xf32>
    %491 = arith.addf %490, %489 : vector<8x128xf32>
    %492 = arith.divf %490, %491 : vector<8x128xf32>
    %493 = arith.mulf %484, %472 : vector<8x128xf32>
    %494 = arith.mulf %478, %486 : vector<8x128xf32>
    %495 = arith.addf %493, %494 : vector<8x128xf32>
    %496 = math.tanh %495 : vector<8x128xf32>
    %497 = arith.mulf %492, %496 : vector<8x128xf32>
    %c1_259 = arith.constant 1 : index
    %c0_260 = arith.constant 0 : index
    %c0_261 = arith.constant 0 : index
    %498 = vector.load %arg10[%c1_259, %c0_260, %c0_261] : memref<3x8x128xf32, #tpu.memory_space<vmem>>, vector<1x8x128xf32>
    %499 = vector.shape_cast %498 : vector<1x8x128xf32> to vector<8x128xf32>
    %500 = vector.shape_cast %497 : vector<8x128xf32> to vector<1x8x128xf32>
    tpu.vector_store %arg10[%c1_259, %c0_260, %c0_261], %500 {strides = array<i32>} : memref<3x8x128xf32, #tpu.memory_space<vmem>>, vector<1x8x128xf32>,
    %c1_262 = arith.constant 1 : index
    %c0_263 = arith.constant 0 : index
    %c0_264 = arith.constant 0 : index
    %501 = vector.load %arg11[%c1_262, %c0_263, %c0_264] : memref<3x8x128xf32, #tpu.memory_space<vmem>>, vector<1x8x128xf32>
    %502 = vector.shape_cast %501 : vector<1x8x128xf32> to vector<8x128xf32>
    %503 = vector.shape_cast %495 : vector<8x128xf32> to vector<1x8x128xf32>
    tpu.vector_store %arg11[%c1_262, %c0_263, %c0_264], %503 {strides = array<i32>} : memref<3x8x128xf32, #tpu.memory_space<vmem>>, vector<1x8x128xf32>,
    %c2_265 = arith.constant 2 : index
    %c0_266 = arith.constant 0 : index
    %c0_267 = arith.constant 0 : index
    %504 = vector.load %arg10[%c2_265, %c0_266, %c0_267] : memref<3x8x128xf32, #tpu.memory_space<vmem>>, vector<1x8x128xf32>
    %505 = vector.shape_cast %504 : vector<1x8x128xf32> to vector<8x128xf32>
    %506 = tpu.concatenate %497, %505 in 1 : vector<8x128xf32>, vector<8x128xf32> -> vector<8x256xf32>
    %c1_268 = arith.constant 1 : index
    %c0_269 = arith.constant 0 : index
    %c0_270 = arith.constant 0 : index
    %507 = vector.load %arg3[%c1_268, %c0_269, %c0_270] : memref<2x256x512xf32, #tpu.memory_space<vmem>>, vector<1x256x512xf32>
    %508 = vector.shape_cast %507 : vector<1x256x512xf32> to vector<256x512xf32>
    %cst_271 = arith.constant dense<0.000000e+00> : vector<8x512xf32>
    %509 = tpu.matmul %506, %508, %cst_271 {dimension_numbers = #tpu.dot_dimension_numbers<[1], [0], [0], [1], [0, 0, 1, 1], [], []>} : vector<8x256xf32>, vector<256x512xf32>, vector<8x512xf32> -> vector<8x512xf32>
    %c2_272 = arith.constant 2 : index
    %c0_273 = arith.constant 0 : index
    %c0_274 = arith.constant 0 : index
    %510 = vector.load %arg4[%c2_272, %c0_273, %c0_274] : memref<3x1x512xf32, #tpu.memory_space<vmem>>, vector<1x1x512xf32>
    %511 = vector.shape_cast %510 : vector<1x1x512xf32> to vector<1x512xf32>
    %512 = vector.broadcast %511 : vector<1x512xf32> to vector<8x512xf32>
    %513 = arith.addf %509, %512 : vector<8x512xf32>
    %c2_275 = arith.constant 2 : index
    %c0_276 = arith.constant 0 : index
    %c0_277 = arith.constant 0 : index
    %514 = vector.load %arg11[%c2_275, %c0_276, %c0_277] : memref<3x8x128xf32, #tpu.memory_space<vmem>>, vector<1x8x128xf32>
    %515 = vector.shape_cast %514 : vector<1x8x128xf32> to vector<8x128xf32>
    %516 = vector.extract_strided_slice %513 {offsets = [0, 0], sizes = [8, 128], strides = [1, 1]} : vector<8x512xf32> to vector<8x128xf32>
    %517 = arith.negf %516 : vector<8x128xf32>
    %518 = math.exp %517 : vector<8x128xf32>
    %cst_278 = arith.constant 1.000000e+00 : f32
    %519 = vector.broadcast %cst_278 : f32 to vector<8x128xf32>
    %520 = arith.addf %519, %518 : vector<8x128xf32>
    %521 = arith.divf %519, %520 : vector<8x128xf32>
    %522 = vector.extract_strided_slice %513 {offsets = [0, 128], sizes = [8, 128], strides = [1, 1]} : vector<8x512xf32> to vector<8x128xf32>
    %523 = arith.negf %522 : vector<8x128xf32>
    %524 = math.exp %523 : vector<8x128xf32>
    %cst_279 = arith.constant 1.000000e+00 : f32
    %525 = vector.broadcast %cst_279 : f32 to vector<8x128xf32>
    %526 = arith.addf %525, %524 : vector<8x128xf32>
    %527 = arith.divf %525, %526 : vector<8x128xf32>
    %528 = vector.extract_strided_slice %513 {offsets = [0, 256], sizes = [8, 128], strides = [1, 1]} : vector<8x512xf32> to vector<8x128xf32>
    %529 = math.tanh %528 : vector<8x128xf32>
    %530 = vector.extract_strided_slice %513 {offsets = [0, 384], sizes = [8, 128], strides = [1, 1]} : vector<8x512xf32> to vector<8x128xf32>
    %531 = arith.negf %530 : vector<8x128xf32>
    %532 = math.exp %531 : vector<8x128xf32>
    %cst_280 = arith.constant 1.000000e+00 : f32
    %533 = vector.broadcast %cst_280 : f32 to vector<8x128xf32>
    %534 = arith.addf %533, %532 : vector<8x128xf32>
    %535 = arith.divf %533, %534 : vector<8x128xf32>
    %536 = arith.mulf %527, %515 : vector<8x128xf32>
    %537 = arith.mulf %521, %529 : vector<8x128xf32>
    %538 = arith.addf %536, %537 : vector<8x128xf32>
    %539 = math.tanh %538 : vector<8x128xf32>
    %540 = arith.mulf %535, %539 : vector<8x128xf32>
    %c2_281 = arith.constant 2 : index
    %c0_282 = arith.constant 0 : index
    %c0_283 = arith.constant 0 : index
    %541 = vector.load %arg10[%c2_281, %c0_282, %c0_283] : memref<3x8x128xf32, #tpu.memory_space<vmem>>, vector<1x8x128xf32>
    %542 = vector.shape_cast %541 : vector<1x8x128xf32> to vector<8x128xf32>
    %543 = vector.shape_cast %540 : vector<8x128xf32> to vector<1x8x128xf32>
    tpu.vector_store %arg10[%c2_281, %c0_282, %c0_283], %543 {strides = array<i32>} : memref<3x8x128xf32, #tpu.memory_space<vmem>>, vector<1x8x128xf32>,
    %c2_284 = arith.constant 2 : index
    %c0_285 = arith.constant 0 : index
    %c0_286 = arith.constant 0 : index
    %544 = vector.load %arg11[%c2_284, %c0_285, %c0_286] : memref<3x8x128xf32, #tpu.memory_space<vmem>>, vector<1x8x128xf32>
    %545 = vector.shape_cast %544 : vector<1x8x128xf32> to vector<8x128xf32>
    %546 = vector.shape_cast %538 : vector<8x128xf32> to vector<1x8x128xf32>
    tpu.vector_store %arg11[%c2_284, %c0_285, %c0_286], %546 {strides = array<i32>} : memref<3x8x128xf32, #tpu.memory_space<vmem>>, vector<1x8x128xf32>,
    %547 = arith.index_cast %c3_i32 : i32 to index
    %c0_287 = arith.constant 0 : index
    %c0_288 = arith.constant 0 : index
    %548 = vector.load %arg13[%547, %c0_287, %c0_288] : memref<8x8x128xf32, #tpu.memory_space<vmem>>, vector<1x8x128xf32>
    %549 = vector.shape_cast %548 : vector<1x8x128xf32> to vector<8x128xf32>
    %550 = vector.shape_cast %540 : vector<8x128xf32> to vector<1x8x128xf32>
    tpu.vector_store %arg13[%547, %c0_287, %c0_288], %550 {strides = array<i32>} : memref<8x8x128xf32, #tpu.memory_space<vmem>>, vector<1x8x128xf32>,
    %c4_i32 = arith.constant 4 : i32
    %551 = arith.index_cast %c4_i32 : i32 to index
    %c0_289 = arith.constant 0 : index
    %c0_290 = arith.constant 0 : index
    %552 = vector.load %arg12[%551, %c0_289, %c0_290] : memref<8x8x512xf32, #tpu.memory_space<vmem>>, vector<1x8x512xf32>
    %553 = vector.shape_cast %552 : vector<1x8x512xf32> to vector<8x512xf32>
    %c0_291 = arith.constant 0 : index
    %c0_292 = arith.constant 0 : index
    %c0_293 = arith.constant 0 : index
    %554 = vector.load %arg10[%c0_291, %c0_292, %c0_293] : memref<3x8x128xf32, #tpu.memory_space<vmem>>, vector<1x8x128xf32>
    %555 = vector.shape_cast %554 : vector<1x8x128xf32> to vector<8x128xf32>
    %c0_294 = arith.constant 0 : index
    %c0_295 = arith.constant 0 : index
    %556 = vector.load %arg2[%c0_294, %c0_295] : memref<128x512xf32, #tpu.memory_space<vmem>>, vector<128x512xf32>
    %cst_296 = arith.constant dense<0.000000e+00> : vector<8x512xf32>
    %557 = tpu.matmul %555, %556, %cst_296 {dimension_numbers = #tpu.dot_dimension_numbers<[1], [0], [0], [1], [0, 0, 1, 1], [], []>} : vector<8x128xf32>, vector<128x512xf32>, vector<8x512xf32> -> vector<8x512xf32>
    %558 = arith.addf %553, %557 : vector<8x512xf32>
    %c0_297 = arith.constant 0 : index
    %c0_298 = arith.constant 0 : index
    %c0_299 = arith.constant 0 : index
    %559 = vector.load %arg4[%c0_297, %c0_298, %c0_299] : memref<3x1x512xf32, #tpu.memory_space<vmem>>, vector<1x1x512xf32>
    %560 = vector.shape_cast %559 : vector<1x1x512xf32> to vector<1x512xf32>
    %561 = vector.broadcast %560 : vector<1x512xf32> to vector<8x512xf32>
    %562 = arith.addf %558, %561 : vector<8x512xf32>
    %c0_300 = arith.constant 0 : index
    %c0_301 = arith.constant 0 : index
    %c0_302 = arith.constant 0 : index
    %563 = vector.load %arg11[%c0_300, %c0_301, %c0_302] : memref<3x8x128xf32, #tpu.memory_space<vmem>>, vector<1x8x128xf32>
    %564 = vector.shape_cast %563 : vector<1x8x128xf32> to vector<8x128xf32>
    %565 = vector.extract_strided_slice %562 {offsets = [0, 0], sizes = [8, 128], strides = [1, 1]} : vector<8x512xf32> to vector<8x128xf32>
    %566 = arith.negf %565 : vector<8x128xf32>
    %567 = math.exp %566 : vector<8x128xf32>
    %cst_303 = arith.constant 1.000000e+00 : f32
    %568 = vector.broadcast %cst_303 : f32 to vector<8x128xf32>
    %569 = arith.addf %568, %567 : vector<8x128xf32>
    %570 = arith.divf %568, %569 : vector<8x128xf32>
    %571 = vector.extract_strided_slice %562 {offsets = [0, 128], sizes = [8, 128], strides = [1, 1]} : vector<8x512xf32> to vector<8x128xf32>
    %572 = arith.negf %571 : vector<8x128xf32>
    %573 = math.exp %572 : vector<8x128xf32>
    %cst_304 = arith.constant 1.000000e+00 : f32
    %574 = vector.broadcast %cst_304 : f32 to vector<8x128xf32>
    %575 = arith.addf %574, %573 : vector<8x128xf32>
    %576 = arith.divf %574, %575 : vector<8x128xf32>
    %577 = vector.extract_strided_slice %562 {offsets = [0, 256], sizes = [8, 128], strides = [1, 1]} : vector<8x512xf32> to vector<8x128xf32>
    %578 = math.tanh %577 : vector<8x128xf32>
    %579 = vector.extract_strided_slice %562 {offsets = [0, 384], sizes = [8, 128], strides = [1, 1]} : vector<8x512xf32> to vector<8x128xf32>
    %580 = arith.negf %579 : vector<8x128xf32>
    %581 = math.exp %580 : vector<8x128xf32>
    %cst_305 = arith.constant 1.000000e+00 : f32
    %582 = vector.broadcast %cst_305 : f32 to vector<8x128xf32>
    %583 = arith.addf %582, %581 : vector<8x128xf32>
    %584 = arith.divf %582, %583 : vector<8x128xf32>
    %585 = arith.mulf %576, %564 : vector<8x128xf32>
    %586 = arith.mulf %570, %578 : vector<8x128xf32>
    %587 = arith.addf %585, %586 : vector<8x128xf32>
    %588 = math.tanh %587 : vector<8x128xf32>
    %589 = arith.mulf %584, %588 : vector<8x128xf32>
    %c0_306 = arith.constant 0 : index
    %c0_307 = arith.constant 0 : index
    %c0_308 = arith.constant 0 : index
    %590 = vector.load %arg10[%c0_306, %c0_307, %c0_308] : memref<3x8x128xf32, #tpu.memory_space<vmem>>, vector<1x8x128xf32>
    %591 = vector.shape_cast %590 : vector<1x8x128xf32> to vector<8x128xf32>
    %592 = vector.shape_cast %589 : vector<8x128xf32> to vector<1x8x128xf32>
    tpu.vector_store %arg10[%c0_306, %c0_307, %c0_308], %592 {strides = array<i32>} : memref<3x8x128xf32, #tpu.memory_space<vmem>>, vector<1x8x128xf32>,
    %c0_309 = arith.constant 0 : index
    %c0_310 = arith.constant 0 : index
    %c0_311 = arith.constant 0 : index
    %593 = vector.load %arg11[%c0_309, %c0_310, %c0_311] : memref<3x8x128xf32, #tpu.memory_space<vmem>>, vector<1x8x128xf32>
    %594 = vector.shape_cast %593 : vector<1x8x128xf32> to vector<8x128xf32>
    %595 = vector.shape_cast %587 : vector<8x128xf32> to vector<1x8x128xf32>
    tpu.vector_store %arg11[%c0_309, %c0_310, %c0_311], %595 {strides = array<i32>} : memref<3x8x128xf32, #tpu.memory_space<vmem>>, vector<1x8x128xf32>,
    %c1_312 = arith.constant 1 : index
    %c0_313 = arith.constant 0 : index
    %c0_314 = arith.constant 0 : index
    %596 = vector.load %arg10[%c1_312, %c0_313, %c0_314] : memref<3x8x128xf32, #tpu.memory_space<vmem>>, vector<1x8x128xf32>
    %597 = vector.shape_cast %596 : vector<1x8x128xf32> to vector<8x128xf32>
    %598 = tpu.concatenate %589, %597 in 1 : vector<8x128xf32>, vector<8x128xf32> -> vector<8x256xf32>
    %c0_315 = arith.constant 0 : index
    %c0_316 = arith.constant 0 : index
    %c0_317 = arith.constant 0 : index
    %599 = vector.load %arg3[%c0_315, %c0_316, %c0_317] : memref<2x256x512xf32, #tpu.memory_space<vmem>>, vector<1x256x512xf32>
    %600 = vector.shape_cast %599 : vector<1x256x512xf32> to vector<256x512xf32>
    %cst_318 = arith.constant dense<0.000000e+00> : vector<8x512xf32>
    %601 = tpu.matmul %598, %600, %cst_318 {dimension_numbers = #tpu.dot_dimension_numbers<[1], [0], [0], [1], [0, 0, 1, 1], [], []>} : vector<8x256xf32>, vector<256x512xf32>, vector<8x512xf32> -> vector<8x512xf32>
    %c1_319 = arith.constant 1 : index
    %c0_320 = arith.constant 0 : index
    %c0_321 = arith.constant 0 : index
    %602 = vector.load %arg4[%c1_319, %c0_320, %c0_321] : memref<3x1x512xf32, #tpu.memory_space<vmem>>, vector<1x1x512xf32>
    %603 = vector.shape_cast %602 : vector<1x1x512xf32> to vector<1x512xf32>
    %604 = vector.broadcast %603 : vector<1x512xf32> to vector<8x512xf32>
    %605 = arith.addf %601, %604 : vector<8x512xf32>
    %c1_322 = arith.constant 1 : index
    %c0_323 = arith.constant 0 : index
    %c0_324 = arith.constant 0 : index
    %606 = vector.load %arg11[%c1_322, %c0_323, %c0_324] : memref<3x8x128xf32, #tpu.memory_space<vmem>>, vector<1x8x128xf32>
    %607 = vector.shape_cast %606 : vector<1x8x128xf32> to vector<8x128xf32>
    %608 = vector.extract_strided_slice %605 {offsets = [0, 0], sizes = [8, 128], strides = [1, 1]} : vector<8x512xf32> to vector<8x128xf32>
    %609 = arith.negf %608 : vector<8x128xf32>
    %610 = math.exp %609 : vector<8x128xf32>
    %cst_325 = arith.constant 1.000000e+00 : f32
    %611 = vector.broadcast %cst_325 : f32 to vector<8x128xf32>
    %612 = arith.addf %611, %610 : vector<8x128xf32>
    %613 = arith.divf %611, %612 : vector<8x128xf32>
    %614 = vector.extract_strided_slice %605 {offsets = [0, 128], sizes = [8, 128], strides = [1, 1]} : vector<8x512xf32> to vector<8x128xf32>
    %615 = arith.negf %614 : vector<8x128xf32>
    %616 = math.exp %615 : vector<8x128xf32>
    %cst_326 = arith.constant 1.000000e+00 : f32
    %617 = vector.broadcast %cst_326 : f32 to vector<8x128xf32>
    %618 = arith.addf %617, %616 : vector<8x128xf32>
    %619 = arith.divf %617, %618 : vector<8x128xf32>
    %620 = vector.extract_strided_slice %605 {offsets = [0, 256], sizes = [8, 128], strides = [1, 1]} : vector<8x512xf32> to vector<8x128xf32>
    %621 = math.tanh %620 : vector<8x128xf32>
    %622 = vector.extract_strided_slice %605 {offsets = [0, 384], sizes = [8, 128], strides = [1, 1]} : vector<8x512xf32> to vector<8x128xf32>
    %623 = arith.negf %622 : vector<8x128xf32>
    %624 = math.exp %623 : vector<8x128xf32>
    %cst_327 = arith.constant 1.000000e+00 : f32
    %625 = vector.broadcast %cst_327 : f32 to vector<8x128xf32>
    %626 = arith.addf %625, %624 : vector<8x128xf32>
    %627 = arith.divf %625, %626 : vector<8x128xf32>
    %628 = arith.mulf %619, %607 : vector<8x128xf32>
    %629 = arith.mulf %613, %621 : vector<8x128xf32>
    %630 = arith.addf %628, %629 : vector<8x128xf32>
    %631 = math.tanh %630 : vector<8x128xf32>
    %632 = arith.mulf %627, %631 : vector<8x128xf32>
    %c1_328 = arith.constant 1 : index
    %c0_329 = arith.constant 0 : index
    %c0_330 = arith.constant 0 : index
    %633 = vector.load %arg10[%c1_328, %c0_329, %c0_330] : memref<3x8x128xf32, #tpu.memory_space<vmem>>, vector<1x8x128xf32>
    %634 = vector.shape_cast %633 : vector<1x8x128xf32> to vector<8x128xf32>
    %635 = vector.shape_cast %632 : vector<8x128xf32> to vector<1x8x128xf32>
    tpu.vector_store %arg10[%c1_328, %c0_329, %c0_330], %635 {strides = array<i32>} : memref<3x8x128xf32, #tpu.memory_space<vmem>>, vector<1x8x128xf32>,
    %c1_331 = arith.constant 1 : index
    %c0_332 = arith.constant 0 : index
    %c0_333 = arith.constant 0 : index
    %636 = vector.load %arg11[%c1_331, %c0_332, %c0_333] : memref<3x8x128xf32, #tpu.memory_space<vmem>>, vector<1x8x128xf32>
    %637 = vector.shape_cast %636 : vector<1x8x128xf32> to vector<8x128xf32>
    %638 = vector.shape_cast %630 : vector<8x128xf32> to vector<1x8x128xf32>
    tpu.vector_store %arg11[%c1_331, %c0_332, %c0_333], %638 {strides = array<i32>} : memref<3x8x128xf32, #tpu.memory_space<vmem>>, vector<1x8x128xf32>,
    %c2_334 = arith.constant 2 : index
    %c0_335 = arith.constant 0 : index
    %c0_336 = arith.constant 0 : index
    %639 = vector.load %arg10[%c2_334, %c0_335, %c0_336] : memref<3x8x128xf32, #tpu.memory_space<vmem>>, vector<1x8x128xf32>
    %640 = vector.shape_cast %639 : vector<1x8x128xf32> to vector<8x128xf32>
    %641 = tpu.concatenate %632, %640 in 1 : vector<8x128xf32>, vector<8x128xf32> -> vector<8x256xf32>
    %c1_337 = arith.constant 1 : index
    %c0_338 = arith.constant 0 : index
    %c0_339 = arith.constant 0 : index
    %642 = vector.load %arg3[%c1_337, %c0_338, %c0_339] : memref<2x256x512xf32, #tpu.memory_space<vmem>>, vector<1x256x512xf32>
    %643 = vector.shape_cast %642 : vector<1x256x512xf32> to vector<256x512xf32>
    %cst_340 = arith.constant dense<0.000000e+00> : vector<8x512xf32>
    %644 = tpu.matmul %641, %643, %cst_340 {dimension_numbers = #tpu.dot_dimension_numbers<[1], [0], [0], [1], [0, 0, 1, 1], [], []>} : vector<8x256xf32>, vector<256x512xf32>, vector<8x512xf32> -> vector<8x512xf32>
    %c2_341 = arith.constant 2 : index
    %c0_342 = arith.constant 0 : index
    %c0_343 = arith.constant 0 : index
    %645 = vector.load %arg4[%c2_341, %c0_342, %c0_343] : memref<3x1x512xf32, #tpu.memory_space<vmem>>, vector<1x1x512xf32>
    %646 = vector.shape_cast %645 : vector<1x1x512xf32> to vector<1x512xf32>
    %647 = vector.broadcast %646 : vector<1x512xf32> to vector<8x512xf32>
    %648 = arith.addf %644, %647 : vector<8x512xf32>
    %c2_344 = arith.constant 2 : index
    %c0_345 = arith.constant 0 : index
    %c0_346 = arith.constant 0 : index
    %649 = vector.load %arg11[%c2_344, %c0_345, %c0_346] : memref<3x8x128xf32, #tpu.memory_space<vmem>>, vector<1x8x128xf32>
    %650 = vector.shape_cast %649 : vector<1x8x128xf32> to vector<8x128xf32>
    %651 = vector.extract_strided_slice %648 {offsets = [0, 0], sizes = [8, 128], strides = [1, 1]} : vector<8x512xf32> to vector<8x128xf32>
    %652 = arith.negf %651 : vector<8x128xf32>
    %653 = math.exp %652 : vector<8x128xf32>
    %cst_347 = arith.constant 1.000000e+00 : f32
    %654 = vector.broadcast %cst_347 : f32 to vector<8x128xf32>
    %655 = arith.addf %654, %653 : vector<8x128xf32>
    %656 = arith.divf %654, %655 : vector<8x128xf32>
    %657 = vector.extract_strided_slice %648 {offsets = [0, 128], sizes = [8, 128], strides = [1, 1]} : vector<8x512xf32> to vector<8x128xf32>
    %658 = arith.negf %657 : vector<8x128xf32>
    %659 = math.exp %658 : vector<8x128xf32>
    %cst_348 = arith.constant 1.000000e+00 : f32
    %660 = vector.broadcast %cst_348 : f32 to vector<8x128xf32>
    %661 = arith.addf %660, %659 : vector<8x128xf32>
    %662 = arith.divf %660, %661 : vector<8x128xf32>
    %663 = vector.extract_strided_slice %648 {offsets = [0, 256], sizes = [8, 128], strides = [1, 1]} : vector<8x512xf32> to vector<8x128xf32>
    %664 = math.tanh %663 : vector<8x128xf32>
    %665 = vector.extract_strided_slice %648 {offsets = [0, 384], sizes = [8, 128], strides = [1, 1]} : vector<8x512xf32> to vector<8x128xf32>
    %666 = arith.negf %665 : vector<8x128xf32>
    %667 = math.exp %666 : vector<8x128xf32>
    %cst_349 = arith.constant 1.000000e+00 : f32
    %668 = vector.broadcast %cst_349 : f32 to vector<8x128xf32>
    %669 = arith.addf %668, %667 : vector<8x128xf32>
    %670 = arith.divf %668, %669 : vector<8x128xf32>
    %671 = arith.mulf %662, %650 : vector<8x128xf32>
    %672 = arith.mulf %656, %664 : vector<8x128xf32>
    %673 = arith.addf %671, %672 : vector<8x128xf32>
    %674 = math.tanh %673 : vector<8x128xf32>
    %675 = arith.mulf %670, %674 : vector<8x128xf32>
    %c2_350 = arith.constant 2 : index
    %c0_351 = arith.constant 0 : index
    %c0_352 = arith.constant 0 : index
    %676 = vector.load %arg10[%c2_350, %c0_351, %c0_352] : memref<3x8x128xf32, #tpu.memory_space<vmem>>, vector<1x8x128xf32>
    %677 = vector.shape_cast %676 : vector<1x8x128xf32> to vector<8x128xf32>
    %678 = vector.shape_cast %675 : vector<8x128xf32> to vector<1x8x128xf32>
    tpu.vector_store %arg10[%c2_350, %c0_351, %c0_352], %678 {strides = array<i32>} : memref<3x8x128xf32, #tpu.memory_space<vmem>>, vector<1x8x128xf32>,
    %c2_353 = arith.constant 2 : index
    %c0_354 = arith.constant 0 : index
    %c0_355 = arith.constant 0 : index
    %679 = vector.load %arg11[%c2_353, %c0_354, %c0_355] : memref<3x8x128xf32, #tpu.memory_space<vmem>>, vector<1x8x128xf32>
    %680 = vector.shape_cast %679 : vector<1x8x128xf32> to vector<8x128xf32>
    %681 = vector.shape_cast %673 : vector<8x128xf32> to vector<1x8x128xf32>
    tpu.vector_store %arg11[%c2_353, %c0_354, %c0_355], %681 {strides = array<i32>} : memref<3x8x128xf32, #tpu.memory_space<vmem>>, vector<1x8x128xf32>,
    %682 = arith.index_cast %c4_i32 : i32 to index
    %c0_356 = arith.constant 0 : index
    %c0_357 = arith.constant 0 : index
    %683 = vector.load %arg13[%682, %c0_356, %c0_357] : memref<8x8x128xf32, #tpu.memory_space<vmem>>, vector<1x8x128xf32>
    %684 = vector.shape_cast %683 : vector<1x8x128xf32> to vector<8x128xf32>
    %685 = vector.shape_cast %675 : vector<8x128xf32> to vector<1x8x128xf32>
    tpu.vector_store %arg13[%682, %c0_356, %c0_357], %685 {strides = array<i32>} : memref<8x8x128xf32, #tpu.memory_space<vmem>>, vector<1x8x128xf32>,
    %c5_i32 = arith.constant 5 : i32
    %686 = arith.index_cast %c5_i32 : i32 to index
    %c0_358 = arith.constant 0 : index
    %c0_359 = arith.constant 0 : index
    %687 = vector.load %arg12[%686, %c0_358, %c0_359] : memref<8x8x512xf32, #tpu.memory_space<vmem>>, vector<1x8x512xf32>
    %688 = vector.shape_cast %687 : vector<1x8x512xf32> to vector<8x512xf32>
    %c0_360 = arith.constant 0 : index
    %c0_361 = arith.constant 0 : index
    %c0_362 = arith.constant 0 : index
    %689 = vector.load %arg10[%c0_360, %c0_361, %c0_362] : memref<3x8x128xf32, #tpu.memory_space<vmem>>, vector<1x8x128xf32>
    %690 = vector.shape_cast %689 : vector<1x8x128xf32> to vector<8x128xf32>
    %c0_363 = arith.constant 0 : index
    %c0_364 = arith.constant 0 : index
    %691 = vector.load %arg2[%c0_363, %c0_364] : memref<128x512xf32, #tpu.memory_space<vmem>>, vector<128x512xf32>
    %cst_365 = arith.constant dense<0.000000e+00> : vector<8x512xf32>
    %692 = tpu.matmul %690, %691, %cst_365 {dimension_numbers = #tpu.dot_dimension_numbers<[1], [0], [0], [1], [0, 0, 1, 1], [], []>} : vector<8x128xf32>, vector<128x512xf32>, vector<8x512xf32> -> vector<8x512xf32>
    %693 = arith.addf %688, %692 : vector<8x512xf32>
    %c0_366 = arith.constant 0 : index
    %c0_367 = arith.constant 0 : index
    %c0_368 = arith.constant 0 : index
    %694 = vector.load %arg4[%c0_366, %c0_367, %c0_368] : memref<3x1x512xf32, #tpu.memory_space<vmem>>, vector<1x1x512xf32>
    %695 = vector.shape_cast %694 : vector<1x1x512xf32> to vector<1x512xf32>
    %696 = vector.broadcast %695 : vector<1x512xf32> to vector<8x512xf32>
    %697 = arith.addf %693, %696 : vector<8x512xf32>
    %c0_369 = arith.constant 0 : index
    %c0_370 = arith.constant 0 : index
    %c0_371 = arith.constant 0 : index
    %698 = vector.load %arg11[%c0_369, %c0_370, %c0_371] : memref<3x8x128xf32, #tpu.memory_space<vmem>>, vector<1x8x128xf32>
    %699 = vector.shape_cast %698 : vector<1x8x128xf32> to vector<8x128xf32>
    %700 = vector.extract_strided_slice %697 {offsets = [0, 0], sizes = [8, 128], strides = [1, 1]} : vector<8x512xf32> to vector<8x128xf32>
    %701 = arith.negf %700 : vector<8x128xf32>
    %702 = math.exp %701 : vector<8x128xf32>
    %cst_372 = arith.constant 1.000000e+00 : f32
    %703 = vector.broadcast %cst_372 : f32 to vector<8x128xf32>
    %704 = arith.addf %703, %702 : vector<8x128xf32>
    %705 = arith.divf %703, %704 : vector<8x128xf32>
    %706 = vector.extract_strided_slice %697 {offsets = [0, 128], sizes = [8, 128], strides = [1, 1]} : vector<8x512xf32> to vector<8x128xf32>
    %707 = arith.negf %706 : vector<8x128xf32>
    %708 = math.exp %707 : vector<8x128xf32>
    %cst_373 = arith.constant 1.000000e+00 : f32
    %709 = vector.broadcast %cst_373 : f32 to vector<8x128xf32>
    %710 = arith.addf %709, %708 : vector<8x128xf32>
    %711 = arith.divf %709, %710 : vector<8x128xf32>
    %712 = vector.extract_strided_slice %697 {offsets = [0, 256], sizes = [8, 128], strides = [1, 1]} : vector<8x512xf32> to vector<8x128xf32>
    %713 = math.tanh %712 : vector<8x128xf32>
    %714 = vector.extract_strided_slice %697 {offsets = [0, 384], sizes = [8, 128], strides = [1, 1]} : vector<8x512xf32> to vector<8x128xf32>
    %715 = arith.negf %714 : vector<8x128xf32>
    %716 = math.exp %715 : vector<8x128xf32>
    %cst_374 = arith.constant 1.000000e+00 : f32
    %717 = vector.broadcast %cst_374 : f32 to vector<8x128xf32>
    %718 = arith.addf %717, %716 : vector<8x128xf32>
    %719 = arith.divf %717, %718 : vector<8x128xf32>
    %720 = arith.mulf %711, %699 : vector<8x128xf32>
    %721 = arith.mulf %705, %713 : vector<8x128xf32>
    %722 = arith.addf %720, %721 : vector<8x128xf32>
    %723 = math.tanh %722 : vector<8x128xf32>
    %724 = arith.mulf %719, %723 : vector<8x128xf32>
    %c0_375 = arith.constant 0 : index
    %c0_376 = arith.constant 0 : index
    %c0_377 = arith.constant 0 : index
    %725 = vector.load %arg10[%c0_375, %c0_376, %c0_377] : memref<3x8x128xf32, #tpu.memory_space<vmem>>, vector<1x8x128xf32>
    %726 = vector.shape_cast %725 : vector<1x8x128xf32> to vector<8x128xf32>
    %727 = vector.shape_cast %724 : vector<8x128xf32> to vector<1x8x128xf32>
    tpu.vector_store %arg10[%c0_375, %c0_376, %c0_377], %727 {strides = array<i32>} : memref<3x8x128xf32, #tpu.memory_space<vmem>>, vector<1x8x128xf32>,
    %c0_378 = arith.constant 0 : index
    %c0_379 = arith.constant 0 : index
    %c0_380 = arith.constant 0 : index
    %728 = vector.load %arg11[%c0_378, %c0_379, %c0_380] : memref<3x8x128xf32, #tpu.memory_space<vmem>>, vector<1x8x128xf32>
    %729 = vector.shape_cast %728 : vector<1x8x128xf32> to vector<8x128xf32>
    %730 = vector.shape_cast %722 : vector<8x128xf32> to vector<1x8x128xf32>
    tpu.vector_store %arg11[%c0_378, %c0_379, %c0_380], %730 {strides = array<i32>} : memref<3x8x128xf32, #tpu.memory_space<vmem>>, vector<1x8x128xf32>,
    %c1_381 = arith.constant 1 : index
    %c0_382 = arith.constant 0 : index
    %c0_383 = arith.constant 0 : index
    %731 = vector.load %arg10[%c1_381, %c0_382, %c0_383] : memref<3x8x128xf32, #tpu.memory_space<vmem>>, vector<1x8x128xf32>
    %732 = vector.shape_cast %731 : vector<1x8x128xf32> to vector<8x128xf32>
    %733 = tpu.concatenate %724, %732 in 1 : vector<8x128xf32>, vector<8x128xf32> -> vector<8x256xf32>
    %c0_384 = arith.constant 0 : index
    %c0_385 = arith.constant 0 : index
    %c0_386 = arith.constant 0 : index
    %734 = vector.load %arg3[%c0_384, %c0_385, %c0_386] : memref<2x256x512xf32, #tpu.memory_space<vmem>>, vector<1x256x512xf32>
    %735 = vector.shape_cast %734 : vector<1x256x512xf32> to vector<256x512xf32>
    %cst_387 = arith.constant dense<0.000000e+00> : vector<8x512xf32>
    %736 = tpu.matmul %733, %735, %cst_387 {dimension_numbers = #tpu.dot_dimension_numbers<[1], [0], [0], [1], [0, 0, 1, 1], [], []>} : vector<8x256xf32>, vector<256x512xf32>, vector<8x512xf32> -> vector<8x512xf32>
    %c1_388 = arith.constant 1 : index
    %c0_389 = arith.constant 0 : index
    %c0_390 = arith.constant 0 : index
    %737 = vector.load %arg4[%c1_388, %c0_389, %c0_390] : memref<3x1x512xf32, #tpu.memory_space<vmem>>, vector<1x1x512xf32>
    %738 = vector.shape_cast %737 : vector<1x1x512xf32> to vector<1x512xf32>
    %739 = vector.broadcast %738 : vector<1x512xf32> to vector<8x512xf32>
    %740 = arith.addf %736, %739 : vector<8x512xf32>
    %c1_391 = arith.constant 1 : index
    %c0_392 = arith.constant 0 : index
    %c0_393 = arith.constant 0 : index
    %741 = vector.load %arg11[%c1_391, %c0_392, %c0_393] : memref<3x8x128xf32, #tpu.memory_space<vmem>>, vector<1x8x128xf32>
    %742 = vector.shape_cast %741 : vector<1x8x128xf32> to vector<8x128xf32>
    %743 = vector.extract_strided_slice %740 {offsets = [0, 0], sizes = [8, 128], strides = [1, 1]} : vector<8x512xf32> to vector<8x128xf32>
    %744 = arith.negf %743 : vector<8x128xf32>
    %745 = math.exp %744 : vector<8x128xf32>
    %cst_394 = arith.constant 1.000000e+00 : f32
    %746 = vector.broadcast %cst_394 : f32 to vector<8x128xf32>
    %747 = arith.addf %746, %745 : vector<8x128xf32>
    %748 = arith.divf %746, %747 : vector<8x128xf32>
    %749 = vector.extract_strided_slice %740 {offsets = [0, 128], sizes = [8, 128], strides = [1, 1]} : vector<8x512xf32> to vector<8x128xf32>
    %750 = arith.negf %749 : vector<8x128xf32>
    %751 = math.exp %750 : vector<8x128xf32>
    %cst_395 = arith.constant 1.000000e+00 : f32
    %752 = vector.broadcast %cst_395 : f32 to vector<8x128xf32>
    %753 = arith.addf %752, %751 : vector<8x128xf32>
    %754 = arith.divf %752, %753 : vector<8x128xf32>
    %755 = vector.extract_strided_slice %740 {offsets = [0, 256], sizes = [8, 128], strides = [1, 1]} : vector<8x512xf32> to vector<8x128xf32>
    %756 = math.tanh %755 : vector<8x128xf32>
    %757 = vector.extract_strided_slice %740 {offsets = [0, 384], sizes = [8, 128], strides = [1, 1]} : vector<8x512xf32> to vector<8x128xf32>
    %758 = arith.negf %757 : vector<8x128xf32>
    %759 = math.exp %758 : vector<8x128xf32>
    %cst_396 = arith.constant 1.000000e+00 : f32
    %760 = vector.broadcast %cst_396 : f32 to vector<8x128xf32>
    %761 = arith.addf %760, %759 : vector<8x128xf32>
    %762 = arith.divf %760, %761 : vector<8x128xf32>
    %763 = arith.mulf %754, %742 : vector<8x128xf32>
    %764 = arith.mulf %748, %756 : vector<8x128xf32>
    %765 = arith.addf %763, %764 : vector<8x128xf32>
    %766 = math.tanh %765 : vector<8x128xf32>
    %767 = arith.mulf %762, %766 : vector<8x128xf32>
    %c1_397 = arith.constant 1 : index
    %c0_398 = arith.constant 0 : index
    %c0_399 = arith.constant 0 : index
    %768 = vector.load %arg10[%c1_397, %c0_398, %c0_399] : memref<3x8x128xf32, #tpu.memory_space<vmem>>, vector<1x8x128xf32>
    %769 = vector.shape_cast %768 : vector<1x8x128xf32> to vector<8x128xf32>
    %770 = vector.shape_cast %767 : vector<8x128xf32> to vector<1x8x128xf32>
    tpu.vector_store %arg10[%c1_397, %c0_398, %c0_399], %770 {strides = array<i32>} : memref<3x8x128xf32, #tpu.memory_space<vmem>>, vector<1x8x128xf32>,
    %c1_400 = arith.constant 1 : index
    %c0_401 = arith.constant 0 : index
    %c0_402 = arith.constant 0 : index
    %771 = vector.load %arg11[%c1_400, %c0_401, %c0_402] : memref<3x8x128xf32, #tpu.memory_space<vmem>>, vector<1x8x128xf32>
    %772 = vector.shape_cast %771 : vector<1x8x128xf32> to vector<8x128xf32>
    %773 = vector.shape_cast %765 : vector<8x128xf32> to vector<1x8x128xf32>
    tpu.vector_store %arg11[%c1_400, %c0_401, %c0_402], %773 {strides = array<i32>} : memref<3x8x128xf32, #tpu.memory_space<vmem>>, vector<1x8x128xf32>,
    %c2_403 = arith.constant 2 : index
    %c0_404 = arith.constant 0 : index
    %c0_405 = arith.constant 0 : index
    %774 = vector.load %arg10[%c2_403, %c0_404, %c0_405] : memref<3x8x128xf32, #tpu.memory_space<vmem>>, vector<1x8x128xf32>
    %775 = vector.shape_cast %774 : vector<1x8x128xf32> to vector<8x128xf32>
    %776 = tpu.concatenate %767, %775 in 1 : vector<8x128xf32>, vector<8x128xf32> -> vector<8x256xf32>
    %c1_406 = arith.constant 1 : index
    %c0_407 = arith.constant 0 : index
    %c0_408 = arith.constant 0 : index
    %777 = vector.load %arg3[%c1_406, %c0_407, %c0_408] : memref<2x256x512xf32, #tpu.memory_space<vmem>>, vector<1x256x512xf32>
    %778 = vector.shape_cast %777 : vector<1x256x512xf32> to vector<256x512xf32>
    %cst_409 = arith.constant dense<0.000000e+00> : vector<8x512xf32>
    %779 = tpu.matmul %776, %778, %cst_409 {dimension_numbers = #tpu.dot_dimension_numbers<[1], [0], [0], [1], [0, 0, 1, 1], [], []>} : vector<8x256xf32>, vector<256x512xf32>, vector<8x512xf32> -> vector<8x512xf32>
    %c2_410 = arith.constant 2 : index
    %c0_411 = arith.constant 0 : index
    %c0_412 = arith.constant 0 : index
    %780 = vector.load %arg4[%c2_410, %c0_411, %c0_412] : memref<3x1x512xf32, #tpu.memory_space<vmem>>, vector<1x1x512xf32>
    %781 = vector.shape_cast %780 : vector<1x1x512xf32> to vector<1x512xf32>
    %782 = vector.broadcast %781 : vector<1x512xf32> to vector<8x512xf32>
    %783 = arith.addf %779, %782 : vector<8x512xf32>
    %c2_413 = arith.constant 2 : index
    %c0_414 = arith.constant 0 : index
    %c0_415 = arith.constant 0 : index
    %784 = vector.load %arg11[%c2_413, %c0_414, %c0_415] : memref<3x8x128xf32, #tpu.memory_space<vmem>>, vector<1x8x128xf32>
    %785 = vector.shape_cast %784 : vector<1x8x128xf32> to vector<8x128xf32>
    %786 = vector.extract_strided_slice %783 {offsets = [0, 0], sizes = [8, 128], strides = [1, 1]} : vector<8x512xf32> to vector<8x128xf32>
    %787 = arith.negf %786 : vector<8x128xf32>
    %788 = math.exp %787 : vector<8x128xf32>
    %cst_416 = arith.constant 1.000000e+00 : f32
    %789 = vector.broadcast %cst_416 : f32 to vector<8x128xf32>
    %790 = arith.addf %789, %788 : vector<8x128xf32>
    %791 = arith.divf %789, %790 : vector<8x128xf32>
    %792 = vector.extract_strided_slice %783 {offsets = [0, 128], sizes = [8, 128], strides = [1, 1]} : vector<8x512xf32> to vector<8x128xf32>
    %793 = arith.negf %792 : vector<8x128xf32>
    %794 = math.exp %793 : vector<8x128xf32>
    %cst_417 = arith.constant 1.000000e+00 : f32
    %795 = vector.broadcast %cst_417 : f32 to vector<8x128xf32>
    %796 = arith.addf %795, %794 : vector<8x128xf32>
    %797 = arith.divf %795, %796 : vector<8x128xf32>
    %798 = vector.extract_strided_slice %783 {offsets = [0, 256], sizes = [8, 128], strides = [1, 1]} : vector<8x512xf32> to vector<8x128xf32>
    %799 = math.tanh %798 : vector<8x128xf32>
    %800 = vector.extract_strided_slice %783 {offsets = [0, 384], sizes = [8, 128], strides = [1, 1]} : vector<8x512xf32> to vector<8x128xf32>
    %801 = arith.negf %800 : vector<8x128xf32>
    %802 = math.exp %801 : vector<8x128xf32>
    %cst_418 = arith.constant 1.000000e+00 : f32
    %803 = vector.broadcast %cst_418 : f32 to vector<8x128xf32>
    %804 = arith.addf %803, %802 : vector<8x128xf32>
    %805 = arith.divf %803, %804 : vector<8x128xf32>
    %806 = arith.mulf %797, %785 : vector<8x128xf32>
    %807 = arith.mulf %791, %799 : vector<8x128xf32>
    %808 = arith.addf %806, %807 : vector<8x128xf32>
    %809 = math.tanh %808 : vector<8x128xf32>
    %810 = arith.mulf %805, %809 : vector<8x128xf32>
    %c2_419 = arith.constant 2 : index
    %c0_420 = arith.constant 0 : index
    %c0_421 = arith.constant 0 : index
    %811 = vector.load %arg10[%c2_419, %c0_420, %c0_421] : memref<3x8x128xf32, #tpu.memory_space<vmem>>, vector<1x8x128xf32>
    %812 = vector.shape_cast %811 : vector<1x8x128xf32> to vector<8x128xf32>
    %813 = vector.shape_cast %810 : vector<8x128xf32> to vector<1x8x128xf32>
    tpu.vector_store %arg10[%c2_419, %c0_420, %c0_421], %813 {strides = array<i32>} : memref<3x8x128xf32, #tpu.memory_space<vmem>>, vector<1x8x128xf32>,
    %c2_422 = arith.constant 2 : index
    %c0_423 = arith.constant 0 : index
    %c0_424 = arith.constant 0 : index
    %814 = vector.load %arg11[%c2_422, %c0_423, %c0_424] : memref<3x8x128xf32, #tpu.memory_space<vmem>>, vector<1x8x128xf32>
    %815 = vector.shape_cast %814 : vector<1x8x128xf32> to vector<8x128xf32>
    %816 = vector.shape_cast %808 : vector<8x128xf32> to vector<1x8x128xf32>
    tpu.vector_store %arg11[%c2_422, %c0_423, %c0_424], %816 {strides = array<i32>} : memref<3x8x128xf32, #tpu.memory_space<vmem>>, vector<1x8x128xf32>,
    %817 = arith.index_cast %c5_i32 : i32 to index
    %c0_425 = arith.constant 0 : index
    %c0_426 = arith.constant 0 : index
    %818 = vector.load %arg13[%817, %c0_425, %c0_426] : memref<8x8x128xf32, #tpu.memory_space<vmem>>, vector<1x8x128xf32>
    %819 = vector.shape_cast %818 : vector<1x8x128xf32> to vector<8x128xf32>
    %820 = vector.shape_cast %810 : vector<8x128xf32> to vector<1x8x128xf32>
    tpu.vector_store %arg13[%817, %c0_425, %c0_426], %820 {strides = array<i32>} : memref<8x8x128xf32, #tpu.memory_space<vmem>>, vector<1x8x128xf32>,
    %c6_i32 = arith.constant 6 : i32
    %821 = arith.index_cast %c6_i32 : i32 to index
    %c0_427 = arith.constant 0 : index
    %c0_428 = arith.constant 0 : index
    %822 = vector.load %arg12[%821, %c0_427, %c0_428] : memref<8x8x512xf32, #tpu.memory_space<vmem>>, vector<1x8x512xf32>
    %823 = vector.shape_cast %822 : vector<1x8x512xf32> to vector<8x512xf32>
    %c0_429 = arith.constant 0 : index
    %c0_430 = arith.constant 0 : index
    %c0_431 = arith.constant 0 : index
    %824 = vector.load %arg10[%c0_429, %c0_430, %c0_431] : memref<3x8x128xf32, #tpu.memory_space<vmem>>, vector<1x8x128xf32>
    %825 = vector.shape_cast %824 : vector<1x8x128xf32> to vector<8x128xf32>
    %c0_432 = arith.constant 0 : index
    %c0_433 = arith.constant 0 : index
    %826 = vector.load %arg2[%c0_432, %c0_433] : memref<128x512xf32, #tpu.memory_space<vmem>>, vector<128x512xf32>
    %cst_434 = arith.constant dense<0.000000e+00> : vector<8x512xf32>
    %827 = tpu.matmul %825, %826, %cst_434 {dimension_numbers = #tpu.dot_dimension_numbers<[1], [0], [0], [1], [0, 0, 1, 1], [], []>} : vector<8x128xf32>, vector<128x512xf32>, vector<8x512xf32> -> vector<8x512xf32>
    %828 = arith.addf %823, %827 : vector<8x512xf32>
    %c0_435 = arith.constant 0 : index
    %c0_436 = arith.constant 0 : index
    %c0_437 = arith.constant 0 : index
    %829 = vector.load %arg4[%c0_435, %c0_436, %c0_437] : memref<3x1x512xf32, #tpu.memory_space<vmem>>, vector<1x1x512xf32>
    %830 = vector.shape_cast %829 : vector<1x1x512xf32> to vector<1x512xf32>
    %831 = vector.broadcast %830 : vector<1x512xf32> to vector<8x512xf32>
    %832 = arith.addf %828, %831 : vector<8x512xf32>
    %c0_438 = arith.constant 0 : index
    %c0_439 = arith.constant 0 : index
    %c0_440 = arith.constant 0 : index
    %833 = vector.load %arg11[%c0_438, %c0_439, %c0_440] : memref<3x8x128xf32, #tpu.memory_space<vmem>>, vector<1x8x128xf32>
    %834 = vector.shape_cast %833 : vector<1x8x128xf32> to vector<8x128xf32>
    %835 = vector.extract_strided_slice %832 {offsets = [0, 0], sizes = [8, 128], strides = [1, 1]} : vector<8x512xf32> to vector<8x128xf32>
    %836 = arith.negf %835 : vector<8x128xf32>
    %837 = math.exp %836 : vector<8x128xf32>
    %cst_441 = arith.constant 1.000000e+00 : f32
    %838 = vector.broadcast %cst_441 : f32 to vector<8x128xf32>
    %839 = arith.addf %838, %837 : vector<8x128xf32>
    %840 = arith.divf %838, %839 : vector<8x128xf32>
    %841 = vector.extract_strided_slice %832 {offsets = [0, 128], sizes = [8, 128], strides = [1, 1]} : vector<8x512xf32> to vector<8x128xf32>
    %842 = arith.negf %841 : vector<8x128xf32>
    %843 = math.exp %842 : vector<8x128xf32>
    %cst_442 = arith.constant 1.000000e+00 : f32
    %844 = vector.broadcast %cst_442 : f32 to vector<8x128xf32>
    %845 = arith.addf %844, %843 : vector<8x128xf32>
    %846 = arith.divf %844, %845 : vector<8x128xf32>
    %847 = vector.extract_strided_slice %832 {offsets = [0, 256], sizes = [8, 128], strides = [1, 1]} : vector<8x512xf32> to vector<8x128xf32>
    %848 = math.tanh %847 : vector<8x128xf32>
    %849 = vector.extract_strided_slice %832 {offsets = [0, 384], sizes = [8, 128], strides = [1, 1]} : vector<8x512xf32> to vector<8x128xf32>
    %850 = arith.negf %849 : vector<8x128xf32>
    %851 = math.exp %850 : vector<8x128xf32>
    %cst_443 = arith.constant 1.000000e+00 : f32
    %852 = vector.broadcast %cst_443 : f32 to vector<8x128xf32>
    %853 = arith.addf %852, %851 : vector<8x128xf32>
    %854 = arith.divf %852, %853 : vector<8x128xf32>
    %855 = arith.mulf %846, %834 : vector<8x128xf32>
    %856 = arith.mulf %840, %848 : vector<8x128xf32>
    %857 = arith.addf %855, %856 : vector<8x128xf32>
    %858 = math.tanh %857 : vector<8x128xf32>
    %859 = arith.mulf %854, %858 : vector<8x128xf32>
    %c0_444 = arith.constant 0 : index
    %c0_445 = arith.constant 0 : index
    %c0_446 = arith.constant 0 : index
    %860 = vector.load %arg10[%c0_444, %c0_445, %c0_446] : memref<3x8x128xf32, #tpu.memory_space<vmem>>, vector<1x8x128xf32>
    %861 = vector.shape_cast %860 : vector<1x8x128xf32> to vector<8x128xf32>
    %862 = vector.shape_cast %859 : vector<8x128xf32> to vector<1x8x128xf32>
    tpu.vector_store %arg10[%c0_444, %c0_445, %c0_446], %862 {strides = array<i32>} : memref<3x8x128xf32, #tpu.memory_space<vmem>>, vector<1x8x128xf32>,
    %c0_447 = arith.constant 0 : index
    %c0_448 = arith.constant 0 : index
    %c0_449 = arith.constant 0 : index
    %863 = vector.load %arg11[%c0_447, %c0_448, %c0_449] : memref<3x8x128xf32, #tpu.memory_space<vmem>>, vector<1x8x128xf32>
    %864 = vector.shape_cast %863 : vector<1x8x128xf32> to vector<8x128xf32>
    %865 = vector.shape_cast %857 : vector<8x128xf32> to vector<1x8x128xf32>
    tpu.vector_store %arg11[%c0_447, %c0_448, %c0_449], %865 {strides = array<i32>} : memref<3x8x128xf32, #tpu.memory_space<vmem>>, vector<1x8x128xf32>,
    %c1_450 = arith.constant 1 : index
    %c0_451 = arith.constant 0 : index
    %c0_452 = arith.constant 0 : index
    %866 = vector.load %arg10[%c1_450, %c0_451, %c0_452] : memref<3x8x128xf32, #tpu.memory_space<vmem>>, vector<1x8x128xf32>
    %867 = vector.shape_cast %866 : vector<1x8x128xf32> to vector<8x128xf32>
    %868 = tpu.concatenate %859, %867 in 1 : vector<8x128xf32>, vector<8x128xf32> -> vector<8x256xf32>
    %c0_453 = arith.constant 0 : index
    %c0_454 = arith.constant 0 : index
    %c0_455 = arith.constant 0 : index
    %869 = vector.load %arg3[%c0_453, %c0_454, %c0_455] : memref<2x256x512xf32, #tpu.memory_space<vmem>>, vector<1x256x512xf32>
    %870 = vector.shape_cast %869 : vector<1x256x512xf32> to vector<256x512xf32>
    %cst_456 = arith.constant dense<0.000000e+00> : vector<8x512xf32>
    %871 = tpu.matmul %868, %870, %cst_456 {dimension_numbers = #tpu.dot_dimension_numbers<[1], [0], [0], [1], [0, 0, 1, 1], [], []>} : vector<8x256xf32>, vector<256x512xf32>, vector<8x512xf32> -> vector<8x512xf32>
    %c1_457 = arith.constant 1 : index
    %c0_458 = arith.constant 0 : index
    %c0_459 = arith.constant 0 : index
    %872 = vector.load %arg4[%c1_457, %c0_458, %c0_459] : memref<3x1x512xf32, #tpu.memory_space<vmem>>, vector<1x1x512xf32>
    %873 = vector.shape_cast %872 : vector<1x1x512xf32> to vector<1x512xf32>
    %874 = vector.broadcast %873 : vector<1x512xf32> to vector<8x512xf32>
    %875 = arith.addf %871, %874 : vector<8x512xf32>
    %c1_460 = arith.constant 1 : index
    %c0_461 = arith.constant 0 : index
    %c0_462 = arith.constant 0 : index
    %876 = vector.load %arg11[%c1_460, %c0_461, %c0_462] : memref<3x8x128xf32, #tpu.memory_space<vmem>>, vector<1x8x128xf32>
    %877 = vector.shape_cast %876 : vector<1x8x128xf32> to vector<8x128xf32>
    %878 = vector.extract_strided_slice %875 {offsets = [0, 0], sizes = [8, 128], strides = [1, 1]} : vector<8x512xf32> to vector<8x128xf32>
    %879 = arith.negf %878 : vector<8x128xf32>
    %880 = math.exp %879 : vector<8x128xf32>
    %cst_463 = arith.constant 1.000000e+00 : f32
    %881 = vector.broadcast %cst_463 : f32 to vector<8x128xf32>
    %882 = arith.addf %881, %880 : vector<8x128xf32>
    %883 = arith.divf %881, %882 : vector<8x128xf32>
    %884 = vector.extract_strided_slice %875 {offsets = [0, 128], sizes = [8, 128], strides = [1, 1]} : vector<8x512xf32> to vector<8x128xf32>
    %885 = arith.negf %884 : vector<8x128xf32>
    %886 = math.exp %885 : vector<8x128xf32>
    %cst_464 = arith.constant 1.000000e+00 : f32
    %887 = vector.broadcast %cst_464 : f32 to vector<8x128xf32>
    %888 = arith.addf %887, %886 : vector<8x128xf32>
    %889 = arith.divf %887, %888 : vector<8x128xf32>
    %890 = vector.extract_strided_slice %875 {offsets = [0, 256], sizes = [8, 128], strides = [1, 1]} : vector<8x512xf32> to vector<8x128xf32>
    %891 = math.tanh %890 : vector<8x128xf32>
    %892 = vector.extract_strided_slice %875 {offsets = [0, 384], sizes = [8, 128], strides = [1, 1]} : vector<8x512xf32> to vector<8x128xf32>
    %893 = arith.negf %892 : vector<8x128xf32>
    %894 = math.exp %893 : vector<8x128xf32>
    %cst_465 = arith.constant 1.000000e+00 : f32
    %895 = vector.broadcast %cst_465 : f32 to vector<8x128xf32>
    %896 = arith.addf %895, %894 : vector<8x128xf32>
    %897 = arith.divf %895, %896 : vector<8x128xf32>
    %898 = arith.mulf %889, %877 : vector<8x128xf32>
    %899 = arith.mulf %883, %891 : vector<8x128xf32>
    %900 = arith.addf %898, %899 : vector<8x128xf32>
    %901 = math.tanh %900 : vector<8x128xf32>
    %902 = arith.mulf %897, %901 : vector<8x128xf32>
    %c1_466 = arith.constant 1 : index
    %c0_467 = arith.constant 0 : index
    %c0_468 = arith.constant 0 : index
    %903 = vector.load %arg10[%c1_466, %c0_467, %c0_468] : memref<3x8x128xf32, #tpu.memory_space<vmem>>, vector<1x8x128xf32>
    %904 = vector.shape_cast %903 : vector<1x8x128xf32> to vector<8x128xf32>
    %905 = vector.shape_cast %902 : vector<8x128xf32> to vector<1x8x128xf32>
    tpu.vector_store %arg10[%c1_466, %c0_467, %c0_468], %905 {strides = array<i32>} : memref<3x8x128xf32, #tpu.memory_space<vmem>>, vector<1x8x128xf32>,
    %c1_469 = arith.constant 1 : index
    %c0_470 = arith.constant 0 : index
    %c0_471 = arith.constant 0 : index
    %906 = vector.load %arg11[%c1_469, %c0_470, %c0_471] : memref<3x8x128xf32, #tpu.memory_space<vmem>>, vector<1x8x128xf32>
    %907 = vector.shape_cast %906 : vector<1x8x128xf32> to vector<8x128xf32>
    %908 = vector.shape_cast %900 : vector<8x128xf32> to vector<1x8x128xf32>
    tpu.vector_store %arg11[%c1_469, %c0_470, %c0_471], %908 {strides = array<i32>} : memref<3x8x128xf32, #tpu.memory_space<vmem>>, vector<1x8x128xf32>,
    %c2_472 = arith.constant 2 : index
    %c0_473 = arith.constant 0 : index
    %c0_474 = arith.constant 0 : index
    %909 = vector.load %arg10[%c2_472, %c0_473, %c0_474] : memref<3x8x128xf32, #tpu.memory_space<vmem>>, vector<1x8x128xf32>
    %910 = vector.shape_cast %909 : vector<1x8x128xf32> to vector<8x128xf32>
    %911 = tpu.concatenate %902, %910 in 1 : vector<8x128xf32>, vector<8x128xf32> -> vector<8x256xf32>
    %c1_475 = arith.constant 1 : index
    %c0_476 = arith.constant 0 : index
    %c0_477 = arith.constant 0 : index
    %912 = vector.load %arg3[%c1_475, %c0_476, %c0_477] : memref<2x256x512xf32, #tpu.memory_space<vmem>>, vector<1x256x512xf32>
    %913 = vector.shape_cast %912 : vector<1x256x512xf32> to vector<256x512xf32>
    %cst_478 = arith.constant dense<0.000000e+00> : vector<8x512xf32>
    %914 = tpu.matmul %911, %913, %cst_478 {dimension_numbers = #tpu.dot_dimension_numbers<[1], [0], [0], [1], [0, 0, 1, 1], [], []>} : vector<8x256xf32>, vector<256x512xf32>, vector<8x512xf32> -> vector<8x512xf32>
    %c2_479 = arith.constant 2 : index
    %c0_480 = arith.constant 0 : index
    %c0_481 = arith.constant 0 : index
    %915 = vector.load %arg4[%c2_479, %c0_480, %c0_481] : memref<3x1x512xf32, #tpu.memory_space<vmem>>, vector<1x1x512xf32>
    %916 = vector.shape_cast %915 : vector<1x1x512xf32> to vector<1x512xf32>
    %917 = vector.broadcast %916 : vector<1x512xf32> to vector<8x512xf32>
    %918 = arith.addf %914, %917 : vector<8x512xf32>
    %c2_482 = arith.constant 2 : index
    %c0_483 = arith.constant 0 : index
    %c0_484 = arith.constant 0 : index
    %919 = vector.load %arg11[%c2_482, %c0_483, %c0_484] : memref<3x8x128xf32, #tpu.memory_space<vmem>>, vector<1x8x128xf32>
    %920 = vector.shape_cast %919 : vector<1x8x128xf32> to vector<8x128xf32>
    %921 = vector.extract_strided_slice %918 {offsets = [0, 0], sizes = [8, 128], strides = [1, 1]} : vector<8x512xf32> to vector<8x128xf32>
    %922 = arith.negf %921 : vector<8x128xf32>
    %923 = math.exp %922 : vector<8x128xf32>
    %cst_485 = arith.constant 1.000000e+00 : f32
    %924 = vector.broadcast %cst_485 : f32 to vector<8x128xf32>
    %925 = arith.addf %924, %923 : vector<8x128xf32>
    %926 = arith.divf %924, %925 : vector<8x128xf32>
    %927 = vector.extract_strided_slice %918 {offsets = [0, 128], sizes = [8, 128], strides = [1, 1]} : vector<8x512xf32> to vector<8x128xf32>
    %928 = arith.negf %927 : vector<8x128xf32>
    %929 = math.exp %928 : vector<8x128xf32>
    %cst_486 = arith.constant 1.000000e+00 : f32
    %930 = vector.broadcast %cst_486 : f32 to vector<8x128xf32>
    %931 = arith.addf %930, %929 : vector<8x128xf32>
    %932 = arith.divf %930, %931 : vector<8x128xf32>
    %933 = vector.extract_strided_slice %918 {offsets = [0, 256], sizes = [8, 128], strides = [1, 1]} : vector<8x512xf32> to vector<8x128xf32>
    %934 = math.tanh %933 : vector<8x128xf32>
    %935 = vector.extract_strided_slice %918 {offsets = [0, 384], sizes = [8, 128], strides = [1, 1]} : vector<8x512xf32> to vector<8x128xf32>
    %936 = arith.negf %935 : vector<8x128xf32>
    %937 = math.exp %936 : vector<8x128xf32>
    %cst_487 = arith.constant 1.000000e+00 : f32
    %938 = vector.broadcast %cst_487 : f32 to vector<8x128xf32>
    %939 = arith.addf %938, %937 : vector<8x128xf32>
    %940 = arith.divf %938, %939 : vector<8x128xf32>
    %941 = arith.mulf %932, %920 : vector<8x128xf32>
    %942 = arith.mulf %926, %934 : vector<8x128xf32>
    %943 = arith.addf %941, %942 : vector<8x128xf32>
    %944 = math.tanh %943 : vector<8x128xf32>
    %945 = arith.mulf %940, %944 : vector<8x128xf32>
    %c2_488 = arith.constant 2 : index
    %c0_489 = arith.constant 0 : index
    %c0_490 = arith.constant 0 : index
    %946 = vector.load %arg10[%c2_488, %c0_489, %c0_490] : memref<3x8x128xf32, #tpu.memory_space<vmem>>, vector<1x8x128xf32>
    %947 = vector.shape_cast %946 : vector<1x8x128xf32> to vector<8x128xf32>
    %948 = vector.shape_cast %945 : vector<8x128xf32> to vector<1x8x128xf32>
    tpu.vector_store %arg10[%c2_488, %c0_489, %c0_490], %948 {strides = array<i32>} : memref<3x8x128xf32, #tpu.memory_space<vmem>>, vector<1x8x128xf32>,
    %c2_491 = arith.constant 2 : index
    %c0_492 = arith.constant 0 : index
    %c0_493 = arith.constant 0 : index
    %949 = vector.load %arg11[%c2_491, %c0_492, %c0_493] : memref<3x8x128xf32, #tpu.memory_space<vmem>>, vector<1x8x128xf32>
    %950 = vector.shape_cast %949 : vector<1x8x128xf32> to vector<8x128xf32>
    %951 = vector.shape_cast %943 : vector<8x128xf32> to vector<1x8x128xf32>
    tpu.vector_store %arg11[%c2_491, %c0_492, %c0_493], %951 {strides = array<i32>} : memref<3x8x128xf32, #tpu.memory_space<vmem>>, vector<1x8x128xf32>,
    %952 = arith.index_cast %c6_i32 : i32 to index
    %c0_494 = arith.constant 0 : index
    %c0_495 = arith.constant 0 : index
    %953 = vector.load %arg13[%952, %c0_494, %c0_495] : memref<8x8x128xf32, #tpu.memory_space<vmem>>, vector<1x8x128xf32>
    %954 = vector.shape_cast %953 : vector<1x8x128xf32> to vector<8x128xf32>
    %955 = vector.shape_cast %945 : vector<8x128xf32> to vector<1x8x128xf32>
    tpu.vector_store %arg13[%952, %c0_494, %c0_495], %955 {strides = array<i32>} : memref<8x8x128xf32, #tpu.memory_space<vmem>>, vector<1x8x128xf32>,
    %c7_i32 = arith.constant 7 : i32
    %956 = arith.index_cast %c7_i32 : i32 to index
    %c0_496 = arith.constant 0 : index
    %c0_497 = arith.constant 0 : index
    %957 = vector.load %arg12[%956, %c0_496, %c0_497] : memref<8x8x512xf32, #tpu.memory_space<vmem>>, vector<1x8x512xf32>
    %958 = vector.shape_cast %957 : vector<1x8x512xf32> to vector<8x512xf32>
    %c0_498 = arith.constant 0 : index
    %c0_499 = arith.constant 0 : index
    %c0_500 = arith.constant 0 : index
    %959 = vector.load %arg10[%c0_498, %c0_499, %c0_500] : memref<3x8x128xf32, #tpu.memory_space<vmem>>, vector<1x8x128xf32>
    %960 = vector.shape_cast %959 : vector<1x8x128xf32> to vector<8x128xf32>
    %c0_501 = arith.constant 0 : index
    %c0_502 = arith.constant 0 : index
    %961 = vector.load %arg2[%c0_501, %c0_502] : memref<128x512xf32, #tpu.memory_space<vmem>>, vector<128x512xf32>
    %cst_503 = arith.constant dense<0.000000e+00> : vector<8x512xf32>
    %962 = tpu.matmul %960, %961, %cst_503 {dimension_numbers = #tpu.dot_dimension_numbers<[1], [0], [0], [1], [0, 0, 1, 1], [], []>} : vector<8x128xf32>, vector<128x512xf32>, vector<8x512xf32> -> vector<8x512xf32>
    %963 = arith.addf %958, %962 : vector<8x512xf32>
    %c0_504 = arith.constant 0 : index
    %c0_505 = arith.constant 0 : index
    %c0_506 = arith.constant 0 : index
    %964 = vector.load %arg4[%c0_504, %c0_505, %c0_506] : memref<3x1x512xf32, #tpu.memory_space<vmem>>, vector<1x1x512xf32>
    %965 = vector.shape_cast %964 : vector<1x1x512xf32> to vector<1x512xf32>
    %966 = vector.broadcast %965 : vector<1x512xf32> to vector<8x512xf32>
    %967 = arith.addf %963, %966 : vector<8x512xf32>
    %c0_507 = arith.constant 0 : index
    %c0_508 = arith.constant 0 : index
    %c0_509 = arith.constant 0 : index
    %968 = vector.load %arg11[%c0_507, %c0_508, %c0_509] : memref<3x8x128xf32, #tpu.memory_space<vmem>>, vector<1x8x128xf32>
    %969 = vector.shape_cast %968 : vector<1x8x128xf32> to vector<8x128xf32>
    %970 = vector.extract_strided_slice %967 {offsets = [0, 0], sizes = [8, 128], strides = [1, 1]} : vector<8x512xf32> to vector<8x128xf32>
    %971 = arith.negf %970 : vector<8x128xf32>
    %972 = math.exp %971 : vector<8x128xf32>
    %cst_510 = arith.constant 1.000000e+00 : f32
    %973 = vector.broadcast %cst_510 : f32 to vector<8x128xf32>
    %974 = arith.addf %973, %972 : vector<8x128xf32>
    %975 = arith.divf %973, %974 : vector<8x128xf32>
    %976 = vector.extract_strided_slice %967 {offsets = [0, 128], sizes = [8, 128], strides = [1, 1]} : vector<8x512xf32> to vector<8x128xf32>
    %977 = arith.negf %976 : vector<8x128xf32>
    %978 = math.exp %977 : vector<8x128xf32>
    %cst_511 = arith.constant 1.000000e+00 : f32
    %979 = vector.broadcast %cst_511 : f32 to vector<8x128xf32>
    %980 = arith.addf %979, %978 : vector<8x128xf32>
    %981 = arith.divf %979, %980 : vector<8x128xf32>
    %982 = vector.extract_strided_slice %967 {offsets = [0, 256], sizes = [8, 128], strides = [1, 1]} : vector<8x512xf32> to vector<8x128xf32>
    %983 = math.tanh %982 : vector<8x128xf32>
    %984 = vector.extract_strided_slice %967 {offsets = [0, 384], sizes = [8, 128], strides = [1, 1]} : vector<8x512xf32> to vector<8x128xf32>
    %985 = arith.negf %984 : vector<8x128xf32>
    %986 = math.exp %985 : vector<8x128xf32>
    %cst_512 = arith.constant 1.000000e+00 : f32
    %987 = vector.broadcast %cst_512 : f32 to vector<8x128xf32>
    %988 = arith.addf %987, %986 : vector<8x128xf32>
    %989 = arith.divf %987, %988 : vector<8x128xf32>
    %990 = arith.mulf %981, %969 : vector<8x128xf32>
    %991 = arith.mulf %975, %983 : vector<8x128xf32>
    %992 = arith.addf %990, %991 : vector<8x128xf32>
    %993 = math.tanh %992 : vector<8x128xf32>
    %994 = arith.mulf %989, %993 : vector<8x128xf32>
    %c0_513 = arith.constant 0 : index
    %c0_514 = arith.constant 0 : index
    %c0_515 = arith.constant 0 : index
    %995 = vector.load %arg10[%c0_513, %c0_514, %c0_515] : memref<3x8x128xf32, #tpu.memory_space<vmem>>, vector<1x8x128xf32>
    %996 = vector.shape_cast %995 : vector<1x8x128xf32> to vector<8x128xf32>
    %997 = vector.shape_cast %994 : vector<8x128xf32> to vector<1x8x128xf32>
    tpu.vector_store %arg10[%c0_513, %c0_514, %c0_515], %997 {strides = array<i32>} : memref<3x8x128xf32, #tpu.memory_space<vmem>>, vector<1x8x128xf32>,
    %c0_516 = arith.constant 0 : index
    %c0_517 = arith.constant 0 : index
    %c0_518 = arith.constant 0 : index
    %998 = vector.load %arg11[%c0_516, %c0_517, %c0_518] : memref<3x8x128xf32, #tpu.memory_space<vmem>>, vector<1x8x128xf32>
    %999 = vector.shape_cast %998 : vector<1x8x128xf32> to vector<8x128xf32>
    %1000 = vector.shape_cast %992 : vector<8x128xf32> to vector<1x8x128xf32>
    tpu.vector_store %arg11[%c0_516, %c0_517, %c0_518], %1000 {strides = array<i32>} : memref<3x8x128xf32, #tpu.memory_space<vmem>>, vector<1x8x128xf32>,
    %c1_519 = arith.constant 1 : index
    %c0_520 = arith.constant 0 : index
    %c0_521 = arith.constant 0 : index
    %1001 = vector.load %arg10[%c1_519, %c0_520, %c0_521] : memref<3x8x128xf32, #tpu.memory_space<vmem>>, vector<1x8x128xf32>
    %1002 = vector.shape_cast %1001 : vector<1x8x128xf32> to vector<8x128xf32>
    %1003 = tpu.concatenate %994, %1002 in 1 : vector<8x128xf32>, vector<8x128xf32> -> vector<8x256xf32>
    %c0_522 = arith.constant 0 : index
    %c0_523 = arith.constant 0 : index
    %c0_524 = arith.constant 0 : index
    %1004 = vector.load %arg3[%c0_522, %c0_523, %c0_524] : memref<2x256x512xf32, #tpu.memory_space<vmem>>, vector<1x256x512xf32>
    %1005 = vector.shape_cast %1004 : vector<1x256x512xf32> to vector<256x512xf32>
    %cst_525 = arith.constant dense<0.000000e+00> : vector<8x512xf32>
    %1006 = tpu.matmul %1003, %1005, %cst_525 {dimension_numbers = #tpu.dot_dimension_numbers<[1], [0], [0], [1], [0, 0, 1, 1], [], []>} : vector<8x256xf32>, vector<256x512xf32>, vector<8x512xf32> -> vector<8x512xf32>
    %c1_526 = arith.constant 1 : index
    %c0_527 = arith.constant 0 : index
    %c0_528 = arith.constant 0 : index
    %1007 = vector.load %arg4[%c1_526, %c0_527, %c0_528] : memref<3x1x512xf32, #tpu.memory_space<vmem>>, vector<1x1x512xf32>
    %1008 = vector.shape_cast %1007 : vector<1x1x512xf32> to vector<1x512xf32>
    %1009 = vector.broadcast %1008 : vector<1x512xf32> to vector<8x512xf32>
    %1010 = arith.addf %1006, %1009 : vector<8x512xf32>
    %c1_529 = arith.constant 1 : index
    %c0_530 = arith.constant 0 : index
    %c0_531 = arith.constant 0 : index
    %1011 = vector.load %arg11[%c1_529, %c0_530, %c0_531] : memref<3x8x128xf32, #tpu.memory_space<vmem>>, vector<1x8x128xf32>
    %1012 = vector.shape_cast %1011 : vector<1x8x128xf32> to vector<8x128xf32>
    %1013 = vector.extract_strided_slice %1010 {offsets = [0, 0], sizes = [8, 128], strides = [1, 1]} : vector<8x512xf32> to vector<8x128xf32>
    %1014 = arith.negf %1013 : vector<8x128xf32>
    %1015 = math.exp %1014 : vector<8x128xf32>
    %cst_532 = arith.constant 1.000000e+00 : f32
    %1016 = vector.broadcast %cst_532 : f32 to vector<8x128xf32>
    %1017 = arith.addf %1016, %1015 : vector<8x128xf32>
    %1018 = arith.divf %1016, %1017 : vector<8x128xf32>
    %1019 = vector.extract_strided_slice %1010 {offsets = [0, 128], sizes = [8, 128], strides = [1, 1]} : vector<8x512xf32> to vector<8x128xf32>
    %1020 = arith.negf %1019 : vector<8x128xf32>
    %1021 = math.exp %1020 : vector<8x128xf32>
    %cst_533 = arith.constant 1.000000e+00 : f32
    %1022 = vector.broadcast %cst_533 : f32 to vector<8x128xf32>
    %1023 = arith.addf %1022, %1021 : vector<8x128xf32>
    %1024 = arith.divf %1022, %1023 : vector<8x128xf32>
    %1025 = vector.extract_strided_slice %1010 {offsets = [0, 256], sizes = [8, 128], strides = [1, 1]} : vector<8x512xf32> to vector<8x128xf32>
    %1026 = math.tanh %1025 : vector<8x128xf32>
    %1027 = vector.extract_strided_slice %1010 {offsets = [0, 384], sizes = [8, 128], strides = [1, 1]} : vector<8x512xf32> to vector<8x128xf32>
    %1028 = arith.negf %1027 : vector<8x128xf32>
    %1029 = math.exp %1028 : vector<8x128xf32>
    %cst_534 = arith.constant 1.000000e+00 : f32
    %1030 = vector.broadcast %cst_534 : f32 to vector<8x128xf32>
    %1031 = arith.addf %1030, %1029 : vector<8x128xf32>
    %1032 = arith.divf %1030, %1031 : vector<8x128xf32>
    %1033 = arith.mulf %1024, %1012 : vector<8x128xf32>
    %1034 = arith.mulf %1018, %1026 : vector<8x128xf32>
    %1035 = arith.addf %1033, %1034 : vector<8x128xf32>
    %1036 = math.tanh %1035 : vector<8x128xf32>
    %1037 = arith.mulf %1032, %1036 : vector<8x128xf32>
    %c1_535 = arith.constant 1 : index
    %c0_536 = arith.constant 0 : index
    %c0_537 = arith.constant 0 : index
    %1038 = vector.load %arg10[%c1_535, %c0_536, %c0_537] : memref<3x8x128xf32, #tpu.memory_space<vmem>>, vector<1x8x128xf32>
    %1039 = vector.shape_cast %1038 : vector<1x8x128xf32> to vector<8x128xf32>
    %1040 = vector.shape_cast %1037 : vector<8x128xf32> to vector<1x8x128xf32>
    tpu.vector_store %arg10[%c1_535, %c0_536, %c0_537], %1040 {strides = array<i32>} : memref<3x8x128xf32, #tpu.memory_space<vmem>>, vector<1x8x128xf32>,
    %c1_538 = arith.constant 1 : index
    %c0_539 = arith.constant 0 : index
    %c0_540 = arith.constant 0 : index
    %1041 = vector.load %arg11[%c1_538, %c0_539, %c0_540] : memref<3x8x128xf32, #tpu.memory_space<vmem>>, vector<1x8x128xf32>
    %1042 = vector.shape_cast %1041 : vector<1x8x128xf32> to vector<8x128xf32>
    %1043 = vector.shape_cast %1035 : vector<8x128xf32> to vector<1x8x128xf32>
    tpu.vector_store %arg11[%c1_538, %c0_539, %c0_540], %1043 {strides = array<i32>} : memref<3x8x128xf32, #tpu.memory_space<vmem>>, vector<1x8x128xf32>,
    %c2_541 = arith.constant 2 : index
    %c0_542 = arith.constant 0 : index
    %c0_543 = arith.constant 0 : index
    %1044 = vector.load %arg10[%c2_541, %c0_542, %c0_543] : memref<3x8x128xf32, #tpu.memory_space<vmem>>, vector<1x8x128xf32>
    %1045 = vector.shape_cast %1044 : vector<1x8x128xf32> to vector<8x128xf32>
    %1046 = tpu.concatenate %1037, %1045 in 1 : vector<8x128xf32>, vector<8x128xf32> -> vector<8x256xf32>
    %c1_544 = arith.constant 1 : index
    %c0_545 = arith.constant 0 : index
    %c0_546 = arith.constant 0 : index
    %1047 = vector.load %arg3[%c1_544, %c0_545, %c0_546] : memref<2x256x512xf32, #tpu.memory_space<vmem>>, vector<1x256x512xf32>
    %1048 = vector.shape_cast %1047 : vector<1x256x512xf32> to vector<256x512xf32>
    %cst_547 = arith.constant dense<0.000000e+00> : vector<8x512xf32>
    %1049 = tpu.matmul %1046, %1048, %cst_547 {dimension_numbers = #tpu.dot_dimension_numbers<[1], [0], [0], [1], [0, 0, 1, 1], [], []>} : vector<8x256xf32>, vector<256x512xf32>, vector<8x512xf32> -> vector<8x512xf32>
    %c2_548 = arith.constant 2 : index
    %c0_549 = arith.constant 0 : index
    %c0_550 = arith.constant 0 : index
    %1050 = vector.load %arg4[%c2_548, %c0_549, %c0_550] : memref<3x1x512xf32, #tpu.memory_space<vmem>>, vector<1x1x512xf32>
    %1051 = vector.shape_cast %1050 : vector<1x1x512xf32> to vector<1x512xf32>
    %1052 = vector.broadcast %1051 : vector<1x512xf32> to vector<8x512xf32>
    %1053 = arith.addf %1049, %1052 : vector<8x512xf32>
    %c2_551 = arith.constant 2 : index
    %c0_552 = arith.constant 0 : index
    %c0_553 = arith.constant 0 : index
    %1054 = vector.load %arg11[%c2_551, %c0_552, %c0_553] : memref<3x8x128xf32, #tpu.memory_space<vmem>>, vector<1x8x128xf32>
    %1055 = vector.shape_cast %1054 : vector<1x8x128xf32> to vector<8x128xf32>
    %1056 = vector.extract_strided_slice %1053 {offsets = [0, 0], sizes = [8, 128], strides = [1, 1]} : vector<8x512xf32> to vector<8x128xf32>
    %1057 = arith.negf %1056 : vector<8x128xf32>
    %1058 = math.exp %1057 : vector<8x128xf32>
    %cst_554 = arith.constant 1.000000e+00 : f32
    %1059 = vector.broadcast %cst_554 : f32 to vector<8x128xf32>
    %1060 = arith.addf %1059, %1058 : vector<8x128xf32>
    %1061 = arith.divf %1059, %1060 : vector<8x128xf32>
    %1062 = vector.extract_strided_slice %1053 {offsets = [0, 128], sizes = [8, 128], strides = [1, 1]} : vector<8x512xf32> to vector<8x128xf32>
    %1063 = arith.negf %1062 : vector<8x128xf32>
    %1064 = math.exp %1063 : vector<8x128xf32>
    %cst_555 = arith.constant 1.000000e+00 : f32
    %1065 = vector.broadcast %cst_555 : f32 to vector<8x128xf32>
    %1066 = arith.addf %1065, %1064 : vector<8x128xf32>
    %1067 = arith.divf %1065, %1066 : vector<8x128xf32>
    %1068 = vector.extract_strided_slice %1053 {offsets = [0, 256], sizes = [8, 128], strides = [1, 1]} : vector<8x512xf32> to vector<8x128xf32>
    %1069 = math.tanh %1068 : vector<8x128xf32>
    %1070 = vector.extract_strided_slice %1053 {offsets = [0, 384], sizes = [8, 128], strides = [1, 1]} : vector<8x512xf32> to vector<8x128xf32>
    %1071 = arith.negf %1070 : vector<8x128xf32>
    %1072 = math.exp %1071 : vector<8x128xf32>
    %cst_556 = arith.constant 1.000000e+00 : f32
    %1073 = vector.broadcast %cst_556 : f32 to vector<8x128xf32>
    %1074 = arith.addf %1073, %1072 : vector<8x128xf32>
    %1075 = arith.divf %1073, %1074 : vector<8x128xf32>
    %1076 = arith.mulf %1067, %1055 : vector<8x128xf32>
    %1077 = arith.mulf %1061, %1069 : vector<8x128xf32>
    %1078 = arith.addf %1076, %1077 : vector<8x128xf32>
    %1079 = math.tanh %1078 : vector<8x128xf32>
    %1080 = arith.mulf %1075, %1079 : vector<8x128xf32>
    %c2_557 = arith.constant 2 : index
    %c0_558 = arith.constant 0 : index
    %c0_559 = arith.constant 0 : index
    %1081 = vector.load %arg10[%c2_557, %c0_558, %c0_559] : memref<3x8x128xf32, #tpu.memory_space<vmem>>, vector<1x8x128xf32>
    %1082 = vector.shape_cast %1081 : vector<1x8x128xf32> to vector<8x128xf32>
    %1083 = vector.shape_cast %1080 : vector<8x128xf32> to vector<1x8x128xf32>
    tpu.vector_store %arg10[%c2_557, %c0_558, %c0_559], %1083 {strides = array<i32>} : memref<3x8x128xf32, #tpu.memory_space<vmem>>, vector<1x8x128xf32>,
    %c2_560 = arith.constant 2 : index
    %c0_561 = arith.constant 0 : index
    %c0_562 = arith.constant 0 : index
    %1084 = vector.load %arg11[%c2_560, %c0_561, %c0_562] : memref<3x8x128xf32, #tpu.memory_space<vmem>>, vector<1x8x128xf32>
    %1085 = vector.shape_cast %1084 : vector<1x8x128xf32> to vector<8x128xf32>
    %1086 = vector.shape_cast %1078 : vector<8x128xf32> to vector<1x8x128xf32>
    tpu.vector_store %arg11[%c2_560, %c0_561, %c0_562], %1086 {strides = array<i32>} : memref<3x8x128xf32, #tpu.memory_space<vmem>>, vector<1x8x128xf32>,
    %1087 = arith.index_cast %c7_i32 : i32 to index
    %c0_563 = arith.constant 0 : index
    %c0_564 = arith.constant 0 : index
    %1088 = vector.load %arg13[%1087, %c0_563, %c0_564] : memref<8x8x128xf32, #tpu.memory_space<vmem>>, vector<1x8x128xf32>
    %1089 = vector.shape_cast %1088 : vector<1x8x128xf32> to vector<8x128xf32>
    %1090 = vector.shape_cast %1080 : vector<8x128xf32> to vector<1x8x128xf32>
    tpu.vector_store %arg13[%1087, %c0_563, %c0_564], %1090 {strides = array<i32>} : memref<8x8x128xf32, #tpu.memory_space<vmem>>, vector<1x8x128xf32>,
    %c8_i32 = arith.constant 8 : i32
    %c0_565 = arith.constant 0 : index
    %c0_566 = arith.constant 0 : index
    %c0_567 = arith.constant 0 : index
    %1091 = vector.load %arg13[%c0_565, %c0_566, %c0_567] : memref<8x8x128xf32, #tpu.memory_space<vmem>>, vector<8x8x128xf32>
    %1092 = tpu.transpose %1091, [1, 0, 2] : vector<8x8x128xf32> -> vector<8x8x128xf32>
    %1093 = vector.shape_cast %1092 : vector<8x8x128xf32> to vector<64x128xf32>
    %c0_568 = arith.constant 0 : index
    %c0_569 = arith.constant 0 : index
    %1094 = vector.load %arg5[%c0_568, %c0_569] : memref<128x128xf32, #tpu.memory_space<vmem>>, vector<128x128xf32>
    %cst_570 = arith.constant dense<0.000000e+00> : vector<64x128xf32>
    %1095 = tpu.matmul %1093, %1094, %cst_570 {dimension_numbers = #tpu.dot_dimension_numbers<[1], [0], [0], [1], [0, 0, 1, 1], [], []>} : vector<64x128xf32>, vector<128x128xf32>, vector<64x128xf32> -> vector<64x128xf32>
    %c0_571 = arith.constant 0 : index
    %c0_572 = arith.constant 0 : index
    %1096 = vector.load %arg6[%c0_571, %c0_572] : memref<1x128xf32, #tpu.memory_space<vmem>>, vector<1x128xf32>
    %1097 = vector.broadcast %1096 : vector<1x128xf32> to vector<64x128xf32>
    %1098 = arith.addf %1095, %1097 : vector<64x128xf32>
    %cst_573 = arith.constant 0.000000e+00 : f32
    %1099 = vector.broadcast %cst_573 : f32 to vector<64x128xf32>
    %1100 = arith.maximumf %1098, %1099 : vector<64x128xf32>
    %c0_574 = arith.constant 0 : index
    %c0_575 = arith.constant 0 : index
    %1101 = vector.load %arg7[%c0_574, %c0_575] : memref<1x128xf32, #tpu.memory_space<vmem>>, vector<1x128xf32>
    %1102 = vector.broadcast %1101 : vector<1x128xf32> to vector<64x128xf32>
    %1103 = arith.mulf %1100, %1102 : vector<64x128xf32>
    %cst_576 = arith.constant dense<0.000000e+00> : vector<64xf32>
    %1104 = vector.multi_reduction <add>, %1103, %cst_576 [1] : vector<64x128xf32> to vector<64xf32>
    %1105 = vector.shape_cast %1104 : vector<64xf32> to vector<64x1xf32>
    %c0_577 = arith.constant 0 : index
    %c0_578 = arith.constant 0 : index
    %1106 = vector.load %arg8[%c0_577, %c0_578] : memref<1x1xf32, #tpu.memory_space<vmem>>, vector<1x1xf32>
    %1107 = vector.broadcast %1106 : vector<1x1xf32> to vector<64x1xf32>
    %1108 = arith.addf %1105, %1107 : vector<64x1xf32>
    %c0_579 = arith.constant 0 : index
    %c0_580 = arith.constant 0 : index
    %1109 = vector.load %arg9[%c0_579, %c0_580] : memref<64x1xf32, #tpu.memory_space<vmem>>, vector<64x1xf32>
    tpu.vector_store %arg9[%c0_579, %c0_580], %1108 {strides = array<i32>} : memref<64x1xf32, #tpu.memory_space<vmem>>, vector<64x1xf32>,
    return
  }
}

</mosaic_0001>

<llo_original>
// kernel: decoder_rnn_forward.1
$region0: #{decoder_rnn_forward.1}
  #allocation0 [shape = 'u32[]', space=smem, size = 0x4, offset = 0x4, fixed_abs, tag = 'smem constant byte address 0x4 - core index']
  #allocation1 [shape = 'u32[144,128]{1,0:T(1,128)}', space=vmem, size = 0x12000, scoped, tag = 'internal scratch']
  #allocation2 [shape = 'f32[8,8,512]{2,1,0:T(8,128)}', space=vmem, size = 0x20000, scoped, tag = 'scratch operand']
  #allocation3 [shape = 'f32[8,8,128]{2,1,0:T(8,128)}', space=vmem, size = 0x8000, scoped, tag = 'scratch operand']
  #allocation4 [shape = 'f32[1,1]{1,0:T(1,128)S(1)}', space=vmem, size = 0x200, scoped, tag = 'scoped memory for decoder_rnn_forward.1']
  %s0 = inlined_call_operand.vmem [shape: f32[8,8,64], index: 0, kind: input, shape index: {}]
  %s1 = inlined_call_operand.vmem [shape: f32[64,512], index: 1, kind: input, shape index: {}]
  %s2 = inlined_call_operand.vmem [shape: f32[128,512], index: 2, kind: input, shape index: {}]
  %s3 = inlined_call_operand.vmem [shape: f32[2,256,512], index: 3, kind: input, shape index: {}]
  %s4 = inlined_call_operand.vmem [shape: f32[3,1,512], index: 4, kind: input, shape index: {}]
  %s5 = inlined_call_operand.vmem [shape: f32[128,128], index: 5, kind: input, shape index: {}]
  %s6 = inlined_call_operand.vmem [shape: f32[1,128], index: 6, kind: input, shape index: {}]
  %s7 = inlined_call_operand.vmem [shape: f32[1,128], index: 7, kind: input, shape index: {}]
  %s8 = inlined_call_operand.<no memory space> [shape: f32[1,1], index: 8, kind: input, shape index: {}]
  %s9 = inlined_call_operand.vmem [shape: f32[64,1], index: 9, kind: output, shape index: {0}]
  %s10 = inlined_call_operand.vmem [shape: f32[3,8,128], index: 10, kind: output, shape index: {1}]
  %s11 = inlined_call_operand.vmem [shape: f32[3,8,128], index: 11, kind: output, shape index: {2}]
  %12 = xla_tuple %s9, %s10, %s11
  %s13 = sld [smem:[#allocation0]]
  $region62: #{decoder_rnn_forward.1} parent=0
    _
  %s15 = ssub.s32 1, %s13
  %s16 = scalar_select 0, %s15, %s13
  %v17 = vstv %s8
  %18 = vst [vmem:[#allocation4] sm:$0x1] %v17
  // Predicated region
  $region2: #{decoder_rnn_forward.1} parent=0 // pred_check
    _
  $region3: #{decoder_rnn_forward.1} parent=0 // pred_check_branch
    %20 = sbr.rel (0) target = $region5
  $region4: #{decoder_rnn_forward.1} parent=0 // pred_region
    _
  $region5: #{decoder_rnn_forward.1} parent=0 // pred_fallthru
    _
  // Predicated region
  $region6: #{decoder_rnn_forward.1} parent=0 // pred_check
    _
  $region7: #{decoder_rnn_forward.1} parent=0 // pred_check_branch
    %22 = sbr.rel (0) target = $region9
  $region8: #{decoder_rnn_forward.1} parent=0 // pred_region
    _
  $region9: #{decoder_rnn_forward.1} parent=0 // pred_fallthru
    _
  // Predicated region
  $region10: #{decoder_rnn_forward.1} parent=0 // pred_check
    _
  $region11: #{decoder_rnn_forward.1} parent=0 // pred_check_branch
    %24 = sbr.rel (0) target = $region13
  $region12: #{decoder_rnn_forward.1} parent=0 // pred_region
    _
  $region13: #{decoder_rnn_forward.1} parent=0 // pred_fallthru
    _
  // Predicated region
  $region14: #{decoder_rnn_forward.1} parent=0 // pred_check
    _
  $region15: #{decoder_rnn_forward.1} parent=0 // pred_check_branch
    %26 = sbr.rel (0) target = $region17
  $region16: #{decoder_rnn_forward.1} parent=0 // pred_region
    _
  $region17: #{decoder_rnn_forward.1} parent=0 // pred_fallthru
    _
  // Predicated region
  $region18: #{decoder_rnn_forward.1} parent=0 // pred_check
    _
  $region19: #{decoder_rnn_forward.1} parent=0 // pred_check_branch
    %28 = sbr.rel (0) target = $region21
  $region20: #{decoder_rnn_forward.1} parent=0 // pred_region
    _
  $region21: #{decoder_rnn_forward.1} parent=0 // pred_fallthru
    _
  // Predicated region
  $region22: #{decoder_rnn_forward.1} parent=0 // pred_check
    _
  $region23: #{decoder_rnn_forward.1} parent=0 // pred_check_branch
    %30 = sbr.rel (0) target = $region25
  $region24: #{decoder_rnn_forward.1} parent=0 // pred_region
    _
  $region25: #{decoder_rnn_forward.1} parent=0 // pred_fallthru
    _
  // Predicated region
  $region26: #{decoder_rnn_forward.1} parent=0 // pred_check
    _
  $region27: #{decoder_rnn_forward.1} parent=0 // pred_check_branch
    %32 = sbr.rel (0) target = $region29
  $region28: #{decoder_rnn_forward.1} parent=0 // pred_region
    _
  $region29: #{decoder_rnn_forward.1} parent=0 // pred_fallthru
    _
  // Predicated region
  $region30: #{decoder_rnn_forward.1} parent=0 // pred_check
    _
  $region31: #{decoder_rnn_forward.1} parent=0 // pred_check_branch
    %34 = sbr.rel (0) target = $region33
  $region32: #{decoder_rnn_forward.1} parent=0 // pred_region
    _
  $region33: #{decoder_rnn_forward.1} parent=0 // pred_fallthru
    _
  // Predicated region
  $region34: #{decoder_rnn_forward.1} parent=0 // pred_check
    _
  $region35: #{decoder_rnn_forward.1} parent=0 // pred_check_branch
    %36 = sbr.rel (0) target = $region37
  $region36: #{decoder_rnn_forward.1} parent=0 // pred_region
    _
  $region37: #{decoder_rnn_forward.1} parent=0 // pred_fallthru
    _
  %37 = vst [vmem:[%s10] sm:$0xff] 0.0
  %38 = vst [vmem:[%s10 + $0x8] sm:$0xff] 0.0
  %39 = vst [vmem:[%s10 + $0x10] sm:$0xff] 0.0
  %40 = vst [vmem:[%s11] sm:$0xff] 0.0
  %41 = vst [vmem:[%s11 + $0x8] sm:$0xff] 0.0
  %42 = vst [vmem:[%s11 + $0x10] sm:$0xff] 0.0
  %v43 = vld [vmem:[%s0] sm:$0xff]
  %v44 = vld [vmem:[%s0 + $0x8] sm:$0xff]
  %v45 = vld [vmem:[%s0 + $0x10] sm:$0xff]
  %v46 = vld [vmem:[%s0 + $0x18] sm:$0xff]
  %v47 = vld [vmem:[%s0 + $0x20] sm:$0xff]
  %v48 = vld [vmem:[%s0 + $0x28] sm:$0xff]
  %v49 = vld [vmem:[%s0 + $0x30] sm:$0xff]
  %v50 = vld [vmem:[%s0 + $0x38] sm:$0xff]
  %v51 = vld [vmem:[%s1] sm:$0xff]
  %v52 = vld [vmem:[%s1 + $0x8] sm:$0xff]
  %v53 = vld [vmem:[%s1 + $0x10] sm:$0xff]
  %v54 = vld [vmem:[%s1 + $0x18] sm:$0xff]
  %v55 = vld [vmem:[%s1 + $0x20] sm:$0xff]
  %v56 = vld [vmem:[%s1 + $0x28] sm:$0xff]
  %v57 = vld [vmem:[%s1 + $0x30] sm:$0xff]
  %v58 = vld [vmem:[%s1 + $0x38] sm:$0xff]
  %v59 = vld [vmem:[%s1 + $0x40] sm:$0xff]
  %v60 = vld [vmem:[%s1 + $0x48] sm:$0xff]
  %v61 = vld [vmem:[%s1 + $0x50] sm:$0xff]
  %v62 = vld [vmem:[%s1 + $0x58] sm:$0xff]
  %v63 = vld [vmem:[%s1 + $0x60] sm:$0xff]
  %v64 = vld [vmem:[%s1 + $0x68] sm:$0xff]
  %v65 = vld [vmem:[%s1 + $0x70] sm:$0xff]
  %v66 = vld [vmem:[%s1 + $0x78] sm:$0xff]
  %v67 = vld [vmem:[%s1 + $0x80] sm:$0xff]
  %v68 = vld [vmem:[%s1 + $0x88] sm:$0xff]
  %v69 = vld [vmem:[%s1 + $0x90] sm:$0xff]
  %v70 = vld [vmem:[%s1 + $0x98] sm:$0xff]
  %v71 = vld [vmem:[%s1 + $0xa0] sm:$0xff]
  %v72 = vld [vmem:[%s1 + $0xa8] sm:$0xff]
  %v73 = vld [vmem:[%s1 + $0xb0] sm:$0xff]
  %v74 = vld [vmem:[%s1 + $0xb8] sm:$0xff]
  %v75 = vld [vmem:[%s1 + $0xc0] sm:$0xff]
  %v76 = vld [vmem:[%s1 + $0xc8] sm:$0xff]
  %v77 = vld [vmem:[%s1 + $0xd0] sm:$0xff]
  %v78 = vld [vmem:[%s1 + $0xd8] sm:$0xff]
  %v79 = vld [vmem:[%s1 + $0xe0] sm:$0xff]
  %v80 = vld [vmem:[%s1 + $0xe8] sm:$0xff]
  %v81 = vld [vmem:[%s1 + $0xf0] sm:$0xff]
  %v82 = vld [vmem:[%s1 + $0xf8] sm:$0xff]
  %vm83 = vcmask 523264
  %v85 = vsel %vm83, %v43, 0
  %v88 = vsel %vm83, %v44, 0
  %v91 = vsel %vm83, %v45, 0
  %v94 = vsel %vm83, %v46, 0
  %v97 = vsel %vm83, %v47, 0
  %v100 = vsel %vm83, %v48, 0
  %v103 = vsel %vm83, %v49, 0
  %v106 = vsel %vm83, %v50, 0
  %108 = vmatprep.subr.mxu0 %v52
  %109 = vmatpush1.msra.mxu0 %v51
  %110 = vmatprep.subr.mxu0 %v56
  %111 = vmatpush1.msra.mxu0 %v55
  %112 = vmatprep.subr.mxu0 %v60
  %113 = vmatpush1.msra.mxu0 %v59
  %114 = vmatprep.subr.mxu0 %v64
  %115 = vmatpush1.msra.mxu0 %v63
  %116 = vmatprep.subr.mxu0 %v68
  %117 = vmatpush1.msra.mxu0 %v67
  %118 = vmatprep.subr.mxu0 %v72
  %119 = vmatpush1.msra.mxu0 %v71
  %120 = vmatprep.subr.mxu0 %v76
  %121 = vmatpush1.msra.mxu0 %v75
  %122 = vmatprep.subr.mxu0 %v80
  %123 = vmatpush1.msra.mxu0 %v79
  %124 = vmatprep.subr.mxu0 0.0
  %125 = vmatpush1.msra.mxu0 0.0
  %126 = vmatprep.subr.mxu0 0.0
  %127 = vmatpush1.msra.mxu0 0.0
  %128 = vmatprep.subr.mxu0 0.0
  %129 = vmatpush1.msra.mxu0 0.0
  %130 = vmatprep.subr.mxu0 0.0
  %131 = vmatpush1.msra.mxu0 0.0
  %132 = vmatprep.subr.mxu0 0.0
  %133 = vmatpush1.msra.mxu0 0.0
  %134 = vmatprep.subr.mxu0 0.0
  %135 = vmatpush1.msra.mxu0 0.0
  %136 = vmatprep.subr.mxu0 0.0
  %137 = vmatpush1.msra.mxu0 0.0
  %138 = vmatprep.subr.mxu0 0.0
  %139 = vmatpush1.msra.mxu0 0.0
  %140 = vmatprep.subr.mxu0 0.0
  %141 = vmatpush1.msra.mxu0 0.0
  %142 = vmatprep.subr.mxu0 0.0
  %143 = vmatpush1.msra.mxu0 0.0
  %144 = vmatprep.subr.mxu0 0.0
  %145 = vmatpush1.msra.mxu0 0.0
  %146 = vmatprep.subr.mxu0 0.0
  %147 = vmatpush1.msra.mxu0 0.0
  %148 = vmatprep.subr.mxu0 0.0
  %149 = vmatpush1.msra.mxu0 0.0
  %150 = vmatprep.subr.mxu0 0.0
  %151 = vmatpush1.msra.mxu0 0.0
  %152 = vmatprep.subr.mxu0 0.0
  %153 = vmatpush1.msra.mxu0 0.0
  %154 = vmatprep.subr.mxu0 0.0
  %155 = vmatpush1.msra.mxu0 0.0
  %156 = vmatprep.subr.mxu0 0.0
  %157 = vmatpush1.msra.mxu0 0.0
  %158 = vmatprep.subr.mxu0 0.0
  %159 = vmatpush1.msra.mxu0 0.0
  %160 = vmatprep.subr.mxu0 0.0
  %161 = vmatpush1.msra.mxu0 0.0
  %162 = vmatprep.subr.mxu0 0.0
  %163 = vmatpush1.msra.mxu0 0.0
  %164 = vmatprep.subr.mxu0 0.0
  %165 = vmatpush1.msra.mxu0 0.0
  %166 = vmatprep.subr.mxu0 0.0
  %167 = vmatpush1.msra.mxu0 0.0
  %168 = vmatprep.subr.mxu0 0.0
  %169 = vmatpush1.msra.mxu0 0.0
  %170 = vmatprep.subr.mxu0 0.0
  %171 = vmatpush1.msra.mxu0 0.0
  %172 = vmatprep.mubr.f32.mxu0 0.0
  %173 = vmatmul.mubr.f32.gmra.mrb[0].mxu0 %v85
  %v174 = vpop.f32.mrb[0].mxu0
  %v175 = vadd.f32 0.0, %v174
  %v176 = vpop.f32.mrb[0].mxu0
  %v177 = vadd.f32 0.0, %v176
  %178 = vmatprep.mubr.f32.mxu0 0.0
  %179 = vmatmul.mubr.f32.gmra.mrb[0].mxu0 %v88
  %v180 = vpop.f32.mrb[0].mxu0
  %v181 = vadd.f32 0.0, %v180
  %v182 = vpop.f32.mrb[0].mxu0
  %v183 = vadd.f32 0.0, %v182
  %184 = vmatprep.mubr.f32.mxu0 0.0
  %185 = vmatmul.mubr.f32.gmra.mrb[0].mxu0 %v91
  %v186 = vpop.f32.mrb[0].mxu0
  %v187 = vadd.f32 0.0, %v186
  %v188 = vpop.f32.mrb[0].mxu0
  %v189 = vadd.f32 0.0, %v188
  %190 = vmatprep.mubr.f32.mxu0 0.0
  %191 = vmatmul.mubr.f32.gmra.mrb[0].mxu0 %v94
  %v192 = vpop.f32.mrb[0].mxu0
  %v193 = vadd.f32 0.0, %v192
  %v194 = vpop.f32.mrb[0].mxu0
  %v195 = vadd.f32 0.0, %v194
  %196 = vmatprep.mubr.f32.mxu0 0.0
  %197 = vmatmul.mubr.f32.gmra.mrb[0].mxu0 %v97
  %v198 = vpop.f32.mrb[0].mxu0
  %v199 = vadd.f32 0.0, %v198
  %v200 = vpop.f32.mrb[0].mxu0
  %v201 = vadd.f32 0.0, %v200
  %202 = vmatprep.mubr.f32.mxu0 0.0
  %203 = vmatmul.mubr.f32.gmra.mrb[0].mxu0 %v100
  %v204 = vpop.f32.mrb[0].mxu0
  %v205 = vadd.f32 0.0, %v204
  %v206 = vpop.f32.mrb[0].mxu0
  %v207 = vadd.f32 0.0, %v206
  %208 = vmatprep.mubr.f32.mxu0 0.0
  %209 = vmatmul.mubr.f32.gmra.mrb[0].mxu0 %v103
  %v210 = vpop.f32.mrb[0].mxu0
  %v211 = vadd.f32 0.0, %v210
  %v212 = vpop.f32.mrb[0].mxu0
  %v213 = vadd.f32 0.0, %v212
  %214 = vmatprep.mubr.f32.mxu0 0.0
  %215 = vmatmul.mubr.f32.gmra.mrb[0].mxu0 %v106
  %v216 = vpop.f32.mrb[0].mxu0
  %v217 = vadd.f32 0.0, %v216
  %v218 = vpop.f32.mrb[0].mxu0
  %v219 = vadd.f32 0.0, %v218
  %220 = vdwg.mxu0
  %221 = vmatprep.subr.mxu0 %v54
  %222 = vmatpush1.msra.mxu0 %v53
  %223 = vmatprep.subr.mxu0 %v58
  %224 = vmatpush1.msra.mxu0 %v57
  %225 = vmatprep.subr.mxu0 %v62
  %226 = vmatpush1.msra.mxu0 %v61
  %227 = vmatprep.subr.mxu0 %v66
  %228 = vmatpush1.msra.mxu0 %v65
  %229 = vmatprep.subr.mxu0 %v70
  %230 = vmatpush1.msra.mxu0 %v69
  %231 = vmatprep.subr.mxu0 %v74
  %232 = vmatpush1.msra.mxu0 %v73
  %233 = vmatprep.subr.mxu0 %v78
  %234 = vmatpush1.msra.mxu0 %v77
  %235 = vmatprep.subr.mxu0 %v82
  %236 = vmatpush1.msra.mxu0 %v81
  %237 = vmatprep.subr.mxu0 0.0
  %238 = vmatpush1.msra.mxu0 0.0
  %239 = vmatprep.subr.mxu0 0.0
  %240 = vmatpush1.msra.mxu0 0.0
  %241 = vmatprep.subr.mxu0 0.0
  %242 = vmatpush1.msra.mxu0 0.0
  %243 = vmatprep.subr.mxu0 0.0
  %244 = vmatpush1.msra.mxu0 0.0
  %245 = vmatprep.subr.mxu0 0.0
  %246 = vmatpush1.msra.mxu0 0.0
  %247 = vmatprep.subr.mxu0 0.0
  %248 = vmatpush1.msra.mxu0 0.0
  %249 = vmatprep.subr.mxu0 0.0
  %250 = vmatpush1.msra.mxu0 0.0
  %251 = vmatprep.subr.mxu0 0.0
  %252 = vmatpush1.msra.mxu0 0.0
  %253 = vmatprep.subr.mxu0 0.0
  %254 = vmatpush1.msra.mxu0 0.0
  %255 = vmatprep.subr.mxu0 0.0
  %256 = vmatpush1.msra.mxu0 0.0
  %257 = vmatprep.subr.mxu0 0.0
  %258 = vmatpush1.msra.mxu0 0.0
  %259 = vmatprep.subr.mxu0 0.0
  %260 = vmatpush1.msra.mxu0 0.0
  %261 = vmatprep.subr.mxu0 0.0
  %262 = vmatpush1.msra.mxu0 0.0
  %263 = vmatprep.subr.mxu0 0.0
  %264 = vmatpush1.msra.mxu0 0.0
  %265 = vmatprep.subr.mxu0 0.0
  %266 = vmatpush1.msra.mxu0 0.0
  %267 = vmatprep.subr.mxu0 0.0
  %268 = vmatpush1.msra.mxu0 0.0
  %269 = vmatprep.subr.mxu0 0.0
  %270 = vmatpush1.msra.mxu0 0.0
  %271 = vmatprep.subr.mxu0 0.0
  %272 = vmatpush1.msra.mxu0 0.0
  %273 = vmatprep.subr.mxu0 0.0
  %274 = vmatpush1.msra.mxu0 0.0
  %275 = vmatprep.subr.mxu0 0.0
  %276 = vmatpush1.msra.mxu0 0.0
  %277 = vmatprep.subr.mxu0 0.0
  %278 = vmatpush1.msra.mxu0 0.0
  %279 = vmatprep.subr.mxu0 0.0
  %280 = vmatpush1.msra.mxu0 0.0
  %281 = vmatprep.subr.mxu0 0.0
  %282 = vmatpush1.msra.mxu0 0.0
  %283 = vmatprep.subr.mxu0 0.0
  %284 = vmatpush1.msra.mxu0 0.0
  %285 = vmatprep.mubr.f32.mxu0 0.0
  %286 = vmatmul.mubr.f32.gmra.mrb[0].mxu0 %v85
  %v287 = vpop.f32.mrb[0].mxu0
  %v288 = vadd.f32 0.0, %v287
  %v289 = vpop.f32.mrb[0].mxu0
  %v290 = vadd.f32 0.0, %v289
  %291 = vmatprep.mubr.f32.mxu0 0.0
  %292 = vmatmul.mubr.f32.gmra.mrb[0].mxu0 %v88
  %v293 = vpop.f32.mrb[0].mxu0
  %v294 = vadd.f32 0.0, %v293
  %v295 = vpop.f32.mrb[0].mxu0
  %v296 = vadd.f32 0.0, %v295
  %297 = vmatprep.mubr.f32.mxu0 0.0
  %298 = vmatmul.mubr.f32.gmra.mrb[0].mxu0 %v91
  %v299 = vpop.f32.mrb[0].mxu0
  %v300 = vadd.f32 0.0, %v299
  %v301 = vpop.f32.mrb[0].mxu0
  %v302 = vadd.f32 0.0, %v301
  %303 = vmatprep.mubr.f32.mxu0 0.0
  %304 = vmatmul.mubr.f32.gmra.mrb[0].mxu0 %v94
  %v305 = vpop.f32.mrb[0].mxu0
  %v306 = vadd.f32 0.0, %v305
  %v307 = vpop.f32.mrb[0].mxu0
  %v308 = vadd.f32 0.0, %v307
  %309 = vmatprep.mubr.f32.mxu0 0.0
  %310 = vmatmul.mubr.f32.gmra.mrb[0].mxu0 %v97
  %v311 = vpop.f32.mrb[0].mxu0
  %v312 = vadd.f32 0.0, %v311
  %v313 = vpop.f32.mrb[0].mxu0
  %v314 = vadd.f32 0.0, %v313
  %315 = vmatprep.mubr.f32.mxu0 0.0
  %316 = vmatmul.mubr.f32.gmra.mrb[0].mxu0 %v100
  %v317 = vpop.f32.mrb[0].mxu0
  %v318 = vadd.f32 0.0, %v317
  %v319 = vpop.f32.mrb[0].mxu0
  %v320 = vadd.f32 0.0, %v319
  %321 = vmatprep.mubr.f32.mxu0 0.0
  %322 = vmatmul.mubr.f32.gmra.mrb[0].mxu0 %v103
  %v323 = vpop.f32.mrb[0].mxu0
  %v324 = vadd.f32 0.0, %v323
  %v325 = vpop.f32.mrb[0].mxu0
  %v326 = vadd.f32 0.0, %v325
  %327 = vmatprep.mubr.f32.mxu0 0.0
  %328 = vmatmul.mubr.f32.gmra.mrb[0].mxu0 %v106
  %v329 = vpop.f32.mrb[0].mxu0
  %v330 = vadd.f32 0.0, %v329
  %v331 = vpop.f32.mrb[0].mxu0
  %v332 = vadd.f32 0.0, %v331
  %333 = vdwg.mxu0
  %v334 = vcombine.low %v175, %v187
  %v335 = vcombine.high %v175, %v187
  %v337 = vunpack.c.l.s4 1983009808
  %v338 = vunpack.c.0.s8 %v337
  %v339 = vlaneseq
  %v340 = vshrl.u32 %v339, 7
  %v341 = vsub.s32 %v338, %v340
  %v342 = vrot.slane %v334, %v341
  %v344 = vunpack.c.l.s4 1983009808
  %v345 = vunpack.c.0.s8 %v344
  %v346 = vlaneseq
  %v347 = vshrl.u32 %v346, 7
  %v348 = vsub.s32 %v345, %v347
  %v349 = vrot.slane %v335, %v348
  %v350 = vcombine.low %v181, %v193
  %v351 = vcombine.high %v181, %v193
  %v353 = vunpack.c.l.s4 1983009808
  %v354 = vunpack.c.0.s8 %v353
  %v355 = vlaneseq
  %v356 = vshrl.u32 %v355, 7
  %v357 = vsub.s32 %v354, %v356
  %v358 = vrot.slane %v350, %v357
  %v360 = vunpack.c.l.s4 1983009808
  %v361 = vunpack.c.0.s8 %v360
  %v362 = vlaneseq
  %v363 = vshrl.u32 %v362, 7
  %v364 = vsub.s32 %v361, %v363
  %v365 = vrot.slane %v351, %v364
  %v366 = vcombine.low %v199, %v211
  %v367 = vcombine.high %v199, %v211
  %v369 = vunpack.c.l.s4 1983009808
  %v370 = vunpack.c.0.s8 %v369
  %v371 = vlaneseq
  %v372 = vshrl.u32 %v371, 7
  %v373 = vsub.s32 %v370, %v372
  %v374 = vrot.slane %v366, %v373
  %v376 = vunpack.c.l.s4 1983009808
  %v377 = vunpack.c.0.s8 %v376
  %v378 = vlaneseq
  %v379 = vshrl.u32 %v378, 7
  %v380 = vsub.s32 %v377, %v379
  %v381 = vrot.slane %v367, %v380
  %v382 = vcombine.low %v205, %v217
  %v383 = vcombine.high %v205, %v217
  %v385 = vunpack.c.l.s4 1983009808
  %v386 = vunpack.c.0.s8 %v385
  %v387 = vlaneseq
  %v388 = vshrl.u32 %v387, 7
  %v389 = vsub.s32 %v386, %v388
  %v390 = vrot.slane %v382, %v389
  %v392 = vunpack.c.l.s4 1983009808
  %v393 = vunpack.c.0.s8 %v392
  %v394 = vlaneseq
  %v395 = vshrl.u32 %v394, 7
  %v396 = vsub.s32 %v393, %v395
  %v397 = vrot.slane %v383, %v396
  %v398 = vcombine.low %v342, %v358
  %v399 = vcombine.high %v342, %v358
  %v401 = vunpack.c.l.s4 1934713408
  %v402 = vunpack.c.0.s8 %v401
  %v403 = vlaneseq
  %v404 = vshrl.u32 %v403, 7
  %v405 = vsub.s32 %v402, %v404
  %v406 = vrot.slane %v398, %v405
  %v408 = vunpack.c.l.s4 1934713408
  %v409 = vunpack.c.0.s8 %v408
  %v410 = vlaneseq
  %v411 = vshrl.u32 %v410, 7
  %v412 = vsub.s32 %v409, %v411
  %v413 = vrot.slane %v399, %v412
  %v414 = vcombine.low %v349, %v365
  %v415 = vcombine.high %v349, %v365
  %v417 = vunpack.c.l.s4 1934713408
  %v418 = vunpack.c.0.s8 %v417
  %v419 = vlaneseq
  %v420 = vshrl.u32 %v419, 7
  %v421 = vsub.s32 %v418, %v420
  %v422 = vrot.slane %v414, %v421
  %v424 = vunpack.c.l.s4 1934713408
  %v425 = vunpack.c.0.s8 %v424
  %v426 = vlaneseq
  %v427 = vshrl.u32 %v426, 7
  %v428 = vsub.s32 %v425, %v427
  %v429 = vrot.slane %v415, %v428
  %v430 = vcombine.low %v374, %v390
  %v431 = vcombine.high %v374, %v390
  %v433 = vunpack.c.l.s4 1934713408
  %v434 = vunpack.c.0.s8 %v433
  %v435 = vlaneseq
  %v436 = vshrl.u32 %v435, 7
  %v437 = vsub.s32 %v434, %v436
  %v438 = vrot.slane %v430, %v437
  %v440 = vunpack.c.l.s4 1934713408
  %v441 = vunpack.c.0.s8 %v440
  %v442 = vlaneseq
  %v443 = vshrl.u32 %v442, 7
  %v444 = vsub.s32 %v441, %v443
  %v445 = vrot.slane %v431, %v444
  %v446 = vcombine.low %v381, %v397
  %v447 = vcombine.high %v381, %v397
  %v449 = vunpack.c.l.s4 1934713408
  %v450 = vunpack.c.0.s8 %v449
  %v451 = vlaneseq
  %v452 = vshrl.u32 %v451, 7
  %v453 = vsub.s32 %v450, %v452
  %v454 = vrot.slane %v446, %v453
  %v456 = vunpack.c.l.s4 1934713408
  %v457 = vunpack.c.0.s8 %v456
  %v458 = vlaneseq
  %v459 = vshrl.u32 %v458, 7
  %v460 = vsub.s32 %v457, %v459
  %v461 = vrot.slane %v447, %v460
  %v462 = vcombine.low %v406, %v438
  %v463 = vcombine.high %v406, %v438
  %v464 = vcombine.low %v413, %v445
  %v465 = vcombine.high %v413, %v445
  %v466 = vcombine.low %v422, %v454
  %v467 = vcombine.high %v422, %v454
  %v468 = vcombine.low %v429, %v461
  %v469 = vcombine.high %v429, %v461
  %v470 = vcombine.low %v177, %v189
  %v471 = vcombine.high %v177, %v189
  %v473 = vunpack.c.l.s4 1983009808
  %v474 = vunpack.c.0.s8 %v473
  %v475 = vlaneseq
  %v476 = vshrl.u32 %v475, 7
  %v477 = vsub.s32 %v474, %v476
  %v478 = vrot.slane %v470, %v477
  %v480 = vunpack.c.l.s4 1983009808
  %v481 = vunpack.c.0.s8 %v480
  %v482 = vlaneseq
  %v483 = vshrl.u32 %v482, 7
  %v484 = vsub.s32 %v481, %v483
  %v485 = vrot.slane %v471, %v484
  %v486 = vcombine.low %v183, %v195
  %v487 = vcombine.high %v183, %v195
  %v489 = vunpack.c.l.s4 1983009808
  %v490 = vunpack.c.0.s8 %v489
  %v491 = vlaneseq
  %v492 = vshrl.u32 %v491, 7
  %v493 = vsub.s32 %v490, %v492
  %v494 = vrot.slane %v486, %v493
  %v496 = vunpack.c.l.s4 1983009808
  %v497 = vunpack.c.0.s8 %v496
  %v498 = vlaneseq
  %v499 = vshrl.u32 %v498, 7
  %v500 = vsub.s32 %v497, %v499
  %v501 = vrot.slane %v487, %v500
  %v502 = vcombine.low %v201, %v213
  %v503 = vcombine.high %v201, %v213
  %v505 = vunpack.c.l.s4 1983009808
  %v506 = vunpack.c.0.s8 %v505
  %v507 = vlaneseq
  %v508 = vshrl.u32 %v507, 7
  %v509 = vsub.s32 %v506, %v508
  %v510 = vrot.slane %v502, %v509
  %v512 = vunpack.c.l.s4 1983009808
  %v513 = vunpack.c.0.s8 %v512
  %v514 = vlaneseq
  %v515 = vshrl.u32 %v514, 7
  %v516 = vsub.s32 %v513, %v515
  %v517 = vrot.slane %v503, %v516
  %v518 = vcombine.low %v207, %v219
  %v519 = vcombine.high %v207, %v219
  %v521 = vunpack.c.l.s4 1983009808
  %v522 = vunpack.c.0.s8 %v521
  %v523 = vlaneseq
  %v524 = vshrl.u32 %v523, 7
  %v525 = vsub.s32 %v522, %v524
  %v526 = vrot.slane %v518, %v525
  %v528 = vunpack.c.l.s4 1983009808
  %v529 = vunpack.c.0.s8 %v528
  %v530 = vlaneseq
  %v531 = vshrl.u32 %v530, 7
  %v532 = vsub.s32 %v529, %v531
  %v533 = vrot.slane %v519, %v532
  %v534 = vcombine.low %v478, %v494
  %v535 = vcombine.high %v478, %v494
  %v537 = vunpack.c.l.s4 1934713408
  %v538 = vunpack.c.0.s8 %v537
  %v539 = vlaneseq
  %v540 = vshrl.u32 %v539, 7
  %v541 = vsub.s32 %v538, %v540
  %v542 = vrot.slane %v534, %v541
  %v544 = vunpack.c.l.s4 1934713408
  %v545 = vunpack.c.0.s8 %v544
  %v546 = vlaneseq
  %v547 = vshrl.u32 %v546, 7
  %v548 = vsub.s32 %v545, %v547
  %v549 = vrot.slane %v535, %v548
  %v550 = vcombine.low %v485, %v501
  %v551 = vcombine.high %v485, %v501
  %v553 = vunpack.c.l.s4 1934713408
  %v554 = vunpack.c.0.s8 %v553
  %v555 = vlaneseq
  %v556 = vshrl.u32 %v555, 7
  %v557 = vsub.s32 %v554, %v556
  %v558 = vrot.slane %v550, %v557
  %v560 = vunpack.c.l.s4 1934713408
  %v561 = vunpack.c.0.s8 %v560
  %v562 = vlaneseq
  %v563 = vshrl.u32 %v562, 7
  %v564 = vsub.s32 %v561, %v563
  %v565 = vrot.slane %v551, %v564
  %v566 = vcombine.low %v510, %v526
  %v567 = vcombine.high %v510, %v526
  %v569 = vunpack.c.l.s4 1934713408
  %v570 = vunpack.c.0.s8 %v569
  %v571 = vlaneseq
  %v572 = vshrl.u32 %v571, 7
  %v573 = vsub.s32 %v570, %v572
  %v574 = vrot.slane %v566, %v573
  %v576 = vunpack.c.l.s4 1934713408
  %v577 = vunpack.c.0.s8 %v576
  %v578 = vlaneseq
  %v579 = vshrl.u32 %v578, 7
  %v580 = vsub.s32 %v577, %v579
  %v581 = vrot.slane %v567, %v580
  %v582 = vcombine.low %v517, %v533
  %v583 = vcombine.high %v517, %v533
  %v585 = vunpack.c.l.s4 1934713408
  %v586 = vunpack.c.0.s8 %v585
  %v587 = vlaneseq
  %v588 = vshrl.u32 %v587, 7
  %v589 = vsub.s32 %v586, %v588
  %v590 = vrot.slane %v582, %v589
  %v592 = vunpack.c.l.s4 1934713408
  %v593 = vunpack.c.0.s8 %v592
  %v594 = vlaneseq
  %v595 = vshrl.u32 %v594, 7
  %v596 = vsub.s32 %v593, %v595
  %v597 = vrot.slane %v583, %v596
  %v598 = vcombine.low %v542, %v574
  %v599 = vcombine.high %v542, %v574
  %v600 = vcombine.low %v549, %v581
  %v601 = vcombine.high %v549, %v581
  %v602 = vcombine.low %v558, %v590
  %v603 = vcombine.high %v558, %v590
  %v604 = vcombine.low %v565, %v597
  %v605 = vcombine.high %v565, %v597
  %v606 = vcombine.low %v288, %v300
  %v607 = vcombine.high %v288, %v300
  %v609 = vunpack.c.l.s4 1983009808
  %v610 = vunpack.c.0.s8 %v609
  %v611 = vlaneseq
  %v612 = vshrl.u32 %v611, 7
  %v613 = vsub.s32 %v610, %v612
  %v614 = vrot.slane %v606, %v613
  %v616 = vunpack.c.l.s4 1983009808
  %v617 = vunpack.c.0.s8 %v616
  %v618 = vlaneseq
  %v619 = vshrl.u32 %v618, 7
  %v620 = vsub.s32 %v617, %v619
  %v621 = vrot.slane %v607, %v620
  %v622 = vcombine.low %v294, %v306
  %v623 = vcombine.high %v294, %v306
  %v625 = vunpack.c.l.s4 1983009808
  %v626 = vunpack.c.0.s8 %v625
  %v627 = vlaneseq
  %v628 = vshrl.u32 %v627, 7
  %v629 = vsub.s32 %v626, %v628
  %v630 = vrot.slane %v622, %v629
  %v632 = vunpack.c.l.s4 1983009808
  %v633 = vunpack.c.0.s8 %v632
  %v634 = vlaneseq
  %v635 = vshrl.u32 %v634, 7
  %v636 = vsub.s32 %v633, %v635
  %v637 = vrot.slane %v623, %v636
  %v638 = vcombine.low %v312, %v324
  %v639 = vcombine.high %v312, %v324
  %v641 = vunpack.c.l.s4 1983009808
  %v642 = vunpack.c.0.s8 %v641
  %v643 = vlaneseq
  %v644 = vshrl.u32 %v643, 7
  %v645 = vsub.s32 %v642, %v644
  %v646 = vrot.slane %v638, %v645
  %v648 = vunpack.c.l.s4 1983009808
  %v649 = vunpack.c.0.s8 %v648
  %v650 = vlaneseq
  %v651 = vshrl.u32 %v650, 7
  %v652 = vsub.s32 %v649, %v651
  %v653 = vrot.slane %v639, %v652
  %v654 = vcombine.low %v318, %v330
  %v655 = vcombine.high %v318, %v330
  %v657 = vunpack.c.l.s4 1983009808
  %v658 = vunpack.c.0.s8 %v657
  %v659 = vlaneseq
  %v660 = vshrl.u32 %v659, 7
  %v661 = vsub.s32 %v658, %v660
  %v662 = vrot.slane %v654, %v661
  %v664 = vunpack.c.l.s4 1983009808
  %v665 = vunpack.c.0.s8 %v664
  %v666 = vlaneseq
  %v667 = vshrl.u32 %v666, 7
  %v668 = vsub.s32 %v665, %v667
  %v669 = vrot.slane %v655, %v668
  %v670 = vcombine.low %v614, %v630
  %v671 = vcombine.high %v614, %v630
  %v673 = vunpack.c.l.s4 1934713408
  %v674 = vunpack.c.0.s8 %v673
  %v675 = vlaneseq
  %v676 = vshrl.u32 %v675, 7
  %v677 = vsub.s32 %v674, %v676
  %v678 = vrot.slane %v670, %v677
  %v680 = vunpack.c.l.s4 1934713408
  %v681 = vunpack.c.0.s8 %v680
  %v682 = vlaneseq
  %v683 = vshrl.u32 %v682, 7
  %v684 = vsub.s32 %v681, %v683
  %v685 = vrot.slane %v671, %v684
  %v686 = vcombine.low %v621, %v637
  %v687 = vcombine.high %v621, %v637
  %v689 = vunpack.c.l.s4 1934713408
  %v690 = vunpack.c.0.s8 %v689
  %v691 = vlaneseq
  %v692 = vshrl.u32 %v691, 7
  %v693 = vsub.s32 %v690, %v692
  %v694 = vrot.slane %v686, %v693
  %v696 = vunpack.c.l.s4 1934713408
  %v697 = vunpack.c.0.s8 %v696
  %v698 = vlaneseq
  %v699 = vshrl.u32 %v698, 7
  %v700 = vsub.s32 %v697, %v699
  %v701 = vrot.slane %v687, %v700
  %v702 = vcombine.low %v646, %v662
  %v703 = vcombine.high %v646, %v662
  %v705 = vunpack.c.l.s4 1934713408
  %v706 = vunpack.c.0.s8 %v705
  %v707 = vlaneseq
  %v708 = vshrl.u32 %v707, 7
  %v709 = vsub.s32 %v706, %v708
  %v710 = vrot.slane %v702, %v709
  %v712 = vunpack.c.l.s4 1934713408
  %v713 = vunpack.c.0.s8 %v712
  %v714 = vlaneseq
  %v715 = vshrl.u32 %v714, 7
  %v716 = vsub.s32 %v713, %v715
  %v717 = vrot.slane %v703, %v716
  %v718 = vcombine.low %v653, %v669
  %v719 = vcombine.high %v653, %v669
  %v721 = vunpack.c.l.s4 1934713408
  %v722 = vunpack.c.0.s8 %v721
  %v723 = vlaneseq
  %v724 = vshrl.u32 %v723, 7
  %v725 = vsub.s32 %v722, %v724
  %v726 = vrot.slane %v718, %v725
  %v728 = vunpack.c.l.s4 1934713408
  %v729 = vunpack.c.0.s8 %v728
  %v730 = vlaneseq
  %v731 = vshrl.u32 %v730, 7
  %v732 = vsub.s32 %v729, %v731
  %v733 = vrot.slane %v719, %v732
  %v734 = vcombine.low %v678, %v710
  %v735 = vcombine.high %v678, %v710
  %v736 = vcombine.low %v685, %v717
  %v737 = vcombine.high %v685, %v717
  %v738 = vcombine.low %v694, %v726
  %v739 = vcombine.high %v694, %v726
  %v740 = vcombine.low %v701, %v733
  %v741 = vcombine.high %v701, %v733
  %v742 = vcombine.low %v290, %v302
  %v743 = vcombine.high %v290, %v302
  %v745 = vunpack.c.l.s4 1983009808
  %v746 = vunpack.c.0.s8 %v745
  %v747 = vlaneseq
  %v748 = vshrl.u32 %v747, 7
  %v749 = vsub.s32 %v746, %v748
  %v750 = vrot.slane %v742, %v749
  %v752 = vunpack.c.l.s4 1983009808
  %v753 = vunpack.c.0.s8 %v752
  %v754 = vlaneseq
  %v755 = vshrl.u32 %v754, 7
  %v756 = vsub.s32 %v753, %v755
  %v757 = vrot.slane %v743, %v756
  %v758 = vcombine.low %v296, %v308
  %v759 = vcombine.high %v296, %v308
  %v761 = vunpack.c.l.s4 1983009808
  %v762 = vunpack.c.0.s8 %v761
  %v763 = vlaneseq
  %v764 = vshrl.u32 %v763, 7
  %v765 = vsub.s32 %v762, %v764
  %v766 = vrot.slane %v758, %v765
  %v768 = vunpack.c.l.s4 1983009808
  %v769 = vunpack.c.0.s8 %v768
  %v770 = vlaneseq
  %v771 = vshrl.u32 %v770, 7
  %v772 = vsub.s32 %v769, %v771
  %v773 = vrot.slane %v759, %v772
  %v774 = vcombine.low %v314, %v326
  %v775 = vcombine.high %v314, %v326
  %v777 = vunpack.c.l.s4 1983009808
  %v778 = vunpack.c.0.s8 %v777
  %v779 = vlaneseq
  %v780 = vshrl.u32 %v779, 7
  %v781 = vsub.s32 %v778, %v780
  %v782 = vrot.slane %v774, %v781
  %v784 = vunpack.c.l.s4 1983009808
  %v785 = vunpack.c.0.s8 %v784
  %v786 = vlaneseq
  %v787 = vshrl.u32 %v786, 7
  %v788 = vsub.s32 %v785, %v787
  %v789 = vrot.slane %v775, %v788
  %v790 = vcombine.low %v320, %v332
  %v791 = vcombine.high %v320, %v332
  %v793 = vunpack.c.l.s4 1983009808
  %v794 = vunpack.c.0.s8 %v793
  %v795 = vlaneseq
  %v796 = vshrl.u32 %v795, 7
  %v797 = vsub.s32 %v794, %v796
  %v798 = vrot.slane %v790, %v797
  %v800 = vunpack.c.l.s4 1983009808
  %v801 = vunpack.c.0.s8 %v800
  %v802 = vlaneseq
  %v803 = vshrl.u32 %v802, 7
  %v804 = vsub.s32 %v801, %v803
  %v805 = vrot.slane %v791, %v804
  %v806 = vcombine.low %v750, %v766
  %v807 = vcombine.high %v750, %v766
  %v809 = vunpack.c.l.s4 1934713408
  %v810 = vunpack.c.0.s8 %v809
  %v811 = vlaneseq
  %v812 = vshrl.u32 %v811, 7
  %v813 = vsub.s32 %v810, %v812
  %v814 = vrot.slane %v806, %v813
  %v816 = vunpack.c.l.s4 1934713408
  %v817 = vunpack.c.0.s8 %v816
  %v818 = vlaneseq
  %v819 = vshrl.u32 %v818, 7
  %v820 = vsub.s32 %v817, %v819
  %v821 = vrot.slane %v807, %v820
  %v822 = vcombine.low %v757, %v773
  %v823 = vcombine.high %v757, %v773
  %v825 = vunpack.c.l.s4 1934713408
  %v826 = vunpack.c.0.s8 %v825
  %v827 = vlaneseq
  %v828 = vshrl.u32 %v827, 7
  %v829 = vsub.s32 %v826, %v828
  %v830 = vrot.slane %v822, %v829
  %v832 = vunpack.c.l.s4 1934713408
  %v833 = vunpack.c.0.s8 %v832
  %v834 = vlaneseq
  %v835 = vshrl.u32 %v834, 7
  %v836 = vsub.s32 %v833, %v835
  %v837 = vrot.slane %v823, %v836
  %v838 = vcombine.low %v782, %v798
  %v839 = vcombine.high %v782, %v798
  %v841 = vunpack.c.l.s4 1934713408
  %v842 = vunpack.c.0.s8 %v841
  %v843 = vlaneseq
  %v844 = vshrl.u32 %v843, 7
  %v845 = vsub.s32 %v842, %v844
  %v846 = vrot.slane %v838, %v845
  %v848 = vunpack.c.l.s4 1934713408
  %v849 = vunpack.c.0.s8 %v848
  %v850 = vlaneseq
  %v851 = vshrl.u32 %v850, 7
  %v852 = vsub.s32 %v849, %v851
  %v853 = vrot.slane %v839, %v852
  %v854 = vcombine.low %v789, %v805
  %v855 = vcombine.high %v789, %v805
  %v857 = vunpack.c.l.s4 1934713408
  %v858 = vunpack.c.0.s8 %v857
  %v859 = vlaneseq
  %v860 = vshrl.u32 %v859, 7
  %v861 = vsub.s32 %v858, %v860
  %v862 = vrot.slane %v854, %v861
  %v864 = vunpack.c.l.s4 1934713408
  %v865 = vunpack.c.0.s8 %v864
  %v866 = vlaneseq
  %v867 = vshrl.u32 %v866, 7
  %v868 = vsub.s32 %v865, %v867
  %v869 = vrot.slane %v855, %v868
  %v870 = vcombine.low %v814, %v846
  %v871 = vcombine.high %v814, %v846
  %v872 = vcombine.low %v821, %v853
  %v873 = vcombine.high %v821, %v853
  %v874 = vcombine.low %v830, %v862
  %v875 = vcombine.high %v830, %v862
  %v876 = vcombine.low %v837, %v869
  %v877 = vcombine.high %v837, %v869
  %878 = vst [vmem:[#allocation2] sm:$0xff] %v462
  %879 = vst [vmem:[#allocation2 + $0x8] sm:$0xff] %v598
  %880 = vst [vmem:[#allocation2 + $0x10] sm:$0xff] %v734
  %881 = vst [vmem:[#allocation2 + $0x18] sm:$0xff] %v870
  %882 = vst [vmem:[#allocation2 + $0x20] sm:$0xff] %v463
  %883 = vst [vmem:[#allocation2 + $0x28] sm:$0xff] %v599
  %884 = vst [vmem:[#allocation2 + $0x30] sm:$0xff] %v735
  %885 = vst [vmem:[#allocation2 + $0x38] sm:$0xff] %v871
  %886 = vst [vmem:[#allocation2 + $0x40] sm:$0xff] %v464
  %887 = vst [vmem:[#allocation2 + $0x48] sm:$0xff] %v600
  %888 = vst [vmem:[#allocation2 + $0x50] sm:$0xff] %v736
  %889 = vst [vmem:[#allocation2 + $0x58] sm:$0xff] %v872
  %890 = vst [vmem:[#allocation2 + $0x60] sm:$0xff] %v465
  %891 = vst [vmem:[#allocation2 + $0x68] sm:$0xff] %v601
  %892 = vst [vmem:[#allocation2 + $0x70] sm:$0xff] %v737
  %893 = vst [vmem:[#allocation2 + $0x78] sm:$0xff] %v873
  %894 = vst [vmem:[#allocation2 + $0x80] sm:$0xff] %v466
  %895 = vst [vmem:[#allocation2 + $0x88] sm:$0xff] %v602
  %896 = vst [vmem:[#allocation2 + $0x90] sm:$0xff] %v738
  %897 = vst [vmem:[#allocation2 + $0x98] sm:$0xff] %v874
  %898 = vst [vmem:[#allocation2 + $0xa0] sm:$0xff] %v467
  %899 = vst [vmem:[#allocation2 + $0xa8] sm:$0xff] %v603
  %900 = vst [vmem:[#allocation2 + $0xb0] sm:$0xff] %v739
  %901 = vst [vmem:[#allocation2 + $0xb8] sm:$0xff] %v875
  %902 = vst [vmem:[#allocation2 + $0xc0] sm:$0xff] %v468
  %903 = vst [vmem:[#allocation2 + $0xc8] sm:$0xff] %v604
  %904 = vst [vmem:[#allocation2 + $0xd0] sm:$0xff] %v740
  %905 = vst [vmem:[#allocation2 + $0xd8] sm:$0xff] %v876
  %906 = vst [vmem:[#allocation2 + $0xe0] sm:$0xff] %v469
  %907 = vst [vmem:[#allocation2 + $0xe8] sm:$0xff] %v605
  %908 = vst [vmem:[#allocation2 + $0xf0] sm:$0xff] %v741
  %909 = vst [vmem:[#allocation2 + $0xf8] sm:$0xff] %v877
  %v910 = vld [vmem:[#allocation2] sm:$0xff]
  %v911 = vld [vmem:[#allocation2 + $0x8] sm:$0xff]
  %v912 = vld [vmem:[#allocation2 + $0x10] sm:$0xff]
  %v913 = vld [vmem:[#allocation2 + $0x18] sm:$0xff]
  %v914 = vld [vmem:[%s10] sm:$0xff]
  %v915 = vld [vmem:[%s2] sm:$0xff]
  %v916 = vld [vmem:[%s2 + $0x8] sm:$0xff]
  %v917 = vld [vmem:[%s2 + $0x10] sm:$0xff]
  %v918 = vld [vmem:[%s2 + $0x18] sm:$0xff]
  %v919 = vld [vmem:[%s2 + $0x20] sm:$0xff]
  %v920 = vld [vmem:[%s2 + $0x28] sm:$0xff]
  %v921 = vld [vmem:[%s2 + $0x30] sm:$0xff]
  %v922 = vld [vmem:[%s2 + $0x38] sm:$0xff]
  %v923 = vld [vmem:[%s2 + $0x40] sm:$0xff]
  %v924 = vld [vmem:[%s2 + $0x48] sm:$0xff]
  %v925 = vld [vmem:[%s2 + $0x50] sm:$0xff]
  %v926 = vld [vmem:[%s2 + $0x58] sm:$0xff]
  %v927 = vld [vmem:[%s2 + $0x60] sm:$0xff]
  %v928 = vld [vmem:[%s2 + $0x68] sm:$0xff]
  %v929 = vld [vmem:[%s2 + $0x70] sm:$0xff]
  %v930 = vld [vmem:[%s2 + $0x78] sm:$0xff]
  %v931 = vld [vmem:[%s2 + $0x80] sm:$0xff]
  %v932 = vld [vmem:[%s2 + $0x88] sm:$0xff]
  %v933 = vld [vmem:[%s2 + $0x90] sm:$0xff]
  %v934 = vld [vmem:[%s2 + $0x98] sm:$0xff]
  %v935 = vld [vmem:[%s2 + $0xa0] sm:$0xff]
  %v936 = vld [vmem:[%s2 + $0xa8] sm:$0xff]
  %v937 = vld [vmem:[%s2 + $0xb0] sm:$0xff]
  %v938 = vld [vmem:[%s2 + $0xb8] sm:$0xff]
  %v939 = vld [vmem:[%s2 + $0xc0] sm:$0xff]
  %v940 = vld [vmem:[%s2 + $0xc8] sm:$0xff]
  %v941 = vld [vmem:[%s2 + $0xd0] sm:$0xff]
  %v942 = vld [vmem:[%s2 + $0xd8] sm:$0xff]
  %v943 = vld [vmem:[%s2 + $0xe0] sm:$0xff]
  %v944 = vld [vmem:[%s2 + $0xe8] sm:$0xff]
  %v945 = vld [vmem:[%s2 + $0xf0] sm:$0xff]
  %v946 = vld [vmem:[%s2 + $0xf8] sm:$0xff]
  %v947 = vld [vmem:[%s2 + $0x100] sm:$0xff]
  %v948 = vld [vmem:[%s2 + $0x108] sm:$0xff]
  %v949 = vld [vmem:[%s2 + $0x110] sm:$0xff]
  %v950 = vld [vmem:[%s2 + $0x118] sm:$0xff]
  %v951 = vld [vmem:[%s2 + $0x120] sm:$0xff]
  %v952 = vld [vmem:[%s2 + $0x128] sm:$0xff]
  %v953 = vld [vmem:[%s2 + $0x130] sm:$0xff]
  %v954 = vld [vmem:[%s2 + $0x138] sm:$0xff]
  %v955 = vld [vmem:[%s2 + $0x140] sm:$0xff]
  %v956 = vld [vmem:[%s2 + $0x148] sm:$0xff]
  %v957 = vld [vmem:[%s2 + $0x150] sm:$0xff]
  %v958 = vld [vmem:[%s2 + $0x158] sm:$0xff]
  %v959 = vld [vmem:[%s2 + $0x160] sm:$0xff]
  %v960 = vld [vmem:[%s2 + $0x168] sm:$0xff]
  %v961 = vld [vmem:[%s2 + $0x170] sm:$0xff]
  %v962 = vld [vmem:[%s2 + $0x178] sm:$0xff]
  %v963 = vld [vmem:[%s2 + $0x180] sm:$0xff]
  %v964 = vld [vmem:[%s2 + $0x188] sm:$0xff]
  %v965 = vld [vmem:[%s2 + $0x190] sm:$0xff]
  %v966 = vld [vmem:[%s2 + $0x198] sm:$0xff]
  %v967 = vld [vmem:[%s2 + $0x1a0] sm:$0xff]
  %v968 = vld [vmem:[%s2 + $0x1a8] sm:$0xff]
  %v969 = vld [vmem:[%s2 + $0x1b0] sm:$0xff]
  %v970 = vld [vmem:[%s2 + $0x1b8] sm:$0xff]
  %v971 = vld [vmem:[%s2 + $0x1c0] sm:$0xff]
  %v972 = vld [vmem:[%s2 + $0x1c8] sm:$0xff]
  %v973 = vld [vmem:[%s2 + $0x1d0] sm:$0xff]
  %v974 = vld [vmem:[%s2 + $0x1d8] sm:$0xff]
  %v975 = vld [vmem:[%s2 + $0x1e0] sm:$0xff]
  %v976 = vld [vmem:[%s2 + $0x1e8] sm:$0xff]
  %v977 = vld [vmem:[%s2 + $0x1f0] sm:$0xff]
  %v978 = vld [vmem:[%s2 + $0x1f8] sm:$0xff]
  %979 = vmatprep.subr.mxu0 %v916
  %980 = vmatpush1.msra.mxu0 %v915
  %981 = vmatprep.subr.mxu0 %v920
  %982 = vmatpush1.msra.mxu0 %v919
  %983 = vmatprep.subr.mxu0 %v924
  %984 = vmatpush1.msra.mxu0 %v923
  %985 = vmatprep.subr.mxu0 %v928
  %986 = vmatpush1.msra.mxu0 %v927
  %987 = vmatprep.subr.mxu0 %v932
  %988 = vmatpush1.msra.mxu0 %v931
  %989 = vmatprep.subr.mxu0 %v936
  %990 = vmatpush1.msra.mxu0 %v935
  %991 = vmatprep.subr.mxu0 %v940
  %992 = vmatpush1.msra.mxu0 %v939
  %993 = vmatprep.subr.mxu0 %v944
  %994 = vmatpush1.msra.mxu0 %v943
  %995 = vmatprep.subr.mxu0 %v948
  %996 = vmatpush1.msra.mxu0 %v947
  %997 = vmatprep.subr.mxu0 %v952
  %998 = vmatpush1.msra.mxu0 %v951
  %999 = vmatprep.subr.mxu0 %v956
  %1000 = vmatpush1.msra.mxu0 %v955
  %1001 = vmatprep.subr.mxu0 %v960
  %1002 = vmatpush1.msra.mxu0 %v959
  %1003 = vmatprep.subr.mxu0 %v964
  %1004 = vmatpush1.msra.mxu0 %v963
  %1005 = vmatprep.subr.mxu0 %v968
  %1006 = vmatpush1.msra.mxu0 %v967
  %1007 = vmatprep.subr.mxu0 %v972
  %1008 = vmatpush1.msra.mxu0 %v971
  %1009 = vmatprep.subr.mxu0 %v976
  %1010 = vmatpush1.msra.mxu0 %v975
  %1011 = vmatprep.subr.mxu0 0.0
  %1012 = vmatpush1.msra.mxu0 0.0
  %1013 = vmatprep.subr.mxu0 0.0
  %1014 = vmatpush1.msra.mxu0 0.0
  %1015 = vmatprep.subr.mxu0 0.0
  %1016 = vmatpush1.msra.mxu0 0.0
  %1017 = vmatprep.subr.mxu0 0.0
  %1018 = vmatpush1.msra.mxu0 0.0
  %1019 = vmatprep.subr.mxu0 0.0
  %1020 = vmatpush1.msra.mxu0 0.0
  %1021 = vmatprep.subr.mxu0 0.0
  %1022 = vmatpush1.msra.mxu0 0.0
  %1023 = vmatprep.subr.mxu0 0.0
  %1024 = vmatpush1.msra.mxu0 0.0
  %1025 = vmatprep.subr.mxu0 0.0
  %1026 = vmatpush1.msra.mxu0 0.0
  %1027 = vmatprep.subr.mxu0 0.0
  %1028 = vmatpush1.msra.mxu0 0.0
  %1029 = vmatprep.subr.mxu0 0.0
  %1030 = vmatpush1.msra.mxu0 0.0
  %1031 = vmatprep.subr.mxu0 0.0
  %1032 = vmatpush1.msra.mxu0 0.0
  %1033 = vmatprep.subr.mxu0 0.0
  %1034 = vmatpush1.msra.mxu0 0.0
  %1035 = vmatprep.subr.mxu0 0.0
  %1036 = vmatpush1.msra.mxu0 0.0
  %1037 = vmatprep.subr.mxu0 0.0
  %1038 = vmatpush1.msra.mxu0 0.0
  %1039 = vmatprep.subr.mxu0 0.0
  %1040 = vmatpush1.msra.mxu0 0.0
  %1041 = vmatprep.subr.mxu0 0.0
  %1042 = vmatpush1.msra.mxu0 0.0
  %1043 = vmatprep.mubr.f32.mxu0 0.0
  %1044 = vmatmul.mubr.f32.gmra.mrb[0].mxu0 %v914
  %v1045 = vpop.f32.mrb[0].mxu0
  %v1046 = vadd.f32 0.0, %v1045
  %v1047 = vpop.f32.mrb[0].mxu0
  %v1048 = vadd.f32 0.0, %v1047
  %1049 = vdwg.mxu0
  %1050 = vmatprep.subr.mxu0 %v918
  %1051 = vmatpush1.msra.mxu0 %v917
  %1052 = vmatprep.subr.mxu0 %v922
  %1053 = vmatpush1.msra.mxu0 %v921
  %1054 = vmatprep.subr.mxu0 %v926
  %1055 = vmatpush1.msra.mxu0 %v925
  %1056 = vmatprep.subr.mxu0 %v930
  %1057 = vmatpush1.msra.mxu0 %v929
  %1058 = vmatprep.subr.mxu0 %v934
  %1059 = vmatpush1.msra.mxu0 %v933
  %1060 = vmatprep.subr.mxu0 %v938
  %1061 = vmatpush1.msra.mxu0 %v937
  %1062 = vmatprep.subr.mxu0 %v942
  %1063 = vmatpush1.msra.mxu0 %v941
  %1064 = vmatprep.subr.mxu0 %v946
  %1065 = vmatpush1.msra.mxu0 %v945
  %1066 = vmatprep.subr.mxu0 %v950
  %1067 = vmatpush1.msra.mxu0 %v949
  %1068 = vmatprep.subr.mxu0 %v954
  %1069 = vmatpush1.msra.mxu0 %v953
  %1070 = vmatprep.subr.mxu0 %v958
  %1071 = vmatpush1.msra.mxu0 %v957
  %1072 = vmatprep.subr.mxu0 %v962
  %1073 = vmatpush1.msra.mxu0 %v961
  %1074 = vmatprep.subr.mxu0 %v966
  %1075 = vmatpush1.msra.mxu0 %v965
  %1076 = vmatprep.subr.mxu0 %v970
  %1077 = vmatpush1.msra.mxu0 %v969
  %1078 = vmatprep.subr.mxu0 %v974
  %1079 = vmatpush1.msra.mxu0 %v973
  %1080 = vmatprep.subr.mxu0 %v978
  %1081 = vmatpush1.msra.mxu0 %v977
  %1082 = vmatprep.subr.mxu0 0.0
  %1083 = vmatpush1.msra.mxu0 0.0
  %1084 = vmatprep.subr.mxu0 0.0
  %1085 = vmatpush1.msra.mxu0 0.0
  %1086 = vmatprep.subr.mxu0 0.0
  %1087 = vmatpush1.msra.mxu0 0.0
  %1088 = vmatprep.subr.mxu0 0.0
  %1089 = vmatpush1.msra.mxu0 0.0
  %1090 = vmatprep.subr.mxu0 0.0
  %1091 = vmatpush1.msra.mxu0 0.0
  %1092 = vmatprep.subr.mxu0 0.0
  %1093 = vmatpush1.msra.mxu0 0.0
  %1094 = vmatprep.subr.mxu0 0.0
  %1095 = vmatpush1.msra.mxu0 0.0
  %1096 = vmatprep.subr.mxu0 0.0
  %1097 = vmatpush1.msra.mxu0 0.0
  %1098 = vmatprep.subr.mxu0 0.0
  %1099 = vmatpush1.msra.mxu0 0.0
  %1100 = vmatprep.subr.mxu0 0.0
  %1101 = vmatpush1.msra.mxu0 0.0
  %1102 = vmatprep.subr.mxu0 0.0
  %1103 = vmatpush1.msra.mxu0 0.0
  %1104 = vmatprep.subr.mxu0 0.0
  %1105 = vmatpush1.msra.mxu0 0.0
  %1106 = vmatprep.subr.mxu0 0.0
  %1107 = vmatpush1.msra.mxu0 0.0
  %1108 = vmatprep.subr.mxu0 0.0
  %1109 = vmatpush1.msra.mxu0 0.0
  %1110 = vmatprep.subr.mxu0 0.0
  %1111 = vmatpush1.msra.mxu0 0.0
  %1112 = vmatprep.subr.mxu0 0.0
  %1113 = vmatpush1.msra.mxu0 0.0
  %1114 = vmatprep.mubr.f32.mxu0 0.0
  %1115 = vmatmul.mubr.f32.gmra.mrb[0].mxu0 %v914
  %v1116 = vpop.f32.mrb[0].mxu0
  %v1117 = vadd.f32 0.0, %v1116
  %v1118 = vpop.f32.mrb[0].mxu0
  %v1119 = vadd.f32 0.0, %v1118
  %1120 = vdwg.mxu0
  %v1121 = vadd.f32 %v910, %v1046
  %v1122 = vadd.f32 %v911, %v1048
  %v1123 = vadd.f32 %v912, %v1117
  %v1124 = vadd.f32 %v913, %v1119
  %v1125 = vld [vmem:[%s4] sm:$0xf]
  %v1127 = vlaneseq
  %v1128 = vshrl.u32 %v1127, 7
  %v1129 = vsub.s32 0, %v1128
  %v1130 = vrot.slane %v1125, %v1129
  %v1131 = vlaneseq
  %v1132 = vshrl.u32 %v1131, 7
  %v1133 = vsub.s32 1, %v1132
  %v1134 = vrot.slane %v1125, %v1133
  %v1135 = vlaneseq
  %v1136 = vshrl.u32 %v1135, 7
  %v1137 = vsub.s32 2, %v1136
  %v1138 = vrot.slane %v1125, %v1137
  %v1139 = vlaneseq
  %v1140 = vshrl.u32 %v1139, 7
  %v1141 = vsub.s32 3, %v1140
  %v1142 = vrot.slane %v1125, %v1141
  %v1147 = vadd.f32 %v1121, %v1130
  %v1148 = vadd.f32 %v1122, %v1134
  %v1149 = vadd.f32 %v1123, %v1138
  %v1150 = vadd.f32 %v1124, %v1142
  %v1151 = vld [vmem:[%s11] sm:$0xff]
  %v1152 = vxor.u32 %v1147, 2147483648
  %v1153 = vmul.f32 %v1152, 1.442695
  %v1154 = vpow.pop %v1153
  %v1155 = vadd.f32 %v1154, 1.0
  %v1156 = vrcp.pop %v1155
  %v1157 = vmul.f32 1.0, %v1156
  %v1158 = vxor.u32 %v1148, 2147483648
  %v1159 = vmul.f32 %v1158, 1.442695
  %v1160 = vpow.pop %v1159
  %v1161 = vadd.f32 %v1160, 1.0
  %v1162 = vrcp.pop %v1161
  %v1163 = vmul.f32 1.0, %v1162
  %v1164 = vtanh.pop %v1149
  %v1165 = vxor.u32 %v1150, 2147483648
  %v1166 = vmul.f32 %v1165, 1.442695
  %v1167 = vpow.pop %v1166
  %v1168 = vadd.f32 %v1167, 1.0
  %v1169 = vrcp.pop %v1168
  %v1170 = vmul.f32 1.0, %v1169
  %v1171 = vmul.f32 %v1163, %v1151
  %v1172 = vmul.f32 %v1157, %v1164
  %v1173 = vadd.f32 %v1171, %v1172
  %v1174 = vtanh.pop %v1173
  %v1175 = vmul.f32 %v1170, %v1174
  %1176 = vst [vmem:[%s10] sm:$0xff] %v1175
  %1177 = vst [vmem:[%s11] sm:$0xff] %v1173
  %s1178 = scalar_lea.vmem %s10, 8
  %v1179 = vld [vmem:[%s1178] sm:$0xff]
  %v1180 = vld [vmem:[%s3] sm:$0xff]
  %v1181 = vld [vmem:[%s3 + $0x8] sm:$0xff]
  %v1182 = vld [vmem:[%s3 + $0x10] sm:$0xff]
  %v1183 = vld [vmem:[%s3 + $0x18] sm:$0xff]
  %v1184 = vld [vmem:[%s3 + $0x20] sm:$0xff]
  %v1185 = vld [vmem:[%s3 + $0x28] sm:$0xff]
  %v1186 = vld [vmem:[%s3 + $0x30] sm:$0xff]
  %v1187 = vld [vmem:[%s3 + $0x38] sm:$0xff]
  %v1188 = vld [vmem:[%s3 + $0x40] sm:$0xff]
  %v1189 = vld [vmem:[%s3 + $0x48] sm:$0xff]
  %v1190 = vld [vmem:[%s3 + $0x50] sm:$0xff]
  %v1191 = vld [vmem:[%s3 + $0x58] sm:$0xff]
  %v1192 = vld [vmem:[%s3 + $0x60] sm:$0xff]
  %v1193 = vld [vmem:[%s3 + $0x68] sm:$0xff]
  %v1194 = vld [vmem:[%s3 + $0x70] sm:$0xff]
  %v1195 = vld [vmem:[%s3 + $0x78] sm:$0xff]
  %v1196 = vld [vmem:[%s3 + $0x80] sm:$0xff]
  %v1197 = vld [vmem:[%s3 + $0x88] sm:$0xff]
  %v1198 = vld [vmem:[%s3 + $0x90] sm:$0xff]
  %v1199 = vld [vmem:[%s3 + $0x98] sm:$0xff]
  %v1200 = vld [vmem:[%s3 + $0xa0] sm:$0xff]
  %v1201 = vld [vmem:[%s3 + $0xa8] sm:$0xff]
  %v1202 = vld [vmem:[%s3 + $0xb0] sm:$0xff]
  %v1203 = vld [vmem:[%s3 + $0xb8] sm:$0xff]
  %v1204 = vld [vmem:[%s3 + $0xc0] sm:$0xff]
  %v1205 = vld [vmem:[%s3 + $0xc8] sm:$0xff]
  %v1206 = vld [vmem:[%s3 + $0xd0] sm:$0xff]
  %v1207 = vld [vmem:[%s3 + $0xd8] sm:$0xff]
  %v1208 = vld [vmem:[%s3 + $0xe0] sm:$0xff]
  %v1209 = vld [vmem:[%s3 + $0xe8] sm:$0xff]
  %v1210 = vld [vmem:[%s3 + $0xf0] sm:$0xff]
  %v1211 = vld [vmem:[%s3 + $0xf8] sm:$0xff]
  %v1212 = vld [vmem:[%s3 + $0x100] sm:$0xff]
  %v1213 = vld [vmem:[%s3 + $0x108] sm:$0xff]
  %v1214 = vld [vmem:[%s3 + $0x110] sm:$0xff]
  %v1215 = vld [vmem:[%s3 + $0x118] sm:$0xff]
  %v1216 = vld [vmem:[%s3 + $0x120] sm:$0xff]
  %v1217 = vld [vmem:[%s3 + $0x128] sm:$0xff]
  %v1218 = vld [vmem:[%s3 + $0x130] sm:$0xff]
  %v1219 = vld [vmem:[%s3 + $0x138] sm:$0xff]
  %v1220 = vld [vmem:[%s3 + $0x140] sm:$0xff]
  %v1221 = vld [vmem:[%s3 + $0x148] sm:$0xff]
  %v1222 = vld [vmem:[%s3 + $0x150] sm:$0xff]
  %v1223 = vld [vmem:[%s3 + $0x158] sm:$0xff]
  %v1224 = vld [vmem:[%s3 + $0x160] sm:$0xff]
  %v1225 = vld [vmem:[%s3 + $0x168] sm:$0xff]
  %v1226 = vld [vmem:[%s3 + $0x170] sm:$0xff]
  %v1227 = vld [vmem:[%s3 + $0x178] sm:$0xff]
  %v1228 = vld [vmem:[%s3 + $0x180] sm:$0xff]
  %v1229 = vld [vmem:[%s3 + $0x188] sm:$0xff]
  %v1230 = vld [vmem:[%s3 + $0x190] sm:$0xff]
  %v1231 = vld [vmem:[%s3 + $0x198] sm:$0xff]
  %v1232 = vld [vmem:[%s3 + $0x1a0] sm:$0xff]
  %v1233 = vld [vmem:[%s3 + $0x1a8] sm:$0xff]
  %v1234 = vld [vmem:[%s3 + $0x1b0] sm:$0xff]
  %v1235 = vld [vmem:[%s3 + $0x1b8] sm:$0xff]
  %v1236 = vld [vmem:[%s3 + $0x1c0] sm:$0xff]
  %v1237 = vld [vmem:[%s3 + $0x1c8] sm:$0xff]
  %v1238 = vld [vmem:[%s3 + $0x1d0] sm:$0xff]
  %v1239 = vld [vmem:[%s3 + $0x1d8] sm:$0xff]
  %v1240 = vld [vmem:[%s3 + $0x1e0] sm:$0xff]
  %v1241 = vld [vmem:[%s3 + $0x1e8] sm:$0xff]
  %v1242 = vld [vmem:[%s3 + $0x1f0] sm:$0xff]
  %v1243 = vld [vmem:[%s3 + $0x1f8] sm:$0xff]
  %v1244 = vld [vmem:[%s3 + $0x200] sm:$0xff]
  %v1245 = vld [vmem:[%s3 + $0x208] sm:$0xff]
  %v1246 = vld [vmem:[%s3 + $0x210] sm:$0xff]
  %v1247 = vld [vmem:[%s3 + $0x218] sm:$0xff]
  %v1248 = vld [vmem:[%s3 + $0x220] sm:$0xff]
  %v1249 = vld [vmem:[%s3 + $0x228] sm:$0xff]
  %v1250 = vld [vmem:[%s3 + $0x230] sm:$0xff]
  %v1251 = vld [vmem:[%s3 + $0x238] sm:$0xff]
  %v1252 = vld [vmem:[%s3 + $0x240] sm:$0xff]
  %v1253 = vld [vmem:[%s3 + $0x248] sm:$0xff]
  %v1254 = vld [vmem:[%s3 + $0x250] sm:$0xff]
  %v1255 = vld [vmem:[%s3 + $0x258] sm:$0xff]
  %v1256 = vld [vmem:[%s3 + $0x260] sm:$0xff]
  %v1257 = vld [vmem:[%s3 + $0x268] sm:$0xff]
  %v1258 = vld [vmem:[%s3 + $0x270] sm:$0xff]
  %v1259 = vld [vmem:[%s3 + $0x278] sm:$0xff]
  %v1260 = vld [vmem:[%s3 + $0x280] sm:$0xff]
  %v1261 = vld [vmem:[%s3 + $0x288] sm:$0xff]
  %v1262 = vld [vmem:[%s3 + $0x290] sm:$0xff]
  %v1263 = vld [vmem:[%s3 + $0x298] sm:$0xff]
  %v1264 = vld [vmem:[%s3 + $0x2a0] sm:$0xff]
  %v1265 = vld [vmem:[%s3 + $0x2a8] sm:$0xff]
  %v1266 = vld [vmem:[%s3 + $0x2b0] sm:$0xff]
  %v1267 = vld [vmem:[%s3 + $0x2b8] sm:$0xff]
  %v1268 = vld [vmem:[%s3 + $0x2c0] sm:$0xff]
  %v1269 = vld [vmem:[%s3 + $0x2c8] sm:$0xff]
  %v1270 = vld [vmem:[%s3 + $0x2d0] sm:$0xff]
  %v1271 = vld [vmem:[%s3 + $0x2d8] sm:$0xff]
  %v1272 = vld [vmem:[%s3 + $0x2e0] sm:$0xff]
  %v1273 = vld [vmem:[%s3 + $0x2e8] sm:$0xff]
  %v1274 = vld [vmem:[%s3 + $0x2f0] sm:$0xff]
  %v1275 = vld [vmem:[%s3 + $0x2f8] sm:$0xff]
  %v1276 = vld [vmem:[%s3 + $0x300] sm:$0xff]
  %v1277 = vld [vmem:[%s3 + $0x308] sm:$0xff]
  %v1278 = vld [vmem:[%s3 + $0x310] sm:$0xff]
  %v1279 = vld [vmem:[%s3 + $0x318] sm:$0xff]
  %v1280 = vld [vmem:[%s3 + $0x320] sm:$0xff]
  %v1281 = vld [vmem:[%s3 + $0x328] sm:$0xff]
  %v1282 = vld [vmem:[%s3 + $0x330] sm:$0xff]
  %v1283 = vld [vmem:[%s3 + $0x338] sm:$0xff]
  %v1284 = vld [vmem:[%s3 + $0x340] sm:$0xff]
  %v1285 = vld [vmem:[%s3 + $0x348] sm:$0xff]
  %v1286 = vld [vmem:[%s3 + $0x350] sm:$0xff]
  %v1287 = vld [vmem:[%s3 + $0x358] sm:$0xff]
  %v1288 = vld [vmem:[%s3 + $0x360] sm:$0xff]
  %v1289 = vld [vmem:[%s3 + $0x368] sm:$0xff]
  %v1290 = vld [vmem:[%s3 + $0x370] sm:$0xff]
  %v1291 = vld [vmem:[%s3 + $0x378] sm:$0xff]
  %v1292 = vld [vmem:[%s3 + $0x380] sm:$0xff]
  %v1293 = vld [vmem:[%s3 + $0x388] sm:$0xff]
  %v1294 = vld [vmem:[%s3 + $0x390] sm:$0xff]
  %v1295 = vld [vmem:[%s3 + $0x398] sm:$0xff]
  %v1296 = vld [vmem:[%s3 + $0x3a0] sm:$0xff]
  %v1297 = vld [vmem:[%s3 + $0x3a8] sm:$0xff]
  %v1298 = vld [vmem:[%s3 + $0x3b0] sm:$0xff]
  %v1299 = vld [vmem:[%s3 + $0x3b8] sm:$0xff]
  %v1300 = vld [vmem:[%s3 + $0x3c0] sm:$0xff]
  %v1301 = vld [vmem:[%s3 + $0x3c8] sm:$0xff]
  %v1302 = vld [vmem:[%s3 + $0x3d0] sm:$0xff]
  %v1303 = vld [vmem:[%s3 + $0x3d8] sm:$0xff]
  %v1304 = vld [vmem:[%s3 + $0x3e0] sm:$0xff]
  %v1305 = vld [vmem:[%s3 + $0x3e8] sm:$0xff]
  %v1306 = vld [vmem:[%s3 + $0x3f0] sm:$0xff]
  %v1307 = vld [vmem:[%s3 + $0x3f8] sm:$0xff]
  %s1308 = scalar_lea.vmem %s4, 4
  %v1309 = vld [vmem:[%s1308] sm:$0xf]
  %v1311 = vlaneseq
  %v1312 = vshrl.u32 %v1311, 7
  %v1313 = vsub.s32 0, %v1312
  %v1314 = vrot.slane %v1309, %v1313
  %v1315 = vlaneseq
  %v1316 = vshrl.u32 %v1315, 7
  %v1317 = vsub.s32 1, %v1316
  %v1318 = vrot.slane %v1309, %v1317
  %v1319 = vlaneseq
  %v1320 = vshrl.u32 %v1319, 7
  %v1321 = vsub.s32 2, %v1320
  %v1322 = vrot.slane %v1309, %v1321
  %v1323 = vlaneseq
  %v1324 = vshrl.u32 %v1323, 7
  %v1325 = vsub.s32 3, %v1324
  %v1326 = vrot.slane %v1309, %v1325
  %1331 = vmatprep.subr.mxu0 %v1181
  %1332 = vmatpush1.msra.mxu0 %v1180
  %1333 = vmatprep.subr.mxu0 %v1185
  %1334 = vmatpush1.msra.mxu0 %v1184
  %1335 = vmatprep.subr.mxu0 %v1189
  %1336 = vmatpush1.msra.mxu0 %v1188
  %1337 = vmatprep.subr.mxu0 %v1193
  %1338 = vmatpush1.msra.mxu0 %v1192
  %1339 = vmatprep.subr.mxu0 %v1197
  %1340 = vmatpush1.msra.mxu0 %v1196
  %1341 = vmatprep.subr.mxu0 %v1201
  %1342 = vmatpush1.msra.mxu0 %v1200
  %1343 = vmatprep.subr.mxu0 %v1205
  %1344 = vmatpush1.msra.mxu0 %v1204
  %1345 = vmatprep.subr.mxu0 %v1209
  %1346 = vmatpush1.msra.mxu0 %v1208
  %1347 = vmatprep.subr.mxu0 %v1213
  %1348 = vmatpush1.msra.mxu0 %v1212
  %1349 = vmatprep.subr.mxu0 %v1217
  %1350 = vmatpush1.msra.mxu0 %v1216
  %1351 = vmatprep.subr.mxu0 %v1221
  %1352 = vmatpush1.msra.mxu0 %v1220
  %1353 = vmatprep.subr.mxu0 %v1225
  %1354 = vmatpush1.msra.mxu0 %v1224
  %1355 = vmatprep.subr.mxu0 %v1229
  %1356 = vmatpush1.msra.mxu0 %v1228
  %1357 = vmatprep.subr.mxu0 %v1233
  %1358 = vmatpush1.msra.mxu0 %v1232
  %1359 = vmatprep.subr.mxu0 %v1237
  %1360 = vmatpush1.msra.mxu0 %v1236
  %1361 = vmatprep.subr.mxu0 %v1241
  %1362 = vmatpush1.msra.mxu0 %v1240
  %1363 = vmatprep.subr.mxu0 %v1245
  %1364 = vmatpush1.msra.mxu0 %v1244
  %1365 = vmatprep.subr.mxu0 %v1249
  %1366 = vmatpush1.msra.mxu0 %v1248
  %1367 = vmatprep.subr.mxu0 %v1253
  %1368 = vmatpush1.msra.mxu0 %v1252
  %1369 = vmatprep.subr.mxu0 %v1257
  %1370 = vmatpush1.msra.mxu0 %v1256
  %1371 = vmatprep.subr.mxu0 %v1261
  %1372 = vmatpush1.msra.mxu0 %v1260
  %1373 = vmatprep.subr.mxu0 %v1265
  %1374 = vmatpush1.msra.mxu0 %v1264
  %1375 = vmatprep.subr.mxu0 %v1269
  %1376 = vmatpush1.msra.mxu0 %v1268
  %1377 = vmatprep.subr.mxu0 %v1273
  %1378 = vmatpush1.msra.mxu0 %v1272
  %1379 = vmatprep.subr.mxu0 %v1277
  %1380 = vmatpush1.msra.mxu0 %v1276
  %1381 = vmatprep.subr.mxu0 %v1281
  %1382 = vmatpush1.msra.mxu0 %v1280
  %1383 = vmatprep.subr.mxu0 %v1285
  %1384 = vmatpush1.msra.mxu0 %v1284
  %1385 = vmatprep.subr.mxu0 %v1289
  %1386 = vmatpush1.msra.mxu0 %v1288
  %1387 = vmatprep.subr.mxu0 %v1293
  %1388 = vmatpush1.msra.mxu0 %v1292
  %1389 = vmatprep.subr.mxu0 %v1297
  %1390 = vmatpush1.msra.mxu0 %v1296
  %1391 = vmatprep.subr.mxu0 %v1301
  %1392 = vmatpush1.msra.mxu0 %v1300
  %1393 = vmatprep.subr.mxu0 %v1305
  %1394 = vmatpush1.msra.mxu0 %v1304
  %1395 = vmatprep.mubr.f32.mxu0 %v1179
  %1396 = vmatmul.mubr.f32.gmra.mrb[0].mxu0 %v1175
  %v1397 = vpop.f32.mrb[0].mxu0
  %v1398 = vadd.f32 %v1314, %v1397
  %v1399 = vpop.f32.mrb[0].mxu0
  %v1400 = vadd.f32 %v1318, %v1399
  %1401 = vdwg.mxu0
  %1402 = vmatprep.subr.mxu0 %v1183
  %1403 = vmatpush1.msra.mxu0 %v1182
  %1404 = vmatprep.subr.mxu0 %v1187
  %1405 = vmatpush1.msra.mxu0 %v1186
  %1406 = vmatprep.subr.mxu0 %v1191
  %1407 = vmatpush1.msra.mxu0 %v1190
  %1408 = vmatprep.subr.mxu0 %v1195
  %1409 = vmatpush1.msra.mxu0 %v1194
  %1410 = vmatprep.subr.mxu0 %v1199
  %1411 = vmatpush1.msra.mxu0 %v1198
  %1412 = vmatprep.subr.mxu0 %v1203
  %1413 = vmatpush1.msra.mxu0 %v1202
  %1414 = vmatprep.subr.mxu0 %v1207
  %1415 = vmatpush1.msra.mxu0 %v1206
  %1416 = vmatprep.subr.mxu0 %v1211
  %1417 = vmatpush1.msra.mxu0 %v1210
  %1418 = vmatprep.subr.mxu0 %v1215
  %1419 = vmatpush1.msra.mxu0 %v1214
  %1420 = vmatprep.subr.mxu0 %v1219
  %1421 = vmatpush1.msra.mxu0 %v1218
  %1422 = vmatprep.subr.mxu0 %v1223
  %1423 = vmatpush1.msra.mxu0 %v1222
  %1424 = vmatprep.subr.mxu0 %v1227
  %1425 = vmatpush1.msra.mxu0 %v1226
  %1426 = vmatprep.subr.mxu0 %v1231
  %1427 = vmatpush1.msra.mxu0 %v1230
  %1428 = vmatprep.subr.mxu0 %v1235
  %1429 = vmatpush1.msra.mxu0 %v1234
  %1430 = vmatprep.subr.mxu0 %v1239
  %1431 = vmatpush1.msra.mxu0 %v1238
  %1432 = vmatprep.subr.mxu0 %v1243
  %1433 = vmatpush1.msra.mxu0 %v1242
  %1434 = vmatprep.subr.mxu0 %v1247
  %1435 = vmatpush1.msra.mxu0 %v1246
  %1436 = vmatprep.subr.mxu0 %v1251
  %1437 = vmatpush1.msra.mxu0 %v1250
  %1438 = vmatprep.subr.mxu0 %v1255
  %1439 = vmatpush1.msra.mxu0 %v1254
  %1440 = vmatprep.subr.mxu0 %v1259
  %1441 = vmatpush1.msra.mxu0 %v1258
  %1442 = vmatprep.subr.mxu0 %v1263
  %1443 = vmatpush1.msra.mxu0 %v1262
  %1444 = vmatprep.subr.mxu0 %v1267
  %1445 = vmatpush1.msra.mxu0 %v1266
  %1446 = vmatprep.subr.mxu0 %v1271
  %1447 = vmatpush1.msra.mxu0 %v1270
  %1448 = vmatprep.subr.mxu0 %v1275
  %1449 = vmatpush1.msra.mxu0 %v1274
  %1450 = vmatprep.subr.mxu0 %v1279
  %1451 = vmatpush1.msra.mxu0 %v1278
  %1452 = vmatprep.subr.mxu0 %v1283
  %1453 = vmatpush1.msra.mxu0 %v1282
  %1454 = vmatprep.subr.mxu0 %v1287
  %1455 = vmatpush1.msra.mxu0 %v1286
  %1456 = vmatprep.subr.mxu0 %v1291
  %1457 = vmatpush1.msra.mxu0 %v1290
  %1458 = vmatprep.subr.mxu0 %v1295
  %1459 = vmatpush1.msra.mxu0 %v1294
  %1460 = vmatprep.subr.mxu0 %v1299
  %1461 = vmatpush1.msra.mxu0 %v1298
  %1462 = vmatprep.subr.mxu0 %v1303
  %1463 = vmatpush1.msra.mxu0 %v1302
  %1464 = vmatprep.subr.mxu0 %v1307
  %1465 = vmatpush1.msra.mxu0 %v1306
  %1466 = vmatprep.mubr.f32.mxu0 %v1179
  %1467 = vmatmul.mubr.f32.gmra.mrb[0].mxu0 %v1175
  %v1468 = vpop.f32.mrb[0].mxu0
  %v1469 = vadd.f32 %v1322, %v1468
  %v1470 = vpop.f32.mrb[0].mxu0
  %v1471 = vadd.f32 %v1326, %v1470
  %1472 = vdwg.mxu0
  %s1473 = scalar_lea.vmem %s11, 8
  %v1474 = vld [vmem:[%s1473] sm:$0xff]
  %v1475 = vxor.u32 %v1398, 2147483648
  %v1476 = vmul.f32 %v1475, 1.442695
  %v1477 = vpow.pop %v1476
  %v1478 = vadd.f32 %v1477, 1.0
  %v1479 = vrcp.pop %v1478
  %v1480 = vmul.f32 1.0, %v1479
  %v1481 = vxor.u32 %v1400, 2147483648
  %v1482 = vmul.f32 %v1481, 1.442695
  %v1483 = vpow.pop %v1482
  %v1484 = vadd.f32 %v1483, 1.0
  %v1485 = vrcp.pop %v1484
  %v1486 = vmul.f32 1.0, %v1485
  %v1487 = vtanh.pop %v1469
  %v1488 = vxor.u32 %v1471, 2147483648
  %v1489 = vmul.f32 %v1488, 1.442695
  %v1490 = vpow.pop %v1489
  %v1491 = vadd.f32 %v1490, 1.0
  %v1492 = vrcp.pop %v1491
  %v1493 = vmul.f32 1.0, %v1492
  %v1494 = vmul.f32 %v1486, %v1474
  %v1495 = vmul.f32 %v1480, %v1487
  %v1496 = vadd.f32 %v1494, %v1495
  %v1497 = vtanh.pop %v1496
  %v1498 = vmul.f32 %v1493, %v1497
  %1499 = vst [vmem:[%s1178] sm:$0xff] %v1498
  %1500 = vst [vmem:[%s1473] sm:$0xff] %v1496
  %s1501 = scalar_lea.vmem %s10, 16
  %v1502 = vld [vmem:[%s1501] sm:$0xff]
  %s1503 = scalar_lea.vmem %s3, 1024
  %v1504 = vld [vmem:[%s1503] sm:$0xff]
  %v1505 = vld [vmem:[%s1503 + $0x8] sm:$0xff]
  %v1506 = vld [vmem:[%s1503 + $0x10] sm:$0xff]
  %v1507 = vld [vmem:[%s1503 + $0x18] sm:$0xff]
  %v1508 = vld [vmem:[%s1503 + $0x20] sm:$0xff]
  %v1509 = vld [vmem:[%s1503 + $0x28] sm:$0xff]
  %v1510 = vld [vmem:[%s1503 + $0x30] sm:$0xff]
  %v1511 = vld [vmem:[%s1503 + $0x38] sm:$0xff]
  %v1512 = vld [vmem:[%s1503 + $0x40] sm:$0xff]
  %v1513 = vld [vmem:[%s1503 + $0x48] sm:$0xff]
  %v1514 = vld [vmem:[%s1503 + $0x50] sm:$0xff]
  %v1515 = vld [vmem:[%s1503 + $0x58] sm:$0xff]
  %v1516 = vld [vmem:[%s1503 + $0x60] sm:$0xff]
  %v1517 = vld [vmem:[%s1503 + $0x68] sm:$0xff]
  %v1518 = vld [vmem:[%s1503 + $0x70] sm:$0xff]
  %v1519 = vld [vmem:[%s1503 + $0x78] sm:$0xff]
  %v1520 = vld [vmem:[%s1503 + $0x80] sm:$0xff]
  %v1521 = vld [vmem:[%s1503 + $0x88] sm:$0xff]
  %v1522 = vld [vmem:[%s1503 + $0x90] sm:$0xff]
  %v1523 = vld [vmem:[%s1503 + $0x98] sm:$0xff]
  %v1524 = vld [vmem:[%s1503 + $0xa0] sm:$0xff]
  %v1525 = vld [vmem:[%s1503 + $0xa8] sm:$0xff]
  %v1526 = vld [vmem:[%s1503 + $0xb0] sm:$0xff]
  %v1527 = vld [vmem:[%s1503 + $0xb8] sm:$0xff]
  %v1528 = vld [vmem:[%s1503 + $0xc0] sm:$0xff]
  %v1529 = vld [vmem:[%s1503 + $0xc8] sm:$0xff]
  %v1530 = vld [vmem:[%s1503 + $0xd0] sm:$0xff]
  %v1531 = vld [vmem:[%s1503 + $0xd8] sm:$0xff]
  %v1532 = vld [vmem:[%s1503 + $0xe0] sm:$0xff]
  %v1533 = vld [vmem:[%s1503 + $0xe8] sm:$0xff]
  %v1534 = vld [vmem:[%s1503 + $0xf0] sm:$0xff]
  %v1535 = vld [vmem:[%s1503 + $0xf8] sm:$0xff]
  %v1536 = vld [vmem:[%s1503 + $0x100] sm:$0xff]
  %v1537 = vld [vmem:[%s1503 + $0x108] sm:$0xff]
  %v1538 = vld [vmem:[%s1503 + $0x110] sm:$0xff]
  %v1539 = vld [vmem:[%s1503 + $0x118] sm:$0xff]
  %v1540 = vld [vmem:[%s1503 + $0x120] sm:$0xff]
  %v1541 = vld [vmem:[%s1503 + $0x128] sm:$0xff]
  %v1542 = vld [vmem:[%s1503 + $0x130] sm:$0xff]
  %v1543 = vld [vmem:[%s1503 + $0x138] sm:$0xff]
  %v1544 = vld [vmem:[%s1503 + $0x140] sm:$0xff]
  %v1545 = vld [vmem:[%s1503 + $0x148] sm:$0xff]
  %v1546 = vld [vmem:[%s1503 + $0x150] sm:$0xff]
  %v1547 = vld [vmem:[%s1503 + $0x158] sm:$0xff]
  %v1548 = vld [vmem:[%s1503 + $0x160] sm:$0xff]
  %v1549 = vld [vmem:[%s1503 + $0x168] sm:$0xff]
  %v1550 = vld [vmem:[%s1503 + $0x170] sm:$0xff]
  %v1551 = vld [vmem:[%s1503 + $0x178] sm:$0xff]
  %v1552 = vld [vmem:[%s1503 + $0x180] sm:$0xff]
  %v1553 = vld [vmem:[%s1503 + $0x188] sm:$0xff]
  %v1554 = vld [vmem:[%s1503 + $0x190] sm:$0xff]
  %v1555 = vld [vmem:[%s1503 + $0x198] sm:$0xff]
  %v1556 = vld [vmem:[%s1503 + $0x1a0] sm:$0xff]
  %v1557 = vld [vmem:[%s1503 + $0x1a8] sm:$0xff]
  %v1558 = vld [vmem:[%s1503 + $0x1b0] sm:$0xff]
  %v1559 = vld [vmem:[%s1503 + $0x1b8] sm:$0xff]
  %v1560 = vld [vmem:[%s1503 + $0x1c0] sm:$0xff]
  %v1561 = vld [vmem:[%s1503 + $0x1c8] sm:$0xff]
  %v1562 = vld [vmem:[%s1503 + $0x1d0] sm:$0xff]
  %v1563 = vld [vmem:[%s1503 + $0x1d8] sm:$0xff]
  %v1564 = vld [vmem:[%s1503 + $0x1e0] sm:$0xff]
  %v1565 = vld [vmem:[%s1503 + $0x1e8] sm:$0xff]
  %v1566 = vld [vmem:[%s1503 + $0x1f0] sm:$0xff]
  %v1567 = vld [vmem:[%s1503 + $0x1f8] sm:$0xff]
  %v1568 = vld [vmem:[%s1503 + $0x200] sm:$0xff]
  %v1569 = vld [vmem:[%s1503 + $0x208] sm:$0xff]
  %v1570 = vld [vmem:[%s1503 + $0x210] sm:$0xff]
  %v1571 = vld [vmem:[%s1503 + $0x218] sm:$0xff]
  %v1572 = vld [vmem:[%s1503 + $0x220] sm:$0xff]
  %v1573 = vld [vmem:[%s1503 + $0x228] sm:$0xff]
  %v1574 = vld [vmem:[%s1503 + $0x230] sm:$0xff]
  %v1575 = vld [vmem:[%s1503 + $0x238] sm:$0xff]
  %v1576 = vld [vmem:[%s1503 + $0x240] sm:$0xff]
  %v1577 = vld [vmem:[%s1503 + $0x248] sm:$0xff]
  %v1578 = vld [vmem:[%s1503 + $0x250] sm:$0xff]
  %v1579 = vld [vmem:[%s1503 + $0x258] sm:$0xff]
  %v1580 = vld [vmem:[%s1503 + $0x260] sm:$0xff]
  %v1581 = vld [vmem:[%s1503 + $0x268] sm:$0xff]
  %v1582 = vld [vmem:[%s1503 + $0x270] sm:$0xff]
  %v1583 = vld [vmem:[%s1503 + $0x278] sm:$0xff]
  %v1584 = vld [vmem:[%s1503 + $0x280] sm:$0xff]
  %v1585 = vld [vmem:[%s1503 + $0x288] sm:$0xff]
  %v1586 = vld [vmem:[%s1503 + $0x290] sm:$0xff]
  %v1587 = vld [vmem:[%s1503 + $0x298] sm:$0xff]
  %v1588 = vld [vmem:[%s1503 + $0x2a0] sm:$0xff]
  %v1589 = vld [vmem:[%s1503 + $0x2a8] sm:$0xff]
  %v1590 = vld [vmem:[%s1503 + $0x2b0] sm:$0xff]
  %v1591 = vld [vmem:[%s1503 + $0x2b8] sm:$0xff]
  %v1592 = vld [vmem:[%s1503 + $0x2c0] sm:$0xff]
  %v1593 = vld [vmem:[%s1503 + $0x2c8] sm:$0xff]
  %v1594 = vld [vmem:[%s1503 + $0x2d0] sm:$0xff]
  %v1595 = vld [vmem:[%s1503 + $0x2d8] sm:$0xff]
  %v1596 = vld [vmem:[%s1503 + $0x2e0] sm:$0xff]
  %v1597 = vld [vmem:[%s1503 + $0x2e8] sm:$0xff]
  %v1598 = vld [vmem:[%s1503 + $0x2f0] sm:$0xff]
  %v1599 = vld [vmem:[%s1503 + $0x2f8] sm:$0xff]
  %v1600 = vld [vmem:[%s1503 + $0x300] sm:$0xff]
  %v1601 = vld [vmem:[%s1503 + $0x308] sm:$0xff]
  %v1602 = vld [vmem:[%s1503 + $0x310] sm:$0xff]
  %v1603 = vld [vmem:[%s1503 + $0x318] sm:$0xff]
  %v1604 = vld [vmem:[%s1503 + $0x320] sm:$0xff]
  %v1605 = vld [vmem:[%s1503 + $0x328] sm:$0xff]
  %v1606 = vld [vmem:[%s1503 + $0x330] sm:$0xff]
  %v1607 = vld [vmem:[%s1503 + $0x338] sm:$0xff]
  %v1608 = vld [vmem:[%s1503 + $0x340] sm:$0xff]
  %v1609 = vld [vmem:[%s1503 + $0x348] sm:$0xff]
  %v1610 = vld [vmem:[%s1503 + $0x350] sm:$0xff]
  %v1611 = vld [vmem:[%s1503 + $0x358] sm:$0xff]
  %v1612 = vld [vmem:[%s1503 + $0x360] sm:$0xff]
  %v1613 = vld [vmem:[%s1503 + $0x368] sm:$0xff]
  %v1614 = vld [vmem:[%s1503 + $0x370] sm:$0xff]
  %v1615 = vld [vmem:[%s1503 + $0x378] sm:$0xff]
  %v1616 = vld [vmem:[%s1503 + $0x380] sm:$0xff]
  %v1617 = vld [vmem:[%s1503 + $0x388] sm:$0xff]
  %v1618 = vld [vmem:[%s1503 + $0x390] sm:$0xff]
  %v1619 = vld [vmem:[%s1503 + $0x398] sm:$0xff]
  %v1620 = vld [vmem:[%s1503 + $0x3a0] sm:$0xff]
  %v1621 = vld [vmem:[%s1503 + $0x3a8] sm:$0xff]
  %v1622 = vld [vmem:[%s1503 + $0x3b0] sm:$0xff]
  %v1623 = vld [vmem:[%s1503 + $0x3b8] sm:$0xff]
  %v1624 = vld [vmem:[%s1503 + $0x3c0] sm:$0xff]
  %v1625 = vld [vmem:[%s1503 + $0x3c8] sm:$0xff]
  %v1626 = vld [vmem:[%s1503 + $0x3d0] sm:$0xff]
  %v1627 = vld [vmem:[%s1503 + $0x3d8] sm:$0xff]
  %v1628 = vld [vmem:[%s1503 + $0x3e0] sm:$0xff]
  %v1629 = vld [vmem:[%s1503 + $0x3e8] sm:$0xff]
  %v1630 = vld [vmem:[%s1503 + $0x3f0] sm:$0xff]
  %v1631 = vld [vmem:[%s1503 + $0x3f8] sm:$0xff]
  %s1632 = scalar_lea.vmem %s4, 8
  %v1633 = vld [vmem:[%s1632] sm:$0xf]
  %v1635 = vlaneseq
  %v1636 = vshrl.u32 %v1635, 7
  %v1637 = vsub.s32 0, %v1636
  %v1638 = vrot.slane %v1633, %v1637
  %v1639 = vlaneseq
  %v1640 = vshrl.u32 %v1639, 7
  %v1641 = vsub.s32 1, %v1640
  %v1642 = vrot.slane %v1633, %v1641
  %v1643 = vlaneseq
  %v1644 = vshrl.u32 %v1643, 7
  %v1645 = vsub.s32 2, %v1644
  %v1646 = vrot.slane %v1633, %v1645
  %v1647 = vlaneseq
  %v1648 = vshrl.u32 %v1647, 7
  %v1649 = vsub.s32 3, %v1648
  %v1650 = vrot.slane %v1633, %v1649
  %1655 = vmatprep.subr.mxu0 %v1505
  %1656 = vmatpush1.msra.mxu0 %v1504
  %1657 = vmatprep.subr.mxu0 %v1509
  %1658 = vmatpush1.msra.mxu0 %v1508
  %1659 = vmatprep.subr.mxu0 %v1513
  %1660 = vmatpush1.msra.mxu0 %v1512
  %1661 = vmatprep.subr.mxu0 %v1517
  %1662 = vmatpush1.msra.mxu0 %v1516
  %1663 = vmatprep.subr.mxu0 %v1521
  %1664 = vmatpush1.msra.mxu0 %v1520
  %1665 = vmatprep.subr.mxu0 %v1525
  %1666 = vmatpush1.msra.mxu0 %v1524
  %1667 = vmatprep.subr.mxu0 %v1529
  %1668 = vmatpush1.msra.mxu0 %v1528
  %1669 = vmatprep.subr.mxu0 %v1533
  %1670 = vmatpush1.msra.mxu0 %v1532
  %1671 = vmatprep.subr.mxu0 %v1537
  %1672 = vmatpush1.msra.mxu0 %v1536
  %1673 = vmatprep.subr.mxu0 %v1541
  %1674 = vmatpush1.msra.mxu0 %v1540
  %1675 = vmatprep.subr.mxu0 %v1545
  %1676 = vmatpush1.msra.mxu0 %v1544
  %1677 = vmatprep.subr.mxu0 %v1549
  %1678 = vmatpush1.msra.mxu0 %v1548
  %1679 = vmatprep.subr.mxu0 %v1553
  %1680 = vmatpush1.msra.mxu0 %v1552
  %1681 = vmatprep.subr.mxu0 %v1557
  %1682 = vmatpush1.msra.mxu0 %v1556
  %1683 = vmatprep.subr.mxu0 %v1561
  %1684 = vmatpush1.msra.mxu0 %v1560
  %1685 = vmatprep.subr.mxu0 %v1565
  %1686 = vmatpush1.msra.mxu0 %v1564
  %1687 = vmatprep.subr.mxu0 %v1569
  %1688 = vmatpush1.msra.mxu0 %v1568
  %1689 = vmatprep.subr.mxu0 %v1573
  %1690 = vmatpush1.msra.mxu0 %v1572
  %1691 = vmatprep.subr.mxu0 %v1577
  %1692 = vmatpush1.msra.mxu0 %v1576
  %1693 = vmatprep.subr.mxu0 %v1581
  %1694 = vmatpush1.msra.mxu0 %v1580
  %1695 = vmatprep.subr.mxu0 %v1585
  %1696 = vmatpush1.msra.mxu0 %v1584
  %1697 = vmatprep.subr.mxu0 %v1589
  %1698 = vmatpush1.msra.mxu0 %v1588
  %1699 = vmatprep.subr.mxu0 %v1593
  %1700 = vmatpush1.msra.mxu0 %v1592
  %1701 = vmatprep.subr.mxu0 %v1597
  %1702 = vmatpush1.msra.mxu0 %v1596
  %1703 = vmatprep.subr.mxu0 %v1601
  %1704 = vmatpush1.msra.mxu0 %v1600
  %1705 = vmatprep.subr.mxu0 %v1605
  %1706 = vmatpush1.msra.mxu0 %v1604
  %1707 = vmatprep.subr.mxu0 %v1609
  %1708 = vmatpush1.msra.mxu0 %v1608
  %1709 = vmatprep.subr.mxu0 %v1613
  %1710 = vmatpush1.msra.mxu0 %v1612
  %1711 = vmatprep.subr.mxu0 %v1617
  %1712 = vmatpush1.msra.mxu0 %v1616
  %1713 = vmatprep.subr.mxu0 %v1621
  %1714 = vmatpush1.msra.mxu0 %v1620
  %1715 = vmatprep.subr.mxu0 %v1625
  %1716 = vmatpush1.msra.mxu0 %v1624
  %1717 = vmatprep.subr.mxu0 %v1629
  %1718 = vmatpush1.msra.mxu0 %v1628
  %1719 = vmatprep.mubr.f32.mxu0 %v1502
  %1720 = vmatmul.mubr.f32.gmra.mrb[0].mxu0 %v1498
  %v1721 = vpop.f32.mrb[0].mxu0
  %v1722 = vadd.f32 %v1638, %v1721
  %v1723 = vpop.f32.mrb[0].mxu0
  %v1724 = vadd.f32 %v1642, %v1723
  %1725 = vdwg.mxu0
  %1726 = vmatprep.subr.mxu0 %v1507
  %1727 = vmatpush1.msra.mxu0 %v1506
  %1728 = vmatprep.subr.mxu0 %v1511
  %1729 = vmatpush1.msra.mxu0 %v1510
  %1730 = vmatprep.subr.mxu0 %v1515
  %1731 = vmatpush1.msra.mxu0 %v1514
  %1732 = vmatprep.subr.mxu0 %v1519
  %1733 = vmatpush1.msra.mxu0 %v1518
  %1734 = vmatprep.subr.mxu0 %v1523
  %1735 = vmatpush1.msra.mxu0 %v1522
  %1736 = vmatprep.subr.mxu0 %v1527
  %1737 = vmatpush1.msra.mxu0 %v1526
  %1738 = vmatprep.subr.mxu0 %v1531
  %1739 = vmatpush1.msra.mxu0 %v1530
  %1740 = vmatprep.subr.mxu0 %v1535
  %1741 = vmatpush1.msra.mxu0 %v1534
  %1742 = vmatprep.subr.mxu0 %v1539
  %1743 = vmatpush1.msra.mxu0 %v1538
  %1744 = vmatprep.subr.mxu0 %v1543
  %1745 = vmatpush1.msra.mxu0 %v1542
  %1746 = vmatprep.subr.mxu0 %v1547
  %1747 = vmatpush1.msra.mxu0 %v1546
  %1748 = vmatprep.subr.mxu0 %v1551
  %1749 = vmatpush1.msra.mxu0 %v1550
  %1750 = vmatprep.subr.mxu0 %v1555
  %1751 = vmatpush1.msra.mxu0 %v1554
  %1752 = vmatprep.subr.mxu0 %v1559
  %1753 = vmatpush1.msra.mxu0 %v1558
  %1754 = vmatprep.subr.mxu0 %v1563
  %1755 = vmatpush1.msra.mxu0 %v1562
  %1756 = vmatprep.subr.mxu0 %v1567
  %1757 = vmatpush1.msra.mxu0 %v1566
  %1758 = vmatprep.subr.mxu0 %v1571
  %1759 = vmatpush1.msra.mxu0 %v1570
  %1760 = vmatprep.subr.mxu0 %v1575
  %1761 = vmatpush1.msra.mxu0 %v1574
  %1762 = vmatprep.subr.mxu0 %v1579
  %1763 = vmatpush1.msra.mxu0 %v1578
  %1764 = vmatprep.subr.mxu0 %v1583
  %1765 = vmatpush1.msra.mxu0 %v1582
  %1766 = vmatprep.subr.mxu0 %v1587
  %1767 = vmatpush1.msra.mxu0 %v1586
  %1768 = vmatprep.subr.mxu0 %v1591
  %1769 = vmatpush1.msra.mxu0 %v1590
  %1770 = vmatprep.subr.mxu0 %v1595
  %1771 = vmatpush1.msra.mxu0 %v1594
  %1772 = vmatprep.subr.mxu0 %v1599
  %1773 = vmatpush1.msra.mxu0 %v1598
  %1774 = vmatprep.subr.mxu0 %v1603
  %1775 = vmatpush1.msra.mxu0 %v1602
  %1776 = vmatprep.subr.mxu0 %v1607
  %1777 = vmatpush1.msra.mxu0 %v1606
  %1778 = vmatprep.subr.mxu0 %v1611
  %1779 = vmatpush1.msra.mxu0 %v1610
  %1780 = vmatprep.subr.mxu0 %v1615
  %1781 = vmatpush1.msra.mxu0 %v1614
  %1782 = vmatprep.subr.mxu0 %v1619
  %1783 = vmatpush1.msra.mxu0 %v1618
  %1784 = vmatprep.subr.mxu0 %v1623
  %1785 = vmatpush1.msra.mxu0 %v1622
  %1786 = vmatprep.subr.mxu0 %v1627
  %1787 = vmatpush1.msra.mxu0 %v1626
  %1788 = vmatprep.subr.mxu0 %v1631
  %1789 = vmatpush1.msra.mxu0 %v1630
  %1790 = vmatprep.mubr.f32.mxu0 %v1502
  %1791 = vmatmul.mubr.f32.gmra.mrb[0].mxu0 %v1498
  %v1792 = vpop.f32.mrb[0].mxu0
  %v1793 = vadd.f32 %v1646, %v1792
  %v1794 = vpop.f32.mrb[0].mxu0
  %v1795 = vadd.f32 %v1650, %v1794
  %1796 = vdwg.mxu0
  %s1797 = scalar_lea.vmem %s11, 16
  %v1798 = vld [vmem:[%s1797] sm:$0xff]
  %v1799 = vxor.u32 %v1722, 2147483648
  %v1800 = vmul.f32 %v1799, 1.442695
  %v1801 = vpow.pop %v1800
  %v1802 = vadd.f32 %v1801, 1.0
  %v1803 = vrcp.pop %v1802
  %v1804 = vmul.f32 1.0, %v1803
  %v1805 = vxor.u32 %v1724, 2147483648
  %v1806 = vmul.f32 %v1805, 1.442695
  %v1807 = vpow.pop %v1806
  %v1808 = vadd.f32 %v1807, 1.0
  %v1809 = vrcp.pop %v1808
  %v1810 = vmul.f32 1.0, %v1809
  %v1811 = vtanh.pop %v1793
  %v1812 = vxor.u32 %v1795, 2147483648
  %v1813 = vmul.f32 %v1812, 1.442695
  %v1814 = vpow.pop %v1813
  %v1815 = vadd.f32 %v1814, 1.0
  %v1816 = vrcp.pop %v1815
  %v1817 = vmul.f32 1.0, %v1816
  %v1818 = vmul.f32 %v1810, %v1798
  %v1819 = vmul.f32 %v1804, %v1811
  %v1820 = vadd.f32 %v1818, %v1819
  %v1821 = vtanh.pop %v1820
  %v1822 = vmul.f32 %v1817, %v1821
  %1823 = vst [vmem:[%s1501] sm:$0xff] %v1822
  %1824 = vst [vmem:[%s1797] sm:$0xff] %v1820
  %1825 = vst [vmem:[#allocation3] sm:$0xff] %v1822
  %s1826 = scalar_lea.vmem [#allocation2], 32
  %v1827 = vld [vmem:[%s1826] sm:$0xff]
  %v1828 = vld [vmem:[%s1826 + $0x8] sm:$0xff]
  %v1829 = vld [vmem:[%s1826 + $0x10] sm:$0xff]
  %v1830 = vld [vmem:[%s1826 + $0x18] sm:$0xff]
  %v1831 = vld [vmem:[%s10] sm:$0xff]
  %v1832 = vld [vmem:[%s2] sm:$0xff]
  %v1833 = vld [vmem:[%s2 + $0x8] sm:$0xff]
  %v1834 = vld [vmem:[%s2 + $0x10] sm:$0xff]
  %v1835 = vld [vmem:[%s2 + $0x18] sm:$0xff]
  %v1836 = vld [vmem:[%s2 + $0x20] sm:$0xff]
  %v1837 = vld [vmem:[%s2 + $0x28] sm:$0xff]
  %v1838 = vld [vmem:[%s2 + $0x30] sm:$0xff]
  %v1839 = vld [vmem:[%s2 + $0x38] sm:$0xff]
  %v1840 = vld [vmem:[%s2 + $0x40] sm:$0xff]
  %v1841 = vld [vmem:[%s2 + $0x48] sm:$0xff]
  %v1842 = vld [vmem:[%s2 + $0x50] sm:$0xff]
  %v1843 = vld [vmem:[%s2 + $0x58] sm:$0xff]
  %v1844 = vld [vmem:[%s2 + $0x60] sm:$0xff]
  %v1845 = vld [vmem:[%s2 + $0x68] sm:$0xff]
  %v1846 = vld [vmem:[%s2 + $0x70] sm:$0xff]
  %v1847 = vld [vmem:[%s2 + $0x78] sm:$0xff]
  %v1848 = vld [vmem:[%s2 + $0x80] sm:$0xff]
  %v1849 = vld [vmem:[%s2 + $0x88] sm:$0xff]
  %v1850 = vld [vmem:[%s2 + $0x90] sm:$0xff]
  %v1851 = vld [vmem:[%s2 + $0x98] sm:$0xff]
  %v1852 = vld [vmem:[%s2 + $0xa0] sm:$0xff]
  %v1853 = vld [vmem:[%s2 + $0xa8] sm:$0xff]
  %v1854 = vld [vmem:[%s2 + $0xb0] sm:$0xff]
  %v1855 = vld [vmem:[%s2 + $0xb8] sm:$0xff]
  %v1856 = vld [vmem:[%s2 + $0xc0] sm:$0xff]
  %v1857 = vld [vmem:[%s2 + $0xc8] sm:$0xff]
  %v1858 = vld [vmem:[%s2 + $0xd0] sm:$0xff]
  %v1859 = vld [vmem:[%s2 + $0xd8] sm:$0xff]
  %v1860 = vld [vmem:[%s2 + $0xe0] sm:$0xff]
  %v1861 = vld [vmem:[%s2 + $0xe8] sm:$0xff]
  %v1862 = vld [vmem:[%s2 + $0xf0] sm:$0xff]
  %v1863 = vld [vmem:[%s2 + $0xf8] sm:$0xff]
  %v1864 = vld [vmem:[%s2 + $0x100] sm:$0xff]
  %v1865 = vld [vmem:[%s2 + $0x108] sm:$0xff]
  %v1866 = vld [vmem:[%s2 + $0x110] sm:$0xff]
  %v1867 = vld [vmem:[%s2 + $0x118] sm:$0xff]
  %v1868 = vld [vmem:[%s2 + $0x120] sm:$0xff]
  %v1869 = vld [vmem:[%s2 + $0x128] sm:$0xff]
  %v1870 = vld [vmem:[%s2 + $0x130] sm:$0xff]
  %v1871 = vld [vmem:[%s2 + $0x138] sm:$0xff]
  %v1872 = vld [vmem:[%s2 + $0x140] sm:$0xff]
  %v1873 = vld [vmem:[%s2 + $0x148] sm:$0xff]
  %v1874 = vld [vmem:[%s2 + $0x150] sm:$0xff]
  %v1875 = vld [vmem:[%s2 + $0x158] sm:$0xff]
  %v1876 = vld [vmem:[%s2 + $0x160] sm:$0xff]
  %v1877 = vld [vmem:[%s2 + $0x168] sm:$0xff]
  %v1878 = vld [vmem:[%s2 + $0x170] sm:$0xff]
  %v1879 = vld [vmem:[%s2 + $0x178] sm:$0xff]
  %v1880 = vld [vmem:[%s2 + $0x180] sm:$0xff]
  %v1881 = vld [vmem:[%s2 + $0x188] sm:$0xff]
  %v1882 = vld [vmem:[%s2 + $0x190] sm:$0xff]
  %v1883 = vld [vmem:[%s2 + $0x198] sm:$0xff]
  %v1884 = vld [vmem:[%s2 + $0x1a0] sm:$0xff]
  %v1885 = vld [vmem:[%s2 + $0x1a8] sm:$0xff]
  %v1886 = vld [vmem:[%s2 + $0x1b0] sm:$0xff]
  %v1887 = vld [vmem:[%s2 + $0x1b8] sm:$0xff]
  %v1888 = vld [vmem:[%s2 + $0x1c0] sm:$0xff]
  %v1889 = vld [vmem:[%s2 + $0x1c8] sm:$0xff]
  %v1890 = vld [vmem:[%s2 + $0x1d0] sm:$0xff]
  %v1891 = vld [vmem:[%s2 + $0x1d8] sm:$0xff]
  %v1892 = vld [vmem:[%s2 + $0x1e0] sm:$0xff]
  %v1893 = vld [vmem:[%s2 + $0x1e8] sm:$0xff]
  %v1894 = vld [vmem:[%s2 + $0x1f0] sm:$0xff]
  %v1895 = vld [vmem:[%s2 + $0x1f8] sm:$0xff]
  %1896 = vmatprep.subr.mxu0 %v1833
  %1897 = vmatpush1.msra.mxu0 %v1832
  %1898 = vmatprep.subr.mxu0 %v1837
  %1899 = vmatpush1.msra.mxu0 %v1836
  %1900 = vmatprep.subr.mxu0 %v1841
  %1901 = vmatpush1.msra.mxu0 %v1840
  %1902 = vmatprep.subr.mxu0 %v1845
  %1903 = vmatpush1.msra.mxu0 %v1844
  %1904 = vmatprep.subr.mxu0 %v1849
  %1905 = vmatpush1.msra.mxu0 %v1848
  %1906 = vmatprep.subr.mxu0 %v1853
  %1907 = vmatpush1.msra.mxu0 %v1852
  %1908 = vmatprep.subr.mxu0 %v1857
  %1909 = vmatpush1.msra.mxu0 %v1856
  %1910 = vmatprep.subr.mxu0 %v1861
  %1911 = vmatpush1.msra.mxu0 %v1860
  %1912 = vmatprep.subr.mxu0 %v1865
  %1913 = vmatpush1.msra.mxu0 %v1864
  %1914 = vmatprep.subr.mxu0 %v1869
  %1915 = vmatpush1.msra.mxu0 %v1868
  %1916 = vmatprep.subr.mxu0 %v1873
  %1917 = vmatpush1.msra.mxu0 %v1872
  %1918 = vmatprep.subr.mxu0 %v1877
  %1919 = vmatpush1.msra.mxu0 %v1876
  %1920 = vmatprep.subr.mxu0 %v1881
  %1921 = vmatpush1.msra.mxu0 %v1880
  %1922 = vmatprep.subr.mxu0 %v1885
  %1923 = vmatpush1.msra.mxu0 %v1884
  %1924 = vmatprep.subr.mxu0 %v1889
  %1925 = vmatpush1.msra.mxu0 %v1888
  %1926 = vmatprep.subr.mxu0 %v1893
  %1927 = vmatpush1.msra.mxu0 %v1892
  %1928 = vmatprep.subr.mxu0 0.0
  %1929 = vmatpush1.msra.mxu0 0.0
  %1930 = vmatprep.subr.mxu0 0.0
  %1931 = vmatpush1.msra.mxu0 0.0
  %1932 = vmatprep.subr.mxu0 0.0
  %1933 = vmatpush1.msra.mxu0 0.0
  %1934 = vmatprep.subr.mxu0 0.0
  %1935 = vmatpush1.msra.mxu0 0.0
  %1936 = vmatprep.subr.mxu0 0.0
  %1937 = vmatpush1.msra.mxu0 0.0
  %1938 = vmatprep.subr.mxu0 0.0
  %1939 = vmatpush1.msra.mxu0 0.0
  %1940 = vmatprep.subr.mxu0 0.0
  %1941 = vmatpush1.msra.mxu0 0.0
  %1942 = vmatprep.subr.mxu0 0.0
  %1943 = vmatpush1.msra.mxu0 0.0
  %1944 = vmatprep.subr.mxu0 0.0
  %1945 = vmatpush1.msra.mxu0 0.0
  %1946 = vmatprep.subr.mxu0 0.0
  %1947 = vmatpush1.msra.mxu0 0.0
  %1948 = vmatprep.subr.mxu0 0.0
  %1949 = vmatpush1.msra.mxu0 0.0
  %1950 = vmatprep.subr.mxu0 0.0
  %1951 = vmatpush1.msra.mxu0 0.0
  %1952 = vmatprep.subr.mxu0 0.0
  %1953 = vmatpush1.msra.mxu0 0.0
  %1954 = vmatprep.subr.mxu0 0.0
  %1955 = vmatpush1.msra.mxu0 0.0
  %1956 = vmatprep.subr.mxu0 0.0
  %1957 = vmatpush1.msra.mxu0 0.0
  %1958 = vmatprep.subr.mxu0 0.0
  %1959 = vmatpush1.msra.mxu0 0.0
  %1960 = vmatprep.mubr.f32.mxu0 0.0
  %1961 = vmatmul.mubr.f32.gmra.mrb[0].mxu0 %v1831
  %v1962 = vpop.f32.mrb[0].mxu0
  %v1963 = vadd.f32 0.0, %v1962
  %v1964 = vpop.f32.mrb[0].mxu0
  %v1965 = vadd.f32 0.0, %v1964
  %1966 = vdwg.mxu0
  %1967 = vmatprep.subr.mxu0 %v1835
  %1968 = vmatpush1.msra.mxu0 %v1834
  %1969 = vmatprep.subr.mxu0 %v1839
  %1970 = vmatpush1.msra.mxu0 %v1838
  %1971 = vmatprep.subr.mxu0 %v1843
  %1972 = vmatpush1.msra.mxu0 %v1842
  %1973 = vmatprep.subr.mxu0 %v1847
  %1974 = vmatpush1.msra.mxu0 %v1846
  %1975 = vmatprep.subr.mxu0 %v1851
  %1976 = vmatpush1.msra.mxu0 %v1850
  %1977 = vmatprep.subr.mxu0 %v1855
  %1978 = vmatpush1.msra.mxu0 %v1854
  %1979 = vmatprep.subr.mxu0 %v1859
  %1980 = vmatpush1.msra.mxu0 %v1858
  %1981 = vmatprep.subr.mxu0 %v1863
  %1982 = vmatpush1.msra.mxu0 %v1862
  %1983 = vmatprep.subr.mxu0 %v1867
  %1984 = vmatpush1.msra.mxu0 %v1866
  %1985 = vmatprep.subr.mxu0 %v1871
  %1986 = vmatpush1.msra.mxu0 %v1870
  %1987 = vmatprep.subr.mxu0 %v1875
  %1988 = vmatpush1.msra.mxu0 %v1874
  %1989 = vmatprep.subr.mxu0 %v1879
  %1990 = vmatpush1.msra.mxu0 %v1878
  %1991 = vmatprep.subr.mxu0 %v1883
  %1992 = vmatpush1.msra.mxu0 %v1882
  %1993 = vmatprep.subr.mxu0 %v1887
  %1994 = vmatpush1.msra.mxu0 %v1886
  %1995 = vmatprep.subr.mxu0 %v1891
  %1996 = vmatpush1.msra.mxu0 %v1890
  %1997 = vmatprep.subr.mxu0 %v1895
  %1998 = vmatpush1.msra.mxu0 %v1894
  %1999 = vmatprep.subr.mxu0 0.0
  %2000 = vmatpush1.msra.mxu0 0.0
  %2001 = vmatprep.subr.mxu0 0.0
  %2002 = vmatpush1.msra.mxu0 0.0
  %2003 = vmatprep.subr.mxu0 0.0
  %2004 = vmatpush1.msra.mxu0 0.0
  %2005 = vmatprep.subr.mxu0 0.0
  %2006 = vmatpush1.msra.mxu0 0.0
  %2007 = vmatprep.subr.mxu0 0.0
  %2008 = vmatpush1.msra.mxu0 0.0
  %2009 = vmatprep.subr.mxu0 0.0
  %2010 = vmatpush1.msra.mxu0 0.0
  %2011 = vmatprep.subr.mxu0 0.0
  %2012 = vmatpush1.msra.mxu0 0.0
  %2013 = vmatprep.subr.mxu0 0.0
  %2014 = vmatpush1.msra.mxu0 0.0
  %2015 = vmatprep.subr.mxu0 0.0
  %2016 = vmatpush1.msra.mxu0 0.0
  %2017 = vmatprep.subr.mxu0 0.0
  %2018 = vmatpush1.msra.mxu0 0.0
  %2019 = vmatprep.subr.mxu0 0.0
  %2020 = vmatpush1.msra.mxu0 0.0
  %2021 = vmatprep.subr.mxu0 0.0
  %2022 = vmatpush1.msra.mxu0 0.0
  %2023 = vmatprep.subr.mxu0 0.0
  %2024 = vmatpush1.msra.mxu0 0.0
  %2025 = vmatprep.subr.mxu0 0.0
  %2026 = vmatpush1.msra.mxu0 0.0
  %2027 = vmatprep.subr.mxu0 0.0
  %2028 = vmatpush1.msra.mxu0 0.0
  %2029 = vmatprep.subr.mxu0 0.0
  %2030 = vmatpush1.msra.mxu0 0.0
  %2031 = vmatprep.mubr.f32.mxu0 0.0
  %2032 = vmatmul.mubr.f32.gmra.mrb[0].mxu0 %v1831
  %v2033 = vpop.f32.mrb[0].mxu0
  %v2034 = vadd.f32 0.0, %v2033
  %v2035 = vpop.f32.mrb[0].mxu0
  %v2036 = vadd.f32 0.0, %v2035
  %2037 = vdwg.mxu0
  %v2038 = vadd.f32 %v1827, %v1963
  %v2039 = vadd.f32 %v1828, %v1965
  %v2040 = vadd.f32 %v1829, %v2034
  %v2041 = vadd.f32 %v1830, %v2036
  %v2042 = vld [vmem:[%s4] sm:$0xf]
  %v2044 = vlaneseq
  %v2045 = vshrl.u32 %v2044, 7
  %v2046 = vsub.s32 0, %v2045
  %v2047 = vrot.slane %v2042, %v2046
  %v2048 = vlaneseq
  %v2049 = vshrl.u32 %v2048, 7
  %v2050 = vsub.s32 1, %v2049
  %v2051 = vrot.slane %v2042, %v2050
  %v2052 = vlaneseq
  %v2053 = vshrl.u32 %v2052, 7
  %v2054 = vsub.s32 2, %v2053
  %v2055 = vrot.slane %v2042, %v2054
  %v2056 = vlaneseq
  %v2057 = vshrl.u32 %v2056, 7
  %v2058 = vsub.s32 3, %v2057
  %v2059 = vrot.slane %v2042, %v2058
  %v2064 = vadd.f32 %v2038, %v2047
  %v2065 = vadd.f32 %v2039, %v2051
  %v2066 = vadd.f32 %v2040, %v2055
  %v2067 = vadd.f32 %v2041, %v2059
  %v2068 = vld [vmem:[%s11] sm:$0xff]
  %v2069 = vxor.u32 %v2064, 2147483648
  %v2070 = vmul.f32 %v2069, 1.442695
  %v2071 = vpow.pop %v2070
  %v2072 = vadd.f32 %v2071, 1.0
  %v2073 = vrcp.pop %v2072
  %v2074 = vmul.f32 1.0, %v2073
  %v2075 = vxor.u32 %v2065, 2147483648
  %v2076 = vmul.f32 %v2075, 1.442695
  %v2077 = vpow.pop %v2076
  %v2078 = vadd.f32 %v2077, 1.0
  %v2079 = vrcp.pop %v2078
  %v2080 = vmul.f32 1.0, %v2079
  %v2081 = vtanh.pop %v2066
  %v2082 = vxor.u32 %v2067, 2147483648
  %v2083 = vmul.f32 %v2082, 1.442695
  %v2084 = vpow.pop %v2083
  %v2085 = vadd.f32 %v2084, 1.0
  %v2086 = vrcp.pop %v2085
  %v2087 = vmul.f32 1.0, %v2086
  %v2088 = vmul.f32 %v2080, %v2068
  %v2089 = vmul.f32 %v2074, %v2081
  %v2090 = vadd.f32 %v2088, %v2089
  %v2091 = vtanh.pop %v2090
  %v2092 = vmul.f32 %v2087, %v2091
  %2093 = vst [vmem:[%s10] sm:$0xff] %v2092
  %2094 = vst [vmem:[%s11] sm:$0xff] %v2090
  %v2095 = vld [vmem:[%s1178] sm:$0xff]
  %v2096 = vld [vmem:[%s3] sm:$0xff]
  %v2097 = vld [vmem:[%s3 + $0x8] sm:$0xff]
  %v2098 = vld [vmem:[%s3 + $0x10] sm:$0xff]
  %v2099 = vld [vmem:[%s3 + $0x18] sm:$0xff]
  %v2100 = vld [vmem:[%s3 + $0x20] sm:$0xff]
  %v2101 = vld [vmem:[%s3 + $0x28] sm:$0xff]
  %v2102 = vld [vmem:[%s3 + $0x30] sm:$0xff]
  %v2103 = vld [vmem:[%s3 + $0x38] sm:$0xff]
  %v2104 = vld [vmem:[%s3 + $0x40] sm:$0xff]
  %v2105 = vld [vmem:[%s3 + $0x48] sm:$0xff]
  %v2106 = vld [vmem:[%s3 + $0x50] sm:$0xff]
  %v2107 = vld [vmem:[%s3 + $0x58] sm:$0xff]
  %v2108 = vld [vmem:[%s3 + $0x60] sm:$0xff]
  %v2109 = vld [vmem:[%s3 + $0x68] sm:$0xff]
  %v2110 = vld [vmem:[%s3 + $0x70] sm:$0xff]
  %v2111 = vld [vmem:[%s3 + $0x78] sm:$0xff]
  %v2112 = vld [vmem:[%s3 + $0x80] sm:$0xff]
  %v2113 = vld [vmem:[%s3 + $0x88] sm:$0xff]
  %v2114 = vld [vmem:[%s3 + $0x90] sm:$0xff]
  %v2115 = vld [vmem:[%s3 + $0x98] sm:$0xff]
  %v2116 = vld [vmem:[%s3 + $0xa0] sm:$0xff]
  %v2117 = vld [vmem:[%s3 + $0xa8] sm:$0xff]
  %v2118 = vld [vmem:[%s3 + $0xb0] sm:$0xff]
  %v2119 = vld [vmem:[%s3 + $0xb8] sm:$0xff]
  %v2120 = vld [vmem:[%s3 + $0xc0] sm:$0xff]
  %v2121 = vld [vmem:[%s3 + $0xc8] sm:$0xff]
  %v2122 = vld [vmem:[%s3 + $0xd0] sm:$0xff]
  %v2123 = vld [vmem:[%s3 + $0xd8] sm:$0xff]
  %v2124 = vld [vmem:[%s3 + $0xe0] sm:$0xff]
  %v2125 = vld [vmem:[%s3 + $0xe8] sm:$0xff]
  %v2126 = vld [vmem:[%s3 + $0xf0] sm:$0xff]
  %v2127 = vld [vmem:[%s3 + $0xf8] sm:$0xff]
  %v2128 = vld [vmem:[%s3 + $0x100] sm:$0xff]
  %v2129 = vld [vmem:[%s3 + $0x108] sm:$0xff]
  %v2130 = vld [vmem:[%s3 + $0x110] sm:$0xff]
  %v2131 = vld [vmem:[%s3 + $0x118] sm:$0xff]
  %v2132 = vld [vmem:[%s3 + $0x120] sm:$0xff]
  %v2133 = vld [vmem:[%s3 + $0x128] sm:$0xff]
  %v2134 = vld [vmem:[%s3 + $0x130] sm:$0xff]
  %v2135 = vld [vmem:[%s3 + $0x138] sm:$0xff]
  %v2136 = vld [vmem:[%s3 + $0x140] sm:$0xff]
  %v2137 = vld [vmem:[%s3 + $0x148] sm:$0xff]
  %v2138 = vld [vmem:[%s3 + $0x150] sm:$0xff]
  %v2139 = vld [vmem:[%s3 + $0x158] sm:$0xff]
  %v2140 = vld [vmem:[%s3 + $0x160] sm:$0xff]
  %v2141 = vld [vmem:[%s3 + $0x168] sm:$0xff]
  %v2142 = vld [vmem:[%s3 + $0x170] sm:$0xff]
  %v2143 = vld [vmem:[%s3 + $0x178] sm:$0xff]
  %v2144 = vld [vmem:[%s3 + $0x180] sm:$0xff]
  %v2145 = vld [vmem:[%s3 + $0x188] sm:$0xff]
  %v2146 = vld [vmem:[%s3 + $0x190] sm:$0xff]
  %v2147 = vld [vmem:[%s3 + $0x198] sm:$0xff]
  %v2148 = vld [vmem:[%s3 + $0x1a0] sm:$0xff]
  %v2149 = vld [vmem:[%s3 + $0x1a8] sm:$0xff]
  %v2150 = vld [vmem:[%s3 + $0x1b0] sm:$0xff]
  %v2151 = vld [vmem:[%s3 + $0x1b8] sm:$0xff]
  %v2152 = vld [vmem:[%s3 + $0x1c0] sm:$0xff]
  %v2153 = vld [vmem:[%s3 + $0x1c8] sm:$0xff]
  %v2154 = vld [vmem:[%s3 + $0x1d0] sm:$0xff]
  %v2155 = vld [vmem:[%s3 + $0x1d8] sm:$0xff]
  %v2156 = vld [vmem:[%s3 + $0x1e0] sm:$0xff]
  %v2157 = vld [vmem:[%s3 + $0x1e8] sm:$0xff]
  %v2158 = vld [vmem:[%s3 + $0x1f0] sm:$0xff]
  %v2159 = vld [vmem:[%s3 + $0x1f8] sm:$0xff]
  %v2160 = vld [vmem:[%s3 + $0x200] sm:$0xff]
  %v2161 = vld [vmem:[%s3 + $0x208] sm:$0xff]
  %v2162 = vld [vmem:[%s3 + $0x210] sm:$0xff]
  %v2163 = vld [vmem:[%s3 + $0x218] sm:$0xff]
  %v2164 = vld [vmem:[%s3 + $0x220] sm:$0xff]
  %v2165 = vld [vmem:[%s3 + $0x228] sm:$0xff]
  %v2166 = vld [vmem:[%s3 + $0x230] sm:$0xff]
  %v2167 = vld [vmem:[%s3 + $0x238] sm:$0xff]
  %v2168 = vld [vmem:[%s3 + $0x240] sm:$0xff]
  %v2169 = vld [vmem:[%s3 + $0x248] sm:$0xff]
  %v2170 = vld [vmem:[%s3 + $0x250] sm:$0xff]
  %v2171 = vld [vmem:[%s3 + $0x258] sm:$0xff]
  %v2172 = vld [vmem:[%s3 + $0x260] sm:$0xff]
  %v2173 = vld [vmem:[%s3 + $0x268] sm:$0xff]
  %v2174 = vld [vmem:[%s3 + $0x270] sm:$0xff]
  %v2175 = vld [vmem:[%s3 + $0x278] sm:$0xff]
  %v2176 = vld [vmem:[%s3 + $0x280] sm:$0xff]
  %v2177 = vld [vmem:[%s3 + $0x288] sm:$0xff]
  %v2178 = vld [vmem:[%s3 + $0x290] sm:$0xff]
  %v2179 = vld [vmem:[%s3 + $0x298] sm:$0xff]
  %v2180 = vld [vmem:[%s3 + $0x2a0] sm:$0xff]
  %v2181 = vld [vmem:[%s3 + $0x2a8] sm:$0xff]
  %v2182 = vld [vmem:[%s3 + $0x2b0] sm:$0xff]
  %v2183 = vld [vmem:[%s3 + $0x2b8] sm:$0xff]
  %v2184 = vld [vmem:[%s3 + $0x2c0] sm:$0xff]
  %v2185 = vld [vmem:[%s3 + $0x2c8] sm:$0xff]
  %v2186 = vld [vmem:[%s3 + $0x2d0] sm:$0xff]
  %v2187 = vld [vmem:[%s3 + $0x2d8] sm:$0xff]
  %v2188 = vld [vmem:[%s3 + $0x2e0] sm:$0xff]
  %v2189 = vld [vmem:[%s3 + $0x2e8] sm:$0xff]
  %v2190 = vld [vmem:[%s3 + $0x2f0] sm:$0xff]
  %v2191 = vld [vmem:[%s3 + $0x2f8] sm:$0xff]
  %v2192 = vld [vmem:[%s3 + $0x300] sm:$0xff]
  %v2193 = vld [vmem:[%s3 + $0x308] sm:$0xff]
  %v2194 = vld [vmem:[%s3 + $0x310] sm:$0xff]
  %v2195 = vld [vmem:[%s3 + $0x318] sm:$0xff]
  %v2196 = vld [vmem:[%s3 + $0x320] sm:$0xff]
  %v2197 = vld [vmem:[%s3 + $0x328] sm:$0xff]
  %v2198 = vld [vmem:[%s3 + $0x330] sm:$0xff]
  %v2199 = vld [vmem:[%s3 + $0x338] sm:$0xff]
  %v2200 = vld [vmem:[%s3 + $0x340] sm:$0xff]
  %v2201 = vld [vmem:[%s3 + $0x348] sm:$0xff]
  %v2202 = vld [vmem:[%s3 + $0x350] sm:$0xff]
  %v2203 = vld [vmem:[%s3 + $0x358] sm:$0xff]
  %v2204 = vld [vmem:[%s3 + $0x360] sm:$0xff]
  %v2205 = vld [vmem:[%s3 + $0x368] sm:$0xff]
  %v2206 = vld [vmem:[%s3 + $0x370] sm:$0xff]
  %v2207 = vld [vmem:[%s3 + $0x378] sm:$0xff]
  %v2208 = vld [vmem:[%s3 + $0x380] sm:$0xff]
  %v2209 = vld [vmem:[%s3 + $0x388] sm:$0xff]
  %v2210 = vld [vmem:[%s3 + $0x390] sm:$0xff]
  %v2211 = vld [vmem:[%s3 + $0x398] sm:$0xff]
  %v2212 = vld [vmem:[%s3 + $0x3a0] sm:$0xff]
  %v2213 = vld [vmem:[%s3 + $0x3a8] sm:$0xff]
  %v2214 = vld [vmem:[%s3 + $0x3b0] sm:$0xff]
  %v2215 = vld [vmem:[%s3 + $0x3b8] sm:$0xff]
  %v2216 = vld [vmem:[%s3 + $0x3c0] sm:$0xff]
  %v2217 = vld [vmem:[%s3 + $0x3c8] sm:$0xff]
  %v2218 = vld [vmem:[%s3 + $0x3d0] sm:$0xff]
  %v2219 = vld [vmem:[%s3 + $0x3d8] sm:$0xff]
  %v2220 = vld [vmem:[%s3 + $0x3e0] sm:$0xff]
  %v2221 = vld [vmem:[%s3 + $0x3e8] sm:$0xff]
  %v2222 = vld [vmem:[%s3 + $0x3f0] sm:$0xff]
  %v2223 = vld [vmem:[%s3 + $0x3f8] sm:$0xff]
  %v2224 = vld [vmem:[%s1308] sm:$0xf]
  %v2226 = vlaneseq
  %v2227 = vshrl.u32 %v2226, 7
  %v2228 = vsub.s32 0, %v2227
  %v2229 = vrot.slane %v2224, %v2228
  %v2230 = vlaneseq
  %v2231 = vshrl.u32 %v2230, 7
  %v2232 = vsub.s32 1, %v2231
  %v2233 = vrot.slane %v2224, %v2232
  %v2234 = vlaneseq
  %v2235 = vshrl.u32 %v2234, 7
  %v2236 = vsub.s32 2, %v2235
  %v2237 = vrot.slane %v2224, %v2236
  %v2238 = vlaneseq
  %v2239 = vshrl.u32 %v2238, 7
  %v2240 = vsub.s32 3, %v2239
  %v2241 = vrot.slane %v2224, %v2240
  %2246 = vmatprep.subr.mxu0 %v2097
  %2247 = vmatpush1.msra.mxu0 %v2096
  %2248 = vmatprep.subr.mxu0 %v2101
  %2249 = vmatpush1.msra.mxu0 %v2100
  %2250 = vmatprep.subr.mxu0 %v2105
  %2251 = vmatpush1.msra.mxu0 %v2104
  %2252 = vmatprep.subr.mxu0 %v2109
  %2253 = vmatpush1.msra.mxu0 %v2108
  %2254 = vmatprep.subr.mxu0 %v2113
  %2255 = vmatpush1.msra.mxu0 %v2112
  %2256 = vmatprep.subr.mxu0 %v2117
  %2257 = vmatpush1.msra.mxu0 %v2116
  %2258 = vmatprep.subr.mxu0 %v2121
  %2259 = vmatpush1.msra.mxu0 %v2120
  %2260 = vmatprep.subr.mxu0 %v2125
  %2261 = vmatpush1.msra.mxu0 %v2124
  %2262 = vmatprep.subr.mxu0 %v2129
  %2263 = vmatpush1.msra.mxu0 %v2128
  %2264 = vmatprep.subr.mxu0 %v2133
  %2265 = vmatpush1.msra.mxu0 %v2132
  %2266 = vmatprep.subr.mxu0 %v2137
  %2267 = vmatpush1.msra.mxu0 %v2136
  %2268 = vmatprep.subr.mxu0 %v2141
  %2269 = vmatpush1.msra.mxu0 %v2140
  %2270 = vmatprep.subr.mxu0 %v2145
  %2271 = vmatpush1.msra.mxu0 %v2144
  %2272 = vmatprep.subr.mxu0 %v2149
  %2273 = vmatpush1.msra.mxu0 %v2148
  %2274 = vmatprep.subr.mxu0 %v2153
  %2275 = vmatpush1.msra.mxu0 %v2152
  %2276 = vmatprep.subr.mxu0 %v2157
  %2277 = vmatpush1.msra.mxu0 %v2156
  %2278 = vmatprep.subr.mxu0 %v2161
  %2279 = vmatpush1.msra.mxu0 %v2160
  %2280 = vmatprep.subr.mxu0 %v2165
  %2281 = vmatpush1.msra.mxu0 %v2164
  %2282 = vmatprep.subr.mxu0 %v2169
  %2283 = vmatpush1.msra.mxu0 %v2168
  %2284 = vmatprep.subr.mxu0 %v2173
  %2285 = vmatpush1.msra.mxu0 %v2172
  %2286 = vmatprep.subr.mxu0 %v2177
  %2287 = vmatpush1.msra.mxu0 %v2176
  %2288 = vmatprep.subr.mxu0 %v2181
  %2289 = vmatpush1.msra.mxu0 %v2180
  %2290 = vmatprep.subr.mxu0 %v2185
  %2291 = vmatpush1.msra.mxu0 %v2184
  %2292 = vmatprep.subr.mxu0 %v2189
  %2293 = vmatpush1.msra.mxu0 %v2188
  %2294 = vmatprep.subr.mxu0 %v2193
  %2295 = vmatpush1.msra.mxu0 %v2192
  %2296 = vmatprep.subr.mxu0 %v2197
  %2297 = vmatpush1.msra.mxu0 %v2196
  %2298 = vmatprep.subr.mxu0 %v2201
  %2299 = vmatpush1.msra.mxu0 %v2200
  %2300 = vmatprep.subr.mxu0 %v2205
  %2301 = vmatpush1.msra.mxu0 %v2204
  %2302 = vmatprep.subr.mxu0 %v2209
  %2303 = vmatpush1.msra.mxu0 %v2208
  %2304 = vmatprep.subr.mxu0 %v2213
  %2305 = vmatpush1.msra.mxu0 %v2212
  %2306 = vmatprep.subr.mxu0 %v2217
  %2307 = vmatpush1.msra.mxu0 %v2216
  %2308 = vmatprep.subr.mxu0 %v2221
  %2309 = vmatpush1.msra.mxu0 %v2220
  %2310 = vmatprep.mubr.f32.mxu0 %v2095
  %2311 = vmatmul.mubr.f32.gmra.mrb[0].mxu0 %v2092
  %v2312 = vpop.f32.mrb[0].mxu0
  %v2313 = vadd.f32 %v2229, %v2312
  %v2314 = vpop.f32.mrb[0].mxu0
  %v2315 = vadd.f32 %v2233, %v2314
  %2316 = vdwg.mxu0
  %2317 = vmatprep.subr.mxu0 %v2099
  %2318 = vmatpush1.msra.mxu0 %v2098
  %2319 = vmatprep.subr.mxu0 %v2103
  %2320 = vmatpush1.msra.mxu0 %v2102
  %2321 = vmatprep.subr.mxu0 %v2107
  %2322 = vmatpush1.msra.mxu0 %v2106
  %2323 = vmatprep.subr.mxu0 %v2111
  %2324 = vmatpush1.msra.mxu0 %v2110
  %2325 = vmatprep.subr.mxu0 %v2115
  %2326 = vmatpush1.msra.mxu0 %v2114
  %2327 = vmatprep.subr.mxu0 %v2119
  %2328 = vmatpush1.msra.mxu0 %v2118
  %2329 = vmatprep.subr.mxu0 %v2123
  %2330 = vmatpush1.msra.mxu0 %v2122
  %2331 = vmatprep.subr.mxu0 %v2127
  %2332 = vmatpush1.msra.mxu0 %v2126
  %2333 = vmatprep.subr.mxu0 %v2131
  %2334 = vmatpush1.msra.mxu0 %v2130
  %2335 = vmatprep.subr.mxu0 %v2135
  %2336 = vmatpush1.msra.mxu0 %v2134
  %2337 = vmatprep.subr.mxu0 %v2139
  %2338 = vmatpush1.msra.mxu0 %v2138
  %2339 = vmatprep.subr.mxu0 %v2143
  %2340 = vmatpush1.msra.mxu0 %v2142
  %2341 = vmatprep.subr.mxu0 %v2147
  %2342 = vmatpush1.msra.mxu0 %v2146
  %2343 = vmatprep.subr.mxu0 %v2151
  %2344 = vmatpush1.msra.mxu0 %v2150
  %2345 = vmatprep.subr.mxu0 %v2155
  %2346 = vmatpush1.msra.mxu0 %v2154
  %2347 = vmatprep.subr.mxu0 %v2159
  %2348 = vmatpush1.msra.mxu0 %v2158
  %2349 = vmatprep.subr.mxu0 %v2163
  %2350 = vmatpush1.msra.mxu0 %v2162
  %2351 = vmatprep.subr.mxu0 %v2167
  %2352 = vmatpush1.msra.mxu0 %v2166
  %2353 = vmatprep.subr.mxu0 %v2171
  %2354 = vmatpush1.msra.mxu0 %v2170
  %2355 = vmatprep.subr.mxu0 %v2175
  %2356 = vmatpush1.msra.mxu0 %v2174
  %2357 = vmatprep.subr.mxu0 %v2179
  %2358 = vmatpush1.msra.mxu0 %v2178
  %2359 = vmatprep.subr.mxu0 %v2183
  %2360 = vmatpush1.msra.mxu0 %v2182
  %2361 = vmatprep.subr.mxu0 %v2187
  %2362 = vmatpush1.msra.mxu0 %v2186
  %2363 = vmatprep.subr.mxu0 %v2191
  %2364 = vmatpush1.msra.mxu0 %v2190
  %2365 = vmatprep.subr.mxu0 %v2195
  %2366 = vmatpush1.msra.mxu0 %v2194
  %2367 = vmatprep.subr.mxu0 %v2199
  %2368 = vmatpush1.msra.mxu0 %v2198
  %2369 = vmatprep.subr.mxu0 %v2203
  %2370 = vmatpush1.msra.mxu0 %v2202
  %2371 = vmatprep.subr.mxu0 %v2207
  %2372 = vmatpush1.msra.mxu0 %v2206
  %2373 = vmatprep.subr.mxu0 %v2211
  %2374 = vmatpush1.msra.mxu0 %v2210
  %2375 = vmatprep.subr.mxu0 %v2215
  %2376 = vmatpush1.msra.mxu0 %v2214
  %2377 = vmatprep.subr.mxu0 %v2219
  %2378 = vmatpush1.msra.mxu0 %v2218
  %2379 = vmatprep.subr.mxu0 %v2223
  %2380 = vmatpush1.msra.mxu0 %v2222
  %2381 = vmatprep.mubr.f32.mxu0 %v2095
  %2382 = vmatmul.mubr.f32.gmra.mrb[0].mxu0 %v2092
  %v2383 = vpop.f32.mrb[0].mxu0
  %v2384 = vadd.f32 %v2237, %v2383
  %v2385 = vpop.f32.mrb[0].mxu0
  %v2386 = vadd.f32 %v2241, %v2385
  %2387 = vdwg.mxu0
  %v2388 = vld [vmem:[%s1473] sm:$0xff]
  %v2389 = vxor.u32 %v2313, 2147483648
  %v2390 = vmul.f32 %v2389, 1.442695
  %v2391 = vpow.pop %v2390
  %v2392 = vadd.f32 %v2391, 1.0
  %v2393 = vrcp.pop %v2392
  %v2394 = vmul.f32 1.0, %v2393
  %v2395 = vxor.u32 %v2315, 2147483648
  %v2396 = vmul.f32 %v2395, 1.442695
  %v2397 = vpow.pop %v2396
  %v2398 = vadd.f32 %v2397, 1.0
  %v2399 = vrcp.pop %v2398
  %v2400 = vmul.f32 1.0, %v2399
  %v2401 = vtanh.pop %v2384
  %v2402 = vxor.u32 %v2386, 2147483648
  %v2403 = vmul.f32 %v2402, 1.442695
  %v2404 = vpow.pop %v2403
  %v2405 = vadd.f32 %v2404, 1.0
  %v2406 = vrcp.pop %v2405
  %v2407 = vmul.f32 1.0, %v2406
  %v2408 = vmul.f32 %v2400, %v2388
  %v2409 = vmul.f32 %v2394, %v2401
  %v2410 = vadd.f32 %v2408, %v2409
  %v2411 = vtanh.pop %v2410
  %v2412 = vmul.f32 %v2407, %v2411
  %2413 = vst [vmem:[%s1178] sm:$0xff] %v2412
  %2414 = vst [vmem:[%s1473] sm:$0xff] %v2410
  %v2415 = vld [vmem:[%s1501] sm:$0xff]
  %v2416 = vld [vmem:[%s1503] sm:$0xff]
  %v2417 = vld [vmem:[%s1503 + $0x8] sm:$0xff]
  %v2418 = vld [vmem:[%s1503 + $0x10] sm:$0xff]
  %v2419 = vld [vmem:[%s1503 + $0x18] sm:$0xff]
  %v2420 = vld [vmem:[%s1503 + $0x20] sm:$0xff]
  %v2421 = vld [vmem:[%s1503 + $0x28] sm:$0xff]
  %v2422 = vld [vmem:[%s1503 + $0x30] sm:$0xff]
  %v2423 = vld [vmem:[%s1503 + $0x38] sm:$0xff]
  %v2424 = vld [vmem:[%s1503 + $0x40] sm:$0xff]
  %v2425 = vld [vmem:[%s1503 + $0x48] sm:$0xff]
  %v2426 = vld [vmem:[%s1503 + $0x50] sm:$0xff]
  %v2427 = vld [vmem:[%s1503 + $0x58] sm:$0xff]
  %v2428 = vld [vmem:[%s1503 + $0x60] sm:$0xff]
  %v2429 = vld [vmem:[%s1503 + $0x68] sm:$0xff]
  %v2430 = vld [vmem:[%s1503 + $0x70] sm:$0xff]
  %v2431 = vld [vmem:[%s1503 + $0x78] sm:$0xff]
  %v2432 = vld [vmem:[%s1503 + $0x80] sm:$0xff]
  %v2433 = vld [vmem:[%s1503 + $0x88] sm:$0xff]
  %v2434 = vld [vmem:[%s1503 + $0x90] sm:$0xff]
  %v2435 = vld [vmem:[%s1503 + $0x98] sm:$0xff]
  %v2436 = vld [vmem:[%s1503 + $0xa0] sm:$0xff]
  %v2437 = vld [vmem:[%s1503 + $0xa8] sm:$0xff]
  %v2438 = vld [vmem:[%s1503 + $0xb0] sm:$0xff]
  %v2439 = vld [vmem:[%s1503 + $0xb8] sm:$0xff]
  %v2440 = vld [vmem:[%s1503 + $0xc0] sm:$0xff]
  %v2441 = vld [vmem:[%s1503 + $0xc8] sm:$0xff]
  %v2442 = vld [vmem:[%s1503 + $0xd0] sm:$0xff]
  %v2443 = vld [vmem:[%s1503 + $0xd8] sm:$0xff]
  %v2444 = vld [vmem:[%s1503 + $0xe0] sm:$0xff]
  %v2445 = vld [vmem:[%s1503 + $0xe8] sm:$0xff]
  %v2446 = vld [vmem:[%s1503 + $0xf0] sm:$0xff]
  %v2447 = vld [vmem:[%s1503 + $0xf8] sm:$0xff]
  %v2448 = vld [vmem:[%s1503 + $0x100] sm:$0xff]
  %v2449 = vld [vmem:[%s1503 + $0x108] sm:$0xff]
  %v2450 = vld [vmem:[%s1503 + $0x110] sm:$0xff]
  %v2451 = vld [vmem:[%s1503 + $0x118] sm:$0xff]
  %v2452 = vld [vmem:[%s1503 + $0x120] sm:$0xff]
  %v2453 = vld [vmem:[%s1503 + $0x128] sm:$0xff]
  %v2454 = vld [vmem:[%s1503 + $0x130] sm:$0xff]
  %v2455 = vld [vmem:[%s1503 + $0x138] sm:$0xff]
  %v2456 = vld [vmem:[%s1503 + $0x140] sm:$0xff]
  %v2457 = vld [vmem:[%s1503 + $0x148] sm:$0xff]
  %v2458 = vld [vmem:[%s1503 + $0x150] sm:$0xff]
  %v2459 = vld [vmem:[%s1503 + $0x158] sm:$0xff]
  %v2460 = vld [vmem:[%s1503 + $0x160] sm:$0xff]
  %v2461 = vld [vmem:[%s1503 + $0x168] sm:$0xff]
  %v2462 = vld [vmem:[%s1503 + $0x170] sm:$0xff]
  %v2463 = vld [vmem:[%s1503 + $0x178] sm:$0xff]
  %v2464 = vld [vmem:[%s1503 + $0x180] sm:$0xff]
  %v2465 = vld [vmem:[%s1503 + $0x188] sm:$0xff]
  %v2466 = vld [vmem:[%s1503 + $0x190] sm:$0xff]
  %v2467 = vld [vmem:[%s1503 + $0x198] sm:$0xff]
  %v2468 = vld [vmem:[%s1503 + $0x1a0] sm:$0xff]
  %v2469 = vld [vmem:[%s1503 + $0x1a8] sm:$0xff]
  %v2470 = vld [vmem:[%s1503 + $0x1b0] sm:$0xff]
  %v2471 = vld [vmem:[%s1503 + $0x1b8] sm:$0xff]
  %v2472 = vld [vmem:[%s1503 + $0x1c0] sm:$0xff]
  %v2473 = vld [vmem:[%s1503 + $0x1c8] sm:$0xff]
  %v2474 = vld [vmem:[%s1503 + $0x1d0] sm:$0xff]
  %v2475 = vld [vmem:[%s1503 + $0x1d8] sm:$0xff]
  %v2476 = vld [vmem:[%s1503 + $0x1e0] sm:$0xff]
  %v2477 = vld [vmem:[%s1503 + $0x1e8] sm:$0xff]
  %v2478 = vld [vmem:[%s1503 + $0x1f0] sm:$0xff]
  %v2479 = vld [vmem:[%s1503 + $0x1f8] sm:$0xff]
  %v2480 = vld [vmem:[%s1503 + $0x200] sm:$0xff]
  %v2481 = vld [vmem:[%s1503 + $0x208] sm:$0xff]
  %v2482 = vld [vmem:[%s1503 + $0x210] sm:$0xff]
  %v2483 = vld [vmem:[%s1503 + $0x218] sm:$0xff]
  %v2484 = vld [vmem:[%s1503 + $0x220] sm:$0xff]
  %v2485 = vld [vmem:[%s1503 + $0x228] sm:$0xff]
  %v2486 = vld [vmem:[%s1503 + $0x230] sm:$0xff]
  %v2487 = vld [vmem:[%s1503 + $0x238] sm:$0xff]
  %v2488 = vld [vmem:[%s1503 + $0x240] sm:$0xff]
  %v2489 = vld [vmem:[%s1503 + $0x248] sm:$0xff]
  %v2490 = vld [vmem:[%s1503 + $0x250] sm:$0xff]
  %v2491 = vld [vmem:[%s1503 + $0x258] sm:$0xff]
  %v2492 = vld [vmem:[%s1503 + $0x260] sm:$0xff]
  %v2493 = vld [vmem:[%s1503 + $0x268] sm:$0xff]
  %v2494 = vld [vmem:[%s1503 + $0x270] sm:$0xff]
  %v2495 = vld [vmem:[%s1503 + $0x278] sm:$0xff]
  %v2496 = vld [vmem:[%s1503 + $0x280] sm:$0xff]
  %v2497 = vld [vmem:[%s1503 + $0x288] sm:$0xff]
  %v2498 = vld [vmem:[%s1503 + $0x290] sm:$0xff]
  %v2499 = vld [vmem:[%s1503 + $0x298] sm:$0xff]
  %v2500 = vld [vmem:[%s1503 + $0x2a0] sm:$0xff]
  %v2501 = vld [vmem:[%s1503 + $0x2a8] sm:$0xff]
  %v2502 = vld [vmem:[%s1503 + $0x2b0] sm:$0xff]
  %v2503 = vld [vmem:[%s1503 + $0x2b8] sm:$0xff]
  %v2504 = vld [vmem:[%s1503 + $0x2c0] sm:$0xff]
  %v2505 = vld [vmem:[%s1503 + $0x2c8] sm:$0xff]
  %v2506 = vld [vmem:[%s1503 + $0x2d0] sm:$0xff]
  %v2507 = vld [vmem:[%s1503 + $0x2d8] sm:$0xff]
  %v2508 = vld [vmem:[%s1503 + $0x2e0] sm:$0xff]
  %v2509 = vld [vmem:[%s1503 + $0x2e8] sm:$0xff]
  %v2510 = vld [vmem:[%s1503 + $0x2f0] sm:$0xff]
  %v2511 = vld [vmem:[%s1503 + $0x2f8] sm:$0xff]
  %v2512 = vld [vmem:[%s1503 + $0x300] sm:$0xff]
  %v2513 = vld [vmem:[%s1503 + $0x308] sm:$0xff]
  %v2514 = vld [vmem:[%s1503 + $0x310] sm:$0xff]
  %v2515 = vld [vmem:[%s1503 + $0x318] sm:$0xff]
  %v2516 = vld [vmem:[%s1503 + $0x320] sm:$0xff]
  %v2517 = vld [vmem:[%s1503 + $0x328] sm:$0xff]
  %v2518 = vld [vmem:[%s1503 + $0x330] sm:$0xff]
  %v2519 = vld [vmem:[%s1503 + $0x338] sm:$0xff]
  %v2520 = vld [vmem:[%s1503 + $0x340] sm:$0xff]
  %v2521 = vld [vmem:[%s1503 + $0x348] sm:$0xff]
  %v2522 = vld [vmem:[%s1503 + $0x350] sm:$0xff]
  %v2523 = vld [vmem:[%s1503 + $0x358] sm:$0xff]
  %v2524 = vld [vmem:[%s1503 + $0x360] sm:$0xff]
  %v2525 = vld [vmem:[%s1503 + $0x368] sm:$0xff]
  %v2526 = vld [vmem:[%s1503 + $0x370] sm:$0xff]
  %v2527 = vld [vmem:[%s1503 + $0x378] sm:$0xff]
  %v2528 = vld [vmem:[%s1503 + $0x380] sm:$0xff]
  %v2529 = vld [vmem:[%s1503 + $0x388] sm:$0xff]
  %v2530 = vld [vmem:[%s1503 + $0x390] sm:$0xff]
  %v2531 = vld [vmem:[%s1503 + $0x398] sm:$0xff]
  %v2532 = vld [vmem:[%s1503 + $0x3a0] sm:$0xff]
  %v2533 = vld [vmem:[%s1503 + $0x3a8] sm:$0xff]
  %v2534 = vld [vmem:[%s1503 + $0x3b0] sm:$0xff]
  %v2535 = vld [vmem:[%s1503 + $0x3b8] sm:$0xff]
  %v2536 = vld [vmem:[%s1503 + $0x3c0] sm:$0xff]
  %v2537 = vld [vmem:[%s1503 + $0x3c8] sm:$0xff]
  %v2538 = vld [vmem:[%s1503 + $0x3d0] sm:$0xff]
  %v2539 = vld [vmem:[%s1503 + $0x3d8] sm:$0xff]
  %v2540 = vld [vmem:[%s1503 + $0x3e0] sm:$0xff]
  %v2541 = vld [vmem:[%s1503 + $0x3e8] sm:$0xff]
  %v2542 = vld [vmem:[%s1503 + $0x3f0] sm:$0xff]
  %v2543 = vld [vmem:[%s1503 + $0x3f8] sm:$0xff]
  %v2544 = vld [vmem:[%s1632] sm:$0xf]
  %v2546 = vlaneseq
  %v2547 = vshrl.u32 %v2546, 7
  %v2548 = vsub.s32 0, %v2547
  %v2549 = vrot.slane %v2544, %v2548
  %v2550 = vlaneseq
  %v2551 = vshrl.u32 %v2550, 7
  %v2552 = vsub.s32 1, %v2551
  %v2553 = vrot.slane %v2544, %v2552
  %v2554 = vlaneseq
  %v2555 = vshrl.u32 %v2554, 7
  %v2556 = vsub.s32 2, %v2555
  %v2557 = vrot.slane %v2544, %v2556
  %v2558 = vlaneseq
  %v2559 = vshrl.u32 %v2558, 7
  %v2560 = vsub.s32 3, %v2559
  %v2561 = vrot.slane %v2544, %v2560
  %2566 = vmatprep.subr.mxu0 %v2417
  %2567 = vmatpush1.msra.mxu0 %v2416
  %2568 = vmatprep.subr.mxu0 %v2421
  %2569 = vmatpush1.msra.mxu0 %v2420
  %2570 = vmatprep.subr.mxu0 %v2425
  %2571 = vmatpush1.msra.mxu0 %v2424
  %2572 = vmatprep.subr.mxu0 %v2429
  %2573 = vmatpush1.msra.mxu0 %v2428
  %2574 = vmatprep.subr.mxu0 %v2433
  %2575 = vmatpush1.msra.mxu0 %v2432
  %2576 = vmatprep.subr.mxu0 %v2437
  %2577 = vmatpush1.msra.mxu0 %v2436
  %2578 = vmatprep.subr.mxu0 %v2441
  %2579 = vmatpush1.msra.mxu0 %v2440
  %2580 = vmatprep.subr.mxu0 %v2445
  %2581 = vmatpush1.msra.mxu0 %v2444
  %2582 = vmatprep.subr.mxu0 %v2449
  %2583 = vmatpush1.msra.mxu0 %v2448
  %2584 = vmatprep.subr.mxu0 %v2453
  %2585 = vmatpush1.msra.mxu0 %v2452
  %2586 = vmatprep.subr.mxu0 %v2457
  %2587 = vmatpush1.msra.mxu0 %v2456
  %2588 = vmatprep.subr.mxu0 %v2461
  %2589 = vmatpush1.msra.mxu0 %v2460
  %2590 = vmatprep.subr.mxu0 %v2465
  %2591 = vmatpush1.msra.mxu0 %v2464
  %2592 = vmatprep.subr.mxu0 %v2469
  %2593 = vmatpush1.msra.mxu0 %v2468
  %2594 = vmatprep.subr.mxu0 %v2473
  %2595 = vmatpush1.msra.mxu0 %v2472
  %2596 = vmatprep.subr.mxu0 %v2477
  %2597 = vmatpush1.msra.mxu0 %v2476
  %2598 = vmatprep.subr.mxu0 %v2481
  %2599 = vmatpush1.msra.mxu0 %v2480
  %2600 = vmatprep.subr.mxu0 %v2485
  %2601 = vmatpush1.msra.mxu0 %v2484
  %2602 = vmatprep.subr.mxu0 %v2489
  %2603 = vmatpush1.msra.mxu0 %v2488
  %2604 = vmatprep.subr.mxu0 %v2493
  %2605 = vmatpush1.msra.mxu0 %v2492
  %2606 = vmatprep.subr.mxu0 %v2497
  %2607 = vmatpush1.msra.mxu0 %v2496
  %2608 = vmatprep.subr.mxu0 %v2501
  %2609 = vmatpush1.msra.mxu0 %v2500
  %2610 = vmatprep.subr.mxu0 %v2505
  %2611 = vmatpush1.msra.mxu0 %v2504
  %2612 = vmatprep.subr.mxu0 %v2509
  %2613 = vmatpush1.msra.mxu0 %v2508
  %2614 = vmatprep.subr.mxu0 %v2513
  %2615 = vmatpush1.msra.mxu0 %v2512
  %2616 = vmatprep.subr.mxu0 %v2517
  %2617 = vmatpush1.msra.mxu0 %v2516
  %2618 = vmatprep.subr.mxu0 %v2521
  %2619 = vmatpush1.msra.mxu0 %v2520
  %2620 = vmatprep.subr.mxu0 %v2525
  %2621 = vmatpush1.msra.mxu0 %v2524
  %2622 = vmatprep.subr.mxu0 %v2529
  %2623 = vmatpush1.msra.mxu0 %v2528
  %2624 = vmatprep.subr.mxu0 %v2533
  %2625 = vmatpush1.msra.mxu0 %v2532
  %2626 = vmatprep.subr.mxu0 %v2537
  %2627 = vmatpush1.msra.mxu0 %v2536
  %2628 = vmatprep.subr.mxu0 %v2541
  %2629 = vmatpush1.msra.mxu0 %v2540
  %2630 = vmatprep.mubr.f32.mxu0 %v2415
  %2631 = vmatmul.mubr.f32.gmra.mrb[0].mxu0 %v2412
  %v2632 = vpop.f32.mrb[0].mxu0
  %v2633 = vadd.f32 %v2549, %v2632
  %v2634 = vpop.f32.mrb[0].mxu0
  %v2635 = vadd.f32 %v2553, %v2634
  %2636 = vdwg.mxu0
  %2637 = vmatprep.subr.mxu0 %v2419
  %2638 = vmatpush1.msra.mxu0 %v2418
  %2639 = vmatprep.subr.mxu0 %v2423
  %2640 = vmatpush1.msra.mxu0 %v2422
  %2641 = vmatprep.subr.mxu0 %v2427
  %2642 = vmatpush1.msra.mxu0 %v2426
  %2643 = vmatprep.subr.mxu0 %v2431
  %2644 = vmatpush1.msra.mxu0 %v2430
  %2645 = vmatprep.subr.mxu0 %v2435
  %2646 = vmatpush1.msra.mxu0 %v2434
  %2647 = vmatprep.subr.mxu0 %v2439
  %2648 = vmatpush1.msra.mxu0 %v2438
  %2649 = vmatprep.subr.mxu0 %v2443
  %2650 = vmatpush1.msra.mxu0 %v2442
  %2651 = vmatprep.subr.mxu0 %v2447
  %2652 = vmatpush1.msra.mxu0 %v2446
  %2653 = vmatprep.subr.mxu0 %v2451
  %2654 = vmatpush1.msra.mxu0 %v2450
  %2655 = vmatprep.subr.mxu0 %v2455
  %2656 = vmatpush1.msra.mxu0 %v2454
  %2657 = vmatprep.subr.mxu0 %v2459
  %2658 = vmatpush1.msra.mxu0 %v2458
  %2659 = vmatprep.subr.mxu0 %v2463
  %2660 = vmatpush1.msra.mxu0 %v2462
  %2661 = vmatprep.subr.mxu0 %v2467
  %2662 = vmatpush1.msra.mxu0 %v2466
  %2663 = vmatprep.subr.mxu0 %v2471
  %2664 = vmatpush1.msra.mxu0 %v2470
  %2665 = vmatprep.subr.mxu0 %v2475
  %2666 = vmatpush1.msra.mxu0 %v2474
  %2667 = vmatprep.subr.mxu0 %v2479
  %2668 = vmatpush1.msra.mxu0 %v2478
  %2669 = vmatprep.subr.mxu0 %v2483
  %2670 = vmatpush1.msra.mxu0 %v2482
  %2671 = vmatprep.subr.mxu0 %v2487
  %2672 = vmatpush1.msra.mxu0 %v2486
  %2673 = vmatprep.subr.mxu0 %v2491
  %2674 = vmatpush1.msra.mxu0 %v2490
  %2675 = vmatprep.subr.mxu0 %v2495
  %2676 = vmatpush1.msra.mxu0 %v2494
  %2677 = vmatprep.subr.mxu0 %v2499
  %2678 = vmatpush1.msra.mxu0 %v2498
  %2679 = vmatprep.subr.mxu0 %v2503
  %2680 = vmatpush1.msra.mxu0 %v2502
  %2681 = vmatprep.subr.mxu0 %v2507
  %2682 = vmatpush1.msra.mxu0 %v2506
  %2683 = vmatprep.subr.mxu0 %v2511
  %2684 = vmatpush1.msra.mxu0 %v2510
  %2685 = vmatprep.subr.mxu0 %v2515
  %2686 = vmatpush1.msra.mxu0 %v2514
  %2687 = vmatprep.subr.mxu0 %v2519
  %2688 = vmatpush1.msra.mxu0 %v2518
  %2689 = vmatprep.subr.mxu0 %v2523
  %2690 = vmatpush1.msra.mxu0 %v2522
  %2691 = vmatprep.subr.mxu0 %v2527
  %2692 = vmatpush1.msra.mxu0 %v2526
  %2693 = vmatprep.subr.mxu0 %v2531
  %2694 = vmatpush1.msra.mxu0 %v2530
  %2695 = vmatprep.subr.mxu0 %v2535
  %2696 = vmatpush1.msra.mxu0 %v2534
  %2697 = vmatprep.subr.mxu0 %v2539
  %2698 = vmatpush1.msra.mxu0 %v2538
  %2699 = vmatprep.subr.mxu0 %v2543
  %2700 = vmatpush1.msra.mxu0 %v2542
  %2701 = vmatprep.mubr.f32.mxu0 %v2415
  %2702 = vmatmul.mubr.f32.gmra.mrb[0].mxu0 %v2412
  %v2703 = vpop.f32.mrb[0].mxu0
  %v2704 = vadd.f32 %v2557, %v2703
  %v2705 = vpop.f32.mrb[0].mxu0
  %v2706 = vadd.f32 %v2561, %v2705
  %2707 = vdwg.mxu0
  %v2708 = vld [vmem:[%s1797] sm:$0xff]
  %v2709 = vxor.u32 %v2633, 2147483648
  %v2710 = vmul.f32 %v2709, 1.442695
  %v2711 = vpow.pop %v2710
  %v2712 = vadd.f32 %v2711, 1.0
  %v2713 = vrcp.pop %v2712
  %v2714 = vmul.f32 1.0, %v2713
  %v2715 = vxor.u32 %v2635, 2147483648
  %v2716 = vmul.f32 %v2715, 1.442695
  %v2717 = vpow.pop %v2716
  %v2718 = vadd.f32 %v2717, 1.0
  %v2719 = vrcp.pop %v2718
  %v2720 = vmul.f32 1.0, %v2719
  %v2721 = vtanh.pop %v2704
  %v2722 = vxor.u32 %v2706, 2147483648
  %v2723 = vmul.f32 %v2722, 1.442695
  %v2724 = vpow.pop %v2723
  %v2725 = vadd.f32 %v2724, 1.0
  %v2726 = vrcp.pop %v2725
  %v2727 = vmul.f32 1.0, %v2726
  %v2728 = vmul.f32 %v2720, %v2708
  %v2729 = vmul.f32 %v2714, %v2721
  %v2730 = vadd.f32 %v2728, %v2729
  %v2731 = vtanh.pop %v2730
  %v2732 = vmul.f32 %v2727, %v2731
  %2733 = vst [vmem:[%s1501] sm:$0xff] %v2732
  %2734 = vst [vmem:[%s1797] sm:$0xff] %v2730
  %s2735 = scalar_lea.vmem [#allocation3], 8
  %2736 = vst [vmem:[%s2735] sm:$0xff] %v2732
  %s2737 = scalar_lea.vmem [#allocation2], 64
  %v2738 = vld [vmem:[%s2737] sm:$0xff]
  %v2739 = vld [vmem:[%s2737 + $0x8] sm:$0xff]
  %v2740 = vld [vmem:[%s2737 + $0x10] sm:$0xff]
  %v2741 = vld [vmem:[%s2737 + $0x18] sm:$0xff]
  %v2742 = vld [vmem:[%s10] sm:$0xff]
  %v2743 = vld [vmem:[%s2] sm:$0xff]
  %v2744 = vld [vmem:[%s2 + $0x8] sm:$0xff]
  %v2745 = vld [vmem:[%s2 + $0x10] sm:$0xff]
  %v2746 = vld [vmem:[%s2 + $0x18] sm:$0xff]
  %v2747 = vld [vmem:[%s2 + $0x20] sm:$0xff]
  %v2748 = vld [vmem:[%s2 + $0x28] sm:$0xff]
  %v2749 = vld [vmem:[%s2 + $0x30] sm:$0xff]
  %v2750 = vld [vmem:[%s2 + $0x38] sm:$0xff]
  %v2751 = vld [vmem:[%s2 + $0x40] sm:$0xff]
  %v2752 = vld [vmem:[%s2 + $0x48] sm:$0xff]
  %v2753 = vld [vmem:[%s2 + $0x50] sm:$0xff]
  %v2754 = vld [vmem:[%s2 + $0x58] sm:$0xff]
  %v2755 = vld [vmem:[%s2 + $0x60] sm:$0xff]
  %v2756 = vld [vmem:[%s2 + $0x68] sm:$0xff]
  %v2757 = vld [vmem:[%s2 + $0x70] sm:$0xff]
  %v2758 = vld [vmem:[%s2 + $0x78] sm:$0xff]
  %v2759 = vld [vmem:[%s2 + $0x80] sm:$0xff]
  %v2760 = vld [vmem:[%s2 + $0x88] sm:$0xff]
  %v2761 = vld [vmem:[%s2 + $0x90] sm:$0xff]
  %v2762 = vld [vmem:[%s2 + $0x98] sm:$0xff]
  %v2763 = vld [vmem:[%s2 + $0xa0] sm:$0xff]
  %v2764 = vld [vmem:[%s2 + $0xa8] sm:$0xff]
  %v2765 = vld [vmem:[%s2 + $0xb0] sm:$0xff]
  %v2766 = vld [vmem:[%s2 + $0xb8] sm:$0xff]
  %v2767 = vld [vmem:[%s2 + $0xc0] sm:$0xff]
  %v2768 = vld [vmem:[%s2 + $0xc8] sm:$0xff]
  %v2769 = vld [vmem:[%s2 + $0xd0] sm:$0xff]
  %v2770 = vld [vmem:[%s2 + $0xd8] sm:$0xff]
  %v2771 = vld [vmem:[%s2 + $0xe0] sm:$0xff]
  %v2772 = vld [vmem:[%s2 + $0xe8] sm:$0xff]
  %v2773 = vld [vmem:[%s2 + $0xf0] sm:$0xff]
  %v2774 = vld [vmem:[%s2 + $0xf8] sm:$0xff]
  %v2775 = vld [vmem:[%s2 + $0x100] sm:$0xff]
  %v2776 = vld [vmem:[%s2 + $0x108] sm:$0xff]
  %v2777 = vld [vmem:[%s2 + $0x110] sm:$0xff]
  %v2778 = vld [vmem:[%s2 + $0x118] sm:$0xff]
  %v2779 = vld [vmem:[%s2 + $0x120] sm:$0xff]
  %v2780 = vld [vmem:[%s2 + $0x128] sm:$0xff]
  %v2781 = vld [vmem:[%s2 + $0x130] sm:$0xff]
  %v2782 = vld [vmem:[%s2 + $0x138] sm:$0xff]
  %v2783 = vld [vmem:[%s2 + $0x140] sm:$0xff]
  %v2784 = vld [vmem:[%s2 + $0x148] sm:$0xff]
  %v2785 = vld [vmem:[%s2 + $0x150] sm:$0xff]
  %v2786 = vld [vmem:[%s2 + $0x158] sm:$0xff]
  %v2787 = vld [vmem:[%s2 + $0x160] sm:$0xff]
  %v2788 = vld [vmem:[%s2 + $0x168] sm:$0xff]
  %v2789 = vld [vmem:[%s2 + $0x170] sm:$0xff]
  %v2790 = vld [vmem:[%s2 + $0x178] sm:$0xff]
  %v2791 = vld [vmem:[%s2 + $0x180] sm:$0xff]
  %v2792 = vld [vmem:[%s2 + $0x188] sm:$0xff]
  %v2793 = vld [vmem:[%s2 + $0x190] sm:$0xff]
  %v2794 = vld [vmem:[%s2 + $0x198] sm:$0xff]
  %v2795 = vld [vmem:[%s2 + $0x1a0] sm:$0xff]
  %v2796 = vld [vmem:[%s2 + $0x1a8] sm:$0xff]
  %v2797 = vld [vmem:[%s2 + $0x1b0] sm:$0xff]
  %v2798 = vld [vmem:[%s2 + $0x1b8] sm:$0xff]
  %v2799 = vld [vmem:[%s2 + $0x1c0] sm:$0xff]
  %v2800 = vld [vmem:[%s2 + $0x1c8] sm:$0xff]
  %v2801 = vld [vmem:[%s2 + $0x1d0] sm:$0xff]
  %v2802 = vld [vmem:[%s2 + $0x1d8] sm:$0xff]
  %v2803 = vld [vmem:[%s2 + $0x1e0] sm:$0xff]
  %v2804 = vld [vmem:[%s2 + $0x1e8] sm:$0xff]
  %v2805 = vld [vmem:[%s2 + $0x1f0] sm:$0xff]
  %v2806 = vld [vmem:[%s2 + $0x1f8] sm:$0xff]
  %2807 = vmatprep.subr.mxu0 %v2744
  %2808 = vmatpush1.msra.mxu0 %v2743
  %2809 = vmatprep.subr.mxu0 %v2748
  %2810 = vmatpush1.msra.mxu0 %v2747
  %2811 = vmatprep.subr.mxu0 %v2752
  %2812 = vmatpush1.msra.mxu0 %v2751
  %2813 = vmatprep.subr.mxu0 %v2756
  %2814 = vmatpush1.msra.mxu0 %v2755
  %2815 = vmatprep.subr.mxu0 %v2760
  %2816 = vmatpush1.msra.mxu0 %v2759
  %2817 = vmatprep.subr.mxu0 %v2764
  %2818 = vmatpush1.msra.mxu0 %v2763
  %2819 = vmatprep.subr.mxu0 %v2768
  %2820 = vmatpush1.msra.mxu0 %v2767
  %2821 = vmatprep.subr.mxu0 %v2772
  %2822 = vmatpush1.msra.mxu0 %v2771
  %2823 = vmatprep.subr.mxu0 %v2776
  %2824 = vmatpush1.msra.mxu0 %v2775
  %2825 = vmatprep.subr.mxu0 %v2780
  %2826 = vmatpush1.msra.mxu0 %v2779
  %2827 = vmatprep.subr.mxu0 %v2784
  %2828 = vmatpush1.msra.mxu0 %v2783
  %2829 = vmatprep.subr.mxu0 %v2788
  %2830 = vmatpush1.msra.mxu0 %v2787
  %2831 = vmatprep.subr.mxu0 %v2792
  %2832 = vmatpush1.msra.mxu0 %v2791
  %2833 = vmatprep.subr.mxu0 %v2796
  %2834 = vmatpush1.msra.mxu0 %v2795
  %2835 = vmatprep.subr.mxu0 %v2800
  %2836 = vmatpush1.msra.mxu0 %v2799
  %2837 = vmatprep.subr.mxu0 %v2804
  %2838 = vmatpush1.msra.mxu0 %v2803
  %2839 = vmatprep.subr.mxu0 0.0
  %2840 = vmatpush1.msra.mxu0 0.0
  %2841 = vmatprep.subr.mxu0 0.0
  %2842 = vmatpush1.msra.mxu0 0.0
  %2843 = vmatprep.subr.mxu0 0.0
  %2844 = vmatpush1.msra.mxu0 0.0
  %2845 = vmatprep.subr.mxu0 0.0
  %2846 = vmatpush1.msra.mxu0 0.0
  %2847 = vmatprep.subr.mxu0 0.0
  %2848 = vmatpush1.msra.mxu0 0.0
  %2849 = vmatprep.subr.mxu0 0.0
  %2850 = vmatpush1.msra.mxu0 0.0
  %2851 = vmatprep.subr.mxu0 0.0
  %2852 = vmatpush1.msra.mxu0 0.0
  %2853 = vmatprep.subr.mxu0 0.0
  %2854 = vmatpush1.msra.mxu0 0.0
  %2855 = vmatprep.subr.mxu0 0.0
  %2856 = vmatpush1.msra.mxu0 0.0
  %2857 = vmatprep.subr.mxu0 0.0
  %2858 = vmatpush1.msra.mxu0 0.0
  %2859 = vmatprep.subr.mxu0 0.0
  %2860 = vmatpush1.msra.mxu0 0.0
  %2861 = vmatprep.subr.mxu0 0.0
  %2862 = vmatpush1.msra.mxu0 0.0
  %2863 = vmatprep.subr.mxu0 0.0
  %2864 = vmatpush1.msra.mxu0 0.0
  %2865 = vmatprep.subr.mxu0 0.0
  %2866 = vmatpush1.msra.mxu0 0.0
  %2867 = vmatprep.subr.mxu0 0.0
  %2868 = vmatpush1.msra.mxu0 0.0
  %2869 = vmatprep.subr.mxu0 0.0
  %2870 = vmatpush1.msra.mxu0 0.0
  %2871 = vmatprep.mubr.f32.mxu0 0.0
  %2872 = vmatmul.mubr.f32.gmra.mrb[0].mxu0 %v2742
  %v2873 = vpop.f32.mrb[0].mxu0
  %v2874 = vadd.f32 0.0, %v2873
  %v2875 = vpop.f32.mrb[0].mxu0
  %v2876 = vadd.f32 0.0, %v2875
  %2877 = vdwg.mxu0
  %2878 = vmatprep.subr.mxu0 %v2746
  %2879 = vmatpush1.msra.mxu0 %v2745
  %2880 = vmatprep.subr.mxu0 %v2750
  %2881 = vmatpush1.msra.mxu0 %v2749
  %2882 = vmatprep.subr.mxu0 %v2754
  %2883 = vmatpush1.msra.mxu0 %v2753
  %2884 = vmatprep.subr.mxu0 %v2758
  %2885 = vmatpush1.msra.mxu0 %v2757
  %2886 = vmatprep.subr.mxu0 %v2762
  %2887 = vmatpush1.msra.mxu0 %v2761
  %2888 = vmatprep.subr.mxu0 %v2766
  %2889 = vmatpush1.msra.mxu0 %v2765
  %2890 = vmatprep.subr.mxu0 %v2770
  %2891 = vmatpush1.msra.mxu0 %v2769
  %2892 = vmatprep.subr.mxu0 %v2774
  %2893 = vmatpush1.msra.mxu0 %v2773
  %2894 = vmatprep.subr.mxu0 %v2778
  %2895 = vmatpush1.msra.mxu0 %v2777
  %2896 = vmatprep.subr.mxu0 %v2782
  %2897 = vmatpush1.msra.mxu0 %v2781
  %2898 = vmatprep.subr.mxu0 %v2786
  %2899 = vmatpush1.msra.mxu0 %v2785
  %2900 = vmatprep.subr.mxu0 %v2790
  %2901 = vmatpush1.msra.mxu0 %v2789
  %2902 = vmatprep.subr.mxu0 %v2794
  %2903 = vmatpush1.msra.mxu0 %v2793
  %2904 = vmatprep.subr.mxu0 %v2798
  %2905 = vmatpush1.msra.mxu0 %v2797
  %2906 = vmatprep.subr.mxu0 %v2802
  %2907 = vmatpush1.msra.mxu0 %v2801
  %2908 = vmatprep.subr.mxu0 %v2806
  %2909 = vmatpush1.msra.mxu0 %v2805
  %2910 = vmatprep.subr.mxu0 0.0
  %2911 = vmatpush1.msra.mxu0 0.0
  %2912 = vmatprep.subr.mxu0 0.0
  %2913 = vmatpush1.msra.mxu0 0.0
  %2914 = vmatprep.subr.mxu0 0.0
  %2915 = vmatpush1.msra.mxu0 0.0
  %2916 = vmatprep.subr.mxu0 0.0
  %2917 = vmatpush1.msra.mxu0 0.0
  %2918 = vmatprep.subr.mxu0 0.0
  %2919 = vmatpush1.msra.mxu0 0.0
  %2920 = vmatprep.subr.mxu0 0.0
  %2921 = vmatpush1.msra.mxu0 0.0
  %2922 = vmatprep.subr.mxu0 0.0
  %2923 = vmatpush1.msra.mxu0 0.0
  %2924 = vmatprep.subr.mxu0 0.0
  %2925 = vmatpush1.msra.mxu0 0.0
  %2926 = vmatprep.subr.mxu0 0.0
  %2927 = vmatpush1.msra.mxu0 0.0
  %2928 = vmatprep.subr.mxu0 0.0
  %2929 = vmatpush1.msra.mxu0 0.0
  %2930 = vmatprep.subr.mxu0 0.0
  %2931 = vmatpush1.msra.mxu0 0.0
  %2932 = vmatprep.subr.mxu0 0.0
  %2933 = vmatpush1.msra.mxu0 0.0
  %2934 = vmatprep.subr.mxu0 0.0
  %2935 = vmatpush1.msra.mxu0 0.0
  %2936 = vmatprep.subr.mxu0 0.0
  %2937 = vmatpush1.msra.mxu0 0.0
  %2938 = vmatprep.subr.mxu0 0.0
  %2939 = vmatpush1.msra.mxu0 0.0
  %2940 = vmatprep.subr.mxu0 0.0
  %2941 = vmatpush1.msra.mxu0 0.0
  %2942 = vmatprep.mubr.f32.mxu0 0.0
  %2943 = vmatmul.mubr.f32.gmra.mrb[0].mxu0 %v2742
  %v2944 = vpop.f32.mrb[0].mxu0
  %v2945 = vadd.f32 0.0, %v2944
  %v2946 = vpop.f32.mrb[0].mxu0
  %v2947 = vadd.f32 0.0, %v2946
  %2948 = vdwg.mxu0
  %v2949 = vadd.f32 %v2738, %v2874
  %v2950 = vadd.f32 %v2739, %v2876
  %v2951 = vadd.f32 %v2740, %v2945
  %v2952 = vadd.f32 %v2741, %v2947
  %v2953 = vld [vmem:[%s4] sm:$0xf]
  %v2955 = vlaneseq
  %v2956 = vshrl.u32 %v2955, 7
  %v2957 = vsub.s32 0, %v2956
  %v2958 = vrot.slane %v2953, %v2957
  %v2959 = vlaneseq
  %v2960 = vshrl.u32 %v2959, 7
  %v2961 = vsub.s32 1, %v2960
  %v2962 = vrot.slane %v2953, %v2961
  %v2963 = vlaneseq
  %v2964 = vshrl.u32 %v2963, 7
  %v2965 = vsub.s32 2, %v2964
  %v2966 = vrot.slane %v2953, %v2965
  %v2967 = vlaneseq
  %v2968 = vshrl.u32 %v2967, 7
  %v2969 = vsub.s32 3, %v2968
  %v2970 = vrot.slane %v2953, %v2969
  %v2975 = vadd.f32 %v2949, %v2958
  %v2976 = vadd.f32 %v2950, %v2962
  %v2977 = vadd.f32 %v2951, %v2966
  %v2978 = vadd.f32 %v2952, %v2970
  %v2979 = vld [vmem:[%s11] sm:$0xff]
  %v2980 = vxor.u32 %v2975, 2147483648
  %v2981 = vmul.f32 %v2980, 1.442695
  %v2982 = vpow.pop %v2981
  %v2983 = vadd.f32 %v2982, 1.0
  %v2984 = vrcp.pop %v2983
  %v2985 = vmul.f32 1.0, %v2984
  %v2986 = vxor.u32 %v2976, 2147483648
  %v2987 = vmul.f32 %v2986, 1.442695
  %v2988 = vpow.pop %v2987
  %v2989 = vadd.f32 %v2988, 1.0
  %v2990 = vrcp.pop %v2989
  %v2991 = vmul.f32 1.0, %v2990
  %v2992 = vtanh.pop %v2977
  %v2993 = vxor.u32 %v2978, 2147483648
  %v2994 = vmul.f32 %v2993, 1.442695
  %v2995 = vpow.pop %v2994
  %v2996 = vadd.f32 %v2995, 1.0
  %v2997 = vrcp.pop %v2996
  %v2998 = vmul.f32 1.0, %v2997
  %v2999 = vmul.f32 %v2991, %v2979
  %v3000 = vmul.f32 %v2985, %v2992
  %v3001 = vadd.f32 %v2999, %v3000
  %v3002 = vtanh.pop %v3001
  %v3003 = vmul.f32 %v2998, %v3002
  %3004 = vst [vmem:[%s10] sm:$0xff] %v3003
  %3005 = vst [vmem:[%s11] sm:$0xff] %v3001
  %v3006 = vld [vmem:[%s1178] sm:$0xff]
  %v3007 = vld [vmem:[%s3] sm:$0xff]
  %v3008 = vld [vmem:[%s3 + $0x8] sm:$0xff]
  %v3009 = vld [vmem:[%s3 + $0x10] sm:$0xff]
  %v3010 = vld [vmem:[%s3 + $0x18] sm:$0xff]
  %v3011 = vld [vmem:[%s3 + $0x20] sm:$0xff]
  %v3012 = vld [vmem:[%s3 + $0x28] sm:$0xff]
  %v3013 = vld [vmem:[%s3 + $0x30] sm:$0xff]
  %v3014 = vld [vmem:[%s3 + $0x38] sm:$0xff]
  %v3015 = vld [vmem:[%s3 + $0x40] sm:$0xff]
  %v3016 = vld [vmem:[%s3 + $0x48] sm:$0xff]
  %v3017 = vld [vmem:[%s3 + $0x50] sm:$0xff]
  %v3018 = vld [vmem:[%s3 + $0x58] sm:$0xff]
  %v3019 = vld [vmem:[%s3 + $0x60] sm:$0xff]
  %v3020 = vld [vmem:[%s3 + $0x68] sm:$0xff]
  %v3021 = vld [vmem:[%s3 + $0x70] sm:$0xff]
  %v3022 = vld [vmem:[%s3 + $0x78] sm:$0xff]
  %v3023 = vld [vmem:[%s3 + $0x80] sm:$0xff]
  %v3024 = vld [vmem:[%s3 + $0x88] sm:$0xff]
  %v3025 = vld [vmem:[%s3 + $0x90] sm:$0xff]
  %v3026 = vld [vmem:[%s3 + $0x98] sm:$0xff]
  %v3027 = vld [vmem:[%s3 + $0xa0] sm:$0xff]
  %v3028 = vld [vmem:[%s3 + $0xa8] sm:$0xff]
  %v3029 = vld [vmem:[%s3 + $0xb0] sm:$0xff]
  %v3030 = vld [vmem:[%s3 + $0xb8] sm:$0xff]
  %v3031 = vld [vmem:[%s3 + $0xc0] sm:$0xff]
  %v3032 = vld [vmem:[%s3 + $0xc8] sm:$0xff]
  %v3033 = vld [vmem:[%s3 + $0xd0] sm:$0xff]
  %v3034 = vld [vmem:[%s3 + $0xd8] sm:$0xff]
  %v3035 = vld [vmem:[%s3 + $0xe0] sm:$0xff]
  %v3036 = vld [vmem:[%s3 + $0xe8] sm:$0xff]
  %v3037 = vld [vmem:[%s3 + $0xf0] sm:$0xff]
  %v3038 = vld [vmem:[%s3 + $0xf8] sm:$0xff]
  %v3039 = vld [vmem:[%s3 + $0x100] sm:$0xff]
  %v3040 = vld [vmem:[%s3 + $0x108] sm:$0xff]
  %v3041 = vld [vmem:[%s3 + $0x110] sm:$0xff]
  %v3042 = vld [vmem:[%s3 + $0x118] sm:$0xff]
  %v3043 = vld [vmem:[%s3 + $0x120] sm:$0xff]
  %v3044 = vld [vmem:[%s3 + $0x128] sm:$0xff]
  %v3045 = vld [vmem:[%s3 + $0x130] sm:$0xff]
  %v3046 = vld [vmem:[%s3 + $0x138] sm:$0xff]
  %v3047 = vld [vmem:[%s3 + $0x140] sm:$0xff]
  %v3048 = vld [vmem:[%s3 + $0x148] sm:$0xff]
  %v3049 = vld [vmem:[%s3 + $0x150] sm:$0xff]
  %v3050 = vld [vmem:[%s3 + $0x158] sm:$0xff]
  %v3051 = vld [vmem:[%s3 + $0x160] sm:$0xff]
  %v3052 = vld [vmem:[%s3 + $0x168] sm:$0xff]
  %v3053 = vld [vmem:[%s3 + $0x170] sm:$0xff]
  %v3054 = vld [vmem:[%s3 + $0x178] sm:$0xff]
  %v3055 = vld [vmem:[%s3 + $0x180] sm:$0xff]
  %v3056 = vld [vmem:[%s3 + $0x188] sm:$0xff]
  %v3057 = vld [vmem:[%s3 + $0x190] sm:$0xff]
  %v3058 = vld [vmem:[%s3 + $0x198] sm:$0xff]
  %v3059 = vld [vmem:[%s3 + $0x1a0] sm:$0xff]
  %v3060 = vld [vmem:[%s3 + $0x1a8] sm:$0xff]
  %v3061 = vld [vmem:[%s3 + $0x1b0] sm:$0xff]
  %v3062 = vld [vmem:[%s3 + $0x1b8] sm:$0xff]
  %v3063 = vld [vmem:[%s3 + $0x1c0] sm:$0xff]
  %v3064 = vld [vmem:[%s3 + $0x1c8] sm:$0xff]
  %v3065 = vld [vmem:[%s3 + $0x1d0] sm:$0xff]
  %v3066 = vld [vmem:[%s3 + $0x1d8] sm:$0xff]
  %v3067 = vld [vmem:[%s3 + $0x1e0] sm:$0xff]
  %v3068 = vld [vmem:[%s3 + $0x1e8] sm:$0xff]
  %v3069 = vld [vmem:[%s3 + $0x1f0] sm:$0xff]
  %v3070 = vld [vmem:[%s3 + $0x1f8] sm:$0xff]
  %v3071 = vld [vmem:[%s3 + $0x200] sm:$0xff]
  %v3072 = vld [vmem:[%s3 + $0x208] sm:$0xff]
  %v3073 = vld [vmem:[%s3 + $0x210] sm:$0xff]
  %v3074 = vld [vmem:[%s3 + $0x218] sm:$0xff]
  %v3075 = vld [vmem:[%s3 + $0x220] sm:$0xff]
  %v3076 = vld [vmem:[%s3 + $0x228] sm:$0xff]
  %v3077 = vld [vmem:[%s3 + $0x230] sm:$0xff]
  %v3078 = vld [vmem:[%s3 + $0x238] sm:$0xff]
  %v3079 = vld [vmem:[%s3 + $0x240] sm:$0xff]
  %v3080 = vld [vmem:[%s3 + $0x248] sm:$0xff]
  %v3081 = vld [vmem:[%s3 + $0x250] sm:$0xff]
  %v3082 = vld [vmem:[%s3 + $0x258] sm:$0xff]
  %v3083 = vld [vmem:[%s3 + $0x260] sm:$0xff]
  %v3084 = vld [vmem:[%s3 + $0x268] sm:$0xff]
  %v3085 = vld [vmem:[%s3 + $0x270] sm:$0xff]
  %v3086 = vld [vmem:[%s3 + $0x278] sm:$0xff]
  %v3087 = vld [vmem:[%s3 + $0x280] sm:$0xff]
  %v3088 = vld [vmem:[%s3 + $0x288] sm:$0xff]
  %v3089 = vld [vmem:[%s3 + $0x290] sm:$0xff]
  %v3090 = vld [vmem:[%s3 + $0x298] sm:$0xff]
  %v3091 = vld [vmem:[%s3 + $0x2a0] sm:$0xff]
  %v3092 = vld [vmem:[%s3 + $0x2a8] sm:$0xff]
  %v3093 = vld [vmem:[%s3 + $0x2b0] sm:$0xff]
  %v3094 = vld [vmem:[%s3 + $0x2b8] sm:$0xff]
  %v3095 = vld [vmem:[%s3 + $0x2c0] sm:$0xff]
  %v3096 = vld [vmem:[%s3 + $0x2c8] sm:$0xff]
  %v3097 = vld [vmem:[%s3 + $0x2d0] sm:$0xff]
  %v3098 = vld [vmem:[%s3 + $0x2d8] sm:$0xff]
  %v3099 = vld [vmem:[%s3 + $0x2e0] sm:$0xff]
  %v3100 = vld [vmem:[%s3 + $0x2e8] sm:$0xff]
  %v3101 = vld [vmem:[%s3 + $0x2f0] sm:$0xff]
  %v3102 = vld [vmem:[%s3 + $0x2f8] sm:$0xff]
  %v3103 = vld [vmem:[%s3 + $0x300] sm:$0xff]
  %v3104 = vld [vmem:[%s3 + $0x308] sm:$0xff]
  %v3105 = vld [vmem:[%s3 + $0x310] sm:$0xff]
  %v3106 = vld [vmem:[%s3 + $0x318] sm:$0xff]
  %v3107 = vld [vmem:[%s3 + $0x320] sm:$0xff]
  %v3108 = vld [vmem:[%s3 + $0x328] sm:$0xff]
  %v3109 = vld [vmem:[%s3 + $0x330] sm:$0xff]
  %v3110 = vld [vmem:[%s3 + $0x338] sm:$0xff]
  %v3111 = vld [vmem:[%s3 + $0x340] sm:$0xff]
  %v3112 = vld [vmem:[%s3 + $0x348] sm:$0xff]
  %v3113 = vld [vmem:[%s3 + $0x350] sm:$0xff]
  %v3114 = vld [vmem:[%s3 + $0x358] sm:$0xff]
  %v3115 = vld [vmem:[%s3 + $0x360] sm:$0xff]
  %v3116 = vld [vmem:[%s3 + $0x368] sm:$0xff]
  %v3117 = vld [vmem:[%s3 + $0x370] sm:$0xff]
  %v3118 = vld [vmem:[%s3 + $0x378] sm:$0xff]
  %v3119 = vld [vmem:[%s3 + $0x380] sm:$0xff]
  %v3120 = vld [vmem:[%s3 + $0x388] sm:$0xff]
  %v3121 = vld [vmem:[%s3 + $0x390] sm:$0xff]
  %v3122 = vld [vmem:[%s3 + $0x398] sm:$0xff]
  %v3123 = vld [vmem:[%s3 + $0x3a0] sm:$0xff]
  %v3124 = vld [vmem:[%s3 + $0x3a8] sm:$0xff]
  %v3125 = vld [vmem:[%s3 + $0x3b0] sm:$0xff]
  %v3126 = vld [vmem:[%s3 + $0x3b8] sm:$0xff]
  %v3127 = vld [vmem:[%s3 + $0x3c0] sm:$0xff]
  %v3128 = vld [vmem:[%s3 + $0x3c8] sm:$0xff]
  %v3129 = vld [vmem:[%s3 + $0x3d0] sm:$0xff]
  %v3130 = vld [vmem:[%s3 + $0x3d8] sm:$0xff]
  %v3131 = vld [vmem:[%s3 + $0x3e0] sm:$0xff]
  %v3132 = vld [vmem:[%s3 + $0x3e8] sm:$0xff]
  %v3133 = vld [vmem:[%s3 + $0x3f0] sm:$0xff]
  %v3134 = vld [vmem:[%s3 + $0x3f8] sm:$0xff]
  %v3135 = vld [vmem:[%s1308] sm:$0xf]
  %v3137 = vlaneseq
  %v3138 = vshrl.u32 %v3137, 7
  %v3139 = vsub.s32 0, %v3138
  %v3140 = vrot.slane %v3135, %v3139
  %v3141 = vlaneseq
  %v3142 = vshrl.u32 %v3141, 7
  %v3143 = vsub.s32 1, %v3142
  %v3144 = vrot.slane %v3135, %v3143
  %v3145 = vlaneseq
  %v3146 = vshrl.u32 %v3145, 7
  %v3147 = vsub.s32 2, %v3146
  %v3148 = vrot.slane %v3135, %v3147
  %v3149 = vlaneseq
  %v3150 = vshrl.u32 %v3149, 7
  %v3151 = vsub.s32 3, %v3150
  %v3152 = vrot.slane %v3135, %v3151
  %3157 = vmatprep.subr.mxu0 %v3008
  %3158 = vmatpush1.msra.mxu0 %v3007
  %3159 = vmatprep.subr.mxu0 %v3012
  %3160 = vmatpush1.msra.mxu0 %v3011
  %3161 = vmatprep.subr.mxu0 %v3016
  %3162 = vmatpush1.msra.mxu0 %v3015
  %3163 = vmatprep.subr.mxu0 %v3020
  %3164 = vmatpush1.msra.mxu0 %v3019
  %3165 = vmatprep.subr.mxu0 %v3024
  %3166 = vmatpush1.msra.mxu0 %v3023
  %3167 = vmatprep.subr.mxu0 %v3028
  %3168 = vmatpush1.msra.mxu0 %v3027
  %3169 = vmatprep.subr.mxu0 %v3032
  %3170 = vmatpush1.msra.mxu0 %v3031
  %3171 = vmatprep.subr.mxu0 %v3036
  %3172 = vmatpush1.msra.mxu0 %v3035
  %3173 = vmatprep.subr.mxu0 %v3040
  %3174 = vmatpush1.msra.mxu0 %v3039
  %3175 = vmatprep.subr.mxu0 %v3044
  %3176 = vmatpush1.msra.mxu0 %v3043
  %3177 = vmatprep.subr.mxu0 %v3048
  %3178 = vmatpush1.msra.mxu0 %v3047
  %3179 = vmatprep.subr.mxu0 %v3052
  %3180 = vmatpush1.msra.mxu0 %v3051
  %3181 = vmatprep.subr.mxu0 %v3056
  %3182 = vmatpush1.msra.mxu0 %v3055
  %3183 = vmatprep.subr.mxu0 %v3060
  %3184 = vmatpush1.msra.mxu0 %v3059
  %3185 = vmatprep.subr.mxu0 %v3064
  %3186 = vmatpush1.msra.mxu0 %v3063
  %3187 = vmatprep.subr.mxu0 %v3068
  %3188 = vmatpush1.msra.mxu0 %v3067
  %3189 = vmatprep.subr.mxu0 %v3072
  %3190 = vmatpush1.msra.mxu0 %v3071
  %3191 = vmatprep.subr.mxu0 %v3076
  %3192 = vmatpush1.msra.mxu0 %v3075
  %3193 = vmatprep.subr.mxu0 %v3080
  %3194 = vmatpush1.msra.mxu0 %v3079
  %3195 = vmatprep.subr.mxu0 %v3084
  %3196 = vmatpush1.msra.mxu0 %v3083
  %3197 = vmatprep.subr.mxu0 %v3088
  %3198 = vmatpush1.msra.mxu0 %v3087
  %3199 = vmatprep.subr.mxu0 %v3092
  %3200 = vmatpush1.msra.mxu0 %v3091
  %3201 = vmatprep.subr.mxu0 %v3096
  %3202 = vmatpush1.msra.mxu0 %v3095
  %3203 = vmatprep.subr.mxu0 %v3100
  %3204 = vmatpush1.msra.mxu0 %v3099
  %3205 = vmatprep.subr.mxu0 %v3104
  %3206 = vmatpush1.msra.mxu0 %v3103
  %3207 = vmatprep.subr.mxu0 %v3108
  %3208 = vmatpush1.msra.mxu0 %v3107
  %3209 = vmatprep.subr.mxu0 %v3112
  %3210 = vmatpush1.msra.mxu0 %v3111
  %3211 = vmatprep.subr.mxu0 %v3116
  %3212 = vmatpush1.msra.mxu0 %v3115
  %3213 = vmatprep.subr.mxu0 %v3120
  %3214 = vmatpush1.msra.mxu0 %v3119
  %3215 = vmatprep.subr.mxu0 %v3124
  %3216 = vmatpush1.msra.mxu0 %v3123
  %3217 = vmatprep.subr.mxu0 %v3128
  %3218 = vmatpush1.msra.mxu0 %v3127
  %3219 = vmatprep.subr.mxu0 %v3132
  %3220 = vmatpush1.msra.mxu0 %v3131
  %3221 = vmatprep.mubr.f32.mxu0 %v3006
  %3222 = vmatmul.mubr.f32.gmra.mrb[0].mxu0 %v3003
  %v3223 = vpop.f32.mrb[0].mxu0
  %v3224 = vadd.f32 %v3140, %v3223
  %v3225 = vpop.f32.mrb[0].mxu0
  %v3226 = vadd.f32 %v3144, %v3225
  %3227 = vdwg.mxu0
  %3228 = vmatprep.subr.mxu0 %v3010
  %3229 = vmatpush1.msra.mxu0 %v3009
  %3230 = vmatprep.subr.mxu0 %v3014
  %3231 = vmatpush1.msra.mxu0 %v3013
  %3232 = vmatprep.subr.mxu0 %v3018
  %3233 = vmatpush1.msra.mxu0 %v3017
  %3234 = vmatprep.subr.mxu0 %v3022
  %3235 = vmatpush1.msra.mxu0 %v3021
  %3236 = vmatprep.subr.mxu0 %v3026
  %3237 = vmatpush1.msra.mxu0 %v3025
  %3238 = vmatprep.subr.mxu0 %v3030
  %3239 = vmatpush1.msra.mxu0 %v3029
  %3240 = vmatprep.subr.mxu0 %v3034
  %3241 = vmatpush1.msra.mxu0 %v3033
  %3242 = vmatprep.subr.mxu0 %v3038
  %3243 = vmatpush1.msra.mxu0 %v3037
  %3244 = vmatprep.subr.mxu0 %v3042
  %3245 = vmatpush1.msra.mxu0 %v3041
  %3246 = vmatprep.subr.mxu0 %v3046
  %3247 = vmatpush1.msra.mxu0 %v3045
  %3248 = vmatprep.subr.mxu0 %v3050
  %3249 = vmatpush1.msra.mxu0 %v3049
  %3250 = vmatprep.subr.mxu0 %v3054
  %3251 = vmatpush1.msra.mxu0 %v3053
  %3252 = vmatprep.subr.mxu0 %v3058
  %3253 = vmatpush1.msra.mxu0 %v3057
  %3254 = vmatprep.subr.mxu0 %v3062
  %3255 = vmatpush1.msra.mxu0 %v3061
  %3256 = vmatprep.subr.mxu0 %v3066
  %3257 = vmatpush1.msra.mxu0 %v3065
  %3258 = vmatprep.subr.mxu0 %v3070
  %3259 = vmatpush1.msra.mxu0 %v3069
  %3260 = vmatprep.subr.mxu0 %v3074
  %3261 = vmatpush1.msra.mxu0 %v3073
  %3262 = vmatprep.subr.mxu0 %v3078
  %3263 = vmatpush1.msra.mxu0 %v3077
  %3264 = vmatprep.subr.mxu0 %v3082
  %3265 = vmatpush1.msra.mxu0 %v3081
  %3266 = vmatprep.subr.mxu0 %v3086
  %3267 = vmatpush1.msra.mxu0 %v3085
  %3268 = vmatprep.subr.mxu0 %v3090
  %3269 = vmatpush1.msra.mxu0 %v3089
  %3270 = vmatprep.subr.mxu0 %v3094
  %3271 = vmatpush1.msra.mxu0 %v3093
  %3272 = vmatprep.subr.mxu0 %v3098
  %3273 = vmatpush1.msra.mxu0 %v3097
  %3274 = vmatprep.subr.mxu0 %v3102
  %3275 = vmatpush1.msra.mxu0 %v3101
  %3276 = vmatprep.subr.mxu0 %v3106
  %3277 = vmatpush1.msra.mxu0 %v3105
  %3278 = vmatprep.subr.mxu0 %v3110
  %3279 = vmatpush1.msra.mxu0 %v3109
  %3280 = vmatprep.subr.mxu0 %v3114
  %3281 = vmatpush1.msra.mxu0 %v3113
  %3282 = vmatprep.subr.mxu0 %v3118
  %3283 = vmatpush1.msra.mxu0 %v3117
  %3284 = vmatprep.subr.mxu0 %v3122
  %3285 = vmatpush1.msra.mxu0 %v3121
  %3286 = vmatprep.subr.mxu0 %v3126
  %3287 = vmatpush1.msra.mxu0 %v3125
  %3288 = vmatprep.subr.mxu0 %v3130
  %3289 = vmatpush1.msra.mxu0 %v3129
  %3290 = vmatprep.subr.mxu0 %v3134
  %3291 = vmatpush1.msra.mxu0 %v3133
  %3292 = vmatprep.mubr.f32.mxu0 %v3006
  %3293 = vmatmul.mubr.f32.gmra.mrb[0].mxu0 %v3003
  %v3294 = vpop.f32.mrb[0].mxu0
  %v3295 = vadd.f32 %v3148, %v3294
  %v3296 = vpop.f32.mrb[0].mxu0
  %v3297 = vadd.f32 %v3152, %v3296
  %3298 = vdwg.mxu0
  %v3299 = vld [vmem:[%s1473] sm:$0xff]
  %v3300 = vxor.u32 %v3224, 2147483648
  %v3301 = vmul.f32 %v3300, 1.442695
  %v3302 = vpow.pop %v3301
  %v3303 = vadd.f32 %v3302, 1.0
  %v3304 = vrcp.pop %v3303
  %v3305 = vmul.f32 1.0, %v3304
  %v3306 = vxor.u32 %v3226, 2147483648
  %v3307 = vmul.f32 %v3306, 1.442695
  %v3308 = vpow.pop %v3307
  %v3309 = vadd.f32 %v3308, 1.0
  %v3310 = vrcp.pop %v3309
  %v3311 = vmul.f32 1.0, %v3310
  %v3312 = vtanh.pop %v3295
  %v3313 = vxor.u32 %v3297, 2147483648
  %v3314 = vmul.f32 %v3313, 1.442695
  %v3315 = vpow.pop %v3314
  %v3316 = vadd.f32 %v3315, 1.0
  %v3317 = vrcp.pop %v3316
  %v3318 = vmul.f32 1.0, %v3317
  %v3319 = vmul.f32 %v3311, %v3299
  %v3320 = vmul.f32 %v3305, %v3312
  %v3321 = vadd.f32 %v3319, %v3320
  %v3322 = vtanh.pop %v3321
  %v3323 = vmul.f32 %v3318, %v3322
  %3324 = vst [vmem:[%s1178] sm:$0xff] %v3323
  %3325 = vst [vmem:[%s1473] sm:$0xff] %v3321
  %v3326 = vld [vmem:[%s1501] sm:$0xff]
  %v3327 = vld [vmem:[%s1503] sm:$0xff]
  %v3328 = vld [vmem:[%s1503 + $0x8] sm:$0xff]
  %v3329 = vld [vmem:[%s1503 + $0x10] sm:$0xff]
  %v3330 = vld [vmem:[%s1503 + $0x18] sm:$0xff]
  %v3331 = vld [vmem:[%s1503 + $0x20] sm:$0xff]
  %v3332 = vld [vmem:[%s1503 + $0x28] sm:$0xff]
  %v3333 = vld [vmem:[%s1503 + $0x30] sm:$0xff]
  %v3334 = vld [vmem:[%s1503 + $0x38] sm:$0xff]
  %v3335 = vld [vmem:[%s1503 + $0x40] sm:$0xff]
  %v3336 = vld [vmem:[%s1503 + $0x48] sm:$0xff]
  %v3337 = vld [vmem:[%s1503 + $0x50] sm:$0xff]
  %v3338 = vld [vmem:[%s1503 + $0x58] sm:$0xff]
  %v3339 = vld [vmem:[%s1503 + $0x60] sm:$0xff]
  %v3340 = vld [vmem:[%s1503 + $0x68] sm:$0xff]
  %v3341 = vld [vmem:[%s1503 + $0x70] sm:$0xff]
  %v3342 = vld [vmem:[%s1503 + $0x78] sm:$0xff]
  %v3343 = vld [vmem:[%s1503 + $0x80] sm:$0xff]
  %v3344 = vld [vmem:[%s1503 + $0x88] sm:$0xff]
  %v3345 = vld [vmem:[%s1503 + $0x90] sm:$0xff]
  %v3346 = vld [vmem:[%s1503 + $0x98] sm:$0xff]
  %v3347 = vld [vmem:[%s1503 + $0xa0] sm:$0xff]
  %v3348 = vld [vmem:[%s1503 + $0xa8] sm:$0xff]
  %v3349 = vld [vmem:[%s1503 + $0xb0] sm:$0xff]
  %v3350 = vld [vmem:[%s1503 + $0xb8] sm:$0xff]
  %v3351 = vld [vmem:[%s1503 + $0xc0] sm:$0xff]
  %v3352 = vld [vmem:[%s1503 + $0xc8] sm:$0xff]
  %v3353 = vld [vmem:[%s1503 + $0xd0] sm:$0xff]
  %v3354 = vld [vmem:[%s1503 + $0xd8] sm:$0xff]
  %v3355 = vld [vmem:[%s1503 + $0xe0] sm:$0xff]
  %v3356 = vld [vmem:[%s1503 + $0xe8] sm:$0xff]
  %v3357 = vld [vmem:[%s1503 + $0xf0] sm:$0xff]
  %v3358 = vld [vmem:[%s1503 + $0xf8] sm:$0xff]
  %v3359 = vld [vmem:[%s1503 + $0x100] sm:$0xff]
  %v3360 = vld [vmem:[%s1503 + $0x108] sm:$0xff]
  %v3361 = vld [vmem:[%s1503 + $0x110] sm:$0xff]
  %v3362 = vld [vmem:[%s1503 + $0x118] sm:$0xff]
  %v3363 = vld [vmem:[%s1503 + $0x120] sm:$0xff]
  %v3364 = vld [vmem:[%s1503 + $0x128] sm:$0xff]
  %v3365 = vld [vmem:[%s1503 + $0x130] sm:$0xff]
  %v3366 = vld [vmem:[%s1503 + $0x138] sm:$0xff]
  %v3367 = vld [vmem:[%s1503 + $0x140] sm:$0xff]
  %v3368 = vld [vmem:[%s1503 + $0x148] sm:$0xff]
  %v3369 = vld [vmem:[%s1503 + $0x150] sm:$0xff]
  %v3370 = vld [vmem:[%s1503 + $0x158] sm:$0xff]
  %v3371 = vld [vmem:[%s1503 + $0x160] sm:$0xff]
  %v3372 = vld [vmem:[%s1503 + $0x168] sm:$0xff]
  %v3373 = vld [vmem:[%s1503 + $0x170] sm:$0xff]
  %v3374 = vld [vmem:[%s1503 + $0x178] sm:$0xff]
  %v3375 = vld [vmem:[%s1503 + $0x180] sm:$0xff]
  %v3376 = vld [vmem:[%s1503 + $0x188] sm:$0xff]
  %v3377 = vld [vmem:[%s1503 + $0x190] sm:$0xff]
  %v3378 = vld [vmem:[%s1503 + $0x198] sm:$0xff]
  %v3379 = vld [vmem:[%s1503 + $0x1a0] sm:$0xff]
  %v3380 = vld [vmem:[%s1503 + $0x1a8] sm:$0xff]
  %v3381 = vld [vmem:[%s1503 + $0x1b0] sm:$0xff]
  %v3382 = vld [vmem:[%s1503 + $0x1b8] sm:$0xff]
  %v3383 = vld [vmem:[%s1503 + $0x1c0] sm:$0xff]
  %v3384 = vld [vmem:[%s1503 + $0x1c8] sm:$0xff]
  %v3385 = vld [vmem:[%s1503 + $0x1d0] sm:$0xff]
  %v3386 = vld [vmem:[%s1503 + $0x1d8] sm:$0xff]
  %v3387 = vld [vmem:[%s1503 + $0x1e0] sm:$0xff]
  %v3388 = vld [vmem:[%s1503 + $0x1e8] sm:$0xff]
  %v3389 = vld [vmem:[%s1503 + $0x1f0] sm:$0xff]
  %v3390 = vld [vmem:[%s1503 + $0x1f8] sm:$0xff]
  %v3391 = vld [vmem:[%s1503 + $0x200] sm:$0xff]
  %v3392 = vld [vmem:[%s1503 + $0x208] sm:$0xff]
  %v3393 = vld [vmem:[%s1503 + $0x210] sm:$0xff]
  %v3394 = vld [vmem:[%s1503 + $0x218] sm:$0xff]
  %v3395 = vld [vmem:[%s1503 + $0x220] sm:$0xff]
  %v3396 = vld [vmem:[%s1503 + $0x228] sm:$0xff]
  %v3397 = vld [vmem:[%s1503 + $0x230] sm:$0xff]
  %v3398 = vld [vmem:[%s1503 + $0x238] sm:$0xff]
  %v3399 = vld [vmem:[%s1503 + $0x240] sm:$0xff]
  %v3400 = vld [vmem:[%s1503 + $0x248] sm:$0xff]
  %v3401 = vld [vmem:[%s1503 + $0x250] sm:$0xff]
  %v3402 = vld [vmem:[%s1503 + $0x258] sm:$0xff]
  %v3403 = vld [vmem:[%s1503 + $0x260] sm:$0xff]
  %v3404 = vld [vmem:[%s1503 + $0x268] sm:$0xff]
  %v3405 = vld [vmem:[%s1503 + $0x270] sm:$0xff]
  %v3406 = vld [vmem:[%s1503 + $0x278] sm:$0xff]
  %v3407 = vld [vmem:[%s1503 + $0x280] sm:$0xff]
  %v3408 = vld [vmem:[%s1503 + $0x288] sm:$0xff]
  %v3409 = vld [vmem:[%s1503 + $0x290] sm:$0xff]
  %v3410 = vld [vmem:[%s1503 + $0x298] sm:$0xff]
  %v3411 = vld [vmem:[%s1503 + $0x2a0] sm:$0xff]
  %v3412 = vld [vmem:[%s1503 + $0x2a8] sm:$0xff]
  %v3413 = vld [vmem:[%s1503 + $0x2b0] sm:$0xff]
  %v3414 = vld [vmem:[%s1503 + $0x2b8] sm:$0xff]
  %v3415 = vld [vmem:[%s1503 + $0x2c0] sm:$0xff]
  %v3416 = vld [vmem:[%s1503 + $0x2c8] sm:$0xff]
  %v3417 = vld [vmem:[%s1503 + $0x2d0] sm:$0xff]
  %v3418 = vld [vmem:[%s1503 + $0x2d8] sm:$0xff]
  %v3419 = vld [vmem:[%s1503 + $0x2e0] sm:$0xff]
  %v3420 = vld [vmem:[%s1503 + $0x2e8] sm:$0xff]
  %v3421 = vld [vmem:[%s1503 + $0x2f0] sm:$0xff]
  %v3422 = vld [vmem:[%s1503 + $0x2f8] sm:$0xff]
  %v3423 = vld [vmem:[%s1503 + $0x300] sm:$0xff]
  %v3424 = vld [vmem:[%s1503 + $0x308] sm:$0xff]
  %v3425 = vld [vmem:[%s1503 + $0x310] sm:$0xff]
  %v3426 = vld [vmem:[%s1503 + $0x318] sm:$0xff]
  %v3427 = vld [vmem:[%s1503 + $0x320] sm:$0xff]
  %v3428 = vld [vmem:[%s1503 + $0x328] sm:$0xff]
  %v3429 = vld [vmem:[%s1503 + $0x330] sm:$0xff]
  %v3430 = vld [vmem:[%s1503 + $0x338] sm:$0xff]
  %v3431 = vld [vmem:[%s1503 + $0x340] sm:$0xff]
  %v3432 = vld [vmem:[%s1503 + $0x348] sm:$0xff]
  %v3433 = vld [vmem:[%s1503 + $0x350] sm:$0xff]
  %v3434 = vld [vmem:[%s1503 + $0x358] sm:$0xff]
  %v3435 = vld [vmem:[%s1503 + $0x360] sm:$0xff]
  %v3436 = vld [vmem:[%s1503 + $0x368] sm:$0xff]
  %v3437 = vld [vmem:[%s1503 + $0x370] sm:$0xff]
  %v3438 = vld [vmem:[%s1503 + $0x378] sm:$0xff]
  %v3439 = vld [vmem:[%s1503 + $0x380] sm:$0xff]
  %v3440 = vld [vmem:[%s1503 + $0x388] sm:$0xff]
  %v3441 = vld [vmem:[%s1503 + $0x390] sm:$0xff]
  %v3442 = vld [vmem:[%s1503 + $0x398] sm:$0xff]
  %v3443 = vld [vmem:[%s1503 + $0x3a0] sm:$0xff]
  %v3444 = vld [vmem:[%s1503 + $0x3a8] sm:$0xff]
  %v3445 = vld [vmem:[%s1503 + $0x3b0] sm:$0xff]
  %v3446 = vld [vmem:[%s1503 + $0x3b8] sm:$0xff]
  %v3447 = vld [vmem:[%s1503 + $0x3c0] sm:$0xff]
  %v3448 = vld [vmem:[%s1503 + $0x3c8] sm:$0xff]
  %v3449 = vld [vmem:[%s1503 + $0x3d0] sm:$0xff]
  %v3450 = vld [vmem:[%s1503 + $0x3d8] sm:$0xff]
  %v3451 = vld [vmem:[%s1503 + $0x3e0] sm:$0xff]
  %v3452 = vld [vmem:[%s1503 + $0x3e8] sm:$0xff]
  %v3453 = vld [vmem:[%s1503 + $0x3f0] sm:$0xff]
  %v3454 = vld [vmem:[%s1503 + $0x3f8] sm:$0xff]
  %v3455 = vld [vmem:[%s1632] sm:$0xf]
  %v3457 = vlaneseq
  %v3458 = vshrl.u32 %v3457, 7
  %v3459 = vsub.s32 0, %v3458
  %v3460 = vrot.slane %v3455, %v3459
  %v3461 = vlaneseq
  %v3462 = vshrl.u32 %v3461, 7
  %v3463 = vsub.s32 1, %v3462
  %v3464 = vrot.slane %v3455, %v3463
  %v3465 = vlaneseq
  %v3466 = vshrl.u32 %v3465, 7
  %v3467 = vsub.s32 2, %v3466
  %v3468 = vrot.slane %v3455, %v3467
  %v3469 = vlaneseq
  %v3470 = vshrl.u32 %v3469, 7
  %v3471 = vsub.s32 3, %v3470
  %v3472 = vrot.slane %v3455, %v3471
  %3477 = vmatprep.subr.mxu0 %v3328
  %3478 = vmatpush1.msra.mxu0 %v3327
  %3479 = vmatprep.subr.mxu0 %v3332
  %3480 = vmatpush1.msra.mxu0 %v3331
  %3481 = vmatprep.subr.mxu0 %v3336
  %3482 = vmatpush1.msra.mxu0 %v3335
  %3483 = vmatprep.subr.mxu0 %v3340
  %3484 = vmatpush1.msra.mxu0 %v3339
  %3485 = vmatprep.subr.mxu0 %v3344
  %3486 = vmatpush1.msra.mxu0 %v3343
  %3487 = vmatprep.subr.mxu0 %v3348
  %3488 = vmatpush1.msra.mxu0 %v3347
  %3489 = vmatprep.subr.mxu0 %v3352
  %3490 = vmatpush1.msra.mxu0 %v3351
  %3491 = vmatprep.subr.mxu0 %v3356
  %3492 = vmatpush1.msra.mxu0 %v3355
  %3493 = vmatprep.subr.mxu0 %v3360
  %3494 = vmatpush1.msra.mxu0 %v3359
  %3495 = vmatprep.subr.mxu0 %v3364
  %3496 = vmatpush1.msra.mxu0 %v3363
  %3497 = vmatprep.subr.mxu0 %v3368
  %3498 = vmatpush1.msra.mxu0 %v3367
  %3499 = vmatprep.subr.mxu0 %v3372
  %3500 = vmatpush1.msra.mxu0 %v3371
  %3501 = vmatprep.subr.mxu0 %v3376
  %3502 = vmatpush1.msra.mxu0 %v3375
  %3503 = vmatprep.subr.mxu0 %v3380
  %3504 = vmatpush1.msra.mxu0 %v3379
  %3505 = vmatprep.subr.mxu0 %v3384
  %3506 = vmatpush1.msra.mxu0 %v3383
  %3507 = vmatprep.subr.mxu0 %v3388
  %3508 = vmatpush1.msra.mxu0 %v3387
  %3509 = vmatprep.subr.mxu0 %v3392
  %3510 = vmatpush1.msra.mxu0 %v3391
  %3511 = vmatprep.subr.mxu0 %v3396
  %3512 = vmatpush1.msra.mxu0 %v3395
  %3513 = vmatprep.subr.mxu0 %v3400
  %3514 = vmatpush1.msra.mxu0 %v3399
  %3515 = vmatprep.subr.mxu0 %v3404
  %3516 = vmatpush1.msra.mxu0 %v3403
  %3517 = vmatprep.subr.mxu0 %v3408
  %3518 = vmatpush1.msra.mxu0 %v3407
  %3519 = vmatprep.subr.mxu0 %v3412
  %3520 = vmatpush1.msra.mxu0 %v3411
  %3521 = vmatprep.subr.mxu0 %v3416
  %3522 = vmatpush1.msra.mxu0 %v3415
  %3523 = vmatprep.subr.mxu0 %v3420
  %3524 = vmatpush1.msra.mxu0 %v3419
  %3525 = vmatprep.subr.mxu0 %v3424
  %3526 = vmatpush1.msra.mxu0 %v3423
  %3527 = vmatprep.subr.mxu0 %v3428
  %3528 = vmatpush1.msra.mxu0 %v3427
  %3529 = vmatprep.subr.mxu0 %v3432
  %3530 = vmatpush1.msra.mxu0 %v3431
  %3531 = vmatprep.subr.mxu0 %v3436
  %3532 = vmatpush1.msra.mxu0 %v3435
  %3533 = vmatprep.subr.mxu0 %v3440
  %3534 = vmatpush1.msra.mxu0 %v3439
  %3535 = vmatprep.subr.mxu0 %v3444
  %3536 = vmatpush1.msra.mxu0 %v3443
  %3537 = vmatprep.subr.mxu0 %v3448
  %3538 = vmatpush1.msra.mxu0 %v3447
  %3539 = vmatprep.subr.mxu0 %v3452
  %3540 = vmatpush1.msra.mxu0 %v3451
  %3541 = vmatprep.mubr.f32.mxu0 %v3326
  %3542 = vmatmul.mubr.f32.gmra.mrb[0].mxu0 %v3323
  %v3543 = vpop.f32.mrb[0].mxu0
  %v3544 = vadd.f32 %v3460, %v3543
  %v3545 = vpop.f32.mrb[0].mxu0
  %v3546 = vadd.f32 %v3464, %v3545
  %3547 = vdwg.mxu0
  %3548 = vmatprep.subr.mxu0 %v3330
  %3549 = vmatpush1.msra.mxu0 %v3329
  %3550 = vmatprep.subr.mxu0 %v3334
  %3551 = vmatpush1.msra.mxu0 %v3333
  %3552 = vmatprep.subr.mxu0 %v3338
  %3553 = vmatpush1.msra.mxu0 %v3337
  %3554 = vmatprep.subr.mxu0 %v3342
  %3555 = vmatpush1.msra.mxu0 %v3341
  %3556 = vmatprep.subr.mxu0 %v3346
  %3557 = vmatpush1.msra.mxu0 %v3345
  %3558 = vmatprep.subr.mxu0 %v3350
  %3559 = vmatpush1.msra.mxu0 %v3349
  %3560 = vmatprep.subr.mxu0 %v3354
  %3561 = vmatpush1.msra.mxu0 %v3353
  %3562 = vmatprep.subr.mxu0 %v3358
  %3563 = vmatpush1.msra.mxu0 %v3357
  %3564 = vmatprep.subr.mxu0 %v3362
  %3565 = vmatpush1.msra.mxu0 %v3361
  %3566 = vmatprep.subr.mxu0 %v3366
  %3567 = vmatpush1.msra.mxu0 %v3365
  %3568 = vmatprep.subr.mxu0 %v3370
  %3569 = vmatpush1.msra.mxu0 %v3369
  %3570 = vmatprep.subr.mxu0 %v3374
  %3571 = vmatpush1.msra.mxu0 %v3373
  %3572 = vmatprep.subr.mxu0 %v3378
  %3573 = vmatpush1.msra.mxu0 %v3377
  %3574 = vmatprep.subr.mxu0 %v3382
  %3575 = vmatpush1.msra.mxu0 %v3381
  %3576 = vmatprep.subr.mxu0 %v3386
  %3577 = vmatpush1.msra.mxu0 %v3385
  %3578 = vmatprep.subr.mxu0 %v3390
  %3579 = vmatpush1.msra.mxu0 %v3389
  %3580 = vmatprep.subr.mxu0 %v3394
  %3581 = vmatpush1.msra.mxu0 %v3393
  %3582 = vmatprep.subr.mxu0 %v3398
  %3583 = vmatpush1.msra.mxu0 %v3397
  %3584 = vmatprep.subr.mxu0 %v3402
  %3585 = vmatpush1.msra.mxu0 %v3401
  %3586 = vmatprep.subr.mxu0 %v3406
  %3587 = vmatpush1.msra.mxu0 %v3405
  %3588 = vmatprep.subr.mxu0 %v3410
  %3589 = vmatpush1.msra.mxu0 %v3409
  %3590 = vmatprep.subr.mxu0 %v3414
  %3591 = vmatpush1.msra.mxu0 %v3413
  %3592 = vmatprep.subr.mxu0 %v3418
  %3593 = vmatpush1.msra.mxu0 %v3417
  %3594 = vmatprep.subr.mxu0 %v3422
  %3595 = vmatpush1.msra.mxu0 %v3421
  %3596 = vmatprep.subr.mxu0 %v3426
  %3597 = vmatpush1.msra.mxu0 %v3425
  %3598 = vmatprep.subr.mxu0 %v3430
  %3599 = vmatpush1.msra.mxu0 %v3429
  %3600 = vmatprep.subr.mxu0 %v3434
  %3601 = vmatpush1.msra.mxu0 %v3433
  %3602 = vmatprep.subr.mxu0 %v3438
  %3603 = vmatpush1.msra.mxu0 %v3437
  %3604 = vmatprep.subr.mxu0 %v3442
  %3605 = vmatpush1.msra.mxu0 %v3441
  %3606 = vmatprep.subr.mxu0 %v3446
  %3607 = vmatpush1.msra.mxu0 %v3445
  %3608 = vmatprep.subr.mxu0 %v3450
  %3609 = vmatpush1.msra.mxu0 %v3449
  %3610 = vmatprep.subr.mxu0 %v3454
  %3611 = vmatpush1.msra.mxu0 %v3453
  %3612 = vmatprep.mubr.f32.mxu0 %v3326
  %3613 = vmatmul.mubr.f32.gmra.mrb[0].mxu0 %v3323
  %v3614 = vpop.f32.mrb[0].mxu0
  %v3615 = vadd.f32 %v3468, %v3614
  %v3616 = vpop.f32.mrb[0].mxu0
  %v3617 = vadd.f32 %v3472, %v3616
  %3618 = vdwg.mxu0
  %v3619 = vld [vmem:[%s1797] sm:$0xff]
  %v3620 = vxor.u32 %v3544, 2147483648
  %v3621 = vmul.f32 %v3620, 1.442695
  %v3622 = vpow.pop %v3621
  %v3623 = vadd.f32 %v3622, 1.0
  %v3624 = vrcp.pop %v3623
  %v3625 = vmul.f32 1.0, %v3624
  %v3626 = vxor.u32 %v3546, 2147483648
  %v3627 = vmul.f32 %v3626, 1.442695
  %v3628 = vpow.pop %v3627
  %v3629 = vadd.f32 %v3628, 1.0
  %v3630 = vrcp.pop %v3629
  %v3631 = vmul.f32 1.0, %v3630
  %v3632 = vtanh.pop %v3615
  %v3633 = vxor.u32 %v3617, 2147483648
  %v3634 = vmul.f32 %v3633, 1.442695
  %v3635 = vpow.pop %v3634
  %v3636 = vadd.f32 %v3635, 1.0
  %v3637 = vrcp.pop %v3636
  %v3638 = vmul.f32 1.0, %v3637
  %v3639 = vmul.f32 %v3631, %v3619
  %v3640 = vmul.f32 %v3625, %v3632
  %v3641 = vadd.f32 %v3639, %v3640
  %v3642 = vtanh.pop %v3641
  %v3643 = vmul.f32 %v3638, %v3642
  %3644 = vst [vmem:[%s1501] sm:$0xff] %v3643
  %3645 = vst [vmem:[%s1797] sm:$0xff] %v3641
  %s3646 = scalar_lea.vmem [#allocation3], 16
  %3647 = vst [vmem:[%s3646] sm:$0xff] %v3643
  %s3648 = scalar_lea.vmem [#allocation2], 96
  %v3649 = vld [vmem:[%s3648] sm:$0xff]
  %v3650 = vld [vmem:[%s3648 + $0x8] sm:$0xff]
  %v3651 = vld [vmem:[%s3648 + $0x10] sm:$0xff]
  %v3652 = vld [vmem:[%s3648 + $0x18] sm:$0xff]
  %v3653 = vld [vmem:[%s10] sm:$0xff]
  %v3654 = vld [vmem:[%s2] sm:$0xff]
  %v3655 = vld [vmem:[%s2 + $0x8] sm:$0xff]
  %v3656 = vld [vmem:[%s2 + $0x10] sm:$0xff]
  %v3657 = vld [vmem:[%s2 + $0x18] sm:$0xff]
  %v3658 = vld [vmem:[%s2 + $0x20] sm:$0xff]
  %v3659 = vld [vmem:[%s2 + $0x28] sm:$0xff]
  %v3660 = vld [vmem:[%s2 + $0x30] sm:$0xff]
  %v3661 = vld [vmem:[%s2 + $0x38] sm:$0xff]
  %v3662 = vld [vmem:[%s2 + $0x40] sm:$0xff]
  %v3663 = vld [vmem:[%s2 + $0x48] sm:$0xff]
  %v3664 = vld [vmem:[%s2 + $0x50] sm:$0xff]
  %v3665 = vld [vmem:[%s2 + $0x58] sm:$0xff]
  %v3666 = vld [vmem:[%s2 + $0x60] sm:$0xff]
  %v3667 = vld [vmem:[%s2 + $0x68] sm:$0xff]
  %v3668 = vld [vmem:[%s2 + $0x70] sm:$0xff]
  %v3669 = vld [vmem:[%s2 + $0x78] sm:$0xff]
  %v3670 = vld [vmem:[%s2 + $0x80] sm:$0xff]
  %v3671 = vld [vmem:[%s2 + $0x88] sm:$0xff]
  %v3672 = vld [vmem:[%s2 + $0x90] sm:$0xff]
  %v3673 = vld [vmem:[%s2 + $0x98] sm:$0xff]
  %v3674 = vld [vmem:[%s2 + $0xa0] sm:$0xff]
  %v3675 = vld [vmem:[%s2 + $0xa8] sm:$0xff]
  %v3676 = vld [vmem:[%s2 + $0xb0] sm:$0xff]
  %v3677 = vld [vmem:[%s2 + $0xb8] sm:$0xff]
  %v3678 = vld [vmem:[%s2 + $0xc0] sm:$0xff]
  %v3679 = vld [vmem:[%s2 + $0xc8] sm:$0xff]
  %v3680 = vld [vmem:[%s2 + $0xd0] sm:$0xff]
  %v3681 = vld [vmem:[%s2 + $0xd8] sm:$0xff]
  %v3682 = vld [vmem:[%s2 + $0xe0] sm:$0xff]
  %v3683 = vld [vmem:[%s2 + $0xe8] sm:$0xff]
  %v3684 = vld [vmem:[%s2 + $0xf0] sm:$0xff]
  %v3685 = vld [vmem:[%s2 + $0xf8] sm:$0xff]
  %v3686 = vld [vmem:[%s2 + $0x100] sm:$0xff]
  %v3687 = vld [vmem:[%s2 + $0x108] sm:$0xff]
  %v3688 = vld [vmem:[%s2 + $0x110] sm:$0xff]
  %v3689 = vld [vmem:[%s2 + $0x118] sm:$0xff]
  %v3690 = vld [vmem:[%s2 + $0x120] sm:$0xff]
  %v3691 = vld [vmem:[%s2 + $0x128] sm:$0xff]
  %v3692 = vld [vmem:[%s2 + $0x130] sm:$0xff]
  %v3693 = vld [vmem:[%s2 + $0x138] sm:$0xff]
  %v3694 = vld [vmem:[%s2 + $0x140] sm:$0xff]
  %v3695 = vld [vmem:[%s2 + $0x148] sm:$0xff]
  %v3696 = vld [vmem:[%s2 + $0x150] sm:$0xff]
  %v3697 = vld [vmem:[%s2 + $0x158] sm:$0xff]
  %v3698 = vld [vmem:[%s2 + $0x160] sm:$0xff]
  %v3699 = vld [vmem:[%s2 + $0x168] sm:$0xff]
  %v3700 = vld [vmem:[%s2 + $0x170] sm:$0xff]
  %v3701 = vld [vmem:[%s2 + $0x178] sm:$0xff]
  %v3702 = vld [vmem:[%s2 + $0x180] sm:$0xff]
  %v3703 = vld [vmem:[%s2 + $0x188] sm:$0xff]
  %v3704 = vld [vmem:[%s2 + $0x190] sm:$0xff]
  %v3705 = vld [vmem:[%s2 + $0x198] sm:$0xff]
  %v3706 = vld [vmem:[%s2 + $0x1a0] sm:$0xff]
  %v3707 = vld [vmem:[%s2 + $0x1a8] sm:$0xff]
  %v3708 = vld [vmem:[%s2 + $0x1b0] sm:$0xff]
  %v3709 = vld [vmem:[%s2 + $0x1b8] sm:$0xff]
  %v3710 = vld [vmem:[%s2 + $0x1c0] sm:$0xff]
  %v3711 = vld [vmem:[%s2 + $0x1c8] sm:$0xff]
  %v3712 = vld [vmem:[%s2 + $0x1d0] sm:$0xff]
  %v3713 = vld [vmem:[%s2 + $0x1d8] sm:$0xff]
  %v3714 = vld [vmem:[%s2 + $0x1e0] sm:$0xff]
  %v3715 = vld [vmem:[%s2 + $0x1e8] sm:$0xff]
  %v3716 = vld [vmem:[%s2 + $0x1f0] sm:$0xff]
  %v3717 = vld [vmem:[%s2 + $0x1f8] sm:$0xff]
  %3718 = vmatprep.subr.mxu0 %v3655
  %3719 = vmatpush1.msra.mxu0 %v3654
  %3720 = vmatprep.subr.mxu0 %v3659
  %3721 = vmatpush1.msra.mxu0 %v3658
  %3722 = vmatprep.subr.mxu0 %v3663
  %3723 = vmatpush1.msra.mxu0 %v3662
  %3724 = vmatprep.subr.mxu0 %v3667
  %3725 = vmatpush1.msra.mxu0 %v3666
  %3726 = vmatprep.subr.mxu0 %v3671
  %3727 = vmatpush1.msra.mxu0 %v3670
  %3728 = vmatprep.subr.mxu0 %v3675
  %3729 = vmatpush1.msra.mxu0 %v3674
  %3730 = vmatprep.subr.mxu0 %v3679
  %3731 = vmatpush1.msra.mxu0 %v3678
  %3732 = vmatprep.subr.mxu0 %v3683
  %3733 = vmatpush1.msra.mxu0 %v3682
  %3734 = vmatprep.subr.mxu0 %v3687
  %3735 = vmatpush1.msra.mxu0 %v3686
  %3736 = vmatprep.subr.mxu0 %v3691
  %3737 = vmatpush1.msra.mxu0 %v3690
  %3738 = vmatprep.subr.mxu0 %v3695
  %3739 = vmatpush1.msra.mxu0 %v3694
  %3740 = vmatprep.subr.mxu0 %v3699
  %3741 = vmatpush1.msra.mxu0 %v3698
  %3742 = vmatprep.subr.mxu0 %v3703
  %3743 = vmatpush1.msra.mxu0 %v3702
  %3744 = vmatprep.subr.mxu0 %v3707
  %3745 = vmatpush1.msra.mxu0 %v3706
  %3746 = vmatprep.subr.mxu0 %v3711
  %3747 = vmatpush1.msra.mxu0 %v3710
  %3748 = vmatprep.subr.mxu0 %v3715
  %3749 = vmatpush1.msra.mxu0 %v3714
  %3750 = vmatprep.subr.mxu0 0.0
  %3751 = vmatpush1.msra.mxu0 0.0
  %3752 = vmatprep.subr.mxu0 0.0
  %3753 = vmatpush1.msra.mxu0 0.0
  %3754 = vmatprep.subr.mxu0 0.0
  %3755 = vmatpush1.msra.mxu0 0.0
  %3756 = vmatprep.subr.mxu0 0.0
  %3757 = vmatpush1.msra.mxu0 0.0
  %3758 = vmatprep.subr.mxu0 0.0
  %3759 = vmatpush1.msra.mxu0 0.0
  %3760 = vmatprep.subr.mxu0 0.0
  %3761 = vmatpush1.msra.mxu0 0.0
  %3762 = vmatprep.subr.mxu0 0.0
  %3763 = vmatpush1.msra.mxu0 0.0
  %3764 = vmatprep.subr.mxu0 0.0
  %3765 = vmatpush1.msra.mxu0 0.0
  %3766 = vmatprep.subr.mxu0 0.0
  %3767 = vmatpush1.msra.mxu0 0.0
  %3768 = vmatprep.subr.mxu0 0.0
  %3769 = vmatpush1.msra.mxu0 0.0
  %3770 = vmatprep.subr.mxu0 0.0
  %3771 = vmatpush1.msra.mxu0 0.0
  %3772 = vmatprep.subr.mxu0 0.0
  %3773 = vmatpush1.msra.mxu0 0.0
  %3774 = vmatprep.subr.mxu0 0.0
  %3775 = vmatpush1.msra.mxu0 0.0
  %3776 = vmatprep.subr.mxu0 0.0
  %3777 = vmatpush1.msra.mxu0 0.0
  %3778 = vmatprep.subr.mxu0 0.0
  %3779 = vmatpush1.msra.mxu0 0.0
  %3780 = vmatprep.subr.mxu0 0.0
  %3781 = vmatpush1.msra.mxu0 0.0
  %3782 = vmatprep.mubr.f32.mxu0 0.0
  %3783 = vmatmul.mubr.f32.gmra.mrb[0].mxu0 %v3653
  %v3784 = vpop.f32.mrb[0].mxu0
  %v3785 = vadd.f32 0.0, %v3784
  %v3786 = vpop.f32.mrb[0].mxu0
  %v3787 = vadd.f32 0.0, %v3786
  %3788 = vdwg.mxu0
  %3789 = vmatprep.subr.mxu0 %v3657
  %3790 = vmatpush1.msra.mxu0 %v3656
  %3791 = vmatprep.subr.mxu0 %v3661
  %3792 = vmatpush1.msra.mxu0 %v3660
  %3793 = vmatprep.subr.mxu0 %v3665
  %3794 = vmatpush1.msra.mxu0 %v3664
  %3795 = vmatprep.subr.mxu0 %v3669
  %3796 = vmatpush1.msra.mxu0 %v3668
  %3797 = vmatprep.subr.mxu0 %v3673
  %3798 = vmatpush1.msra.mxu0 %v3672
  %3799 = vmatprep.subr.mxu0 %v3677
  %3800 = vmatpush1.msra.mxu0 %v3676
  %3801 = vmatprep.subr.mxu0 %v3681
  %3802 = vmatpush1.msra.mxu0 %v3680
  %3803 = vmatprep.subr.mxu0 %v3685
  %3804 = vmatpush1.msra.mxu0 %v3684
  %3805 = vmatprep.subr.mxu0 %v3689
  %3806 = vmatpush1.msra.mxu0 %v3688
  %3807 = vmatprep.subr.mxu0 %v3693
  %3808 = vmatpush1.msra.mxu0 %v3692
  %3809 = vmatprep.subr.mxu0 %v3697
  %3810 = vmatpush1.msra.mxu0 %v3696
  %3811 = vmatprep.subr.mxu0 %v3701
  %3812 = vmatpush1.msra.mxu0 %v3700
  %3813 = vmatprep.subr.mxu0 %v3705
  %3814 = vmatpush1.msra.mxu0 %v3704
  %3815 = vmatprep.subr.mxu0 %v3709
  %3816 = vmatpush1.msra.mxu0 %v3708
  %3817 = vmatprep.subr.mxu0 %v3713
  %3818 = vmatpush1.msra.mxu0 %v3712
  %3819 = vmatprep.subr.mxu0 %v3717
  %3820 = vmatpush1.msra.mxu0 %v3716
  %3821 = vmatprep.subr.mxu0 0.0
  %3822 = vmatpush1.msra.mxu0 0.0
  %3823 = vmatprep.subr.mxu0 0.0
  %3824 = vmatpush1.msra.mxu0 0.0
  %3825 = vmatprep.subr.mxu0 0.0
  %3826 = vmatpush1.msra.mxu0 0.0
  %3827 = vmatprep.subr.mxu0 0.0
  %3828 = vmatpush1.msra.mxu0 0.0
  %3829 = vmatprep.subr.mxu0 0.0
  %3830 = vmatpush1.msra.mxu0 0.0
  %3831 = vmatprep.subr.mxu0 0.0
  %3832 = vmatpush1.msra.mxu0 0.0
  %3833 = vmatprep.subr.mxu0 0.0
  %3834 = vmatpush1.msra.mxu0 0.0
  %3835 = vmatprep.subr.mxu0 0.0
  %3836 = vmatpush1.msra.mxu0 0.0
  %3837 = vmatprep.subr.mxu0 0.0
  %3838 = vmatpush1.msra.mxu0 0.0
  %3839 = vmatprep.subr.mxu0 0.0
  %3840 = vmatpush1.msra.mxu0 0.0
  %3841 = vmatprep.subr.mxu0 0.0
  %3842 = vmatpush1.msra.mxu0 0.0
  %3843 = vmatprep.subr.mxu0 0.0
  %3844 = vmatpush1.msra.mxu0 0.0
  %3845 = vmatprep.subr.mxu0 0.0
  %3846 = vmatpush1.msra.mxu0 0.0
  %3847 = vmatprep.subr.mxu0 0.0
  %3848 = vmatpush1.msra.mxu0 0.0
  %3849 = vmatprep.subr.mxu0 0.0
  %3850 = vmatpush1.msra.mxu0 0.0
  %3851 = vmatprep.subr.mxu0 0.0
  %3852 = vmatpush1.msra.mxu0 0.0
  %3853 = vmatprep.mubr.f32.mxu0 0.0
  %3854 = vmatmul.mubr.f32.gmra.mrb[0].mxu0 %v3653
  %v3855 = vpop.f32.mrb[0].mxu0
  %v3856 = vadd.f32 0.0, %v3855
  %v3857 = vpop.f32.mrb[0].mxu0
  %v3858 = vadd.f32 0.0, %v3857
  %3859 = vdwg.mxu0
  %v3860 = vadd.f32 %v3649, %v3785
  %v3861 = vadd.f32 %v3650, %v3787
  %v3862 = vadd.f32 %v3651, %v3856
  %v3863 = vadd.f32 %v3652, %v3858
  %v3864 = vld [vmem:[%s4] sm:$0xf]
  %v3866 = vlaneseq
  %v3867 = vshrl.u32 %v3866, 7
  %v3868 = vsub.s32 0, %v3867
  %v3869 = vrot.slane %v3864, %v3868
  %v3870 = vlaneseq
  %v3871 = vshrl.u32 %v3870, 7
  %v3872 = vsub.s32 1, %v3871
  %v3873 = vrot.slane %v3864, %v3872
  %v3874 = vlaneseq
  %v3875 = vshrl.u32 %v3874, 7
  %v3876 = vsub.s32 2, %v3875
  %v3877 = vrot.slane %v3864, %v3876
  %v3878 = vlaneseq
  %v3879 = vshrl.u32 %v3878, 7
  %v3880 = vsub.s32 3, %v3879
  %v3881 = vrot.slane %v3864, %v3880
  %v3886 = vadd.f32 %v3860, %v3869
  %v3887 = vadd.f32 %v3861, %v3873
  %v3888 = vadd.f32 %v3862, %v3877
  %v3889 = vadd.f32 %v3863, %v3881
  %v3890 = vld [vmem:[%s11] sm:$0xff]
  %v3891 = vxor.u32 %v3886, 2147483648
  %v3892 = vmul.f32 %v3891, 1.442695
  %v3893 = vpow.pop %v3892
  %v3894 = vadd.f32 %v3893, 1.0
  %v3895 = vrcp.pop %v3894
  %v3896 = vmul.f32 1.0, %v3895
  %v3897 = vxor.u32 %v3887, 2147483648
  %v3898 = vmul.f32 %v3897, 1.442695
  %v3899 = vpow.pop %v3898
  %v3900 = vadd.f32 %v3899, 1.0
  %v3901 = vrcp.pop %v3900
  %v3902 = vmul.f32 1.0, %v3901
  %v3903 = vtanh.pop %v3888
  %v3904 = vxor.u32 %v3889, 2147483648
  %v3905 = vmul.f32 %v3904, 1.442695
  %v3906 = vpow.pop %v3905
  %v3907 = vadd.f32 %v3906, 1.0
  %v3908 = vrcp.pop %v3907
  %v3909 = vmul.f32 1.0, %v3908
  %v3910 = vmul.f32 %v3902, %v3890
  %v3911 = vmul.f32 %v3896, %v3903
  %v3912 = vadd.f32 %v3910, %v3911
  %v3913 = vtanh.pop %v3912
  %v3914 = vmul.f32 %v3909, %v3913
  %3915 = vst [vmem:[%s10] sm:$0xff] %v3914
  %3916 = vst [vmem:[%s11] sm:$0xff] %v3912
  %v3917 = vld [vmem:[%s1178] sm:$0xff]
  %v3918 = vld [vmem:[%s3] sm:$0xff]
  %v3919 = vld [vmem:[%s3 + $0x8] sm:$0xff]
  %v3920 = vld [vmem:[%s3 + $0x10] sm:$0xff]
  %v3921 = vld [vmem:[%s3 + $0x18] sm:$0xff]
  %v3922 = vld [vmem:[%s3 + $0x20] sm:$0xff]
  %v3923 = vld [vmem:[%s3 + $0x28] sm:$0xff]
  %v3924 = vld [vmem:[%s3 + $0x30] sm:$0xff]
  %v3925 = vld [vmem:[%s3 + $0x38] sm:$0xff]
  %v3926 = vld [vmem:[%s3 + $0x40] sm:$0xff]
  %v3927 = vld [vmem:[%s3 + $0x48] sm:$0xff]
  %v3928 = vld [vmem:[%s3 + $0x50] sm:$0xff]
  %v3929 = vld [vmem:[%s3 + $0x58] sm:$0xff]
  %v3930 = vld [vmem:[%s3 + $0x60] sm:$0xff]
  %v3931 = vld [vmem:[%s3 + $0x68] sm:$0xff]
  %v3932 = vld [vmem:[%s3 + $0x70] sm:$0xff]
  %v3933 = vld [vmem:[%s3 + $0x78] sm:$0xff]
  %v3934 = vld [vmem:[%s3 + $0x80] sm:$0xff]
  %v3935 = vld [vmem:[%s3 + $0x88] sm:$0xff]
  %v3936 = vld [vmem:[%s3 + $0x90] sm:$0xff]
  %v3937 = vld [vmem:[%s3 + $0x98] sm:$0xff]
  %v3938 = vld [vmem:[%s3 + $0xa0] sm:$0xff]
  %v3939 = vld [vmem:[%s3 + $0xa8] sm:$0xff]
  %v3940 = vld [vmem:[%s3 + $0xb0] sm:$0xff]
  %v3941 = vld [vmem:[%s3 + $0xb8] sm:$0xff]
  %v3942 = vld [vmem:[%s3 + $0xc0] sm:$0xff]
  %v3943 = vld [vmem:[%s3 + $0xc8] sm:$0xff]
  %v3944 = vld [vmem:[%s3 + $0xd0] sm:$0xff]
  %v3945 = vld [vmem:[%s3 + $0xd8] sm:$0xff]
  %v3946 = vld [vmem:[%s3 + $0xe0] sm:$0xff]
  %v3947 = vld [vmem:[%s3 + $0xe8] sm:$0xff]
  %v3948 = vld [vmem:[%s3 + $0xf0] sm:$0xff]
  %v3949 = vld [vmem:[%s3 + $0xf8] sm:$0xff]
  %v3950 = vld [vmem:[%s3 + $0x100] sm:$0xff]
  %v3951 = vld [vmem:[%s3 + $0x108] sm:$0xff]
  %v3952 = vld [vmem:[%s3 + $0x110] sm:$0xff]
  %v3953 = vld [vmem:[%s3 + $0x118] sm:$0xff]
  %v3954 = vld [vmem:[%s3 + $0x120] sm:$0xff]
  %v3955 = vld [vmem:[%s3 + $0x128] sm:$0xff]
  %v3956 = vld [vmem:[%s3 + $0x130] sm:$0xff]
  %v3957 = vld [vmem:[%s3 + $0x138] sm:$0xff]
  %v3958 = vld [vmem:[%s3 + $0x140] sm:$0xff]
  %v3959 = vld [vmem:[%s3 + $0x148] sm:$0xff]
  %v3960 = vld [vmem:[%s3 + $0x150] sm:$0xff]
  %v3961 = vld [vmem:[%s3 + $0x158] sm:$0xff]
  %v3962 = vld [vmem:[%s3 + $0x160] sm:$0xff]
  %v3963 = vld [vmem:[%s3 + $0x168] sm:$0xff]
  %v3964 = vld [vmem:[%s3 + $0x170] sm:$0xff]
  %v3965 = vld [vmem:[%s3 + $0x178] sm:$0xff]
  %v3966 = vld [vmem:[%s3 + $0x180] sm:$0xff]
  %v3967 = vld [vmem:[%s3 + $0x188] sm:$0xff]
  %v3968 = vld [vmem:[%s3 + $0x190] sm:$0xff]
  %v3969 = vld [vmem:[%s3 + $0x198] sm:$0xff]
  %v3970 = vld [vmem:[%s3 + $0x1a0] sm:$0xff]
  %v3971 = vld [vmem:[%s3 + $0x1a8] sm:$0xff]
  %v3972 = vld [vmem:[%s3 + $0x1b0] sm:$0xff]
  %v3973 = vld [vmem:[%s3 + $0x1b8] sm:$0xff]
  %v3974 = vld [vmem:[%s3 + $0x1c0] sm:$0xff]
  %v3975 = vld [vmem:[%s3 + $0x1c8] sm:$0xff]
  %v3976 = vld [vmem:[%s3 + $0x1d0] sm:$0xff]
  %v3977 = vld [vmem:[%s3 + $0x1d8] sm:$0xff]
  %v3978 = vld [vmem:[%s3 + $0x1e0] sm:$0xff]
  %v3979 = vld [vmem:[%s3 + $0x1e8] sm:$0xff]
  %v3980 = vld [vmem:[%s3 + $0x1f0] sm:$0xff]
  %v3981 = vld [vmem:[%s3 + $0x1f8] sm:$0xff]
  %v3982 = vld [vmem:[%s3 + $0x200] sm:$0xff]
  %v3983 = vld [vmem:[%s3 + $0x208] sm:$0xff]
  %v3984 = vld [vmem:[%s3 + $0x210] sm:$0xff]
  %v3985 = vld [vmem:[%s3 + $0x218] sm:$0xff]
  %v3986 = vld [vmem:[%s3 + $0x220] sm:$0xff]
  %v3987 = vld [vmem:[%s3 + $0x228] sm:$0xff]
  %v3988 = vld [vmem:[%s3 + $0x230] sm:$0xff]
  %v3989 = vld [vmem:[%s3 + $0x238] sm:$0xff]
  %v3990 = vld [vmem:[%s3 + $0x240] sm:$0xff]
  %v3991 = vld [vmem:[%s3 + $0x248] sm:$0xff]
  %v3992 = vld [vmem:[%s3 + $0x250] sm:$0xff]
  %v3993 = vld [vmem:[%s3 + $0x258] sm:$0xff]
  %v3994 = vld [vmem:[%s3 + $0x260] sm:$0xff]
  %v3995 = vld [vmem:[%s3 + $0x268] sm:$0xff]
  %v3996 = vld [vmem:[%s3 + $0x270] sm:$0xff]
  %v3997 = vld [vmem:[%s3 + $0x278] sm:$0xff]
  %v3998 = vld [vmem:[%s3 + $0x280] sm:$0xff]
  %v3999 = vld [vmem:[%s3 + $0x288] sm:$0xff]
  %v4000 = vld [vmem:[%s3 + $0x290] sm:$0xff]
  %v4001 = vld [vmem:[%s3 + $0x298] sm:$0xff]
  %v4002 = vld [vmem:[%s3 + $0x2a0] sm:$0xff]
  %v4003 = vld [vmem:[%s3 + $0x2a8] sm:$0xff]
  %v4004 = vld [vmem:[%s3 + $0x2b0] sm:$0xff]
  %v4005 = vld [vmem:[%s3 + $0x2b8] sm:$0xff]
  %v4006 = vld [vmem:[%s3 + $0x2c0] sm:$0xff]
  %v4007 = vld [vmem:[%s3 + $0x2c8] sm:$0xff]
  %v4008 = vld [vmem:[%s3 + $0x2d0] sm:$0xff]
  %v4009 = vld [vmem:[%s3 + $0x2d8] sm:$0xff]
  %v4010 = vld [vmem:[%s3 + $0x2e0] sm:$0xff]
  %v4011 = vld [vmem:[%s3 + $0x2e8] sm:$0xff]
  %v4012 = vld [vmem:[%s3 + $0x2f0] sm:$0xff]
  %v4013 = vld [vmem:[%s3 + $0x2f8] sm:$0xff]
  %v4014 = vld [vmem:[%s3 + $0x300] sm:$0xff]
  %v4015 = vld [vmem:[%s3 + $0x308] sm:$0xff]
  %v4016 = vld [vmem:[%s3 + $0x310] sm:$0xff]
  %v4017 = vld [vmem:[%s3 + $0x318] sm:$0xff]
  %v4018 = vld [vmem:[%s3 + $0x320] sm:$0xff]
  %v4019 = vld [vmem:[%s3 + $0x328] sm:$0xff]
  %v4020 = vld [vmem:[%s3 + $0x330] sm:$0xff]
  %v4021 = vld [vmem:[%s3 + $0x338] sm:$0xff]
  %v4022 = vld [vmem:[%s3 + $0x340] sm:$0xff]
  %v4023 = vld [vmem:[%s3 + $0x348] sm:$0xff]
  %v4024 = vld [vmem:[%s3 + $0x350] sm:$0xff]
  %v4025 = vld [vmem:[%s3 + $0x358] sm:$0xff]
  %v4026 = vld [vmem:[%s3 + $0x360] sm:$0xff]
  %v4027 = vld [vmem:[%s3 + $0x368] sm:$0xff]
  %v4028 = vld [vmem:[%s3 + $0x370] sm:$0xff]
  %v4029 = vld [vmem:[%s3 + $0x378] sm:$0xff]
  %v4030 = vld [vmem:[%s3 + $0x380] sm:$0xff]
  %v4031 = vld [vmem:[%s3 + $0x388] sm:$0xff]
  %v4032 = vld [vmem:[%s3 + $0x390] sm:$0xff]
  %v4033 = vld [vmem:[%s3 + $0x398] sm:$0xff]
  %v4034 = vld [vmem:[%s3 + $0x3a0] sm:$0xff]
  %v4035 = vld [vmem:[%s3 + $0x3a8] sm:$0xff]
  %v4036 = vld [vmem:[%s3 + $0x3b0] sm:$0xff]
  %v4037 = vld [vmem:[%s3 + $0x3b8] sm:$0xff]
  %v4038 = vld [vmem:[%s3 + $0x3c0] sm:$0xff]
  %v4039 = vld [vmem:[%s3 + $0x3c8] sm:$0xff]
  %v4040 = vld [vmem:[%s3 + $0x3d0] sm:$0xff]
  %v4041 = vld [vmem:[%s3 + $0x3d8] sm:$0xff]
  %v4042 = vld [vmem:[%s3 + $0x3e0] sm:$0xff]
  %v4043 = vld [vmem:[%s3 + $0x3e8] sm:$0xff]
  %v4044 = vld [vmem:[%s3 + $0x3f0] sm:$0xff]
  %v4045 = vld [vmem:[%s3 + $0x3f8] sm:$0xff]
  %v4046 = vld [vmem:[%s1308] sm:$0xf]
  %v4048 = vlaneseq
  %v4049 = vshrl.u32 %v4048, 7
  %v4050 = vsub.s32 0, %v4049
  %v4051 = vrot.slane %v4046, %v4050
  %v4052 = vlaneseq
  %v4053 = vshrl.u32 %v4052, 7
  %v4054 = vsub.s32 1, %v4053
  %v4055 = vrot.slane %v4046, %v4054
  %v4056 = vlaneseq
  %v4057 = vshrl.u32 %v4056, 7
  %v4058 = vsub.s32 2, %v4057
  %v4059 = vrot.slane %v4046, %v4058
  %v4060 = vlaneseq
  %v4061 = vshrl.u32 %v4060, 7
  %v4062 = vsub.s32 3, %v4061
  %v4063 = vrot.slane %v4046, %v4062
  %4068 = vmatprep.subr.mxu0 %v3919
  %4069 = vmatpush1.msra.mxu0 %v3918
  %4070 = vmatprep.subr.mxu0 %v3923
  %4071 = vmatpush1.msra.mxu0 %v3922
  %4072 = vmatprep.subr.mxu0 %v3927
  %4073 = vmatpush1.msra.mxu0 %v3926
  %4074 = vmatprep.subr.mxu0 %v3931
  %4075 = vmatpush1.msra.mxu0 %v3930
  %4076 = vmatprep.subr.mxu0 %v3935
  %4077 = vmatpush1.msra.mxu0 %v3934
  %4078 = vmatprep.subr.mxu0 %v3939
  %4079 = vmatpush1.msra.mxu0 %v3938
  %4080 = vmatprep.subr.mxu0 %v3943
  %4081 = vmatpush1.msra.mxu0 %v3942
  %4082 = vmatprep.subr.mxu0 %v3947
  %4083 = vmatpush1.msra.mxu0 %v3946
  %4084 = vmatprep.subr.mxu0 %v3951
  %4085 = vmatpush1.msra.mxu0 %v3950
  %4086 = vmatprep.subr.mxu0 %v3955
  %4087 = vmatpush1.msra.mxu0 %v3954
  %4088 = vmatprep.subr.mxu0 %v3959
  %4089 = vmatpush1.msra.mxu0 %v3958
  %4090 = vmatprep.subr.mxu0 %v3963
  %4091 = vmatpush1.msra.mxu0 %v3962
  %4092 = vmatprep.subr.mxu0 %v3967
  %4093 = vmatpush1.msra.mxu0 %v3966
  %4094 = vmatprep.subr.mxu0 %v3971
  %4095 = vmatpush1.msra.mxu0 %v3970
  %4096 = vmatprep.subr.mxu0 %v3975
  %4097 = vmatpush1.msra.mxu0 %v3974
  %4098 = vmatprep.subr.mxu0 %v3979
  %4099 = vmatpush1.msra.mxu0 %v3978
  %4100 = vmatprep.subr.mxu0 %v3983
  %4101 = vmatpush1.msra.mxu0 %v3982
  %4102 = vmatprep.subr.mxu0 %v3987
  %4103 = vmatpush1.msra.mxu0 %v3986
  %4104 = vmatprep.subr.mxu0 %v3991
  %4105 = vmatpush1.msra.mxu0 %v3990
  %4106 = vmatprep.subr.mxu0 %v3995
  %4107 = vmatpush1.msra.mxu0 %v3994
  %4108 = vmatprep.subr.mxu0 %v3999
  %4109 = vmatpush1.msra.mxu0 %v3998
  %4110 = vmatprep.subr.mxu0 %v4003
  %4111 = vmatpush1.msra.mxu0 %v4002
  %4112 = vmatprep.subr.mxu0 %v4007
  %4113 = vmatpush1.msra.mxu0 %v4006
  %4114 = vmatprep.subr.mxu0 %v4011
  %4115 = vmatpush1.msra.mxu0 %v4010
  %4116 = vmatprep.subr.mxu0 %v4015
  %4117 = vmatpush1.msra.mxu0 %v4014
  %4118 = vmatprep.subr.mxu0 %v4019
  %4119 = vmatpush1.msra.mxu0 %v4018
  %4120 = vmatprep.subr.mxu0 %v4023
  %4121 = vmatpush1.msra.mxu0 %v4022
  %4122 = vmatprep.subr.mxu0 %v4027
  %4123 = vmatpush1.msra.mxu0 %v4026
  %4124 = vmatprep.subr.mxu0 %v4031
  %4125 = vmatpush1.msra.mxu0 %v4030
  %4126 = vmatprep.subr.mxu0 %v4035
  %4127 = vmatpush1.msra.mxu0 %v4034
  %4128 = vmatprep.subr.mxu0 %v4039
  %4129 = vmatpush1.msra.mxu0 %v4038
  %4130 = vmatprep.subr.mxu0 %v4043
  %4131 = vmatpush1.msra.mxu0 %v4042
  %4132 = vmatprep.mubr.f32.mxu0 %v3917
  %4133 = vmatmul.mubr.f32.gmra.mrb[0].mxu0 %v3914
  %v4134 = vpop.f32.mrb[0].mxu0
  %v4135 = vadd.f32 %v4051, %v4134
  %v4136 = vpop.f32.mrb[0].mxu0
  %v4137 = vadd.f32 %v4055, %v4136
  %4138 = vdwg.mxu0
  %4139 = vmatprep.subr.mxu0 %v3921
  %4140 = vmatpush1.msra.mxu0 %v3920
  %4141 = vmatprep.subr.mxu0 %v3925
  %4142 = vmatpush1.msra.mxu0 %v3924
  %4143 = vmatprep.subr.mxu0 %v3929
  %4144 = vmatpush1.msra.mxu0 %v3928
  %4145 = vmatprep.subr.mxu0 %v3933
  %4146 = vmatpush1.msra.mxu0 %v3932
  %4147 = vmatprep.subr.mxu0 %v3937
  %4148 = vmatpush1.msra.mxu0 %v3936
  %4149 = vmatprep.subr.mxu0 %v3941
  %4150 = vmatpush1.msra.mxu0 %v3940
  %4151 = vmatprep.subr.mxu0 %v3945
  %4152 = vmatpush1.msra.mxu0 %v3944
  %4153 = vmatprep.subr.mxu0 %v3949
  %4154 = vmatpush1.msra.mxu0 %v3948
  %4155 = vmatprep.subr.mxu0 %v3953
  %4156 = vmatpush1.msra.mxu0 %v3952
  %4157 = vmatprep.subr.mxu0 %v3957
  %4158 = vmatpush1.msra.mxu0 %v3956
  %4159 = vmatprep.subr.mxu0 %v3961
  %4160 = vmatpush1.msra.mxu0 %v3960
  %4161 = vmatprep.subr.mxu0 %v3965
  %4162 = vmatpush1.msra.mxu0 %v3964
  %4163 = vmatprep.subr.mxu0 %v3969
  %4164 = vmatpush1.msra.mxu0 %v3968
  %4165 = vmatprep.subr.mxu0 %v3973
  %4166 = vmatpush1.msra.mxu0 %v3972
  %4167 = vmatprep.subr.mxu0 %v3977
  %4168 = vmatpush1.msra.mxu0 %v3976
  %4169 = vmatprep.subr.mxu0 %v3981
  %4170 = vmatpush1.msra.mxu0 %v3980
  %4171 = vmatprep.subr.mxu0 %v3985
  %4172 = vmatpush1.msra.mxu0 %v3984
  %4173 = vmatprep.subr.mxu0 %v3989
  %4174 = vmatpush1.msra.mxu0 %v3988
  %4175 = vmatprep.subr.mxu0 %v3993
  %4176 = vmatpush1.msra.mxu0 %v3992
  %4177 = vmatprep.subr.mxu0 %v3997
  %4178 = vmatpush1.msra.mxu0 %v3996
  %4179 = vmatprep.subr.mxu0 %v4001
  %4180 = vmatpush1.msra.mxu0 %v4000
  %4181 = vmatprep.subr.mxu0 %v4005
  %4182 = vmatpush1.msra.mxu0 %v4004
  %4183 = vmatprep.subr.mxu0 %v4009
  %4184 = vmatpush1.msra.mxu0 %v4008
  %4185 = vmatprep.subr.mxu0 %v4013
  %4186 = vmatpush1.msra.mxu0 %v4012
  %4187 = vmatprep.subr.mxu0 %v4017
  %4188 = vmatpush1.msra.mxu0 %v4016
  %4189 = vmatprep.subr.mxu0 %v4021
  %4190 = vmatpush1.msra.mxu0 %v4020
  %4191 = vmatprep.subr.mxu0 %v4025
  %4192 = vmatpush1.msra.mxu0 %v4024
  %4193 = vmatprep.subr.mxu0 %v4029
  %4194 = vmatpush1.msra.mxu0 %v4028
  %4195 = vmatprep.subr.mxu0 %v4033
  %4196 = vmatpush1.msra.mxu0 %v4032
  %4197 = vmatprep.subr.mxu0 %v4037
  %4198 = vmatpush1.msra.mxu0 %v4036
  %4199 = vmatprep.subr.mxu0 %v4041
  %4200 = vmatpush1.msra.mxu0 %v4040
  %4201 = vmatprep.subr.mxu0 %v4045
  %4202 = vmatpush1.msra.mxu0 %v4044
  %4203 = vmatprep.mubr.f32.mxu0 %v3917
  %4204 = vmatmul.mubr.f32.gmra.mrb[0].mxu0 %v3914
  %v4205 = vpop.f32.mrb[0].mxu0
  %v4206 = vadd.f32 %v4059, %v4205
  %v4207 = vpop.f32.mrb[0].mxu0
  %v4208 = vadd.f32 %v4063, %v4207
  %4209 = vdwg.mxu0
  %v4210 = vld [vmem:[%s1473] sm:$0xff]
  %v4211 = vxor.u32 %v4135, 2147483648
  %v4212 = vmul.f32 %v4211, 1.442695
  %v4213 = vpow.pop %v4212
  %v4214 = vadd.f32 %v4213, 1.0
  %v4215 = vrcp.pop %v4214
  %v4216 = vmul.f32 1.0, %v4215
  %v4217 = vxor.u32 %v4137, 2147483648
  %v4218 = vmul.f32 %v4217, 1.442695
  %v4219 = vpow.pop %v4218
  %v4220 = vadd.f32 %v4219, 1.0
  %v4221 = vrcp.pop %v4220
  %v4222 = vmul.f32 1.0, %v4221
  %v4223 = vtanh.pop %v4206
  %v4224 = vxor.u32 %v4208, 2147483648
  %v4225 = vmul.f32 %v4224, 1.442695
  %v4226 = vpow.pop %v4225
  %v4227 = vadd.f32 %v4226, 1.0
  %v4228 = vrcp.pop %v4227
  %v4229 = vmul.f32 1.0, %v4228
  %v4230 = vmul.f32 %v4222, %v4210
  %v4231 = vmul.f32 %v4216, %v4223
  %v4232 = vadd.f32 %v4230, %v4231
  %v4233 = vtanh.pop %v4232
  %v4234 = vmul.f32 %v4229, %v4233
  %4235 = vst [vmem:[%s1178] sm:$0xff] %v4234
  %4236 = vst [vmem:[%s1473] sm:$0xff] %v4232
  %v4237 = vld [vmem:[%s1501] sm:$0xff]
  %v4238 = vld [vmem:[%s1503] sm:$0xff]
  %v4239 = vld [vmem:[%s1503 + $0x8] sm:$0xff]
  %v4240 = vld [vmem:[%s1503 + $0x10] sm:$0xff]
  %v4241 = vld [vmem:[%s1503 + $0x18] sm:$0xff]
  %v4242 = vld [vmem:[%s1503 + $0x20] sm:$0xff]
  %v4243 = vld [vmem:[%s1503 + $0x28] sm:$0xff]
  %v4244 = vld [vmem:[%s1503 + $0x30] sm:$0xff]
  %v4245 = vld [vmem:[%s1503 + $0x38] sm:$0xff]
  %v4246 = vld [vmem:[%s1503 + $0x40] sm:$0xff]
  %v4247 = vld [vmem:[%s1503 + $0x48] sm:$0xff]
  %v4248 = vld [vmem:[%s1503 + $0x50] sm:$0xff]
  %v4249 = vld [vmem:[%s1503 + $0x58] sm:$0xff]
  %v4250 = vld [vmem:[%s1503 + $0x60] sm:$0xff]
  %v4251 = vld [vmem:[%s1503 + $0x68] sm:$0xff]
  %v4252 = vld [vmem:[%s1503 + $0x70] sm:$0xff]
  %v4253 = vld [vmem:[%s1503 + $0x78] sm:$0xff]
  %v4254 = vld [vmem:[%s1503 + $0x80] sm:$0xff]
  %v4255 = vld [vmem:[%s1503 + $0x88] sm:$0xff]
  %v4256 = vld [vmem:[%s1503 + $0x90] sm:$0xff]
  %v4257 = vld [vmem:[%s1503 + $0x98] sm:$0xff]
  %v4258 = vld [vmem:[%s1503 + $0xa0] sm:$0xff]
  %v4259 = vld [vmem:[%s1503 + $0xa8] sm:$0xff]
  %v4260 = vld [vmem:[%s1503 + $0xb0] sm:$0xff]
  %v4261 = vld [vmem:[%s1503 + $0xb8] sm:$0xff]
  %v4262 = vld [vmem:[%s1503 + $0xc0] sm:$0xff]
  %v4263 = vld [vmem:[%s1503 + $0xc8] sm:$0xff]
  %v4264 = vld [vmem:[%s1503 + $0xd0] sm:$0xff]
  %v4265 = vld [vmem:[%s1503 + $0xd8] sm:$0xff]
  %v4266 = vld [vmem:[%s1503 + $0xe0] sm:$0xff]
  %v4267 = vld [vmem:[%s1503 + $0xe8] sm:$0xff]
  %v4268 = vld [vmem:[%s1503 + $0xf0] sm:$0xff]
  %v4269 = vld [vmem:[%s1503 + $0xf8] sm:$0xff]
  %v4270 = vld [vmem:[%s1503 + $0x100] sm:$0xff]
  %v4271 = vld [vmem:[%s1503 + $0x108] sm:$0xff]
  %v4272 = vld [vmem:[%s1503 + $0x110] sm:$0xff]
  %v4273 = vld [vmem:[%s1503 + $0x118] sm:$0xff]
  %v4274 = vld [vmem:[%s1503 + $0x120] sm:$0xff]
  %v4275 = vld [vmem:[%s1503 + $0x128] sm:$0xff]
  %v4276 = vld [vmem:[%s1503 + $0x130] sm:$0xff]
  %v4277 = vld [vmem:[%s1503 + $0x138] sm:$0xff]
  %v4278 = vld [vmem:[%s1503 + $0x140] sm:$0xff]
  %v4279 = vld [vmem:[%s1503 + $0x148] sm:$0xff]
  %v4280 = vld [vmem:[%s1503 + $0x150] sm:$0xff]
  %v4281 = vld [vmem:[%s1503 + $0x158] sm:$0xff]
  %v4282 = vld [vmem:[%s1503 + $0x160] sm:$0xff]
  %v4283 = vld [vmem:[%s1503 + $0x168] sm:$0xff]
  %v4284 = vld [vmem:[%s1503 + $0x170] sm:$0xff]
  %v4285 = vld [vmem:[%s1503 + $0x178] sm:$0xff]
  %v4286 = vld [vmem:[%s1503 + $0x180] sm:$0xff]
  %v4287 = vld [vmem:[%s1503 + $0x188] sm:$0xff]
  %v4288 = vld [vmem:[%s1503 + $0x190] sm:$0xff]
  %v4289 = vld [vmem:[%s1503 + $0x198] sm:$0xff]
  %v4290 = vld [vmem:[%s1503 + $0x1a0] sm:$0xff]
  %v4291 = vld [vmem:[%s1503 + $0x1a8] sm:$0xff]
  %v4292 = vld [vmem:[%s1503 + $0x1b0] sm:$0xff]
  %v4293 = vld [vmem:[%s1503 + $0x1b8] sm:$0xff]
  %v4294 = vld [vmem:[%s1503 + $0x1c0] sm:$0xff]
  %v4295 = vld [vmem:[%s1503 + $0x1c8] sm:$0xff]
  %v4296 = vld [vmem:[%s1503 + $0x1d0] sm:$0xff]
  %v4297 = vld [vmem:[%s1503 + $0x1d8] sm:$0xff]
  %v4298 = vld [vmem:[%s1503 + $0x1e0] sm:$0xff]
  %v4299 = vld [vmem:[%s1503 + $0x1e8] sm:$0xff]
  %v4300 = vld [vmem:[%s1503 + $0x1f0] sm:$0xff]
  %v4301 = vld [vmem:[%s1503 + $0x1f8] sm:$0xff]
  %v4302 = vld [vmem:[%s1503 + $0x200] sm:$0xff]
  %v4303 = vld [vmem:[%s1503 + $0x208] sm:$0xff]
  %v4304 = vld [vmem:[%s1503 + $0x210] sm:$0xff]
  %v4305 = vld [vmem:[%s1503 + $0x218] sm:$0xff]
  %v4306 = vld [vmem:[%s1503 + $0x220] sm:$0xff]
  %v4307 = vld [vmem:[%s1503 + $0x228] sm:$0xff]
  %v4308 = vld [vmem:[%s1503 + $0x230] sm:$0xff]
  %v4309 = vld [vmem:[%s1503 + $0x238] sm:$0xff]
  %v4310 = vld [vmem:[%s1503 + $0x240] sm:$0xff]
  %v4311 = vld [vmem:[%s1503 + $0x248] sm:$0xff]
  %v4312 = vld [vmem:[%s1503 + $0x250] sm:$0xff]
  %v4313 = vld [vmem:[%s1503 + $0x258] sm:$0xff]
  %v4314 = vld [vmem:[%s1503 + $0x260] sm:$0xff]
  %v4315 = vld [vmem:[%s1503 + $0x268] sm:$0xff]
  %v4316 = vld [vmem:[%s1503 + $0x270] sm:$0xff]
  %v4317 = vld [vmem:[%s1503 + $0x278] sm:$0xff]
  %v4318 = vld [vmem:[%s1503 + $0x280] sm:$0xff]
  %v4319 = vld [vmem:[%s1503 + $0x288] sm:$0xff]
  %v4320 = vld [vmem:[%s1503 + $0x290] sm:$0xff]
  %v4321 = vld [vmem:[%s1503 + $0x298] sm:$0xff]
  %v4322 = vld [vmem:[%s1503 + $0x2a0] sm:$0xff]
  %v4323 = vld [vmem:[%s1503 + $0x2a8] sm:$0xff]
  %v4324 = vld [vmem:[%s1503 + $0x2b0] sm:$0xff]
  %v4325 = vld [vmem:[%s1503 + $0x2b8] sm:$0xff]
  %v4326 = vld [vmem:[%s1503 + $0x2c0] sm:$0xff]
  %v4327 = vld [vmem:[%s1503 + $0x2c8] sm:$0xff]
  %v4328 = vld [vmem:[%s1503 + $0x2d0] sm:$0xff]
  %v4329 = vld [vmem:[%s1503 + $0x2d8] sm:$0xff]
  %v4330 = vld [vmem:[%s1503 + $0x2e0] sm:$0xff]
  %v4331 = vld [vmem:[%s1503 + $0x2e8] sm:$0xff]
  %v4332 = vld [vmem:[%s1503 + $0x2f0] sm:$0xff]
  %v4333 = vld [vmem:[%s1503 + $0x2f8] sm:$0xff]
  %v4334 = vld [vmem:[%s1503 + $0x300] sm:$0xff]
  %v4335 = vld [vmem:[%s1503 + $0x308] sm:$0xff]
  %v4336 = vld [vmem:[%s1503 + $0x310] sm:$0xff]
  %v4337 = vld [vmem:[%s1503 + $0x318] sm:$0xff]
  %v4338 = vld [vmem:[%s1503 + $0x320] sm:$0xff]
  %v4339 = vld [vmem:[%s1503 + $0x328] sm:$0xff]
  %v4340 = vld [vmem:[%s1503 + $0x330] sm:$0xff]
  %v4341 = vld [vmem:[%s1503 + $0x338] sm:$0xff]
  %v4342 = vld [vmem:[%s1503 + $0x340] sm:$0xff]
  %v4343 = vld [vmem:[%s1503 + $0x348] sm:$0xff]
  %v4344 = vld [vmem:[%s1503 + $0x350] sm:$0xff]
  %v4345 = vld [vmem:[%s1503 + $0x358] sm:$0xff]
  %v4346 = vld [vmem:[%s1503 + $0x360] sm:$0xff]
  %v4347 = vld [vmem:[%s1503 + $0x368] sm:$0xff]
  %v4348 = vld [vmem:[%s1503 + $0x370] sm:$0xff]
  %v4349 = vld [vmem:[%s1503 + $0x378] sm:$0xff]
  %v4350 = vld [vmem:[%s1503 + $0x380] sm:$0xff]
  %v4351 = vld [vmem:[%s1503 + $0x388] sm:$0xff]
  %v4352 = vld [vmem:[%s1503 + $0x390] sm:$0xff]
  %v4353 = vld [vmem:[%s1503 + $0x398] sm:$0xff]
  %v4354 = vld [vmem:[%s1503 + $0x3a0] sm:$0xff]
  %v4355 = vld [vmem:[%s1503 + $0x3a8] sm:$0xff]
  %v4356 = vld [vmem:[%s1503 + $0x3b0] sm:$0xff]
  %v4357 = vld [vmem:[%s1503 + $0x3b8] sm:$0xff]
  %v4358 = vld [vmem:[%s1503 + $0x3c0] sm:$0xff]
  %v4359 = vld [vmem:[%s1503 + $0x3c8] sm:$0xff]
  %v4360 = vld [vmem:[%s1503 + $0x3d0] sm:$0xff]
  %v4361 = vld [vmem:[%s1503 + $0x3d8] sm:$0xff]
  %v4362 = vld [vmem:[%s1503 + $0x3e0] sm:$0xff]
  %v4363 = vld [vmem:[%s1503 + $0x3e8] sm:$0xff]
  %v4364 = vld [vmem:[%s1503 + $0x3f0] sm:$0xff]
  %v4365 = vld [vmem:[%s1503 + $0x3f8] sm:$0xff]
  %v4366 = vld [vmem:[%s1632] sm:$0xf]
  %v4368 = vlaneseq
  %v4369 = vshrl.u32 %v4368, 7
  %v4370 = vsub.s32 0, %v4369
  %v4371 = vrot.slane %v4366, %v4370
  %v4372 = vlaneseq
  %v4373 = vshrl.u32 %v4372, 7
  %v4374 = vsub.s32 1, %v4373
  %v4375 = vrot.slane %v4366, %v4374
  %v4376 = vlaneseq
  %v4377 = vshrl.u32 %v4376, 7
  %v4378 = vsub.s32 2, %v4377
  %v4379 = vrot.slane %v4366, %v4378
  %v4380 = vlaneseq
  %v4381 = vshrl.u32 %v4380, 7
  %v4382 = vsub.s32 3, %v4381
  %v4383 = vrot.slane %v4366, %v4382
  %4388 = vmatprep.subr.mxu0 %v4239
  %4389 = vmatpush1.msra.mxu0 %v4238
  %4390 = vmatprep.subr.mxu0 %v4243
  %4391 = vmatpush1.msra.mxu0 %v4242
  %4392 = vmatprep.subr.mxu0 %v4247
  %4393 = vmatpush1.msra.mxu0 %v4246
  %4394 = vmatprep.subr.mxu0 %v4251
  %4395 = vmatpush1.msra.mxu0 %v4250
  %4396 = vmatprep.subr.mxu0 %v4255
  %4397 = vmatpush1.msra.mxu0 %v4254
  %4398 = vmatprep.subr.mxu0 %v4259
  %4399 = vmatpush1.msra.mxu0 %v4258
  %4400 = vmatprep.subr.mxu0 %v4263
  %4401 = vmatpush1.msra.mxu0 %v4262
  %4402 = vmatprep.subr.mxu0 %v4267
  %4403 = vmatpush1.msra.mxu0 %v4266
  %4404 = vmatprep.subr.mxu0 %v4271
  %4405 = vmatpush1.msra.mxu0 %v4270
  %4406 = vmatprep.subr.mxu0 %v4275
  %4407 = vmatpush1.msra.mxu0 %v4274
  %4408 = vmatprep.subr.mxu0 %v4279
  %4409 = vmatpush1.msra.mxu0 %v4278
  %4410 = vmatprep.subr.mxu0 %v4283
  %4411 = vmatpush1.msra.mxu0 %v4282
  %4412 = vmatprep.subr.mxu0 %v4287
  %4413 = vmatpush1.msra.mxu0 %v4286
  %4414 = vmatprep.subr.mxu0 %v4291
  %4415 = vmatpush1.msra.mxu0 %v4290
  %4416 = vmatprep.subr.mxu0 %v4295
  %4417 = vmatpush1.msra.mxu0 %v4294
  %4418 = vmatprep.subr.mxu0 %v4299
  %4419 = vmatpush1.msra.mxu0 %v4298
  %4420 = vmatprep.subr.mxu0 %v4303
  %4421 = vmatpush1.msra.mxu0 %v4302
  %4422 = vmatprep.subr.mxu0 %v4307
  %4423 = vmatpush1.msra.mxu0 %v4306
  %4424 = vmatprep.subr.mxu0 %v4311
  %4425 = vmatpush1.msra.mxu0 %v4310
  %4426 = vmatprep.subr.mxu0 %v4315
  %4427 = vmatpush1.msra.mxu0 %v4314
  %4428 = vmatprep.subr.mxu0 %v4319
  %4429 = vmatpush1.msra.mxu0 %v4318
  %4430 = vmatprep.subr.mxu0 %v4323
  %4431 = vmatpush1.msra.mxu0 %v4322
  %4432 = vmatprep.subr.mxu0 %v4327
  %4433 = vmatpush1.msra.mxu0 %v4326
  %4434 = vmatprep.subr.mxu0 %v4331
  %4435 = vmatpush1.msra.mxu0 %v4330
  %4436 = vmatprep.subr.mxu0 %v4335
  %4437 = vmatpush1.msra.mxu0 %v4334
  %4438 = vmatprep.subr.mxu0 %v4339
  %4439 = vmatpush1.msra.mxu0 %v4338
  %4440 = vmatprep.subr.mxu0 %v4343
  %4441 = vmatpush1.msra.mxu0 %v4342
  %4442 = vmatprep.subr.mxu0 %v4347
  %4443 = vmatpush1.msra.mxu0 %v4346
  %4444 = vmatprep.subr.mxu0 %v4351
  %4445 = vmatpush1.msra.mxu0 %v4350
  %4446 = vmatprep.subr.mxu0 %v4355
  %4447 = vmatpush1.msra.mxu0 %v4354
  %4448 = vmatprep.subr.mxu0 %v4359
  %4449 = vmatpush1.msra.mxu0 %v4358
  %4450 = vmatprep.subr.mxu0 %v4363
  %4451 = vmatpush1.msra.mxu0 %v4362
  %4452 = vmatprep.mubr.f32.mxu0 %v4237
  %4453 = vmatmul.mubr.f32.gmra.mrb[0].mxu0 %v4234
  %v4454 = vpop.f32.mrb[0].mxu0
  %v4455 = vadd.f32 %v4371, %v4454
  %v4456 = vpop.f32.mrb[0].mxu0
  %v4457 = vadd.f32 %v4375, %v4456
  %4458 = vdwg.mxu0
  %4459 = vmatprep.subr.mxu0 %v4241
  %4460 = vmatpush1.msra.mxu0 %v4240
  %4461 = vmatprep.subr.mxu0 %v4245
  %4462 = vmatpush1.msra.mxu0 %v4244
  %4463 = vmatprep.subr.mxu0 %v4249
  %4464 = vmatpush1.msra.mxu0 %v4248
  %4465 = vmatprep.subr.mxu0 %v4253
  %4466 = vmatpush1.msra.mxu0 %v4252
  %4467 = vmatprep.subr.mxu0 %v4257
  %4468 = vmatpush1.msra.mxu0 %v4256
  %4469 = vmatprep.subr.mxu0 %v4261
  %4470 = vmatpush1.msra.mxu0 %v4260
  %4471 = vmatprep.subr.mxu0 %v4265
  %4472 = vmatpush1.msra.mxu0 %v4264
  %4473 = vmatprep.subr.mxu0 %v4269
  %4474 = vmatpush1.msra.mxu0 %v4268
  %4475 = vmatprep.subr.mxu0 %v4273
  %4476 = vmatpush1.msra.mxu0 %v4272
  %4477 = vmatprep.subr.mxu0 %v4277
  %4478 = vmatpush1.msra.mxu0 %v4276
  %4479 = vmatprep.subr.mxu0 %v4281
  %4480 = vmatpush1.msra.mxu0 %v4280
  %4481 = vmatprep.subr.mxu0 %v4285
  %4482 = vmatpush1.msra.mxu0 %v4284
  %4483 = vmatprep.subr.mxu0 %v4289
  %4484 = vmatpush1.msra.mxu0 %v4288
  %4485 = vmatprep.subr.mxu0 %v4293
  %4486 = vmatpush1.msra.mxu0 %v4292
  %4487 = vmatprep.subr.mxu0 %v4297
  %4488 = vmatpush1.msra.mxu0 %v4296
  %4489 = vmatprep.subr.mxu0 %v4301
  %4490 = vmatpush1.msra.mxu0 %v4300
  %4491 = vmatprep.subr.mxu0 %v4305
  %4492 = vmatpush1.msra.mxu0 %v4304
  %4493 = vmatprep.subr.mxu0 %v4309
  %4494 = vmatpush1.msra.mxu0 %v4308
  %4495 = vmatprep.subr.mxu0 %v4313
  %4496 = vmatpush1.msra.mxu0 %v4312
  %4497 = vmatprep.subr.mxu0 %v4317
  %4498 = vmatpush1.msra.mxu0 %v4316
  %4499 = vmatprep.subr.mxu0 %v4321
  %4500 = vmatpush1.msra.mxu0 %v4320
  %4501 = vmatprep.subr.mxu0 %v4325
  %4502 = vmatpush1.msra.mxu0 %v4324
  %4503 = vmatprep.subr.mxu0 %v4329
  %4504 = vmatpush1.msra.mxu0 %v4328
  %4505 = vmatprep.subr.mxu0 %v4333
  %4506 = vmatpush1.msra.mxu0 %v4332
  %4507 = vmatprep.subr.mxu0 %v4337
  %4508 = vmatpush1.msra.mxu0 %v4336
  %4509 = vmatprep.subr.mxu0 %v4341
  %4510 = vmatpush1.msra.mxu0 %v4340
  %4511 = vmatprep.subr.mxu0 %v4345
  %4512 = vmatpush1.msra.mxu0 %v4344
  %4513 = vmatprep.subr.mxu0 %v4349
  %4514 = vmatpush1.msra.mxu0 %v4348
  %4515 = vmatprep.subr.mxu0 %v4353
  %4516 = vmatpush1.msra.mxu0 %v4352
  %4517 = vmatprep.subr.mxu0 %v4357
  %4518 = vmatpush1.msra.mxu0 %v4356
  %4519 = vmatprep.subr.mxu0 %v4361
  %4520 = vmatpush1.msra.mxu0 %v4360
  %4521 = vmatprep.subr.mxu0 %v4365
  %4522 = vmatpush1.msra.mxu0 %v4364
  %4523 = vmatprep.mubr.f32.mxu0 %v4237
  %4524 = vmatmul.mubr.f32.gmra.mrb[0].mxu0 %v4234
  %v4525 = vpop.f32.mrb[0].mxu0
  %v4526 = vadd.f32 %v4379, %v4525
  %v4527 = vpop.f32.mrb[0].mxu0
  %v4528 = vadd.f32 %v4383, %v4527
  %4529 = vdwg.mxu0
  %v4530 = vld [vmem:[%s1797] sm:$0xff]
  %v4531 = vxor.u32 %v4455, 2147483648
  %v4532 = vmul.f32 %v4531, 1.442695
  %v4533 = vpow.pop %v4532
  %v4534 = vadd.f32 %v4533, 1.0
  %v4535 = vrcp.pop %v4534
  %v4536 = vmul.f32 1.0, %v4535
  %v4537 = vxor.u32 %v4457, 2147483648
  %v4538 = vmul.f32 %v4537, 1.442695
  %v4539 = vpow.pop %v4538
  %v4540 = vadd.f32 %v4539, 1.0
  %v4541 = vrcp.pop %v4540
  %v4542 = vmul.f32 1.0, %v4541
  %v4543 = vtanh.pop %v4526
  %v4544 = vxor.u32 %v4528, 2147483648
  %v4545 = vmul.f32 %v4544, 1.442695
  %v4546 = vpow.pop %v4545
  %v4547 = vadd.f32 %v4546, 1.0
  %v4548 = vrcp.pop %v4547
  %v4549 = vmul.f32 1.0, %v4548
  %v4550 = vmul.f32 %v4542, %v4530
  %v4551 = vmul.f32 %v4536, %v4543
  %v4552 = vadd.f32 %v4550, %v4551
  %v4553 = vtanh.pop %v4552
  %v4554 = vmul.f32 %v4549, %v4553
  %4555 = vst [vmem:[%s1501] sm:$0xff] %v4554
  %4556 = vst [vmem:[%s1797] sm:$0xff] %v4552
  %s4557 = scalar_lea.vmem [#allocation3], 24
  %4558 = vst [vmem:[%s4557] sm:$0xff] %v4554
  %s4559 = scalar_lea.vmem [#allocation2], 128
  %v4560 = vld [vmem:[%s4559] sm:$0xff]
  %v4561 = vld [vmem:[%s4559 + $0x8] sm:$0xff]
  %v4562 = vld [vmem:[%s4559 + $0x10] sm:$0xff]
  %v4563 = vld [vmem:[%s4559 + $0x18] sm:$0xff]
  %v4564 = vld [vmem:[%s10] sm:$0xff]
  %v4565 = vld [vmem:[%s2] sm:$0xff]
  %v4566 = vld [vmem:[%s2 + $0x8] sm:$0xff]
  %v4567 = vld [vmem:[%s2 + $0x10] sm:$0xff]
  %v4568 = vld [vmem:[%s2 + $0x18] sm:$0xff]
  %v4569 = vld [vmem:[%s2 + $0x20] sm:$0xff]
  %v4570 = vld [vmem:[%s2 + $0x28] sm:$0xff]
  %v4571 = vld [vmem:[%s2 + $0x30] sm:$0xff]
  %v4572 = vld [vmem:[%s2 + $0x38] sm:$0xff]
  %v4573 = vld [vmem:[%s2 + $0x40] sm:$0xff]
  %v4574 = vld [vmem:[%s2 + $0x48] sm:$0xff]
  %v4575 = vld [vmem:[%s2 + $0x50] sm:$0xff]
  %v4576 = vld [vmem:[%s2 + $0x58] sm:$0xff]
  %v4577 = vld [vmem:[%s2 + $0x60] sm:$0xff]
  %v4578 = vld [vmem:[%s2 + $0x68] sm:$0xff]
  %v4579 = vld [vmem:[%s2 + $0x70] sm:$0xff]
  %v4580 = vld [vmem:[%s2 + $0x78] sm:$0xff]
  %v4581 = vld [vmem:[%s2 + $0x80] sm:$0xff]
  %v4582 = vld [vmem:[%s2 + $0x88] sm:$0xff]
  %v4583 = vld [vmem:[%s2 + $0x90] sm:$0xff]
  %v4584 = vld [vmem:[%s2 + $0x98] sm:$0xff]
  %v4585 = vld [vmem:[%s2 + $0xa0] sm:$0xff]
  %v4586 = vld [vmem:[%s2 + $0xa8] sm:$0xff]
  %v4587 = vld [vmem:[%s2 + $0xb0] sm:$0xff]
  %v4588 = vld [vmem:[%s2 + $0xb8] sm:$0xff]
  %v4589 = vld [vmem:[%s2 + $0xc0] sm:$0xff]
  %v4590 = vld [vmem:[%s2 + $0xc8] sm:$0xff]
  %v4591 = vld [vmem:[%s2 + $0xd0] sm:$0xff]
  %v4592 = vld [vmem:[%s2 + $0xd8] sm:$0xff]
  %v4593 = vld [vmem:[%s2 + $0xe0] sm:$0xff]
  %v4594 = vld [vmem:[%s2 + $0xe8] sm:$0xff]
  %v4595 = vld [vmem:[%s2 + $0xf0] sm:$0xff]
  %v4596 = vld [vmem:[%s2 + $0xf8] sm:$0xff]
  %v4597 = vld [vmem:[%s2 + $0x100] sm:$0xff]
  %v4598 = vld [vmem:[%s2 + $0x108] sm:$0xff]
  %v4599 = vld [vmem:[%s2 + $0x110] sm:$0xff]
  %v4600 = vld [vmem:[%s2 + $0x118] sm:$0xff]
  %v4601 = vld [vmem:[%s2 + $0x120] sm:$0xff]
  %v4602 = vld [vmem:[%s2 + $0x128] sm:$0xff]
  %v4603 = vld [vmem:[%s2 + $0x130] sm:$0xff]
  %v4604 = vld [vmem:[%s2 + $0x138] sm:$0xff]
  %v4605 = vld [vmem:[%s2 + $0x140] sm:$0xff]
  %v4606 = vld [vmem:[%s2 + $0x148] sm:$0xff]
  %v4607 = vld [vmem:[%s2 + $0x150] sm:$0xff]
  %v4608 = vld [vmem:[%s2 + $0x158] sm:$0xff]
  %v4609 = vld [vmem:[%s2 + $0x160] sm:$0xff]
  %v4610 = vld [vmem:[%s2 + $0x168] sm:$0xff]
  %v4611 = vld [vmem:[%s2 + $0x170] sm:$0xff]
  %v4612 = vld [vmem:[%s2 + $0x178] sm:$0xff]
  %v4613 = vld [vmem:[%s2 + $0x180] sm:$0xff]
  %v4614 = vld [vmem:[%s2 + $0x188] sm:$0xff]
  %v4615 = vld [vmem:[%s2 + $0x190] sm:$0xff]
  %v4616 = vld [vmem:[%s2 + $0x198] sm:$0xff]
  %v4617 = vld [vmem:[%s2 + $0x1a0] sm:$0xff]
  %v4618 = vld [vmem:[%s2 + $0x1a8] sm:$0xff]
  %v4619 = vld [vmem:[%s2 + $0x1b0] sm:$0xff]
  %v4620 = vld [vmem:[%s2 + $0x1b8] sm:$0xff]
  %v4621 = vld [vmem:[%s2 + $0x1c0] sm:$0xff]
  %v4622 = vld [vmem:[%s2 + $0x1c8] sm:$0xff]
  %v4623 = vld [vmem:[%s2 + $0x1d0] sm:$0xff]
  %v4624 = vld [vmem:[%s2 + $0x1d8] sm:$0xff]
  %v4625 = vld [vmem:[%s2 + $0x1e0] sm:$0xff]
  %v4626 = vld [vmem:[%s2 + $0x1e8] sm:$0xff]
  %v4627 = vld [vmem:[%s2 + $0x1f0] sm:$0xff]
  %v4628 = vld [vmem:[%s2 + $0x1f8] sm:$0xff]
  %4629 = vmatprep.subr.mxu0 %v4566
  %4630 = vmatpush1.msra.mxu0 %v4565
  %4631 = vmatprep.subr.mxu0 %v4570
  %4632 = vmatpush1.msra.mxu0 %v4569
  %4633 = vmatprep.subr.mxu0 %v4574
  %4634 = vmatpush1.msra.mxu0 %v4573
  %4635 = vmatprep.subr.mxu0 %v4578
  %4636 = vmatpush1.msra.mxu0 %v4577
  %4637 = vmatprep.subr.mxu0 %v4582
  %4638 = vmatpush1.msra.mxu0 %v4581
  %4639 = vmatprep.subr.mxu0 %v4586
  %4640 = vmatpush1.msra.mxu0 %v4585
  %4641 = vmatprep.subr.mxu0 %v4590
  %4642 = vmatpush1.msra.mxu0 %v4589
  %4643 = vmatprep.subr.mxu0 %v4594
  %4644 = vmatpush1.msra.mxu0 %v4593
  %4645 = vmatprep.subr.mxu0 %v4598
  %4646 = vmatpush1.msra.mxu0 %v4597
  %4647 = vmatprep.subr.mxu0 %v4602
  %4648 = vmatpush1.msra.mxu0 %v4601
  %4649 = vmatprep.subr.mxu0 %v4606
  %4650 = vmatpush1.msra.mxu0 %v4605
  %4651 = vmatprep.subr.mxu0 %v4610
  %4652 = vmatpush1.msra.mxu0 %v4609
  %4653 = vmatprep.subr.mxu0 %v4614
  %4654 = vmatpush1.msra.mxu0 %v4613
  %4655 = vmatprep.subr.mxu0 %v4618
  %4656 = vmatpush1.msra.mxu0 %v4617
  %4657 = vmatprep.subr.mxu0 %v4622
  %4658 = vmatpush1.msra.mxu0 %v4621
  %4659 = vmatprep.subr.mxu0 %v4626
  %4660 = vmatpush1.msra.mxu0 %v4625
  %4661 = vmatprep.subr.mxu0 0.0
  %4662 = vmatpush1.msra.mxu0 0.0
  %4663 = vmatprep.subr.mxu0 0.0
  %4664 = vmatpush1.msra.mxu0 0.0
  %4665 = vmatprep.subr.mxu0 0.0
  %4666 = vmatpush1.msra.mxu0 0.0
  %4667 = vmatprep.subr.mxu0 0.0
  %4668 = vmatpush1.msra.mxu0 0.0
  %4669 = vmatprep.subr.mxu0 0.0
  %4670 = vmatpush1.msra.mxu0 0.0
  %4671 = vmatprep.subr.mxu0 0.0
  %4672 = vmatpush1.msra.mxu0 0.0
  %4673 = vmatprep.subr.mxu0 0.0
  %4674 = vmatpush1.msra.mxu0 0.0
  %4675 = vmatprep.subr.mxu0 0.0
  %4676 = vmatpush1.msra.mxu0 0.0
  %4677 = vmatprep.subr.mxu0 0.0
  %4678 = vmatpush1.msra.mxu0 0.0
  %4679 = vmatprep.subr.mxu0 0.0
  %4680 = vmatpush1.msra.mxu0 0.0
  %4681 = vmatprep.subr.mxu0 0.0
  %4682 = vmatpush1.msra.mxu0 0.0
  %4683 = vmatprep.subr.mxu0 0.0
  %4684 = vmatpush1.msra.mxu0 0.0
  %4685 = vmatprep.subr.mxu0 0.0
  %4686 = vmatpush1.msra.mxu0 0.0
  %4687 = vmatprep.subr.mxu0 0.0
  %4688 = vmatpush1.msra.mxu0 0.0
  %4689 = vmatprep.subr.mxu0 0.0
  %4690 = vmatpush1.msra.mxu0 0.0
  %4691 = vmatprep.subr.mxu0 0.0
  %4692 = vmatpush1.msra.mxu0 0.0
  %4693 = vmatprep.mubr.f32.mxu0 0.0
  %4694 = vmatmul.mubr.f32.gmra.mrb[0].mxu0 %v4564
  %v4695 = vpop.f32.mrb[0].mxu0
  %v4696 = vadd.f32 0.0, %v4695
  %v4697 = vpop.f32.mrb[0].mxu0
  %v4698 = vadd.f32 0.0, %v4697
  %4699 = vdwg.mxu0
  %4700 = vmatprep.subr.mxu0 %v4568
  %4701 = vmatpush1.msra.mxu0 %v4567
  %4702 = vmatprep.subr.mxu0 %v4572
  %4703 = vmatpush1.msra.mxu0 %v4571
  %4704 = vmatprep.subr.mxu0 %v4576
  %4705 = vmatpush1.msra.mxu0 %v4575
  %4706 = vmatprep.subr.mxu0 %v4580
  %4707 = vmatpush1.msra.mxu0 %v4579
  %4708 = vmatprep.subr.mxu0 %v4584
  %4709 = vmatpush1.msra.mxu0 %v4583
  %4710 = vmatprep.subr.mxu0 %v4588
  %4711 = vmatpush1.msra.mxu0 %v4587
  %4712 = vmatprep.subr.mxu0 %v4592
  %4713 = vmatpush1.msra.mxu0 %v4591
  %4714 = vmatprep.subr.mxu0 %v4596
  %4715 = vmatpush1.msra.mxu0 %v4595
  %4716 = vmatprep.subr.mxu0 %v4600
  %4717 = vmatpush1.msra.mxu0 %v4599
  %4718 = vmatprep.subr.mxu0 %v4604
  %4719 = vmatpush1.msra.mxu0 %v4603
  %4720 = vmatprep.subr.mxu0 %v4608
  %4721 = vmatpush1.msra.mxu0 %v4607
  %4722 = vmatprep.subr.mxu0 %v4612
  %4723 = vmatpush1.msra.mxu0 %v4611
  %4724 = vmatprep.subr.mxu0 %v4616
  %4725 = vmatpush1.msra.mxu0 %v4615
  %4726 = vmatprep.subr.mxu0 %v4620
  %4727 = vmatpush1.msra.mxu0 %v4619
  %4728 = vmatprep.subr.mxu0 %v4624
  %4729 = vmatpush1.msra.mxu0 %v4623
  %4730 = vmatprep.subr.mxu0 %v4628
  %4731 = vmatpush1.msra.mxu0 %v4627
  %4732 = vmatprep.subr.mxu0 0.0
  %4733 = vmatpush1.msra.mxu0 0.0
  %4734 = vmatprep.subr.mxu0 0.0
  %4735 = vmatpush1.msra.mxu0 0.0
  %4736 = vmatprep.subr.mxu0 0.0
  %4737 = vmatpush1.msra.mxu0 0.0
  %4738 = vmatprep.subr.mxu0 0.0
  %4739 = vmatpush1.msra.mxu0 0.0
  %4740 = vmatprep.subr.mxu0 0.0
  %4741 = vmatpush1.msra.mxu0 0.0
  %4742 = vmatprep.subr.mxu0 0.0
  %4743 = vmatpush1.msra.mxu0 0.0
  %4744 = vmatprep.subr.mxu0 0.0
  %4745 = vmatpush1.msra.mxu0 0.0
  %4746 = vmatprep.subr.mxu0 0.0
  %4747 = vmatpush1.msra.mxu0 0.0
  %4748 = vmatprep.subr.mxu0 0.0
  %4749 = vmatpush1.msra.mxu0 0.0
  %4750 = vmatprep.subr.mxu0 0.0
  %4751 = vmatpush1.msra.mxu0 0.0
  %4752 = vmatprep.subr.mxu0 0.0
  %4753 = vmatpush1.msra.mxu0 0.0
  %4754 = vmatprep.subr.mxu0 0.0
  %4755 = vmatpush1.msra.mxu0 0.0
  %4756 = vmatprep.subr.mxu0 0.0
  %4757 = vmatpush1.msra.mxu0 0.0
  %4758 = vmatprep.subr.mxu0 0.0
  %4759 = vmatpush1.msra.mxu0 0.0
  %4760 = vmatprep.subr.mxu0 0.0
  %4761 = vmatpush1.msra.mxu0 0.0
  %4762 = vmatprep.subr.mxu0 0.0
  %4763 = vmatpush1.msra.mxu0 0.0
  %4764 = vmatprep.mubr.f32.mxu0 0.0
  %4765 = vmatmul.mubr.f32.gmra.mrb[0].mxu0 %v4564
  %v4766 = vpop.f32.mrb[0].mxu0
  %v4767 = vadd.f32 0.0, %v4766
  %v4768 = vpop.f32.mrb[0].mxu0
  %v4769 = vadd.f32 0.0, %v4768
  %4770 = vdwg.mxu0
  %v4771 = vadd.f32 %v4560, %v4696
  %v4772 = vadd.f32 %v4561, %v4698
  %v4773 = vadd.f32 %v4562, %v4767
  %v4774 = vadd.f32 %v4563, %v4769
  %v4775 = vld [vmem:[%s4] sm:$0xf]
  %v4777 = vlaneseq
  %v4778 = vshrl.u32 %v4777, 7
  %v4779 = vsub.s32 0, %v4778
  %v4780 = vrot.slane %v4775, %v4779
  %v4781 = vlaneseq
  %v4782 = vshrl.u32 %v4781, 7
  %v4783 = vsub.s32 1, %v4782
  %v4784 = vrot.slane %v4775, %v4783
  %v4785 = vlaneseq
  %v4786 = vshrl.u32 %v4785, 7
  %v4787 = vsub.s32 2, %v4786
  %v4788 = vrot.slane %v4775, %v4787
  %v4789 = vlaneseq
  %v4790 = vshrl.u32 %v4789, 7
  %v4791 = vsub.s32 3, %v4790
  %v4792 = vrot.slane %v4775, %v4791
  %v4797 = vadd.f32 %v4771, %v4780
  %v4798 = vadd.f32 %v4772, %v4784
  %v4799 = vadd.f32 %v4773, %v4788
  %v4800 = vadd.f32 %v4774, %v4792
  %v4801 = vld [vmem:[%s11] sm:$0xff]
  %v4802 = vxor.u32 %v4797, 2147483648
  %v4803 = vmul.f32 %v4802, 1.442695
  %v4804 = vpow.pop %v4803
  %v4805 = vadd.f32 %v4804, 1.0
  %v4806 = vrcp.pop %v4805
  %v4807 = vmul.f32 1.0, %v4806
  %v4808 = vxor.u32 %v4798, 2147483648
  %v4809 = vmul.f32 %v4808, 1.442695
  %v4810 = vpow.pop %v4809
  %v4811 = vadd.f32 %v4810, 1.0
  %v4812 = vrcp.pop %v4811
  %v4813 = vmul.f32 1.0, %v4812
  %v4814 = vtanh.pop %v4799
  %v4815 = vxor.u32 %v4800, 2147483648
  %v4816 = vmul.f32 %v4815, 1.442695
  %v4817 = vpow.pop %v4816
  %v4818 = vadd.f32 %v4817, 1.0
  %v4819 = vrcp.pop %v4818
  %v4820 = vmul.f32 1.0, %v4819
  %v4821 = vmul.f32 %v4813, %v4801
  %v4822 = vmul.f32 %v4807, %v4814
  %v4823 = vadd.f32 %v4821, %v4822
  %v4824 = vtanh.pop %v4823
  %v4825 = vmul.f32 %v4820, %v4824
  %4826 = vst [vmem:[%s10] sm:$0xff] %v4825
  %4827 = vst [vmem:[%s11] sm:$0xff] %v4823
  %v4828 = vld [vmem:[%s1178] sm:$0xff]
  %v4829 = vld [vmem:[%s3] sm:$0xff]
  %v4830 = vld [vmem:[%s3 + $0x8] sm:$0xff]
  %v4831 = vld [vmem:[%s3 + $0x10] sm:$0xff]
  %v4832 = vld [vmem:[%s3 + $0x18] sm:$0xff]
  %v4833 = vld [vmem:[%s3 + $0x20] sm:$0xff]
  %v4834 = vld [vmem:[%s3 + $0x28] sm:$0xff]
  %v4835 = vld [vmem:[%s3 + $0x30] sm:$0xff]
  %v4836 = vld [vmem:[%s3 + $0x38] sm:$0xff]
  %v4837 = vld [vmem:[%s3 + $0x40] sm:$0xff]
  %v4838 = vld [vmem:[%s3 + $0x48] sm:$0xff]
  %v4839 = vld [vmem:[%s3 + $0x50] sm:$0xff]
  %v4840 = vld [vmem:[%s3 + $0x58] sm:$0xff]
  %v4841 = vld [vmem:[%s3 + $0x60] sm:$0xff]
  %v4842 = vld [vmem:[%s3 + $0x68] sm:$0xff]
  %v4843 = vld [vmem:[%s3 + $0x70] sm:$0xff]
  %v4844 = vld [vmem:[%s3 + $0x78] sm:$0xff]
  %v4845 = vld [vmem:[%s3 + $0x80] sm:$0xff]
  %v4846 = vld [vmem:[%s3 + $0x88] sm:$0xff]
  %v4847 = vld [vmem:[%s3 + $0x90] sm:$0xff]
  %v4848 = vld [vmem:[%s3 + $0x98] sm:$0xff]
  %v4849 = vld [vmem:[%s3 + $0xa0] sm:$0xff]
  %v4850 = vld [vmem:[%s3 + $0xa8] sm:$0xff]
  %v4851 = vld [vmem:[%s3 + $0xb0] sm:$0xff]
  %v4852 = vld [vmem:[%s3 + $0xb8] sm:$0xff]
  %v4853 = vld [vmem:[%s3 + $0xc0] sm:$0xff]
  %v4854 = vld [vmem:[%s3 + $0xc8] sm:$0xff]
  %v4855 = vld [vmem:[%s3 + $0xd0] sm:$0xff]
  %v4856 = vld [vmem:[%s3 + $0xd8] sm:$0xff]
  %v4857 = vld [vmem:[%s3 + $0xe0] sm:$0xff]
  %v4858 = vld [vmem:[%s3 + $0xe8] sm:$0xff]
  %v4859 = vld [vmem:[%s3 + $0xf0] sm:$0xff]
  %v4860 = vld [vmem:[%s3 + $0xf8] sm:$0xff]
  %v4861 = vld [vmem:[%s3 + $0x100] sm:$0xff]
  %v4862 = vld [vmem:[%s3 + $0x108] sm:$0xff]
  %v4863 = vld [vmem:[%s3 + $0x110] sm:$0xff]
  %v4864 = vld [vmem:[%s3 + $0x118] sm:$0xff]
  %v4865 = vld [vmem:[%s3 + $0x120] sm:$0xff]
  %v4866 = vld [vmem:[%s3 + $0x128] sm:$0xff]
  %v4867 = vld [vmem:[%s3 + $0x130] sm:$0xff]
  %v4868 = vld [vmem:[%s3 + $0x138] sm:$0xff]
  %v4869 = vld [vmem:[%s3 + $0x140] sm:$0xff]
  %v4870 = vld [vmem:[%s3 + $0x148] sm:$0xff]
  %v4871 = vld [vmem:[%s3 + $0x150] sm:$0xff]
  %v4872 = vld [vmem:[%s3 + $0x158] sm:$0xff]
  %v4873 = vld [vmem:[%s3 + $0x160] sm:$0xff]
  %v4874 = vld [vmem:[%s3 + $0x168] sm:$0xff]
  %v4875 = vld [vmem:[%s3 + $0x170] sm:$0xff]
  %v4876 = vld [vmem:[%s3 + $0x178] sm:$0xff]
  %v4877 = vld [vmem:[%s3 + $0x180] sm:$0xff]
  %v4878 = vld [vmem:[%s3 + $0x188] sm:$0xff]
  %v4879 = vld [vmem:[%s3 + $0x190] sm:$0xff]
  %v4880 = vld [vmem:[%s3 + $0x198] sm:$0xff]
  %v4881 = vld [vmem:[%s3 + $0x1a0] sm:$0xff]
  %v4882 = vld [vmem:[%s3 + $0x1a8] sm:$0xff]
  %v4883 = vld [vmem:[%s3 + $0x1b0] sm:$0xff]
  %v4884 = vld [vmem:[%s3 + $0x1b8] sm:$0xff]
  %v4885 = vld [vmem:[%s3 + $0x1c0] sm:$0xff]
  %v4886 = vld [vmem:[%s3 + $0x1c8] sm:$0xff]
  %v4887 = vld [vmem:[%s3 + $0x1d0] sm:$0xff]
  %v4888 = vld [vmem:[%s3 + $0x1d8] sm:$0xff]
  %v4889 = vld [vmem:[%s3 + $0x1e0] sm:$0xff]
  %v4890 = vld [vmem:[%s3 + $0x1e8] sm:$0xff]
  %v4891 = vld [vmem:[%s3 + $0x1f0] sm:$0xff]
  %v4892 = vld [vmem:[%s3 + $0x1f8] sm:$0xff]
  %v4893 = vld [vmem:[%s3 + $0x200] sm:$0xff]
  %v4894 = vld [vmem:[%s3 + $0x208] sm:$0xff]
  %v4895 = vld [vmem:[%s3 + $0x210] sm:$0xff]
  %v4896 = vld [vmem:[%s3 + $0x218] sm:$0xff]
  %v4897 = vld [vmem:[%s3 + $0x220] sm:$0xff]
  %v4898 = vld [vmem:[%s3 + $0x228] sm:$0xff]
  %v4899 = vld [vmem:[%s3 + $0x230] sm:$0xff]
  %v4900 = vld [vmem:[%s3 + $0x238] sm:$0xff]
  %v4901 = vld [vmem:[%s3 + $0x240] sm:$0xff]
  %v4902 = vld [vmem:[%s3 + $0x248] sm:$0xff]
  %v4903 = vld [vmem:[%s3 + $0x250] sm:$0xff]
  %v4904 = vld [vmem:[%s3 + $0x258] sm:$0xff]
  %v4905 = vld [vmem:[%s3 + $0x260] sm:$0xff]
  %v4906 = vld [vmem:[%s3 + $0x268] sm:$0xff]
  %v4907 = vld [vmem:[%s3 + $0x270] sm:$0xff]
  %v4908 = vld [vmem:[%s3 + $0x278] sm:$0xff]
  %v4909 = vld [vmem:[%s3 + $0x280] sm:$0xff]
  %v4910 = vld [vmem:[%s3 + $0x288] sm:$0xff]
  %v4911 = vld [vmem:[%s3 + $0x290] sm:$0xff]
  %v4912 = vld [vmem:[%s3 + $0x298] sm:$0xff]
  %v4913 = vld [vmem:[%s3 + $0x2a0] sm:$0xff]
  %v4914 = vld [vmem:[%s3 + $0x2a8] sm:$0xff]
  %v4915 = vld [vmem:[%s3 + $0x2b0] sm:$0xff]
  %v4916 = vld [vmem:[%s3 + $0x2b8] sm:$0xff]
  %v4917 = vld [vmem:[%s3 + $0x2c0] sm:$0xff]
  %v4918 = vld [vmem:[%s3 + $0x2c8] sm:$0xff]
  %v4919 = vld [vmem:[%s3 + $0x2d0] sm:$0xff]
  %v4920 = vld [vmem:[%s3 + $0x2d8] sm:$0xff]
  %v4921 = vld [vmem:[%s3 + $0x2e0] sm:$0xff]
  %v4922 = vld [vmem:[%s3 + $0x2e8] sm:$0xff]
  %v4923 = vld [vmem:[%s3 + $0x2f0] sm:$0xff]
  %v4924 = vld [vmem:[%s3 + $0x2f8] sm:$0xff]
  %v4925 = vld [vmem:[%s3 + $0x300] sm:$0xff]
  %v4926 = vld [vmem:[%s3 + $0x308] sm:$0xff]
  %v4927 = vld [vmem:[%s3 + $0x310] sm:$0xff]
  %v4928 = vld [vmem:[%s3 + $0x318] sm:$0xff]
  %v4929 = vld [vmem:[%s3 + $0x320] sm:$0xff]
  %v4930 = vld [vmem:[%s3 + $0x328] sm:$0xff]
  %v4931 = vld [vmem:[%s3 + $0x330] sm:$0xff]
  %v4932 = vld [vmem:[%s3 + $0x338] sm:$0xff]
  %v4933 = vld [vmem:[%s3 + $0x340] sm:$0xff]
  %v4934 = vld [vmem:[%s3 + $0x348] sm:$0xff]
  %v4935 = vld [vmem:[%s3 + $0x350] sm:$0xff]
  %v4936 = vld [vmem:[%s3 + $0x358] sm:$0xff]
  %v4937 = vld [vmem:[%s3 + $0x360] sm:$0xff]
  %v4938 = vld [vmem:[%s3 + $0x368] sm:$0xff]
  %v4939 = vld [vmem:[%s3 + $0x370] sm:$0xff]
  %v4940 = vld [vmem:[%s3 + $0x378] sm:$0xff]
  %v4941 = vld [vmem:[%s3 + $0x380] sm:$0xff]
  %v4942 = vld [vmem:[%s3 + $0x388] sm:$0xff]
  %v4943 = vld [vmem:[%s3 + $0x390] sm:$0xff]
  %v4944 = vld [vmem:[%s3 + $0x398] sm:$0xff]
  %v4945 = vld [vmem:[%s3 + $0x3a0] sm:$0xff]
  %v4946 = vld [vmem:[%s3 + $0x3a8] sm:$0xff]
  %v4947 = vld [vmem:[%s3 + $0x3b0] sm:$0xff]
  %v4948 = vld [vmem:[%s3 + $0x3b8] sm:$0xff]
  %v4949 = vld [vmem:[%s3 + $0x3c0] sm:$0xff]
  %v4950 = vld [vmem:[%s3 + $0x3c8] sm:$0xff]
  %v4951 = vld [vmem:[%s3 + $0x3d0] sm:$0xff]
  %v4952 = vld [vmem:[%s3 + $0x3d8] sm:$0xff]
  %v4953 = vld [vmem:[%s3 + $0x3e0] sm:$0xff]
  %v4954 = vld [vmem:[%s3 + $0x3e8] sm:$0xff]
  %v4955 = vld [vmem:[%s3 + $0x3f0] sm:$0xff]
  %v4956 = vld [vmem:[%s3 + $0x3f8] sm:$0xff]
  %v4957 = vld [vmem:[%s1308] sm:$0xf]
  %v4959 = vlaneseq
  %v4960 = vshrl.u32 %v4959, 7
  %v4961 = vsub.s32 0, %v4960
  %v4962 = vrot.slane %v4957, %v4961
  %v4963 = vlaneseq
  %v4964 = vshrl.u32 %v4963, 7
  %v4965 = vsub.s32 1, %v4964
  %v4966 = vrot.slane %v4957, %v4965
  %v4967 = vlaneseq
  %v4968 = vshrl.u32 %v4967, 7
  %v4969 = vsub.s32 2, %v4968
  %v4970 = vrot.slane %v4957, %v4969
  %v4971 = vlaneseq
  %v4972 = vshrl.u32 %v4971, 7
  %v4973 = vsub.s32 3, %v4972
  %v4974 = vrot.slane %v4957, %v4973
  %4979 = vmatprep.subr.mxu0 %v4830
  %4980 = vmatpush1.msra.mxu0 %v4829
  %4981 = vmatprep.subr.mxu0 %v4834
  %4982 = vmatpush1.msra.mxu0 %v4833
  %4983 = vmatprep.subr.mxu0 %v4838
  %4984 = vmatpush1.msra.mxu0 %v4837
  %4985 = vmatprep.subr.mxu0 %v4842
  %4986 = vmatpush1.msra.mxu0 %v4841
  %4987 = vmatprep.subr.mxu0 %v4846
  %4988 = vmatpush1.msra.mxu0 %v4845
  %4989 = vmatprep.subr.mxu0 %v4850
  %4990 = vmatpush1.msra.mxu0 %v4849
  %4991 = vmatprep.subr.mxu0 %v4854
  %4992 = vmatpush1.msra.mxu0 %v4853
  %4993 = vmatprep.subr.mxu0 %v4858
  %4994 = vmatpush1.msra.mxu0 %v4857
  %4995 = vmatprep.subr.mxu0 %v4862
  %4996 = vmatpush1.msra.mxu0 %v4861
  %4997 = vmatprep.subr.mxu0 %v4866
  %4998 = vmatpush1.msra.mxu0 %v4865
  %4999 = vmatprep.subr.mxu0 %v4870
  %5000 = vmatpush1.msra.mxu0 %v4869
  %5001 = vmatprep.subr.mxu0 %v4874
  %5002 = vmatpush1.msra.mxu0 %v4873
  %5003 = vmatprep.subr.mxu0 %v4878
  %5004 = vmatpush1.msra.mxu0 %v4877
  %5005 = vmatprep.subr.mxu0 %v4882
  %5006 = vmatpush1.msra.mxu0 %v4881
  %5007 = vmatprep.subr.mxu0 %v4886
  %5008 = vmatpush1.msra.mxu0 %v4885
  %5009 = vmatprep.subr.mxu0 %v4890
  %5010 = vmatpush1.msra.mxu0 %v4889
  %5011 = vmatprep.subr.mxu0 %v4894
  %5012 = vmatpush1.msra.mxu0 %v4893
  %5013 = vmatprep.subr.mxu0 %v4898
  %5014 = vmatpush1.msra.mxu0 %v4897
  %5015 = vmatprep.subr.mxu0 %v4902
  %5016 = vmatpush1.msra.mxu0 %v4901
  %5017 = vmatprep.subr.mxu0 %v4906
  %5018 = vmatpush1.msra.mxu0 %v4905
  %5019 = vmatprep.subr.mxu0 %v4910
  %5020 = vmatpush1.msra.mxu0 %v4909
  %5021 = vmatprep.subr.mxu0 %v4914
  %5022 = vmatpush1.msra.mxu0 %v4913
  %5023 = vmatprep.subr.mxu0 %v4918
  %5024 = vmatpush1.msra.mxu0 %v4917
  %5025 = vmatprep.subr.mxu0 %v4922
  %5026 = vmatpush1.msra.mxu0 %v4921
  %5027 = vmatprep.subr.mxu0 %v4926
  %5028 = vmatpush1.msra.mxu0 %v4925
  %5029 = vmatprep.subr.mxu0 %v4930
  %5030 = vmatpush1.msra.mxu0 %v4929
  %5031 = vmatprep.subr.mxu0 %v4934
  %5032 = vmatpush1.msra.mxu0 %v4933
  %5033 = vmatprep.subr.mxu0 %v4938
  %5034 = vmatpush1.msra.mxu0 %v4937
  %5035 = vmatprep.subr.mxu0 %v4942
  %5036 = vmatpush1.msra.mxu0 %v4941
  %5037 = vmatprep.subr.mxu0 %v4946
  %5038 = vmatpush1.msra.mxu0 %v4945
  %5039 = vmatprep.subr.mxu0 %v4950
  %5040 = vmatpush1.msra.mxu0 %v4949
  %5041 = vmatprep.subr.mxu0 %v4954
  %5042 = vmatpush1.msra.mxu0 %v4953
  %5043 = vmatprep.mubr.f32.mxu0 %v4828
  %5044 = vmatmul.mubr.f32.gmra.mrb[0].mxu0 %v4825
  %v5045 = vpop.f32.mrb[0].mxu0
  %v5046 = vadd.f32 %v4962, %v5045
  %v5047 = vpop.f32.mrb[0].mxu0
  %v5048 = vadd.f32 %v4966, %v5047
  %5049 = vdwg.mxu0
  %5050 = vmatprep.subr.mxu0 %v4832
  %5051 = vmatpush1.msra.mxu0 %v4831
  %5052 = vmatprep.subr.mxu0 %v4836
  %5053 = vmatpush1.msra.mxu0 %v4835
  %5054 = vmatprep.subr.mxu0 %v4840
  %5055 = vmatpush1.msra.mxu0 %v4839
  %5056 = vmatprep.subr.mxu0 %v4844
  %5057 = vmatpush1.msra.mxu0 %v4843
  %5058 = vmatprep.subr.mxu0 %v4848
  %5059 = vmatpush1.msra.mxu0 %v4847
  %5060 = vmatprep.subr.mxu0 %v4852
  %5061 = vmatpush1.msra.mxu0 %v4851
  %5062 = vmatprep.subr.mxu0 %v4856
  %5063 = vmatpush1.msra.mxu0 %v4855
  %5064 = vmatprep.subr.mxu0 %v4860
  %5065 = vmatpush1.msra.mxu0 %v4859
  %5066 = vmatprep.subr.mxu0 %v4864
  %5067 = vmatpush1.msra.mxu0 %v4863
  %5068 = vmatprep.subr.mxu0 %v4868
  %5069 = vmatpush1.msra.mxu0 %v4867
  %5070 = vmatprep.subr.mxu0 %v4872
  %5071 = vmatpush1.msra.mxu0 %v4871
  %5072 = vmatprep.subr.mxu0 %v4876
  %5073 = vmatpush1.msra.mxu0 %v4875
  %5074 = vmatprep.subr.mxu0 %v4880
  %5075 = vmatpush1.msra.mxu0 %v4879
  %5076 = vmatprep.subr.mxu0 %v4884
  %5077 = vmatpush1.msra.mxu0 %v4883
  %5078 = vmatprep.subr.mxu0 %v4888
  %5079 = vmatpush1.msra.mxu0 %v4887
  %5080 = vmatprep.subr.mxu0 %v4892
  %5081 = vmatpush1.msra.mxu0 %v4891
  %5082 = vmatprep.subr.mxu0 %v4896
  %5083 = vmatpush1.msra.mxu0 %v4895
  %5084 = vmatprep.subr.mxu0 %v4900
  %5085 = vmatpush1.msra.mxu0 %v4899
  %5086 = vmatprep.subr.mxu0 %v4904
  %5087 = vmatpush1.msra.mxu0 %v4903
  %5088 = vmatprep.subr.mxu0 %v4908
  %5089 = vmatpush1.msra.mxu0 %v4907
  %5090 = vmatprep.subr.mxu0 %v4912
  %5091 = vmatpush1.msra.mxu0 %v4911
  %5092 = vmatprep.subr.mxu0 %v4916
  %5093 = vmatpush1.msra.mxu0 %v4915
  %5094 = vmatprep.subr.mxu0 %v4920
  %5095 = vmatpush1.msra.mxu0 %v4919
  %5096 = vmatprep.subr.mxu0 %v4924
  %5097 = vmatpush1.msra.mxu0 %v4923
  %5098 = vmatprep.subr.mxu0 %v4928
  %5099 = vmatpush1.msra.mxu0 %v4927
  %5100 = vmatprep.subr.mxu0 %v4932
  %5101 = vmatpush1.msra.mxu0 %v4931
  %5102 = vmatprep.subr.mxu0 %v4936
  %5103 = vmatpush1.msra.mxu0 %v4935
  %5104 = vmatprep.subr.mxu0 %v4940
  %5105 = vmatpush1.msra.mxu0 %v4939
  %5106 = vmatprep.subr.mxu0 %v4944
  %5107 = vmatpush1.msra.mxu0 %v4943
  %5108 = vmatprep.subr.mxu0 %v4948
  %5109 = vmatpush1.msra.mxu0 %v4947
  %5110 = vmatprep.subr.mxu0 %v4952
  %5111 = vmatpush1.msra.mxu0 %v4951
  %5112 = vmatprep.subr.mxu0 %v4956
  %5113 = vmatpush1.msra.mxu0 %v4955
  %5114 = vmatprep.mubr.f32.mxu0 %v4828
  %5115 = vmatmul.mubr.f32.gmra.mrb[0].mxu0 %v4825
  %v5116 = vpop.f32.mrb[0].mxu0
  %v5117 = vadd.f32 %v4970, %v5116
  %v5118 = vpop.f32.mrb[0].mxu0
  %v5119 = vadd.f32 %v4974, %v5118
  %5120 = vdwg.mxu0
  %v5121 = vld [vmem:[%s1473] sm:$0xff]
  %v5122 = vxor.u32 %v5046, 2147483648
  %v5123 = vmul.f32 %v5122, 1.442695
  %v5124 = vpow.pop %v5123
  %v5125 = vadd.f32 %v5124, 1.0
  %v5126 = vrcp.pop %v5125
  %v5127 = vmul.f32 1.0, %v5126
  %v5128 = vxor.u32 %v5048, 2147483648
  %v5129 = vmul.f32 %v5128, 1.442695
  %v5130 = vpow.pop %v5129
  %v5131 = vadd.f32 %v5130, 1.0
  %v5132 = vrcp.pop %v5131
  %v5133 = vmul.f32 1.0, %v5132
  %v5134 = vtanh.pop %v5117
  %v5135 = vxor.u32 %v5119, 2147483648
  %v5136 = vmul.f32 %v5135, 1.442695
  %v5137 = vpow.pop %v5136
  %v5138 = vadd.f32 %v5137, 1.0
  %v5139 = vrcp.pop %v5138
  %v5140 = vmul.f32 1.0, %v5139
  %v5141 = vmul.f32 %v5133, %v5121
  %v5142 = vmul.f32 %v5127, %v5134
  %v5143 = vadd.f32 %v5141, %v5142
  %v5144 = vtanh.pop %v5143
  %v5145 = vmul.f32 %v5140, %v5144
  %5146 = vst [vmem:[%s1178] sm:$0xff] %v5145
  %5147 = vst [vmem:[%s1473] sm:$0xff] %v5143
  %v5148 = vld [vmem:[%s1501] sm:$0xff]
  %v5149 = vld [vmem:[%s1503] sm:$0xff]
  %v5150 = vld [vmem:[%s1503 + $0x8] sm:$0xff]
  %v5151 = vld [vmem:[%s1503 + $0x10] sm:$0xff]
  %v5152 = vld [vmem:[%s1503 + $0x18] sm:$0xff]
  %v5153 = vld [vmem:[%s1503 + $0x20] sm:$0xff]
  %v5154 = vld [vmem:[%s1503 + $0x28] sm:$0xff]
  %v5155 = vld [vmem:[%s1503 + $0x30] sm:$0xff]
  %v5156 = vld [vmem:[%s1503 + $0x38] sm:$0xff]
  %v5157 = vld [vmem:[%s1503 + $0x40] sm:$0xff]
  %v5158 = vld [vmem:[%s1503 + $0x48] sm:$0xff]
  %v5159 = vld [vmem:[%s1503 + $0x50] sm:$0xff]
  %v5160 = vld [vmem:[%s1503 + $0x58] sm:$0xff]
  %v5161 = vld [vmem:[%s1503 + $0x60] sm:$0xff]
  %v5162 = vld [vmem:[%s1503 + $0x68] sm:$0xff]
  %v5163 = vld [vmem:[%s1503 + $0x70] sm:$0xff]
  %v5164 = vld [vmem:[%s1503 + $0x78] sm:$0xff]
  %v5165 = vld [vmem:[%s1503 + $0x80] sm:$0xff]
  %v5166 = vld [vmem:[%s1503 + $0x88] sm:$0xff]
  %v5167 = vld [vmem:[%s1503 + $0x90] sm:$0xff]
  %v5168 = vld [vmem:[%s1503 + $0x98] sm:$0xff]
  %v5169 = vld [vmem:[%s1503 + $0xa0] sm:$0xff]
  %v5170 = vld [vmem:[%s1503 + $0xa8] sm:$0xff]
  %v5171 = vld [vmem:[%s1503 + $0xb0] sm:$0xff]
  %v5172 = vld [vmem:[%s1503 + $0xb8] sm:$0xff]
  %v5173 = vld [vmem:[%s1503 + $0xc0] sm:$0xff]
  %v5174 = vld [vmem:[%s1503 + $0xc8] sm:$0xff]
  %v5175 = vld [vmem:[%s1503 + $0xd0] sm:$0xff]
  %v5176 = vld [vmem:[%s1503 + $0xd8] sm:$0xff]
  %v5177 = vld [vmem:[%s1503 + $0xe0] sm:$0xff]
  %v5178 = vld [vmem:[%s1503 + $0xe8] sm:$0xff]
  %v5179 = vld [vmem:[%s1503 + $0xf0] sm:$0xff]
  %v5180 = vld [vmem:[%s1503 + $0xf8] sm:$0xff]
  %v5181 = vld [vmem:[%s1503 + $0x100] sm:$0xff]
  %v5182 = vld [vmem:[%s1503 + $0x108] sm:$0xff]
  %v5183 = vld [vmem:[%s1503 + $0x110] sm:$0xff]
  %v5184 = vld [vmem:[%s1503 + $0x118] sm:$0xff]
  %v5185 = vld [vmem:[%s1503 + $0x120] sm:$0xff]
  %v5186 = vld [vmem:[%s1503 + $0x128] sm:$0xff]
  %v5187 = vld [vmem:[%s1503 + $0x130] sm:$0xff]
  %v5188 = vld [vmem:[%s1503 + $0x138] sm:$0xff]
  %v5189 = vld [vmem:[%s1503 + $0x140] sm:$0xff]
  %v5190 = vld [vmem:[%s1503 + $0x148] sm:$0xff]
  %v5191 = vld [vmem:[%s1503 + $0x150] sm:$0xff]
  %v5192 = vld [vmem:[%s1503 + $0x158] sm:$0xff]
  %v5193 = vld [vmem:[%s1503 + $0x160] sm:$0xff]
  %v5194 = vld [vmem:[%s1503 + $0x168] sm:$0xff]
  %v5195 = vld [vmem:[%s1503 + $0x170] sm:$0xff]
  %v5196 = vld [vmem:[%s1503 + $0x178] sm:$0xff]
  %v5197 = vld [vmem:[%s1503 + $0x180] sm:$0xff]
  %v5198 = vld [vmem:[%s1503 + $0x188] sm:$0xff]
  %v5199 = vld [vmem:[%s1503 + $0x190] sm:$0xff]
  %v5200 = vld [vmem:[%s1503 + $0x198] sm:$0xff]
  %v5201 = vld [vmem:[%s1503 + $0x1a0] sm:$0xff]
  %v5202 = vld [vmem:[%s1503 + $0x1a8] sm:$0xff]
  %v5203 = vld [vmem:[%s1503 + $0x1b0] sm:$0xff]
  %v5204 = vld [vmem:[%s1503 + $0x1b8] sm:$0xff]
  %v5205 = vld [vmem:[%s1503 + $0x1c0] sm:$0xff]
  %v5206 = vld [vmem:[%s1503 + $0x1c8] sm:$0xff]
  %v5207 = vld [vmem:[%s1503 + $0x1d0] sm:$0xff]
  %v5208 = vld [vmem:[%s1503 + $0x1d8] sm:$0xff]
  %v5209 = vld [vmem:[%s1503 + $0x1e0] sm:$0xff]
  %v5210 = vld [vmem:[%s1503 + $0x1e8] sm:$0xff]
  %v5211 = vld [vmem:[%s1503 + $0x1f0] sm:$0xff]
  %v5212 = vld [vmem:[%s1503 + $0x1f8] sm:$0xff]
  %v5213 = vld [vmem:[%s1503 + $0x200] sm:$0xff]
  %v5214 = vld [vmem:[%s1503 + $0x208] sm:$0xff]
  %v5215 = vld [vmem:[%s1503 + $0x210] sm:$0xff]
  %v5216 = vld [vmem:[%s1503 + $0x218] sm:$0xff]
  %v5217 = vld [vmem:[%s1503 + $0x220] sm:$0xff]
  %v5218 = vld [vmem:[%s1503 + $0x228] sm:$0xff]
  %v5219 = vld [vmem:[%s1503 + $0x230] sm:$0xff]
  %v5220 = vld [vmem:[%s1503 + $0x238] sm:$0xff]
  %v5221 = vld [vmem:[%s1503 + $0x240] sm:$0xff]
  %v5222 = vld [vmem:[%s1503 + $0x248] sm:$0xff]
  %v5223 = vld [vmem:[%s1503 + $0x250] sm:$0xff]
  %v5224 = vld [vmem:[%s1503 + $0x258] sm:$0xff]
  %v5225 = vld [vmem:[%s1503 + $0x260] sm:$0xff]
  %v5226 = vld [vmem:[%s1503 + $0x268] sm:$0xff]
  %v5227 = vld [vmem:[%s1503 + $0x270] sm:$0xff]
  %v5228 = vld [vmem:[%s1503 + $0x278] sm:$0xff]
  %v5229 = vld [vmem:[%s1503 + $0x280] sm:$0xff]
  %v5230 = vld [vmem:[%s1503 + $0x288] sm:$0xff]
  %v5231 = vld [vmem:[%s1503 + $0x290] sm:$0xff]
  %v5232 = vld [vmem:[%s1503 + $0x298] sm:$0xff]
  %v5233 = vld [vmem:[%s1503 + $0x2a0] sm:$0xff]
  %v5234 = vld [vmem:[%s1503 + $0x2a8] sm:$0xff]
  %v5235 = vld [vmem:[%s1503 + $0x2b0] sm:$0xff]
  %v5236 = vld [vmem:[%s1503 + $0x2b8] sm:$0xff]
  %v5237 = vld [vmem:[%s1503 + $0x2c0] sm:$0xff]
  %v5238 = vld [vmem:[%s1503 + $0x2c8] sm:$0xff]
  %v5239 = vld [vmem:[%s1503 + $0x2d0] sm:$0xff]
  %v5240 = vld [vmem:[%s1503 + $0x2d8] sm:$0xff]
  %v5241 = vld [vmem:[%s1503 + $0x2e0] sm:$0xff]
  %v5242 = vld [vmem:[%s1503 + $0x2e8] sm:$0xff]
  %v5243 = vld [vmem:[%s1503 + $0x2f0] sm:$0xff]
  %v5244 = vld [vmem:[%s1503 + $0x2f8] sm:$0xff]
  %v5245 = vld [vmem:[%s1503 + $0x300] sm:$0xff]
  %v5246 = vld [vmem:[%s1503 + $0x308] sm:$0xff]
  %v5247 = vld [vmem:[%s1503 + $0x310] sm:$0xff]
  %v5248 = vld [vmem:[%s1503 + $0x318] sm:$0xff]
  %v5249 = vld [vmem:[%s1503 + $0x320] sm:$0xff]
  %v5250 = vld [vmem:[%s1503 + $0x328] sm:$0xff]
  %v5251 = vld [vmem:[%s1503 + $0x330] sm:$0xff]
  %v5252 = vld [vmem:[%s1503 + $0x338] sm:$0xff]
  %v5253 = vld [vmem:[%s1503 + $0x340] sm:$0xff]
  %v5254 = vld [vmem:[%s1503 + $0x348] sm:$0xff]
  %v5255 = vld [vmem:[%s1503 + $0x350] sm:$0xff]
  %v5256 = vld [vmem:[%s1503 + $0x358] sm:$0xff]
  %v5257 = vld [vmem:[%s1503 + $0x360] sm:$0xff]
  %v5258 = vld [vmem:[%s1503 + $0x368] sm:$0xff]
  %v5259 = vld [vmem:[%s1503 + $0x370] sm:$0xff]
  %v5260 = vld [vmem:[%s1503 + $0x378] sm:$0xff]
  %v5261 = vld [vmem:[%s1503 + $0x380] sm:$0xff]
  %v5262 = vld [vmem:[%s1503 + $0x388] sm:$0xff]
  %v5263 = vld [vmem:[%s1503 + $0x390] sm:$0xff]
  %v5264 = vld [vmem:[%s1503 + $0x398] sm:$0xff]
  %v5265 = vld [vmem:[%s1503 + $0x3a0] sm:$0xff]
  %v5266 = vld [vmem:[%s1503 + $0x3a8] sm:$0xff]
  %v5267 = vld [vmem:[%s1503 + $0x3b0] sm:$0xff]
  %v5268 = vld [vmem:[%s1503 + $0x3b8] sm:$0xff]
  %v5269 = vld [vmem:[%s1503 + $0x3c0] sm:$0xff]
  %v5270 = vld [vmem:[%s1503 + $0x3c8] sm:$0xff]
  %v5271 = vld [vmem:[%s1503 + $0x3d0] sm:$0xff]
  %v5272 = vld [vmem:[%s1503 + $0x3d8] sm:$0xff]
  %v5273 = vld [vmem:[%s1503 + $0x3e0] sm:$0xff]
  %v5274 = vld [vmem:[%s1503 + $0x3e8] sm:$0xff]
  %v5275 = vld [vmem:[%s1503 + $0x3f0] sm:$0xff]
  %v5276 = vld [vmem:[%s1503 + $0x3f8] sm:$0xff]
  %v5277 = vld [vmem:[%s1632] sm:$0xf]
  %v5279 = vlaneseq
  %v5280 = vshrl.u32 %v5279, 7
  %v5281 = vsub.s32 0, %v5280
  %v5282 = vrot.slane %v5277, %v5281
  %v5283 = vlaneseq
  %v5284 = vshrl.u32 %v5283, 7
  %v5285 = vsub.s32 1, %v5284
  %v5286 = vrot.slane %v5277, %v5285
  %v5287 = vlaneseq
  %v5288 = vshrl.u32 %v5287, 7
  %v5289 = vsub.s32 2, %v5288
  %v5290 = vrot.slane %v5277, %v5289
  %v5291 = vlaneseq
  %v5292 = vshrl.u32 %v5291, 7
  %v5293 = vsub.s32 3, %v5292
  %v5294 = vrot.slane %v5277, %v5293
  %5299 = vmatprep.subr.mxu0 %v5150
  %5300 = vmatpush1.msra.mxu0 %v5149
  %5301 = vmatprep.subr.mxu0 %v5154
  %5302 = vmatpush1.msra.mxu0 %v5153
  %5303 = vmatprep.subr.mxu0 %v5158
  %5304 = vmatpush1.msra.mxu0 %v5157
  %5305 = vmatprep.subr.mxu0 %v5162
  %5306 = vmatpush1.msra.mxu0 %v5161
  %5307 = vmatprep.subr.mxu0 %v5166
  %5308 = vmatpush1.msra.mxu0 %v5165
  %5309 = vmatprep.subr.mxu0 %v5170
  %5310 = vmatpush1.msra.mxu0 %v5169
  %5311 = vmatprep.subr.mxu0 %v5174
  %5312 = vmatpush1.msra.mxu0 %v5173
  %5313 = vmatprep.subr.mxu0 %v5178
  %5314 = vmatpush1.msra.mxu0 %v5177
  %5315 = vmatprep.subr.mxu0 %v5182
  %5316 = vmatpush1.msra.mxu0 %v5181
  %5317 = vmatprep.subr.mxu0 %v5186
  %5318 = vmatpush1.msra.mxu0 %v5185
  %5319 = vmatprep.subr.mxu0 %v5190
  %5320 = vmatpush1.msra.mxu0 %v5189
  %5321 = vmatprep.subr.mxu0 %v5194
  %5322 = vmatpush1.msra.mxu0 %v5193
  %5323 = vmatprep.subr.mxu0 %v5198
  %5324 = vmatpush1.msra.mxu0 %v5197
  %5325 = vmatprep.subr.mxu0 %v5202
  %5326 = vmatpush1.msra.mxu0 %v5201
  %5327 = vmatprep.subr.mxu0 %v5206
  %5328 = vmatpush1.msra.mxu0 %v5205
  %5329 = vmatprep.subr.mxu0 %v5210
  %5330 = vmatpush1.msra.mxu0 %v5209
  %5331 = vmatprep.subr.mxu0 %v5214
  %5332 = vmatpush1.msra.mxu0 %v5213
  %5333 = vmatprep.subr.mxu0 %v5218
  %5334 = vmatpush1.msra.mxu0 %v5217
  %5335 = vmatprep.subr.mxu0 %v5222
  %5336 = vmatpush1.msra.mxu0 %v5221
  %5337 = vmatprep.subr.mxu0 %v5226
  %5338 = vmatpush1.msra.mxu0 %v5225
  %5339 = vmatprep.subr.mxu0 %v5230
  %5340 = vmatpush1.msra.mxu0 %v5229
  %5341 = vmatprep.subr.mxu0 %v5234
  %5342 = vmatpush1.msra.mxu0 %v5233
  %5343 = vmatprep.subr.mxu0 %v5238
  %5344 = vmatpush1.msra.mxu0 %v5237
  %5345 = vmatprep.subr.mxu0 %v5242
  %5346 = vmatpush1.msra.mxu0 %v5241
  %5347 = vmatprep.subr.mxu0 %v5246
  %5348 = vmatpush1.msra.mxu0 %v5245
  %5349 = vmatprep.subr.mxu0 %v5250
  %5350 = vmatpush1.msra.mxu0 %v5249
  %5351 = vmatprep.subr.mxu0 %v5254
  %5352 = vmatpush1.msra.mxu0 %v5253
  %5353 = vmatprep.subr.mxu0 %v5258
  %5354 = vmatpush1.msra.mxu0 %v5257
  %5355 = vmatprep.subr.mxu0 %v5262
  %5356 = vmatpush1.msra.mxu0 %v5261
  %5357 = vmatprep.subr.mxu0 %v5266
  %5358 = vmatpush1.msra.mxu0 %v5265
  %5359 = vmatprep.subr.mxu0 %v5270
  %5360 = vmatpush1.msra.mxu0 %v5269
  %5361 = vmatprep.subr.mxu0 %v5274
  %5362 = vmatpush1.msra.mxu0 %v5273
  %5363 = vmatprep.mubr.f32.mxu0 %v5148
  %5364 = vmatmul.mubr.f32.gmra.mrb[0].mxu0 %v5145
  %v5365 = vpop.f32.mrb[0].mxu0
  %v5366 = vadd.f32 %v5282, %v5365
  %v5367 = vpop.f32.mrb[0].mxu0
  %v5368 = vadd.f32 %v5286, %v5367
  %5369 = vdwg.mxu0
  %5370 = vmatprep.subr.mxu0 %v5152
  %5371 = vmatpush1.msra.mxu0 %v5151
  %5372 = vmatprep.subr.mxu0 %v5156
  %5373 = vmatpush1.msra.mxu0 %v5155
  %5374 = vmatprep.subr.mxu0 %v5160
  %5375 = vmatpush1.msra.mxu0 %v5159
  %5376 = vmatprep.subr.mxu0 %v5164
  %5377 = vmatpush1.msra.mxu0 %v5163
  %5378 = vmatprep.subr.mxu0 %v5168
  %5379 = vmatpush1.msra.mxu0 %v5167
  %5380 = vmatprep.subr.mxu0 %v5172
  %5381 = vmatpush1.msra.mxu0 %v5171
  %5382 = vmatprep.subr.mxu0 %v5176
  %5383 = vmatpush1.msra.mxu0 %v5175
  %5384 = vmatprep.subr.mxu0 %v5180
  %5385 = vmatpush1.msra.mxu0 %v5179
  %5386 = vmatprep.subr.mxu0 %v5184
  %5387 = vmatpush1.msra.mxu0 %v5183
  %5388 = vmatprep.subr.mxu0 %v5188
  %5389 = vmatpush1.msra.mxu0 %v5187
  %5390 = vmatprep.subr.mxu0 %v5192
  %5391 = vmatpush1.msra.mxu0 %v5191
  %5392 = vmatprep.subr.mxu0 %v5196
  %5393 = vmatpush1.msra.mxu0 %v5195
  %5394 = vmatprep.subr.mxu0 %v5200
  %5395 = vmatpush1.msra.mxu0 %v5199
  %5396 = vmatprep.subr.mxu0 %v5204
  %5397 = vmatpush1.msra.mxu0 %v5203
  %5398 = vmatprep.subr.mxu0 %v5208
  %5399 = vmatpush1.msra.mxu0 %v5207
  %5400 = vmatprep.subr.mxu0 %v5212
  %5401 = vmatpush1.msra.mxu0 %v5211
  %5402 = vmatprep.subr.mxu0 %v5216
  %5403 = vmatpush1.msra.mxu0 %v5215
  %5404 = vmatprep.subr.mxu0 %v5220
  %5405 = vmatpush1.msra.mxu0 %v5219
  %5406 = vmatprep.subr.mxu0 %v5224
  %5407 = vmatpush1.msra.mxu0 %v5223
  %5408 = vmatprep.subr.mxu0 %v5228
  %5409 = vmatpush1.msra.mxu0 %v5227
  %5410 = vmatprep.subr.mxu0 %v5232
  %5411 = vmatpush1.msra.mxu0 %v5231
  %5412 = vmatprep.subr.mxu0 %v5236
  %5413 = vmatpush1.msra.mxu0 %v5235
  %5414 = vmatprep.subr.mxu0 %v5240
  %5415 = vmatpush1.msra.mxu0 %v5239
  %5416 = vmatprep.subr.mxu0 %v5244
  %5417 = vmatpush1.msra.mxu0 %v5243
  %5418 = vmatprep.subr.mxu0 %v5248
  %5419 = vmatpush1.msra.mxu0 %v5247
  %5420 = vmatprep.subr.mxu0 %v5252
  %5421 = vmatpush1.msra.mxu0 %v5251
  %5422 = vmatprep.subr.mxu0 %v5256
  %5423 = vmatpush1.msra.mxu0 %v5255
  %5424 = vmatprep.subr.mxu0 %v5260
  %5425 = vmatpush1.msra.mxu0 %v5259
  %5426 = vmatprep.subr.mxu0 %v5264
  %5427 = vmatpush1.msra.mxu0 %v5263
  %5428 = vmatprep.subr.mxu0 %v5268
  %5429 = vmatpush1.msra.mxu0 %v5267
  %5430 = vmatprep.subr.mxu0 %v5272
  %5431 = vmatpush1.msra.mxu0 %v5271
  %5432 = vmatprep.subr.mxu0 %v5276
  %5433 = vmatpush1.msra.mxu0 %v5275
  %5434 = vmatprep.mubr.f32.mxu0 %v5148
  %5435 = vmatmul.mubr.f32.gmra.mrb[0].mxu0 %v5145
  %v5436 = vpop.f32.mrb[0].mxu0
  %v5437 = vadd.f32 %v5290, %v5436
  %v5438 = vpop.f32.mrb[0].mxu0
  %v5439 = vadd.f32 %v5294, %v5438
  %5440 = vdwg.mxu0
  %v5441 = vld [vmem:[%s1797] sm:$0xff]
  %v5442 = vxor.u32 %v5366, 2147483648
  %v5443 = vmul.f32 %v5442, 1.442695
  %v5444 = vpow.pop %v5443
  %v5445 = vadd.f32 %v5444, 1.0
  %v5446 = vrcp.pop %v5445
  %v5447 = vmul.f32 1.0, %v5446
  %v5448 = vxor.u32 %v5368, 2147483648
  %v5449 = vmul.f32 %v5448, 1.442695
  %v5450 = vpow.pop %v5449
  %v5451 = vadd.f32 %v5450, 1.0
  %v5452 = vrcp.pop %v5451
  %v5453 = vmul.f32 1.0, %v5452
  %v5454 = vtanh.pop %v5437
  %v5455 = vxor.u32 %v5439, 2147483648
  %v5456 = vmul.f32 %v5455, 1.442695
  %v5457 = vpow.pop %v5456
  %v5458 = vadd.f32 %v5457, 1.0
  %v5459 = vrcp.pop %v5458
  %v5460 = vmul.f32 1.0, %v5459
  %v5461 = vmul.f32 %v5453, %v5441
  %v5462 = vmul.f32 %v5447, %v5454
  %v5463 = vadd.f32 %v5461, %v5462
  %v5464 = vtanh.pop %v5463
  %v5465 = vmul.f32 %v5460, %v5464
  %5466 = vst [vmem:[%s1501] sm:$0xff] %v5465
  %5467 = vst [vmem:[%s1797] sm:$0xff] %v5463
  %s5468 = scalar_lea.vmem [#allocation3], 32
  %5469 = vst [vmem:[%s5468] sm:$0xff] %v5465
  %s5470 = scalar_lea.vmem [#allocation2], 160
  %v5471 = vld [vmem:[%s5470] sm:$0xff]
  %v5472 = vld [vmem:[%s5470 + $0x8] sm:$0xff]
  %v5473 = vld [vmem:[%s5470 + $0x10] sm:$0xff]
  %v5474 = vld [vmem:[%s5470 + $0x18] sm:$0xff]
  %v5475 = vld [vmem:[%s10] sm:$0xff]
  %v5476 = vld [vmem:[%s2] sm:$0xff]
  %v5477 = vld [vmem:[%s2 + $0x8] sm:$0xff]
  %v5478 = vld [vmem:[%s2 + $0x10] sm:$0xff]
  %v5479 = vld [vmem:[%s2 + $0x18] sm:$0xff]
  %v5480 = vld [vmem:[%s2 + $0x20] sm:$0xff]
  %v5481 = vld [vmem:[%s2 + $0x28] sm:$0xff]
  %v5482 = vld [vmem:[%s2 + $0x30] sm:$0xff]
  %v5483 = vld [vmem:[%s2 + $0x38] sm:$0xff]
  %v5484 = vld [vmem:[%s2 + $0x40] sm:$0xff]
  %v5485 = vld [vmem:[%s2 + $0x48] sm:$0xff]
  %v5486 = vld [vmem:[%s2 + $0x50] sm:$0xff]
  %v5487 = vld [vmem:[%s2 + $0x58] sm:$0xff]
  %v5488 = vld [vmem:[%s2 + $0x60] sm:$0xff]
  %v5489 = vld [vmem:[%s2 + $0x68] sm:$0xff]
  %v5490 = vld [vmem:[%s2 + $0x70] sm:$0xff]
  %v5491 = vld [vmem:[%s2 + $0x78] sm:$0xff]
  %v5492 = vld [vmem:[%s2 + $0x80] sm:$0xff]
  %v5493 = vld [vmem:[%s2 + $0x88] sm:$0xff]
  %v5494 = vld [vmem:[%s2 + $0x90] sm:$0xff]
  %v5495 = vld [vmem:[%s2 + $0x98] sm:$0xff]
  %v5496 = vld [vmem:[%s2 + $0xa0] sm:$0xff]
  %v5497 = vld [vmem:[%s2 + $0xa8] sm:$0xff]
  %v5498 = vld [vmem:[%s2 + $0xb0] sm:$0xff]
  %v5499 = vld [vmem:[%s2 + $0xb8] sm:$0xff]
  %v5500 = vld [vmem:[%s2 + $0xc0] sm:$0xff]
  %v5501 = vld [vmem:[%s2 + $0xc8] sm:$0xff]
  %v5502 = vld [vmem:[%s2 + $0xd0] sm:$0xff]
  %v5503 = vld [vmem:[%s2 + $0xd8] sm:$0xff]
  %v5504 = vld [vmem:[%s2 + $0xe0] sm:$0xff]
  %v5505 = vld [vmem:[%s2 + $0xe8] sm:$0xff]
  %v5506 = vld [vmem:[%s2 + $0xf0] sm:$0xff]
  %v5507 = vld [vmem:[%s2 + $0xf8] sm:$0xff]
  %v5508 = vld [vmem:[%s2 + $0x100] sm:$0xff]
  %v5509 = vld [vmem:[%s2 + $0x108] sm:$0xff]
  %v5510 = vld [vmem:[%s2 + $0x110] sm:$0xff]
  %v5511 = vld [vmem:[%s2 + $0x118] sm:$0xff]
  %v5512 = vld [vmem:[%s2 + $0x120] sm:$0xff]
  %v5513 = vld [vmem:[%s2 + $0x128] sm:$0xff]
  %v5514 = vld [vmem:[%s2 + $0x130] sm:$0xff]
  %v5515 = vld [vmem:[%s2 + $0x138] sm:$0xff]
  %v5516 = vld [vmem:[%s2 + $0x140] sm:$0xff]
  %v5517 = vld [vmem:[%s2 + $0x148] sm:$0xff]
  %v5518 = vld [vmem:[%s2 + $0x150] sm:$0xff]
  %v5519 = vld [vmem:[%s2 + $0x158] sm:$0xff]
  %v5520 = vld [vmem:[%s2 + $0x160] sm:$0xff]
  %v5521 = vld [vmem:[%s2 + $0x168] sm:$0xff]
  %v5522 = vld [vmem:[%s2 + $0x170] sm:$0xff]
  %v5523 = vld [vmem:[%s2 + $0x178] sm:$0xff]
  %v5524 = vld [vmem:[%s2 + $0x180] sm:$0xff]
  %v5525 = vld [vmem:[%s2 + $0x188] sm:$0xff]
  %v5526 = vld [vmem:[%s2 + $0x190] sm:$0xff]
  %v5527 = vld [vmem:[%s2 + $0x198] sm:$0xff]
  %v5528 = vld [vmem:[%s2 + $0x1a0] sm:$0xff]
  %v5529 = vld [vmem:[%s2 + $0x1a8] sm:$0xff]
  %v5530 = vld [vmem:[%s2 + $0x1b0] sm:$0xff]
  %v5531 = vld [vmem:[%s2 + $0x1b8] sm:$0xff]
  %v5532 = vld [vmem:[%s2 + $0x1c0] sm:$0xff]
  %v5533 = vld [vmem:[%s2 + $0x1c8] sm:$0xff]
  %v5534 = vld [vmem:[%s2 + $0x1d0] sm:$0xff]
  %v5535 = vld [vmem:[%s2 + $0x1d8] sm:$0xff]
  %v5536 = vld [vmem:[%s2 + $0x1e0] sm:$0xff]
  %v5537 = vld [vmem:[%s2 + $0x1e8] sm:$0xff]
  %v5538 = vld [vmem:[%s2 + $0x1f0] sm:$0xff]
  %v5539 = vld [vmem:[%s2 + $0x1f8] sm:$0xff]
  %5540 = vmatprep.subr.mxu0 %v5477
  %5541 = vmatpush1.msra.mxu0 %v5476
  %5542 = vmatprep.subr.mxu0 %v5481
  %5543 = vmatpush1.msra.mxu0 %v5480
  %5544 = vmatprep.subr.mxu0 %v5485
  %5545 = vmatpush1.msra.mxu0 %v5484
  %5546 = vmatprep.subr.mxu0 %v5489
  %5547 = vmatpush1.msra.mxu0 %v5488
  %5548 = vmatprep.subr.mxu0 %v5493
  %5549 = vmatpush1.msra.mxu0 %v5492
  %5550 = vmatprep.subr.mxu0 %v5497
  %5551 = vmatpush1.msra.mxu0 %v5496
  %5552 = vmatprep.subr.mxu0 %v5501
  %5553 = vmatpush1.msra.mxu0 %v5500
  %5554 = vmatprep.subr.mxu0 %v5505
  %5555 = vmatpush1.msra.mxu0 %v5504
  %5556 = vmatprep.subr.mxu0 %v5509
  %5557 = vmatpush1.msra.mxu0 %v5508
  %5558 = vmatprep.subr.mxu0 %v5513
  %5559 = vmatpush1.msra.mxu0 %v5512
  %5560 = vmatprep.subr.mxu0 %v5517
  %5561 = vmatpush1.msra.mxu0 %v5516
  %5562 = vmatprep.subr.mxu0 %v5521
  %5563 = vmatpush1.msra.mxu0 %v5520
  %5564 = vmatprep.subr.mxu0 %v5525
  %5565 = vmatpush1.msra.mxu0 %v5524
  %5566 = vmatprep.subr.mxu0 %v5529
  %5567 = vmatpush1.msra.mxu0 %v5528
  %5568 = vmatprep.subr.mxu0 %v5533
  %5569 = vmatpush1.msra.mxu0 %v5532
  %5570 = vmatprep.subr.mxu0 %v5537
  %5571 = vmatpush1.msra.mxu0 %v5536
  %5572 = vmatprep.subr.mxu0 0.0
  %5573 = vmatpush1.msra.mxu0 0.0
  %5574 = vmatprep.subr.mxu0 0.0
  %5575 = vmatpush1.msra.mxu0 0.0
  %5576 = vmatprep.subr.mxu0 0.0
  %5577 = vmatpush1.msra.mxu0 0.0
  %5578 = vmatprep.subr.mxu0 0.0
  %5579 = vmatpush1.msra.mxu0 0.0
  %5580 = vmatprep.subr.mxu0 0.0
  %5581 = vmatpush1.msra.mxu0 0.0
  %5582 = vmatprep.subr.mxu0 0.0
  %5583 = vmatpush1.msra.mxu0 0.0
  %5584 = vmatprep.subr.mxu0 0.0
  %5585 = vmatpush1.msra.mxu0 0.0
  %5586 = vmatprep.subr.mxu0 0.0
  %5587 = vmatpush1.msra.mxu0 0.0
  %5588 = vmatprep.subr.mxu0 0.0
  %5589 = vmatpush1.msra.mxu0 0.0
  %5590 = vmatprep.subr.mxu0 0.0
  %5591 = vmatpush1.msra.mxu0 0.0
  %5592 = vmatprep.subr.mxu0 0.0
  %5593 = vmatpush1.msra.mxu0 0.0
  %5594 = vmatprep.subr.mxu0 0.0
  %5595 = vmatpush1.msra.mxu0 0.0
  %5596 = vmatprep.subr.mxu0 0.0
  %5597 = vmatpush1.msra.mxu0 0.0
  %5598 = vmatprep.subr.mxu0 0.0
  %5599 = vmatpush1.msra.mxu0 0.0
  %5600 = vmatprep.subr.mxu0 0.0
  %5601 = vmatpush1.msra.mxu0 0.0
  %5602 = vmatprep.subr.mxu0 0.0
  %5603 = vmatpush1.msra.mxu0 0.0
  %5604 = vmatprep.mubr.f32.mxu0 0.0
  %5605 = vmatmul.mubr.f32.gmra.mrb[0].mxu0 %v5475
  %v5606 = vpop.f32.mrb[0].mxu0
  %v5607 = vadd.f32 0.0, %v5606
  %v5608 = vpop.f32.mrb[0].mxu0
  %v5609 = vadd.f32 0.0, %v5608
  %5610 = vdwg.mxu0
  %5611 = vmatprep.subr.mxu0 %v5479
  %5612 = vmatpush1.msra.mxu0 %v5478
  %5613 = vmatprep.subr.mxu0 %v5483
  %5614 = vmatpush1.msra.mxu0 %v5482
  %5615 = vmatprep.subr.mxu0 %v5487
  %5616 = vmatpush1.msra.mxu0 %v5486
  %5617 = vmatprep.subr.mxu0 %v5491
  %5618 = vmatpush1.msra.mxu0 %v5490
  %5619 = vmatprep.subr.mxu0 %v5495
  %5620 = vmatpush1.msra.mxu0 %v5494
  %5621 = vmatprep.subr.mxu0 %v5499
  %5622 = vmatpush1.msra.mxu0 %v5498
  %5623 = vmatprep.subr.mxu0 %v5503
  %5624 = vmatpush1.msra.mxu0 %v5502
  %5625 = vmatprep.subr.mxu0 %v5507
  %5626 = vmatpush1.msra.mxu0 %v5506
  %5627 = vmatprep.subr.mxu0 %v5511
  %5628 = vmatpush1.msra.mxu0 %v5510
  %5629 = vmatprep.subr.mxu0 %v5515
  %5630 = vmatpush1.msra.mxu0 %v5514
  %5631 = vmatprep.subr.mxu0 %v5519
  %5632 = vmatpush1.msra.mxu0 %v5518
  %5633 = vmatprep.subr.mxu0 %v5523
  %5634 = vmatpush1.msra.mxu0 %v5522
  %5635 = vmatprep.subr.mxu0 %v5527
  %5636 = vmatpush1.msra.mxu0 %v5526
  %5637 = vmatprep.subr.mxu0 %v5531
  %5638 = vmatpush1.msra.mxu0 %v5530
  %5639 = vmatprep.subr.mxu0 %v5535
  %5640 = vmatpush1.msra.mxu0 %v5534
  %5641 = vmatprep.subr.mxu0 %v5539
  %5642 = vmatpush1.msra.mxu0 %v5538
  %5643 = vmatprep.subr.mxu0 0.0
  %5644 = vmatpush1.msra.mxu0 0.0
  %5645 = vmatprep.subr.mxu0 0.0
  %5646 = vmatpush1.msra.mxu0 0.0
  %5647 = vmatprep.subr.mxu0 0.0
  %5648 = vmatpush1.msra.mxu0 0.0
  %5649 = vmatprep.subr.mxu0 0.0
  %5650 = vmatpush1.msra.mxu0 0.0
  %5651 = vmatprep.subr.mxu0 0.0
  %5652 = vmatpush1.msra.mxu0 0.0
  %5653 = vmatprep.subr.mxu0 0.0
  %5654 = vmatpush1.msra.mxu0 0.0
  %5655 = vmatprep.subr.mxu0 0.0
  %5656 = vmatpush1.msra.mxu0 0.0
  %5657 = vmatprep.subr.mxu0 0.0
  %5658 = vmatpush1.msra.mxu0 0.0
  %5659 = vmatprep.subr.mxu0 0.0
  %5660 = vmatpush1.msra.mxu0 0.0
  %5661 = vmatprep.subr.mxu0 0.0
  %5662 = vmatpush1.msra.mxu0 0.0
  %5663 = vmatprep.subr.mxu0 0.0
  %5664 = vmatpush1.msra.mxu0 0.0
  %5665 = vmatprep.subr.mxu0 0.0
  %5666 = vmatpush1.msra.mxu0 0.0
  %5667 = vmatprep.subr.mxu0 0.0
  %5668 = vmatpush1.msra.mxu0 0.0
  %5669 = vmatprep.subr.mxu0 0.0
  %5670 = vmatpush1.msra.mxu0 0.0
  %5671 = vmatprep.subr.mxu0 0.0
  %5672 = vmatpush1.msra.mxu0 0.0
  %5673 = vmatprep.subr.mxu0 0.0
  %5674 = vmatpush1.msra.mxu0 0.0
  %5675 = vmatprep.mubr.f32.mxu0 0.0
  %5676 = vmatmul.mubr.f32.gmra.mrb[0].mxu0 %v5475
  %v5677 = vpop.f32.mrb[0].mxu0
  %v5678 = vadd.f32 0.0, %v5677
  %v5679 = vpop.f32.mrb[0].mxu0
  %v5680 = vadd.f32 0.0, %v5679
  %5681 = vdwg.mxu0
  %v5682 = vadd.f32 %v5471, %v5607
  %v5683 = vadd.f32 %v5472, %v5609
  %v5684 = vadd.f32 %v5473, %v5678
  %v5685 = vadd.f32 %v5474, %v5680
  %v5686 = vld [vmem:[%s4] sm:$0xf]
  %v5688 = vlaneseq
  %v5689 = vshrl.u32 %v5688, 7
  %v5690 = vsub.s32 0, %v5689
  %v5691 = vrot.slane %v5686, %v5690
  %v5692 = vlaneseq
  %v5693 = vshrl.u32 %v5692, 7
  %v5694 = vsub.s32 1, %v5693
  %v5695 = vrot.slane %v5686, %v5694
  %v5696 = vlaneseq
  %v5697 = vshrl.u32 %v5696, 7
  %v5698 = vsub.s32 2, %v5697
  %v5699 = vrot.slane %v5686, %v5698
  %v5700 = vlaneseq
  %v5701 = vshrl.u32 %v5700, 7
  %v5702 = vsub.s32 3, %v5701
  %v5703 = vrot.slane %v5686, %v5702
  %v5708 = vadd.f32 %v5682, %v5691
  %v5709 = vadd.f32 %v5683, %v5695
  %v5710 = vadd.f32 %v5684, %v5699
  %v5711 = vadd.f32 %v5685, %v5703
  %v5712 = vld [vmem:[%s11] sm:$0xff]
  %v5713 = vxor.u32 %v5708, 2147483648
  %v5714 = vmul.f32 %v5713, 1.442695
  %v5715 = vpow.pop %v5714
  %v5716 = vadd.f32 %v5715, 1.0
  %v5717 = vrcp.pop %v5716
  %v5718 = vmul.f32 1.0, %v5717
  %v5719 = vxor.u32 %v5709, 2147483648
  %v5720 = vmul.f32 %v5719, 1.442695
  %v5721 = vpow.pop %v5720
  %v5722 = vadd.f32 %v5721, 1.0
  %v5723 = vrcp.pop %v5722
  %v5724 = vmul.f32 1.0, %v5723
  %v5725 = vtanh.pop %v5710
  %v5726 = vxor.u32 %v5711, 2147483648
  %v5727 = vmul.f32 %v5726, 1.442695
  %v5728 = vpow.pop %v5727
  %v5729 = vadd.f32 %v5728, 1.0
  %v5730 = vrcp.pop %v5729
  %v5731 = vmul.f32 1.0, %v5730
  %v5732 = vmul.f32 %v5724, %v5712
  %v5733 = vmul.f32 %v5718, %v5725
  %v5734 = vadd.f32 %v5732, %v5733
  %v5735 = vtanh.pop %v5734
  %v5736 = vmul.f32 %v5731, %v5735
  %5737 = vst [vmem:[%s10] sm:$0xff] %v5736
  %5738 = vst [vmem:[%s11] sm:$0xff] %v5734
  %v5739 = vld [vmem:[%s1178] sm:$0xff]
  %v5740 = vld [vmem:[%s3] sm:$0xff]
  %v5741 = vld [vmem:[%s3 + $0x8] sm:$0xff]
  %v5742 = vld [vmem:[%s3 + $0x10] sm:$0xff]
  %v5743 = vld [vmem:[%s3 + $0x18] sm:$0xff]
  %v5744 = vld [vmem:[%s3 + $0x20] sm:$0xff]
  %v5745 = vld [vmem:[%s3 + $0x28] sm:$0xff]
  %v5746 = vld [vmem:[%s3 + $0x30] sm:$0xff]
  %v5747 = vld [vmem:[%s3 + $0x38] sm:$0xff]
  %v5748 = vld [vmem:[%s3 + $0x40] sm:$0xff]
  %v5749 = vld [vmem:[%s3 + $0x48] sm:$0xff]
  %v5750 = vld [vmem:[%s3 + $0x50] sm:$0xff]
  %v5751 = vld [vmem:[%s3 + $0x58] sm:$0xff]
  %v5752 = vld [vmem:[%s3 + $0x60] sm:$0xff]
  %v5753 = vld [vmem:[%s3 + $0x68] sm:$0xff]
  %v5754 = vld [vmem:[%s3 + $0x70] sm:$0xff]
  %v5755 = vld [vmem:[%s3 + $0x78] sm:$0xff]
  %v5756 = vld [vmem:[%s3 + $0x80] sm:$0xff]
  %v5757 = vld [vmem:[%s3 + $0x88] sm:$0xff]
  %v5758 = vld [vmem:[%s3 + $0x90] sm:$0xff]
  %v5759 = vld [vmem:[%s3 + $0x98] sm:$0xff]
  %v5760 = vld [vmem:[%s3 + $0xa0] sm:$0xff]
  %v5761 = vld [vmem:[%s3 + $0xa8] sm:$0xff]
  %v5762 = vld [vmem:[%s3 + $0xb0] sm:$0xff]
  %v5763 = vld [vmem:[%s3 + $0xb8] sm:$0xff]
  %v5764 = vld [vmem:[%s3 + $0xc0] sm:$0xff]
  %v5765 = vld [vmem:[%s3 + $0xc8] sm:$0xff]
  %v5766 = vld [vmem:[%s3 + $0xd0] sm:$0xff]
  %v5767 = vld [vmem:[%s3 + $0xd8] sm:$0xff]
  %v5768 = vld [vmem:[%s3 + $0xe0] sm:$0xff]
  %v5769 = vld [vmem:[%s3 + $0xe8] sm:$0xff]
  %v5770 = vld [vmem:[%s3 + $0xf0] sm:$0xff]
  %v5771 = vld [vmem:[%s3 + $0xf8] sm:$0xff]
  %v5772 = vld [vmem:[%s3 + $0x100] sm:$0xff]
  %v5773 = vld [vmem:[%s3 + $0x108] sm:$0xff]
  %v5774 = vld [vmem:[%s3 + $0x110] sm:$0xff]
  %v5775 = vld [vmem:[%s3 + $0x118] sm:$0xff]
  %v5776 = vld [vmem:[%s3 + $0x120] sm:$0xff]
  %v5777 = vld [vmem:[%s3 + $0x128] sm:$0xff]
  %v5778 = vld [vmem:[%s3 + $0x130] sm:$0xff]
  %v5779 = vld [vmem:[%s3 + $0x138] sm:$0xff]
  %v5780 = vld [vmem:[%s3 + $0x140] sm:$0xff]
  %v5781 = vld [vmem:[%s3 + $0x148] sm:$0xff]
  %v5782 = vld [vmem:[%s3 + $0x150] sm:$0xff]
  %v5783 = vld [vmem:[%s3 + $0x158] sm:$0xff]
  %v5784 = vld [vmem:[%s3 + $0x160] sm:$0xff]
  %v5785 = vld [vmem:[%s3 + $0x168] sm:$0xff]
  %v5786 = vld [vmem:[%s3 + $0x170] sm:$0xff]
  %v5787 = vld [vmem:[%s3 + $0x178] sm:$0xff]
  %v5788 = vld [vmem:[%s3 + $0x180] sm:$0xff]
  %v5789 = vld [vmem:[%s3 + $0x188] sm:$0xff]
  %v5790 = vld [vmem:[%s3 + $0x190] sm:$0xff]
  %v5791 = vld [vmem:[%s3 + $0x198] sm:$0xff]
  %v5792 = vld [vmem:[%s3 + $0x1a0] sm:$0xff]
  %v5793 = vld [vmem:[%s3 + $0x1a8] sm:$0xff]
  %v5794 = vld [vmem:[%s3 + $0x1b0] sm:$0xff]
  %v5795 = vld [vmem:[%s3 + $0x1b8] sm:$0xff]
  %v5796 = vld [vmem:[%s3 + $0x1c0] sm:$0xff]
  %v5797 = vld [vmem:[%s3 + $0x1c8] sm:$0xff]
  %v5798 = vld [vmem:[%s3 + $0x1d0] sm:$0xff]
  %v5799 = vld [vmem:[%s3 + $0x1d8] sm:$0xff]
  %v5800 = vld [vmem:[%s3 + $0x1e0] sm:$0xff]
  %v5801 = vld [vmem:[%s3 + $0x1e8] sm:$0xff]
  %v5802 = vld [vmem:[%s3 + $0x1f0] sm:$0xff]
  %v5803 = vld [vmem:[%s3 + $0x1f8] sm:$0xff]
  %v5804 = vld [vmem:[%s3 + $0x200] sm:$0xff]
  %v5805 = vld [vmem:[%s3 + $0x208] sm:$0xff]
  %v5806 = vld [vmem:[%s3 + $0x210] sm:$0xff]
  %v5807 = vld [vmem:[%s3 + $0x218] sm:$0xff]
  %v5808 = vld [vmem:[%s3 + $0x220] sm:$0xff]
  %v5809 = vld [vmem:[%s3 + $0x228] sm:$0xff]
  %v5810 = vld [vmem:[%s3 + $0x230] sm:$0xff]
  %v5811 = vld [vmem:[%s3 + $0x238] sm:$0xff]
  %v5812 = vld [vmem:[%s3 + $0x240] sm:$0xff]
  %v5813 = vld [vmem:[%s3 + $0x248] sm:$0xff]
  %v5814 = vld [vmem:[%s3 + $0x250] sm:$0xff]
  %v5815 = vld [vmem:[%s3 + $0x258] sm:$0xff]
  %v5816 = vld [vmem:[%s3 + $0x260] sm:$0xff]
  %v5817 = vld [vmem:[%s3 + $0x268] sm:$0xff]
  %v5818 = vld [vmem:[%s3 + $0x270] sm:$0xff]
  %v5819 = vld [vmem:[%s3 + $0x278] sm:$0xff]
  %v5820 = vld [vmem:[%s3 + $0x280] sm:$0xff]
  %v5821 = vld [vmem:[%s3 + $0x288] sm:$0xff]
  %v5822 = vld [vmem:[%s3 + $0x290] sm:$0xff]
  %v5823 = vld [vmem:[%s3 + $0x298] sm:$0xff]
  %v5824 = vld [vmem:[%s3 + $0x2a0] sm:$0xff]
  %v5825 = vld [vmem:[%s3 + $0x2a8] sm:$0xff]
  %v5826 = vld [vmem:[%s3 + $0x2b0] sm:$0xff]
  %v5827 = vld [vmem:[%s3 + $0x2b8] sm:$0xff]
  %v5828 = vld [vmem:[%s3 + $0x2c0] sm:$0xff]
  %v5829 = vld [vmem:[%s3 + $0x2c8] sm:$0xff]
  %v5830 = vld [vmem:[%s3 + $0x2d0] sm:$0xff]
  %v5831 = vld [vmem:[%s3 + $0x2d8] sm:$0xff]
  %v5832 = vld [vmem:[%s3 + $0x2e0] sm:$0xff]
  %v5833 = vld [vmem:[%s3 + $0x2e8] sm:$0xff]
  %v5834 = vld [vmem:[%s3 + $0x2f0] sm:$0xff]
  %v5835 = vld [vmem:[%s3 + $0x2f8] sm:$0xff]
  %v5836 = vld [vmem:[%s3 + $0x300] sm:$0xff]
  %v5837 = vld [vmem:[%s3 + $0x308] sm:$0xff]
  %v5838 = vld [vmem:[%s3 + $0x310] sm:$0xff]
  %v5839 = vld [vmem:[%s3 + $0x318] sm:$0xff]
  %v5840 = vld [vmem:[%s3 + $0x320] sm:$0xff]
  %v5841 = vld [vmem:[%s3 + $0x328] sm:$0xff]
  %v5842 = vld [vmem:[%s3 + $0x330] sm:$0xff]
  %v5843 = vld [vmem:[%s3 + $0x338] sm:$0xff]
  %v5844 = vld [vmem:[%s3 + $0x340] sm:$0xff]
  %v5845 = vld [vmem:[%s3 + $0x348] sm:$0xff]
  %v5846 = vld [vmem:[%s3 + $0x350] sm:$0xff]
  %v5847 = vld [vmem:[%s3 + $0x358] sm:$0xff]
  %v5848 = vld [vmem:[%s3 + $0x360] sm:$0xff]
  %v5849 = vld [vmem:[%s3 + $0x368] sm:$0xff]
  %v5850 = vld [vmem:[%s3 + $0x370] sm:$0xff]
  %v5851 = vld [vmem:[%s3 + $0x378] sm:$0xff]
  %v5852 = vld [vmem:[%s3 + $0x380] sm:$0xff]
  %v5853 = vld [vmem:[%s3 + $0x388] sm:$0xff]
  %v5854 = vld [vmem:[%s3 + $0x390] sm:$0xff]
  %v5855 = vld [vmem:[%s3 + $0x398] sm:$0xff]
  %v5856 = vld [vmem:[%s3 + $0x3a0] sm:$0xff]
  %v5857 = vld [vmem:[%s3 + $0x3a8] sm:$0xff]
  %v5858 = vld [vmem:[%s3 + $0x3b0] sm:$0xff]
  %v5859 = vld [vmem:[%s3 + $0x3b8] sm:$0xff]
  %v5860 = vld [vmem:[%s3 + $0x3c0] sm:$0xff]
  %v5861 = vld [vmem:[%s3 + $0x3c8] sm:$0xff]
  %v5862 = vld [vmem:[%s3 + $0x3d0] sm:$0xff]
  %v5863 = vld [vmem:[%s3 + $0x3d8] sm:$0xff]
  %v5864 = vld [vmem:[%s3 + $0x3e0] sm:$0xff]
  %v5865 = vld [vmem:[%s3 + $0x3e8] sm:$0xff]
  %v5866 = vld [vmem:[%s3 + $0x3f0] sm:$0xff]
  %v5867 = vld [vmem:[%s3 + $0x3f8] sm:$0xff]
  %v5868 = vld [vmem:[%s1308] sm:$0xf]
  %v5870 = vlaneseq
  %v5871 = vshrl.u32 %v5870, 7
  %v5872 = vsub.s32 0, %v5871
  %v5873 = vrot.slane %v5868, %v5872
  %v5874 = vlaneseq
  %v5875 = vshrl.u32 %v5874, 7
  %v5876 = vsub.s32 1, %v5875
  %v5877 = vrot.slane %v5868, %v5876
  %v5878 = vlaneseq
  %v5879 = vshrl.u32 %v5878, 7
  %v5880 = vsub.s32 2, %v5879
  %v5881 = vrot.slane %v5868, %v5880
  %v5882 = vlaneseq
  %v5883 = vshrl.u32 %v5882, 7
  %v5884 = vsub.s32 3, %v5883
  %v5885 = vrot.slane %v5868, %v5884
  %5890 = vmatprep.subr.mxu0 %v5741
  %5891 = vmatpush1.msra.mxu0 %v5740
  %5892 = vmatprep.subr.mxu0 %v5745
  %5893 = vmatpush1.msra.mxu0 %v5744
  %5894 = vmatprep.subr.mxu0 %v5749
  %5895 = vmatpush1.msra.mxu0 %v5748
  %5896 = vmatprep.subr.mxu0 %v5753
  %5897 = vmatpush1.msra.mxu0 %v5752
  %5898 = vmatprep.subr.mxu0 %v5757
  %5899 = vmatpush1.msra.mxu0 %v5756
  %5900 = vmatprep.subr.mxu0 %v5761
  %5901 = vmatpush1.msra.mxu0 %v5760
  %5902 = vmatprep.subr.mxu0 %v5765
  %5903 = vmatpush1.msra.mxu0 %v5764
  %5904 = vmatprep.subr.mxu0 %v5769
  %5905 = vmatpush1.msra.mxu0 %v5768
  %5906 = vmatprep.subr.mxu0 %v5773
  %5907 = vmatpush1.msra.mxu0 %v5772
  %5908 = vmatprep.subr.mxu0 %v5777
  %5909 = vmatpush1.msra.mxu0 %v5776
  %5910 = vmatprep.subr.mxu0 %v5781
  %5911 = vmatpush1.msra.mxu0 %v5780
  %5912 = vmatprep.subr.mxu0 %v5785
  %5913 = vmatpush1.msra.mxu0 %v5784
  %5914 = vmatprep.subr.mxu0 %v5789
  %5915 = vmatpush1.msra.mxu0 %v5788
  %5916 = vmatprep.subr.mxu0 %v5793
  %5917 = vmatpush1.msra.mxu0 %v5792
  %5918 = vmatprep.subr.mxu0 %v5797
  %5919 = vmatpush1.msra.mxu0 %v5796
  %5920 = vmatprep.subr.mxu0 %v5801
  %5921 = vmatpush1.msra.mxu0 %v5800
  %5922 = vmatprep.subr.mxu0 %v5805
  %5923 = vmatpush1.msra.mxu0 %v5804
  %5924 = vmatprep.subr.mxu0 %v5809
  %5925 = vmatpush1.msra.mxu0 %v5808
  %5926 = vmatprep.subr.mxu0 %v5813
  %5927 = vmatpush1.msra.mxu0 %v5812
  %5928 = vmatprep.subr.mxu0 %v5817
  %5929 = vmatpush1.msra.mxu0 %v5816
  %5930 = vmatprep.subr.mxu0 %v5821
  %5931 = vmatpush1.msra.mxu0 %v5820
  %5932 = vmatprep.subr.mxu0 %v5825
  %5933 = vmatpush1.msra.mxu0 %v5824
  %5934 = vmatprep.subr.mxu0 %v5829
  %5935 = vmatpush1.msra.mxu0 %v5828
  %5936 = vmatprep.subr.mxu0 %v5833
  %5937 = vmatpush1.msra.mxu0 %v5832
  %5938 = vmatprep.subr.mxu0 %v5837
  %5939 = vmatpush1.msra.mxu0 %v5836
  %5940 = vmatprep.subr.mxu0 %v5841
  %5941 = vmatpush1.msra.mxu0 %v5840
  %5942 = vmatprep.subr.mxu0 %v5845
  %5943 = vmatpush1.msra.mxu0 %v5844
  %5944 = vmatprep.subr.mxu0 %v5849
  %5945 = vmatpush1.msra.mxu0 %v5848
  %5946 = vmatprep.subr.mxu0 %v5853
  %5947 = vmatpush1.msra.mxu0 %v5852
  %5948 = vmatprep.subr.mxu0 %v5857
  %5949 = vmatpush1.msra.mxu0 %v5856
  %5950 = vmatprep.subr.mxu0 %v5861
  %5951 = vmatpush1.msra.mxu0 %v5860
  %5952 = vmatprep.subr.mxu0 %v5865
  %5953 = vmatpush1.msra.mxu0 %v5864
  %5954 = vmatprep.mubr.f32.mxu0 %v5739
  %5955 = vmatmul.mubr.f32.gmra.mrb[0].mxu0 %v5736
  %v5956 = vpop.f32.mrb[0].mxu0
  %v5957 = vadd.f32 %v5873, %v5956
  %v5958 = vpop.f32.mrb[0].mxu0
  %v5959 = vadd.f32 %v5877, %v5958
  %5960 = vdwg.mxu0
  %5961 = vmatprep.subr.mxu0 %v5743
  %5962 = vmatpush1.msra.mxu0 %v5742
  %5963 = vmatprep.subr.mxu0 %v5747
  %5964 = vmatpush1.msra.mxu0 %v5746
  %5965 = vmatprep.subr.mxu0 %v5751
  %5966 = vmatpush1.msra.mxu0 %v5750
  %5967 = vmatprep.subr.mxu0 %v5755
  %5968 = vmatpush1.msra.mxu0 %v5754
  %5969 = vmatprep.subr.mxu0 %v5759
  %5970 = vmatpush1.msra.mxu0 %v5758
  %5971 = vmatprep.subr.mxu0 %v5763
  %5972 = vmatpush1.msra.mxu0 %v5762
  %5973 = vmatprep.subr.mxu0 %v5767
  %5974 = vmatpush1.msra.mxu0 %v5766
  %5975 = vmatprep.subr.mxu0 %v5771
  %5976 = vmatpush1.msra.mxu0 %v5770
  %5977 = vmatprep.subr.mxu0 %v5775
  %5978 = vmatpush1.msra.mxu0 %v5774
  %5979 = vmatprep.subr.mxu0 %v5779
  %5980 = vmatpush1.msra.mxu0 %v5778
  %5981 = vmatprep.subr.mxu0 %v5783
  %5982 = vmatpush1.msra.mxu0 %v5782
  %5983 = vmatprep.subr.mxu0 %v5787
  %5984 = vmatpush1.msra.mxu0 %v5786
  %5985 = vmatprep.subr.mxu0 %v5791
  %5986 = vmatpush1.msra.mxu0 %v5790
  %5987 = vmatprep.subr.mxu0 %v5795
  %5988 = vmatpush1.msra.mxu0 %v5794
  %5989 = vmatprep.subr.mxu0 %v5799
  %5990 = vmatpush1.msra.mxu0 %v5798
  %5991 = vmatprep.subr.mxu0 %v5803
  %5992 = vmatpush1.msra.mxu0 %v5802
  %5993 = vmatprep.subr.mxu0 %v5807
  %5994 = vmatpush1.msra.mxu0 %v5806
  %5995 = vmatprep.subr.mxu0 %v5811
  %5996 = vmatpush1.msra.mxu0 %v5810
  %5997 = vmatprep.subr.mxu0 %v5815
  %5998 = vmatpush1.msra.mxu0 %v5814
  %5999 = vmatprep.subr.mxu0 %v5819
  %6000 = vmatpush1.msra.mxu0 %v5818
  %6001 = vmatprep.subr.mxu0 %v5823
  %6002 = vmatpush1.msra.mxu0 %v5822
  %6003 = vmatprep.subr.mxu0 %v5827
  %6004 = vmatpush1.msra.mxu0 %v5826
  %6005 = vmatprep.subr.mxu0 %v5831
  %6006 = vmatpush1.msra.mxu0 %v5830
  %6007 = vmatprep.subr.mxu0 %v5835
  %6008 = vmatpush1.msra.mxu0 %v5834
  %6009 = vmatprep.subr.mxu0 %v5839
  %6010 = vmatpush1.msra.mxu0 %v5838
  %6011 = vmatprep.subr.mxu0 %v5843
  %6012 = vmatpush1.msra.mxu0 %v5842
  %6013 = vmatprep.subr.mxu0 %v5847
  %6014 = vmatpush1.msra.mxu0 %v5846
  %6015 = vmatprep.subr.mxu0 %v5851
  %6016 = vmatpush1.msra.mxu0 %v5850
  %6017 = vmatprep.subr.mxu0 %v5855
  %6018 = vmatpush1.msra.mxu0 %v5854
  %6019 = vmatprep.subr.mxu0 %v5859
  %6020 = vmatpush1.msra.mxu0 %v5858
  %6021 = vmatprep.subr.mxu0 %v5863
  %6022 = vmatpush1.msra.mxu0 %v5862
  %6023 = vmatprep.subr.mxu0 %v5867
  %6024 = vmatpush1.msra.mxu0 %v5866
  %6025 = vmatprep.mubr.f32.mxu0 %v5739
  %6026 = vmatmul.mubr.f32.gmra.mrb[0].mxu0 %v5736
  %v6027 = vpop.f32.mrb[0].mxu0
  %v6028 = vadd.f32 %v5881, %v6027
  %v6029 = vpop.f32.mrb[0].mxu0
  %v6030 = vadd.f32 %v5885, %v6029
  %6031 = vdwg.mxu0
  %v6032 = vld [vmem:[%s1473] sm:$0xff]
  %v6033 = vxor.u32 %v5957, 2147483648
  %v6034 = vmul.f32 %v6033, 1.442695
  %v6035 = vpow.pop %v6034
  %v6036 = vadd.f32 %v6035, 1.0
  %v6037 = vrcp.pop %v6036
  %v6038 = vmul.f32 1.0, %v6037
  %v6039 = vxor.u32 %v5959, 2147483648
  %v6040 = vmul.f32 %v6039, 1.442695
  %v6041 = vpow.pop %v6040
  %v6042 = vadd.f32 %v6041, 1.0
  %v6043 = vrcp.pop %v6042
  %v6044 = vmul.f32 1.0, %v6043
  %v6045 = vtanh.pop %v6028
  %v6046 = vxor.u32 %v6030, 2147483648
  %v6047 = vmul.f32 %v6046, 1.442695
  %v6048 = vpow.pop %v6047
  %v6049 = vadd.f32 %v6048, 1.0
  %v6050 = vrcp.pop %v6049
  %v6051 = vmul.f32 1.0, %v6050
  %v6052 = vmul.f32 %v6044, %v6032
  %v6053 = vmul.f32 %v6038, %v6045
  %v6054 = vadd.f32 %v6052, %v6053
  %v6055 = vtanh.pop %v6054
  %v6056 = vmul.f32 %v6051, %v6055
  %6057 = vst [vmem:[%s1178] sm:$0xff] %v6056
  %6058 = vst [vmem:[%s1473] sm:$0xff] %v6054
  %v6059 = vld [vmem:[%s1501] sm:$0xff]
  %v6060 = vld [vmem:[%s1503] sm:$0xff]
  %v6061 = vld [vmem:[%s1503 + $0x8] sm:$0xff]
  %v6062 = vld [vmem:[%s1503 + $0x10] sm:$0xff]
  %v6063 = vld [vmem:[%s1503 + $0x18] sm:$0xff]
  %v6064 = vld [vmem:[%s1503 + $0x20] sm:$0xff]
  %v6065 = vld [vmem:[%s1503 + $0x28] sm:$0xff]
  %v6066 = vld [vmem:[%s1503 + $0x30] sm:$0xff]
  %v6067 = vld [vmem:[%s1503 + $0x38] sm:$0xff]
  %v6068 = vld [vmem:[%s1503 + $0x40] sm:$0xff]
  %v6069 = vld [vmem:[%s1503 + $0x48] sm:$0xff]
  %v6070 = vld [vmem:[%s1503 + $0x50] sm:$0xff]
  %v6071 = vld [vmem:[%s1503 + $0x58] sm:$0xff]
  %v6072 = vld [vmem:[%s1503 + $0x60] sm:$0xff]
  %v6073 = vld [vmem:[%s1503 + $0x68] sm:$0xff]
  %v6074 = vld [vmem:[%s1503 + $0x70] sm:$0xff]
  %v6075 = vld [vmem:[%s1503 + $0x78] sm:$0xff]
  %v6076 = vld [vmem:[%s1503 + $0x80] sm:$0xff]
  %v6077 = vld [vmem:[%s1503 + $0x88] sm:$0xff]
  %v6078 = vld [vmem:[%s1503 + $0x90] sm:$0xff]
  %v6079 = vld [vmem:[%s1503 + $0x98] sm:$0xff]
  %v6080 = vld [vmem:[%s1503 + $0xa0] sm:$0xff]
  %v6081 = vld [vmem:[%s1503 + $0xa8] sm:$0xff]
  %v6082 = vld [vmem:[%s1503 + $0xb0] sm:$0xff]
  %v6083 = vld [vmem:[%s1503 + $0xb8] sm:$0xff]
  %v6084 = vld [vmem:[%s1503 + $0xc0] sm:$0xff]
  %v6085 = vld [vmem:[%s1503 + $0xc8] sm:$0xff]
  %v6086 = vld [vmem:[%s1503 + $0xd0] sm:$0xff]
  %v6087 = vld [vmem:[%s1503 + $0xd8] sm:$0xff]
  %v6088 = vld [vmem:[%s1503 + $0xe0] sm:$0xff]
  %v6089 = vld [vmem:[%s1503 + $0xe8] sm:$0xff]
  %v6090 = vld [vmem:[%s1503 + $0xf0] sm:$0xff]
  %v6091 = vld [vmem:[%s1503 + $0xf8] sm:$0xff]
  %v6092 = vld [vmem:[%s1503 + $0x100] sm:$0xff]
  %v6093 = vld [vmem:[%s1503 + $0x108] sm:$0xff]
  %v6094 = vld [vmem:[%s1503 + $0x110] sm:$0xff]
  %v6095 = vld [vmem:[%s1503 + $0x118] sm:$0xff]
  %v6096 = vld [vmem:[%s1503 + $0x120] sm:$0xff]
  %v6097 = vld [vmem:[%s1503 + $0x128] sm:$0xff]
  %v6098 = vld [vmem:[%s1503 + $0x130] sm:$0xff]
  %v6099 = vld [vmem:[%s1503 + $0x138] sm:$0xff]
  %v6100 = vld [vmem:[%s1503 + $0x140] sm:$0xff]
  %v6101 = vld [vmem:[%s1503 + $0x148] sm:$0xff]
  %v6102 = vld [vmem:[%s1503 + $0x150] sm:$0xff]
  %v6103 = vld [vmem:[%s1503 + $0x158] sm:$0xff]
  %v6104 = vld [vmem:[%s1503 + $0x160] sm:$0xff]
  %v6105 = vld [vmem:[%s1503 + $0x168] sm:$0xff]
  %v6106 = vld [vmem:[%s1503 + $0x170] sm:$0xff]
  %v6107 = vld [vmem:[%s1503 + $0x178] sm:$0xff]
  %v6108 = vld [vmem:[%s1503 + $0x180] sm:$0xff]
  %v6109 = vld [vmem:[%s1503 + $0x188] sm:$0xff]
  %v6110 = vld [vmem:[%s1503 + $0x190] sm:$0xff]
  %v6111 = vld [vmem:[%s1503 + $0x198] sm:$0xff]
  %v6112 = vld [vmem:[%s1503 + $0x1a0] sm:$0xff]
  %v6113 = vld [vmem:[%s1503 + $0x1a8] sm:$0xff]
  %v6114 = vld [vmem:[%s1503 + $0x1b0] sm:$0xff]
  %v6115 = vld [vmem:[%s1503 + $0x1b8] sm:$0xff]
  %v6116 = vld [vmem:[%s1503 + $0x1c0] sm:$0xff]
  %v6117 = vld [vmem:[%s1503 + $0x1c8] sm:$0xff]
  %v6118 = vld [vmem:[%s1503 + $0x1d0] sm:$0xff]
  %v6119 = vld [vmem:[%s1503 + $0x1d8] sm:$0xff]
  %v6120 = vld [vmem:[%s1503 + $0x1e0] sm:$0xff]
  %v6121 = vld [vmem:[%s1503 + $0x1e8] sm:$0xff]
  %v6122 = vld [vmem:[%s1503 + $0x1f0] sm:$0xff]
  %v6123 = vld [vmem:[%s1503 + $0x1f8] sm:$0xff]
  %v6124 = vld [vmem:[%s1503 + $0x200] sm:$0xff]
  %v6125 = vld [vmem:[%s1503 + $0x208] sm:$0xff]
  %v6126 = vld [vmem:[%s1503 + $0x210] sm:$0xff]
  %v6127 = vld [vmem:[%s1503 + $0x218] sm:$0xff]
  %v6128 = vld [vmem:[%s1503 + $0x220] sm:$0xff]
  %v6129 = vld [vmem:[%s1503 + $0x228] sm:$0xff]
  %v6130 = vld [vmem:[%s1503 + $0x230] sm:$0xff]
  %v6131 = vld [vmem:[%s1503 + $0x238] sm:$0xff]
  %v6132 = vld [vmem:[%s1503 + $0x240] sm:$0xff]
  %v6133 = vld [vmem:[%s1503 + $0x248] sm:$0xff]
  %v6134 = vld [vmem:[%s1503 + $0x250] sm:$0xff]
  %v6135 = vld [vmem:[%s1503 + $0x258] sm:$0xff]
  %v6136 = vld [vmem:[%s1503 + $0x260] sm:$0xff]
  %v6137 = vld [vmem:[%s1503 + $0x268] sm:$0xff]
  %v6138 = vld [vmem:[%s1503 + $0x270] sm:$0xff]
  %v6139 = vld [vmem:[%s1503 + $0x278] sm:$0xff]
  %v6140 = vld [vmem:[%s1503 + $0x280] sm:$0xff]
  %v6141 = vld [vmem:[%s1503 + $0x288] sm:$0xff]
  %v6142 = vld [vmem:[%s1503 + $0x290] sm:$0xff]
  %v6143 = vld [vmem:[%s1503 + $0x298] sm:$0xff]
  %v6144 = vld [vmem:[%s1503 + $0x2a0] sm:$0xff]
  %v6145 = vld [vmem:[%s1503 + $0x2a8] sm:$0xff]
  %v6146 = vld [vmem:[%s1503 + $0x2b0] sm:$0xff]
  %v6147 = vld [vmem:[%s1503 + $0x2b8] sm:$0xff]
  %v6148 = vld [vmem:[%s1503 + $0x2c0] sm:$0xff]
  %v6149 = vld [vmem:[%s1503 + $0x2c8] sm:$0xff]
  %v6150 = vld [vmem:[%s1503 + $0x2d0] sm:$0xff]
  %v6151 = vld [vmem:[%s1503 + $0x2d8] sm:$0xff]
  %v6152 = vld [vmem:[%s1503 + $0x2e0] sm:$0xff]
  %v6153 = vld [vmem:[%s1503 + $0x2e8] sm:$0xff]
  %v6154 = vld [vmem:[%s1503 + $0x2f0] sm:$0xff]
  %v6155 = vld [vmem:[%s1503 + $0x2f8] sm:$0xff]
  %v6156 = vld [vmem:[%s1503 + $0x300] sm:$0xff]
  %v6157 = vld [vmem:[%s1503 + $0x308] sm:$0xff]
  %v6158 = vld [vmem:[%s1503 + $0x310] sm:$0xff]
  %v6159 = vld [vmem:[%s1503 + $0x318] sm:$0xff]
  %v6160 = vld [vmem:[%s1503 + $0x320] sm:$0xff]
  %v6161 = vld [vmem:[%s1503 + $0x328] sm:$0xff]
  %v6162 = vld [vmem:[%s1503 + $0x330] sm:$0xff]
  %v6163 = vld [vmem:[%s1503 + $0x338] sm:$0xff]
  %v6164 = vld [vmem:[%s1503 + $0x340] sm:$0xff]
  %v6165 = vld [vmem:[%s1503 + $0x348] sm:$0xff]
  %v6166 = vld [vmem:[%s1503 + $0x350] sm:$0xff]
  %v6167 = vld [vmem:[%s1503 + $0x358] sm:$0xff]
  %v6168 = vld [vmem:[%s1503 + $0x360] sm:$0xff]
  %v6169 = vld [vmem:[%s1503 + $0x368] sm:$0xff]
  %v6170 = vld [vmem:[%s1503 + $0x370] sm:$0xff]
  %v6171 = vld [vmem:[%s1503 + $0x378] sm:$0xff]
  %v6172 = vld [vmem:[%s1503 + $0x380] sm:$0xff]
  %v6173 = vld [vmem:[%s1503 + $0x388] sm:$0xff]
  %v6174 = vld [vmem:[%s1503 + $0x390] sm:$0xff]
  %v6175 = vld [vmem:[%s1503 + $0x398] sm:$0xff]
  %v6176 = vld [vmem:[%s1503 + $0x3a0] sm:$0xff]
  %v6177 = vld [vmem:[%s1503 + $0x3a8] sm:$0xff]
  %v6178 = vld [vmem:[%s1503 + $0x3b0] sm:$0xff]
  %v6179 = vld [vmem:[%s1503 + $0x3b8] sm:$0xff]
  %v6180 = vld [vmem:[%s1503 + $0x3c0] sm:$0xff]
  %v6181 = vld [vmem:[%s1503 + $0x3c8] sm:$0xff]
  %v6182 = vld [vmem:[%s1503 + $0x3d0] sm:$0xff]
  %v6183 = vld [vmem:[%s1503 + $0x3d8] sm:$0xff]
  %v6184 = vld [vmem:[%s1503 + $0x3e0] sm:$0xff]
  %v6185 = vld [vmem:[%s1503 + $0x3e8] sm:$0xff]
  %v6186 = vld [vmem:[%s1503 + $0x3f0] sm:$0xff]
  %v6187 = vld [vmem:[%s1503 + $0x3f8] sm:$0xff]
  %v6188 = vld [vmem:[%s1632] sm:$0xf]
  %v6190 = vlaneseq
  %v6191 = vshrl.u32 %v6190, 7
  %v6192 = vsub.s32 0, %v6191
  %v6193 = vrot.slane %v6188, %v6192
  %v6194 = vlaneseq
  %v6195 = vshrl.u32 %v6194, 7
  %v6196 = vsub.s32 1, %v6195
  %v6197 = vrot.slane %v6188, %v6196
  %v6198 = vlaneseq
  %v6199 = vshrl.u32 %v6198, 7
  %v6200 = vsub.s32 2, %v6199
  %v6201 = vrot.slane %v6188, %v6200
  %v6202 = vlaneseq
  %v6203 = vshrl.u32 %v6202, 7
  %v6204 = vsub.s32 3, %v6203
  %v6205 = vrot.slane %v6188, %v6204
  %6210 = vmatprep.subr.mxu0 %v6061
  %6211 = vmatpush1.msra.mxu0 %v6060
  %6212 = vmatprep.subr.mxu0 %v6065
  %6213 = vmatpush1.msra.mxu0 %v6064
  %6214 = vmatprep.subr.mxu0 %v6069
  %6215 = vmatpush1.msra.mxu0 %v6068
  %6216 = vmatprep.subr.mxu0 %v6073
  %6217 = vmatpush1.msra.mxu0 %v6072
  %6218 = vmatprep.subr.mxu0 %v6077
  %6219 = vmatpush1.msra.mxu0 %v6076
  %6220 = vmatprep.subr.mxu0 %v6081
  %6221 = vmatpush1.msra.mxu0 %v6080
  %6222 = vmatprep.subr.mxu0 %v6085
  %6223 = vmatpush1.msra.mxu0 %v6084
  %6224 = vmatprep.subr.mxu0 %v6089
  %6225 = vmatpush1.msra.mxu0 %v6088
  %6226 = vmatprep.subr.mxu0 %v6093
  %6227 = vmatpush1.msra.mxu0 %v6092
  %6228 = vmatprep.subr.mxu0 %v6097
  %6229 = vmatpush1.msra.mxu0 %v6096
  %6230 = vmatprep.subr.mxu0 %v6101
  %6231 = vmatpush1.msra.mxu0 %v6100
  %6232 = vmatprep.subr.mxu0 %v6105
  %6233 = vmatpush1.msra.mxu0 %v6104
  %6234 = vmatprep.subr.mxu0 %v6109
  %6235 = vmatpush1.msra.mxu0 %v6108
  %6236 = vmatprep.subr.mxu0 %v6113
  %6237 = vmatpush1.msra.mxu0 %v6112
  %6238 = vmatprep.subr.mxu0 %v6117
  %6239 = vmatpush1.msra.mxu0 %v6116
  %6240 = vmatprep.subr.mxu0 %v6121
  %6241 = vmatpush1.msra.mxu0 %v6120
  %6242 = vmatprep.subr.mxu0 %v6125
  %6243 = vmatpush1.msra.mxu0 %v6124
  %6244 = vmatprep.subr.mxu0 %v6129
  %6245 = vmatpush1.msra.mxu0 %v6128
  %6246 = vmatprep.subr.mxu0 %v6133
  %6247 = vmatpush1.msra.mxu0 %v6132
  %6248 = vmatprep.subr.mxu0 %v6137
  %6249 = vmatpush1.msra.mxu0 %v6136
  %6250 = vmatprep.subr.mxu0 %v6141
  %6251 = vmatpush1.msra.mxu0 %v6140
  %6252 = vmatprep.subr.mxu0 %v6145
  %6253 = vmatpush1.msra.mxu0 %v6144
  %6254 = vmatprep.subr.mxu0 %v6149
  %6255 = vmatpush1.msra.mxu0 %v6148
  %6256 = vmatprep.subr.mxu0 %v6153
  %6257 = vmatpush1.msra.mxu0 %v6152
  %6258 = vmatprep.subr.mxu0 %v6157
  %6259 = vmatpush1.msra.mxu0 %v6156
  %6260 = vmatprep.subr.mxu0 %v6161
  %6261 = vmatpush1.msra.mxu0 %v6160
  %6262 = vmatprep.subr.mxu0 %v6165
  %6263 = vmatpush1.msra.mxu0 %v6164
  %6264 = vmatprep.subr.mxu0 %v6169
  %6265 = vmatpush1.msra.mxu0 %v6168
  %6266 = vmatprep.subr.mxu0 %v6173
  %6267 = vmatpush1.msra.mxu0 %v6172
  %6268 = vmatprep.subr.mxu0 %v6177
  %6269 = vmatpush1.msra.mxu0 %v6176
  %6270 = vmatprep.subr.mxu0 %v6181
  %6271 = vmatpush1.msra.mxu0 %v6180
  %6272 = vmatprep.subr.mxu0 %v6185
  %6273 = vmatpush1.msra.mxu0 %v6184
  %6274 = vmatprep.mubr.f32.mxu0 %v6059
  %6275 = vmatmul.mubr.f32.gmra.mrb[0].mxu0 %v6056
  %v6276 = vpop.f32.mrb[0].mxu0
  %v6277 = vadd.f32 %v6193, %v6276
  %v6278 = vpop.f32.mrb[0].mxu0
  %v6279 = vadd.f32 %v6197, %v6278
  %6280 = vdwg.mxu0
  %6281 = vmatprep.subr.mxu0 %v6063
  %6282 = vmatpush1.msra.mxu0 %v6062
  %6283 = vmatprep.subr.mxu0 %v6067
  %6284 = vmatpush1.msra.mxu0 %v6066
  %6285 = vmatprep.subr.mxu0 %v6071
  %6286 = vmatpush1.msra.mxu0 %v6070
  %6287 = vmatprep.subr.mxu0 %v6075
  %6288 = vmatpush1.msra.mxu0 %v6074
  %6289 = vmatprep.subr.mxu0 %v6079
  %6290 = vmatpush1.msra.mxu0 %v6078
  %6291 = vmatprep.subr.mxu0 %v6083
  %6292 = vmatpush1.msra.mxu0 %v6082
  %6293 = vmatprep.subr.mxu0 %v6087
  %6294 = vmatpush1.msra.mxu0 %v6086
  %6295 = vmatprep.subr.mxu0 %v6091
  %6296 = vmatpush1.msra.mxu0 %v6090
  %6297 = vmatprep.subr.mxu0 %v6095
  %6298 = vmatpush1.msra.mxu0 %v6094
  %6299 = vmatprep.subr.mxu0 %v6099
  %6300 = vmatpush1.msra.mxu0 %v6098
  %6301 = vmatprep.subr.mxu0 %v6103
  %6302 = vmatpush1.msra.mxu0 %v6102
  %6303 = vmatprep.subr.mxu0 %v6107
  %6304 = vmatpush1.msra.mxu0 %v6106
  %6305 = vmatprep.subr.mxu0 %v6111
  %6306 = vmatpush1.msra.mxu0 %v6110
  %6307 = vmatprep.subr.mxu0 %v6115
  %6308 = vmatpush1.msra.mxu0 %v6114
  %6309 = vmatprep.subr.mxu0 %v6119
  %6310 = vmatpush1.msra.mxu0 %v6118
  %6311 = vmatprep.subr.mxu0 %v6123
  %6312 = vmatpush1.msra.mxu0 %v6122
  %6313 = vmatprep.subr.mxu0 %v6127
  %6314 = vmatpush1.msra.mxu0 %v6126
  %6315 = vmatprep.subr.mxu0 %v6131
  %6316 = vmatpush1.msra.mxu0 %v6130
  %6317 = vmatprep.subr.mxu0 %v6135
  %6318 = vmatpush1.msra.mxu0 %v6134
  %6319 = vmatprep.subr.mxu0 %v6139
  %6320 = vmatpush1.msra.mxu0 %v6138
  %6321 = vmatprep.subr.mxu0 %v6143
  %6322 = vmatpush1.msra.mxu0 %v6142
  %6323 = vmatprep.subr.mxu0 %v6147
  %6324 = vmatpush1.msra.mxu0 %v6146
  %6325 = vmatprep.subr.mxu0 %v6151
  %6326 = vmatpush1.msra.mxu0 %v6150
  %6327 = vmatprep.subr.mxu0 %v6155
  %6328 = vmatpush1.msra.mxu0 %v6154
  %6329 = vmatprep.subr.mxu0 %v6159
  %6330 = vmatpush1.msra.mxu0 %v6158
  %6331 = vmatprep.subr.mxu0 %v6163
  %6332 = vmatpush1.msra.mxu0 %v6162
  %6333 = vmatprep.subr.mxu0 %v6167
  %6334 = vmatpush1.msra.mxu0 %v6166
  %6335 = vmatprep.subr.mxu0 %v6171
  %6336 = vmatpush1.msra.mxu0 %v6170
  %6337 = vmatprep.subr.mxu0 %v6175
  %6338 = vmatpush1.msra.mxu0 %v6174
  %6339 = vmatprep.subr.mxu0 %v6179
  %6340 = vmatpush1.msra.mxu0 %v6178
  %6341 = vmatprep.subr.mxu0 %v6183
  %6342 = vmatpush1.msra.mxu0 %v6182
  %6343 = vmatprep.subr.mxu0 %v6187
  %6344 = vmatpush1.msra.mxu0 %v6186
  %6345 = vmatprep.mubr.f32.mxu0 %v6059
  %6346 = vmatmul.mubr.f32.gmra.mrb[0].mxu0 %v6056
  %v6347 = vpop.f32.mrb[0].mxu0
  %v6348 = vadd.f32 %v6201, %v6347
  %v6349 = vpop.f32.mrb[0].mxu0
  %v6350 = vadd.f32 %v6205, %v6349
  %6351 = vdwg.mxu0
  %v6352 = vld [vmem:[%s1797] sm:$0xff]
  %v6353 = vxor.u32 %v6277, 2147483648
  %v6354 = vmul.f32 %v6353, 1.442695
  %v6355 = vpow.pop %v6354
  %v6356 = vadd.f32 %v6355, 1.0
  %v6357 = vrcp.pop %v6356
  %v6358 = vmul.f32 1.0, %v6357
  %v6359 = vxor.u32 %v6279, 2147483648
  %v6360 = vmul.f32 %v6359, 1.442695
  %v6361 = vpow.pop %v6360
  %v6362 = vadd.f32 %v6361, 1.0
  %v6363 = vrcp.pop %v6362
  %v6364 = vmul.f32 1.0, %v6363
  %v6365 = vtanh.pop %v6348
  %v6366 = vxor.u32 %v6350, 2147483648
  %v6367 = vmul.f32 %v6366, 1.442695
  %v6368 = vpow.pop %v6367
  %v6369 = vadd.f32 %v6368, 1.0
  %v6370 = vrcp.pop %v6369
  %v6371 = vmul.f32 1.0, %v6370
  %v6372 = vmul.f32 %v6364, %v6352
  %v6373 = vmul.f32 %v6358, %v6365
  %v6374 = vadd.f32 %v6372, %v6373
  %v6375 = vtanh.pop %v6374
  %v6376 = vmul.f32 %v6371, %v6375
  %6377 = vst [vmem:[%s1501] sm:$0xff] %v6376
  %6378 = vst [vmem:[%s1797] sm:$0xff] %v6374
  %s6379 = scalar_lea.vmem [#allocation3], 40
  %6380 = vst [vmem:[%s6379] sm:$0xff] %v6376
  %s6381 = scalar_lea.vmem [#allocation2], 192
  %v6382 = vld [vmem:[%s6381] sm:$0xff]
  %v6383 = vld [vmem:[%s6381 + $0x8] sm:$0xff]
  %v6384 = vld [vmem:[%s6381 + $0x10] sm:$0xff]
  %v6385 = vld [vmem:[%s6381 + $0x18] sm:$0xff]
  %v6386 = vld [vmem:[%s10] sm:$0xff]
  %v6387 = vld [vmem:[%s2] sm:$0xff]
  %v6388 = vld [vmem:[%s2 + $0x8] sm:$0xff]
  %v6389 = vld [vmem:[%s2 + $0x10] sm:$0xff]
  %v6390 = vld [vmem:[%s2 + $0x18] sm:$0xff]
  %v6391 = vld [vmem:[%s2 + $0x20] sm:$0xff]
  %v6392 = vld [vmem:[%s2 + $0x28] sm:$0xff]
  %v6393 = vld [vmem:[%s2 + $0x30] sm:$0xff]
  %v6394 = vld [vmem:[%s2 + $0x38] sm:$0xff]
  %v6395 = vld [vmem:[%s2 + $0x40] sm:$0xff]
  %v6396 = vld [vmem:[%s2 + $0x48] sm:$0xff]
  %v6397 = vld [vmem:[%s2 + $0x50] sm:$0xff]
  %v6398 = vld [vmem:[%s2 + $0x58] sm:$0xff]
  %v6399 = vld [vmem:[%s2 + $0x60] sm:$0xff]
  %v6400 = vld [vmem:[%s2 + $0x68] sm:$0xff]
  %v6401 = vld [vmem:[%s2 + $0x70] sm:$0xff]
  %v6402 = vld [vmem:[%s2 + $0x78] sm:$0xff]
  %v6403 = vld [vmem:[%s2 + $0x80] sm:$0xff]
  %v6404 = vld [vmem:[%s2 + $0x88] sm:$0xff]
  %v6405 = vld [vmem:[%s2 + $0x90] sm:$0xff]
  %v6406 = vld [vmem:[%s2 + $0x98] sm:$0xff]
  %v6407 = vld [vmem:[%s2 + $0xa0] sm:$0xff]
  %v6408 = vld [vmem:[%s2 + $0xa8] sm:$0xff]
  %v6409 = vld [vmem:[%s2 + $0xb0] sm:$0xff]
  %v6410 = vld [vmem:[%s2 + $0xb8] sm:$0xff]
  %v6411 = vld [vmem:[%s2 + $0xc0] sm:$0xff]
  %v6412 = vld [vmem:[%s2 + $0xc8] sm:$0xff]
  %v6413 = vld [vmem:[%s2 + $0xd0] sm:$0xff]
  %v6414 = vld [vmem:[%s2 + $0xd8] sm:$0xff]
  %v6415 = vld [vmem:[%s2 + $0xe0] sm:$0xff]
  %v6416 = vld [vmem:[%s2 + $0xe8] sm:$0xff]
  %v6417 = vld [vmem:[%s2 + $0xf0] sm:$0xff]
  %v6418 = vld [vmem:[%s2 + $0xf8] sm:$0xff]
  %v6419 = vld [vmem:[%s2 + $0x100] sm:$0xff]
  %v6420 = vld [vmem:[%s2 + $0x108] sm:$0xff]
  %v6421 = vld [vmem:[%s2 + $0x110] sm:$0xff]
  %v6422 = vld [vmem:[%s2 + $0x118] sm:$0xff]
  %v6423 = vld [vmem:[%s2 + $0x120] sm:$0xff]
  %v6424 = vld [vmem:[%s2 + $0x128] sm:$0xff]
  %v6425 = vld [vmem:[%s2 + $0x130] sm:$0xff]
  %v6426 = vld [vmem:[%s2 + $0x138] sm:$0xff]
  %v6427 = vld [vmem:[%s2 + $0x140] sm:$0xff]
  %v6428 = vld [vmem:[%s2 + $0x148] sm:$0xff]
  %v6429 = vld [vmem:[%s2 + $0x150] sm:$0xff]
  %v6430 = vld [vmem:[%s2 + $0x158] sm:$0xff]
  %v6431 = vld [vmem:[%s2 + $0x160] sm:$0xff]
  %v6432 = vld [vmem:[%s2 + $0x168] sm:$0xff]
  %v6433 = vld [vmem:[%s2 + $0x170] sm:$0xff]
  %v6434 = vld [vmem:[%s2 + $0x178] sm:$0xff]
  %v6435 = vld [vmem:[%s2 + $0x180] sm:$0xff]
  %v6436 = vld [vmem:[%s2 + $0x188] sm:$0xff]
  %v6437 = vld [vmem:[%s2 + $0x190] sm:$0xff]
  %v6438 = vld [vmem:[%s2 + $0x198] sm:$0xff]
  %v6439 = vld [vmem:[%s2 + $0x1a0] sm:$0xff]
  %v6440 = vld [vmem:[%s2 + $0x1a8] sm:$0xff]
  %v6441 = vld [vmem:[%s2 + $0x1b0] sm:$0xff]
  %v6442 = vld [vmem:[%s2 + $0x1b8] sm:$0xff]
  %v6443 = vld [vmem:[%s2 + $0x1c0] sm:$0xff]
  %v6444 = vld [vmem:[%s2 + $0x1c8] sm:$0xff]
  %v6445 = vld [vmem:[%s2 + $0x1d0] sm:$0xff]
  %v6446 = vld [vmem:[%s2 + $0x1d8] sm:$0xff]
  %v6447 = vld [vmem:[%s2 + $0x1e0] sm:$0xff]
  %v6448 = vld [vmem:[%s2 + $0x1e8] sm:$0xff]
  %v6449 = vld [vmem:[%s2 + $0x1f0] sm:$0xff]
  %v6450 = vld [vmem:[%s2 + $0x1f8] sm:$0xff]
  %6451 = vmatprep.subr.mxu0 %v6388
  %6452 = vmatpush1.msra.mxu0 %v6387
  %6453 = vmatprep.subr.mxu0 %v6392
  %6454 = vmatpush1.msra.mxu0 %v6391
  %6455 = vmatprep.subr.mxu0 %v6396
  %6456 = vmatpush1.msra.mxu0 %v6395
  %6457 = vmatprep.subr.mxu0 %v6400
  %6458 = vmatpush1.msra.mxu0 %v6399
  %6459 = vmatprep.subr.mxu0 %v6404
  %6460 = vmatpush1.msra.mxu0 %v6403
  %6461 = vmatprep.subr.mxu0 %v6408
  %6462 = vmatpush1.msra.mxu0 %v6407
  %6463 = vmatprep.subr.mxu0 %v6412
  %6464 = vmatpush1.msra.mxu0 %v6411
  %6465 = vmatprep.subr.mxu0 %v6416
  %6466 = vmatpush1.msra.mxu0 %v6415
  %6467 = vmatprep.subr.mxu0 %v6420
  %6468 = vmatpush1.msra.mxu0 %v6419
  %6469 = vmatprep.subr.mxu0 %v6424
  %6470 = vmatpush1.msra.mxu0 %v6423
  %6471 = vmatprep.subr.mxu0 %v6428
  %6472 = vmatpush1.msra.mxu0 %v6427
  %6473 = vmatprep.subr.mxu0 %v6432
  %6474 = vmatpush1.msra.mxu0 %v6431
  %6475 = vmatprep.subr.mxu0 %v6436
  %6476 = vmatpush1.msra.mxu0 %v6435
  %6477 = vmatprep.subr.mxu0 %v6440
  %6478 = vmatpush1.msra.mxu0 %v6439
  %6479 = vmatprep.subr.mxu0 %v6444
  %6480 = vmatpush1.msra.mxu0 %v6443
  %6481 = vmatprep.subr.mxu0 %v6448
  %6482 = vmatpush1.msra.mxu0 %v6447
  %6483 = vmatprep.subr.mxu0 0.0
  %6484 = vmatpush1.msra.mxu0 0.0
  %6485 = vmatprep.subr.mxu0 0.0
  %6486 = vmatpush1.msra.mxu0 0.0
  %6487 = vmatprep.subr.mxu0 0.0
  %6488 = vmatpush1.msra.mxu0 0.0
  %6489 = vmatprep.subr.mxu0 0.0
  %6490 = vmatpush1.msra.mxu0 0.0
  %6491 = vmatprep.subr.mxu0 0.0
  %6492 = vmatpush1.msra.mxu0 0.0
  %6493 = vmatprep.subr.mxu0 0.0
  %6494 = vmatpush1.msra.mxu0 0.0
  %6495 = vmatprep.subr.mxu0 0.0
  %6496 = vmatpush1.msra.mxu0 0.0
  %6497 = vmatprep.subr.mxu0 0.0
  %6498 = vmatpush1.msra.mxu0 0.0
  %6499 = vmatprep.subr.mxu0 0.0
  %6500 = vmatpush1.msra.mxu0 0.0
  %6501 = vmatprep.subr.mxu0 0.0
  %6502 = vmatpush1.msra.mxu0 0.0
  %6503 = vmatprep.subr.mxu0 0.0
  %6504 = vmatpush1.msra.mxu0 0.0
  %6505 = vmatprep.subr.mxu0 0.0
  %6506 = vmatpush1.msra.mxu0 0.0
  %6507 = vmatprep.subr.mxu0 0.0
  %6508 = vmatpush1.msra.mxu0 0.0
  %6509 = vmatprep.subr.mxu0 0.0
  %6510 = vmatpush1.msra.mxu0 0.0
  %6511 = vmatprep.subr.mxu0 0.0
  %6512 = vmatpush1.msra.mxu0 0.0
  %6513 = vmatprep.subr.mxu0 0.0
  %6514 = vmatpush1.msra.mxu0 0.0
  %6515 = vmatprep.mubr.f32.mxu0 0.0
  %6516 = vmatmul.mubr.f32.gmra.mrb[0].mxu0 %v6386
  %v6517 = vpop.f32.mrb[0].mxu0
  %v6518 = vadd.f32 0.0, %v6517
  %v6519 = vpop.f32.mrb[0].mxu0
  %v6520 = vadd.f32 0.0, %v6519
  %6521 = vdwg.mxu0
  %6522 = vmatprep.subr.mxu0 %v6390
  %6523 = vmatpush1.msra.mxu0 %v6389
  %6524 = vmatprep.subr.mxu0 %v6394
  %6525 = vmatpush1.msra.mxu0 %v6393
  %6526 = vmatprep.subr.mxu0 %v6398
  %6527 = vmatpush1.msra.mxu0 %v6397
  %6528 = vmatprep.subr.mxu0 %v6402
  %6529 = vmatpush1.msra.mxu0 %v6401
  %6530 = vmatprep.subr.mxu0 %v6406
  %6531 = vmatpush1.msra.mxu0 %v6405
  %6532 = vmatprep.subr.mxu0 %v6410
  %6533 = vmatpush1.msra.mxu0 %v6409
  %6534 = vmatprep.subr.mxu0 %v6414
  %6535 = vmatpush1.msra.mxu0 %v6413
  %6536 = vmatprep.subr.mxu0 %v6418
  %6537 = vmatpush1.msra.mxu0 %v6417
  %6538 = vmatprep.subr.mxu0 %v6422
  %6539 = vmatpush1.msra.mxu0 %v6421
  %6540 = vmatprep.subr.mxu0 %v6426
  %6541 = vmatpush1.msra.mxu0 %v6425
  %6542 = vmatprep.subr.mxu0 %v6430
  %6543 = vmatpush1.msra.mxu0 %v6429
  %6544 = vmatprep.subr.mxu0 %v6434
  %6545 = vmatpush1.msra.mxu0 %v6433
  %6546 = vmatprep.subr.mxu0 %v6438
  %6547 = vmatpush1.msra.mxu0 %v6437
  %6548 = vmatprep.subr.mxu0 %v6442
  %6549 = vmatpush1.msra.mxu0 %v6441
  %6550 = vmatprep.subr.mxu0 %v6446
  %6551 = vmatpush1.msra.mxu0 %v6445
  %6552 = vmatprep.subr.mxu0 %v6450
  %6553 = vmatpush1.msra.mxu0 %v6449
  %6554 = vmatprep.subr.mxu0 0.0
  %6555 = vmatpush1.msra.mxu0 0.0
  %6556 = vmatprep.subr.mxu0 0.0
  %6557 = vmatpush1.msra.mxu0 0.0
  %6558 = vmatprep.subr.mxu0 0.0
  %6559 = vmatpush1.msra.mxu0 0.0
  %6560 = vmatprep.subr.mxu0 0.0
  %6561 = vmatpush1.msra.mxu0 0.0
  %6562 = vmatprep.subr.mxu0 0.0
  %6563 = vmatpush1.msra.mxu0 0.0
  %6564 = vmatprep.subr.mxu0 0.0
  %6565 = vmatpush1.msra.mxu0 0.0
  %6566 = vmatprep.subr.mxu0 0.0
  %6567 = vmatpush1.msra.mxu0 0.0
  %6568 = vmatprep.subr.mxu0 0.0
  %6569 = vmatpush1.msra.mxu0 0.0
  %6570 = vmatprep.subr.mxu0 0.0
  %6571 = vmatpush1.msra.mxu0 0.0
  %6572 = vmatprep.subr.mxu0 0.0
  %6573 = vmatpush1.msra.mxu0 0.0
  %6574 = vmatprep.subr.mxu0 0.0
  %6575 = vmatpush1.msra.mxu0 0.0
  %6576 = vmatprep.subr.mxu0 0.0
  %6577 = vmatpush1.msra.mxu0 0.0
  %6578 = vmatprep.subr.mxu0 0.0
  %6579 = vmatpush1.msra.mxu0 0.0
  %6580 = vmatprep.subr.mxu0 0.0
  %6581 = vmatpush1.msra.mxu0 0.0
  %6582 = vmatprep.subr.mxu0 0.0
  %6583 = vmatpush1.msra.mxu0 0.0
  %6584 = vmatprep.subr.mxu0 0.0
  %6585 = vmatpush1.msra.mxu0 0.0
  %6586 = vmatprep.mubr.f32.mxu0 0.0
  %6587 = vmatmul.mubr.f32.gmra.mrb[0].mxu0 %v6386
  %v6588 = vpop.f32.mrb[0].mxu0
  %v6589 = vadd.f32 0.0, %v6588
  %v6590 = vpop.f32.mrb[0].mxu0
  %v6591 = vadd.f32 0.0, %v6590
  %6592 = vdwg.mxu0
  %v6593 = vadd.f32 %v6382, %v6518
  %v6594 = vadd.f32 %v6383, %v6520
  %v6595 = vadd.f32 %v6384, %v6589
  %v6596 = vadd.f32 %v6385, %v6591
  %v6597 = vld [vmem:[%s4] sm:$0xf]
  %v6599 = vlaneseq
  %v6600 = vshrl.u32 %v6599, 7
  %v6601 = vsub.s32 0, %v6600
  %v6602 = vrot.slane %v6597, %v6601
  %v6603 = vlaneseq
  %v6604 = vshrl.u32 %v6603, 7
  %v6605 = vsub.s32 1, %v6604
  %v6606 = vrot.slane %v6597, %v6605
  %v6607 = vlaneseq
  %v6608 = vshrl.u32 %v6607, 7
  %v6609 = vsub.s32 2, %v6608
  %v6610 = vrot.slane %v6597, %v6609
  %v6611 = vlaneseq
  %v6612 = vshrl.u32 %v6611, 7
  %v6613 = vsub.s32 3, %v6612
  %v6614 = vrot.slane %v6597, %v6613
  %v6619 = vadd.f32 %v6593, %v6602
  %v6620 = vadd.f32 %v6594, %v6606
  %v6621 = vadd.f32 %v6595, %v6610
  %v6622 = vadd.f32 %v6596, %v6614
  %v6623 = vld [vmem:[%s11] sm:$0xff]
  %v6624 = vxor.u32 %v6619, 2147483648
  %v6625 = vmul.f32 %v6624, 1.442695
  %v6626 = vpow.pop %v6625
  %v6627 = vadd.f32 %v6626, 1.0
  %v6628 = vrcp.pop %v6627
  %v6629 = vmul.f32 1.0, %v6628
  %v6630 = vxor.u32 %v6620, 2147483648
  %v6631 = vmul.f32 %v6630, 1.442695
  %v6632 = vpow.pop %v6631
  %v6633 = vadd.f32 %v6632, 1.0
  %v6634 = vrcp.pop %v6633
  %v6635 = vmul.f32 1.0, %v6634
  %v6636 = vtanh.pop %v6621
  %v6637 = vxor.u32 %v6622, 2147483648
  %v6638 = vmul.f32 %v6637, 1.442695
  %v6639 = vpow.pop %v6638
  %v6640 = vadd.f32 %v6639, 1.0
  %v6641 = vrcp.pop %v6640
  %v6642 = vmul.f32 1.0, %v6641
  %v6643 = vmul.f32 %v6635, %v6623
  %v6644 = vmul.f32 %v6629, %v6636
  %v6645 = vadd.f32 %v6643, %v6644
  %v6646 = vtanh.pop %v6645
  %v6647 = vmul.f32 %v6642, %v6646
  %6648 = vst [vmem:[%s10] sm:$0xff] %v6647
  %6649 = vst [vmem:[%s11] sm:$0xff] %v6645
  %v6650 = vld [vmem:[%s1178] sm:$0xff]
  %v6651 = vld [vmem:[%s3] sm:$0xff]
  %v6652 = vld [vmem:[%s3 + $0x8] sm:$0xff]
  %v6653 = vld [vmem:[%s3 + $0x10] sm:$0xff]
  %v6654 = vld [vmem:[%s3 + $0x18] sm:$0xff]
  %v6655 = vld [vmem:[%s3 + $0x20] sm:$0xff]
  %v6656 = vld [vmem:[%s3 + $0x28] sm:$0xff]
  %v6657 = vld [vmem:[%s3 + $0x30] sm:$0xff]
  %v6658 = vld [vmem:[%s3 + $0x38] sm:$0xff]
  %v6659 = vld [vmem:[%s3 + $0x40] sm:$0xff]
  %v6660 = vld [vmem:[%s3 + $0x48] sm:$0xff]
  %v6661 = vld [vmem:[%s3 + $0x50] sm:$0xff]
  %v6662 = vld [vmem:[%s3 + $0x58] sm:$0xff]
  %v6663 = vld [vmem:[%s3 + $0x60] sm:$0xff]
  %v6664 = vld [vmem:[%s3 + $0x68] sm:$0xff]
  %v6665 = vld [vmem:[%s3 + $0x70] sm:$0xff]
  %v6666 = vld [vmem:[%s3 + $0x78] sm:$0xff]
  %v6667 = vld [vmem:[%s3 + $0x80] sm:$0xff]
  %v6668 = vld [vmem:[%s3 + $0x88] sm:$0xff]
  %v6669 = vld [vmem:[%s3 + $0x90] sm:$0xff]
  %v6670 = vld [vmem:[%s3 + $0x98] sm:$0xff]
  %v6671 = vld [vmem:[%s3 + $0xa0] sm:$0xff]
  %v6672 = vld [vmem:[%s3 + $0xa8] sm:$0xff]
  %v6673 = vld [vmem:[%s3 + $0xb0] sm:$0xff]
  %v6674 = vld [vmem:[%s3 + $0xb8] sm:$0xff]
  %v6675 = vld [vmem:[%s3 + $0xc0] sm:$0xff]
  %v6676 = vld [vmem:[%s3 + $0xc8] sm:$0xff]
  %v6677 = vld [vmem:[%s3 + $0xd0] sm:$0xff]
  %v6678 = vld [vmem:[%s3 + $0xd8] sm:$0xff]
  %v6679 = vld [vmem:[%s3 + $0xe0] sm:$0xff]
  %v6680 = vld [vmem:[%s3 + $0xe8] sm:$0xff]
  %v6681 = vld [vmem:[%s3 + $0xf0] sm:$0xff]
  %v6682 = vld [vmem:[%s3 + $0xf8] sm:$0xff]
  %v6683 = vld [vmem:[%s3 + $0x100] sm:$0xff]
  %v6684 = vld [vmem:[%s3 + $0x108] sm:$0xff]
  %v6685 = vld [vmem:[%s3 + $0x110] sm:$0xff]
  %v6686 = vld [vmem:[%s3 + $0x118] sm:$0xff]
  %v6687 = vld [vmem:[%s3 + $0x120] sm:$0xff]
  %v6688 = vld [vmem:[%s3 + $0x128] sm:$0xff]
  %v6689 = vld [vmem:[%s3 + $0x130] sm:$0xff]
  %v6690 = vld [vmem:[%s3 + $0x138] sm:$0xff]
  %v6691 = vld [vmem:[%s3 + $0x140] sm:$0xff]
  %v6692 = vld [vmem:[%s3 + $0x148] sm:$0xff]
  %v6693 = vld [vmem:[%s3 + $0x150] sm:$0xff]
  %v6694 = vld [vmem:[%s3 + $0x158] sm:$0xff]
  %v6695 = vld [vmem:[%s3 + $0x160] sm:$0xff]
  %v6696 = vld [vmem:[%s3 + $0x168] sm:$0xff]
  %v6697 = vld [vmem:[%s3 + $0x170] sm:$0xff]
  %v6698 = vld [vmem:[%s3 + $0x178] sm:$0xff]
  %v6699 = vld [vmem:[%s3 + $0x180] sm:$0xff]
  %v6700 = vld [vmem:[%s3 + $0x188] sm:$0xff]
  %v6701 = vld [vmem:[%s3 + $0x190] sm:$0xff]
  %v6702 = vld [vmem:[%s3 + $0x198] sm:$0xff]
  %v6703 = vld [vmem:[%s3 + $0x1a0] sm:$0xff]
  %v6704 = vld [vmem:[%s3 + $0x1a8] sm:$0xff]
  %v6705 = vld [vmem:[%s3 + $0x1b0] sm:$0xff]
  %v6706 = vld [vmem:[%s3 + $0x1b8] sm:$0xff]
  %v6707 = vld [vmem:[%s3 + $0x1c0] sm:$0xff]
  %v6708 = vld [vmem:[%s3 + $0x1c8] sm:$0xff]
  %v6709 = vld [vmem:[%s3 + $0x1d0] sm:$0xff]
  %v6710 = vld [vmem:[%s3 + $0x1d8] sm:$0xff]
  %v6711 = vld [vmem:[%s3 + $0x1e0] sm:$0xff]
  %v6712 = vld [vmem:[%s3 + $0x1e8] sm:$0xff]
  %v6713 = vld [vmem:[%s3 + $0x1f0] sm:$0xff]
  %v6714 = vld [vmem:[%s3 + $0x1f8] sm:$0xff]
  %v6715 = vld [vmem:[%s3 + $0x200] sm:$0xff]
  %v6716 = vld [vmem:[%s3 + $0x208] sm:$0xff]
  %v6717 = vld [vmem:[%s3 + $0x210] sm:$0xff]
  %v6718 = vld [vmem:[%s3 + $0x218] sm:$0xff]
  %v6719 = vld [vmem:[%s3 + $0x220] sm:$0xff]
  %v6720 = vld [vmem:[%s3 + $0x228] sm:$0xff]
  %v6721 = vld [vmem:[%s3 + $0x230] sm:$0xff]
  %v6722 = vld [vmem:[%s3 + $0x238] sm:$0xff]
  %v6723 = vld [vmem:[%s3 + $0x240] sm:$0xff]
  %v6724 = vld [vmem:[%s3 + $0x248] sm:$0xff]
  %v6725 = vld [vmem:[%s3 + $0x250] sm:$0xff]
  %v6726 = vld [vmem:[%s3 + $0x258] sm:$0xff]
  %v6727 = vld [vmem:[%s3 + $0x260] sm:$0xff]
  %v6728 = vld [vmem:[%s3 + $0x268] sm:$0xff]
  %v6729 = vld [vmem:[%s3 + $0x270] sm:$0xff]
  %v6730 = vld [vmem:[%s3 + $0x278] sm:$0xff]
  %v6731 = vld [vmem:[%s3 + $0x280] sm:$0xff]
  %v6732 = vld [vmem:[%s3 + $0x288] sm:$0xff]
  %v6733 = vld [vmem:[%s3 + $0x290] sm:$0xff]
  %v6734 = vld [vmem:[%s3 + $0x298] sm:$0xff]
  %v6735 = vld [vmem:[%s3 + $0x2a0] sm:$0xff]
  %v6736 = vld [vmem:[%s3 + $0x2a8] sm:$0xff]
  %v6737 = vld [vmem:[%s3 + $0x2b0] sm:$0xff]
  %v6738 = vld [vmem:[%s3 + $0x2b8] sm:$0xff]
  %v6739 = vld [vmem:[%s3 + $0x2c0] sm:$0xff]
  %v6740 = vld [vmem:[%s3 + $0x2c8] sm:$0xff]
  %v6741 = vld [vmem:[%s3 + $0x2d0] sm:$0xff]
  %v6742 = vld [vmem:[%s3 + $0x2d8] sm:$0xff]
  %v6743 = vld [vmem:[%s3 + $0x2e0] sm:$0xff]
  %v6744 = vld [vmem:[%s3 + $0x2e8] sm:$0xff]
  %v6745 = vld [vmem:[%s3 + $0x2f0] sm:$0xff]
  %v6746 = vld [vmem:[%s3 + $0x2f8] sm:$0xff]
  %v6747 = vld [vmem:[%s3 + $0x300] sm:$0xff]
  %v6748 = vld [vmem:[%s3 + $0x308] sm:$0xff]
  %v6749 = vld [vmem:[%s3 + $0x310] sm:$0xff]
  %v6750 = vld [vmem:[%s3 + $0x318] sm:$0xff]
  %v6751 = vld [vmem:[%s3 + $0x320] sm:$0xff]
  %v6752 = vld [vmem:[%s3 + $0x328] sm:$0xff]
  %v6753 = vld [vmem:[%s3 + $0x330] sm:$0xff]
  %v6754 = vld [vmem:[%s3 + $0x338] sm:$0xff]
  %v6755 = vld [vmem:[%s3 + $0x340] sm:$0xff]
  %v6756 = vld [vmem:[%s3 + $0x348] sm:$0xff]
  %v6757 = vld [vmem:[%s3 + $0x350] sm:$0xff]
  %v6758 = vld [vmem:[%s3 + $0x358] sm:$0xff]
  %v6759 = vld [vmem:[%s3 + $0x360] sm:$0xff]
  %v6760 = vld [vmem:[%s3 + $0x368] sm:$0xff]
  %v6761 = vld [vmem:[%s3 + $0x370] sm:$0xff]
  %v6762 = vld [vmem:[%s3 + $0x378] sm:$0xff]
  %v6763 = vld [vmem:[%s3 + $0x380] sm:$0xff]
  %v6764 = vld [vmem:[%s3 + $0x388] sm:$0xff]
  %v6765 = vld [vmem:[%s3 + $0x390] sm:$0xff]
  %v6766 = vld [vmem:[%s3 + $0x398] sm:$0xff]
  %v6767 = vld [vmem:[%s3 + $0x3a0] sm:$0xff]
  %v6768 = vld [vmem:[%s3 + $0x3a8] sm:$0xff]
  %v6769 = vld [vmem:[%s3 + $0x3b0] sm:$0xff]
  %v6770 = vld [vmem:[%s3 + $0x3b8] sm:$0xff]
  %v6771 = vld [vmem:[%s3 + $0x3c0] sm:$0xff]
  %v6772 = vld [vmem:[%s3 + $0x3c8] sm:$0xff]
  %v6773 = vld [vmem:[%s3 + $0x3d0] sm:$0xff]
  %v6774 = vld [vmem:[%s3 + $0x3d8] sm:$0xff]
  %v6775 = vld [vmem:[%s3 + $0x3e0] sm:$0xff]
  %v6776 = vld [vmem:[%s3 + $0x3e8] sm:$0xff]
  %v6777 = vld [vmem:[%s3 + $0x3f0] sm:$0xff]
  %v6778 = vld [vmem:[%s3 + $0x3f8] sm:$0xff]
  %v6779 = vld [vmem:[%s1308] sm:$0xf]
  %v6781 = vlaneseq
  %v6782 = vshrl.u32 %v6781, 7
  %v6783 = vsub.s32 0, %v6782
  %v6784 = vrot.slane %v6779, %v6783
  %v6785 = vlaneseq
  %v6786 = vshrl.u32 %v6785, 7
  %v6787 = vsub.s32 1, %v6786
  %v6788 = vrot.slane %v6779, %v6787
  %v6789 = vlaneseq
  %v6790 = vshrl.u32 %v6789, 7
  %v6791 = vsub.s32 2, %v6790
  %v6792 = vrot.slane %v6779, %v6791
  %v6793 = vlaneseq
  %v6794 = vshrl.u32 %v6793, 7
  %v6795 = vsub.s32 3, %v6794
  %v6796 = vrot.slane %v6779, %v6795
  %6801 = vmatprep.subr.mxu0 %v6652
  %6802 = vmatpush1.msra.mxu0 %v6651
  %6803 = vmatprep.subr.mxu0 %v6656
  %6804 = vmatpush1.msra.mxu0 %v6655
  %6805 = vmatprep.subr.mxu0 %v6660
  %6806 = vmatpush1.msra.mxu0 %v6659
  %6807 = vmatprep.subr.mxu0 %v6664
  %6808 = vmatpush1.msra.mxu0 %v6663
  %6809 = vmatprep.subr.mxu0 %v6668
  %6810 = vmatpush1.msra.mxu0 %v6667
  %6811 = vmatprep.subr.mxu0 %v6672
  %6812 = vmatpush1.msra.mxu0 %v6671
  %6813 = vmatprep.subr.mxu0 %v6676
  %6814 = vmatpush1.msra.mxu0 %v6675
  %6815 = vmatprep.subr.mxu0 %v6680
  %6816 = vmatpush1.msra.mxu0 %v6679
  %6817 = vmatprep.subr.mxu0 %v6684
  %6818 = vmatpush1.msra.mxu0 %v6683
  %6819 = vmatprep.subr.mxu0 %v6688
  %6820 = vmatpush1.msra.mxu0 %v6687
  %6821 = vmatprep.subr.mxu0 %v6692
  %6822 = vmatpush1.msra.mxu0 %v6691
  %6823 = vmatprep.subr.mxu0 %v6696
  %6824 = vmatpush1.msra.mxu0 %v6695
  %6825 = vmatprep.subr.mxu0 %v6700
  %6826 = vmatpush1.msra.mxu0 %v6699
  %6827 = vmatprep.subr.mxu0 %v6704
  %6828 = vmatpush1.msra.mxu0 %v6703
  %6829 = vmatprep.subr.mxu0 %v6708
  %6830 = vmatpush1.msra.mxu0 %v6707
  %6831 = vmatprep.subr.mxu0 %v6712
  %6832 = vmatpush1.msra.mxu0 %v6711
  %6833 = vmatprep.subr.mxu0 %v6716
  %6834 = vmatpush1.msra.mxu0 %v6715
  %6835 = vmatprep.subr.mxu0 %v6720
  %6836 = vmatpush1.msra.mxu0 %v6719
  %6837 = vmatprep.subr.mxu0 %v6724
  %6838 = vmatpush1.msra.mxu0 %v6723
  %6839 = vmatprep.subr.mxu0 %v6728
  %6840 = vmatpush1.msra.mxu0 %v6727
  %6841 = vmatprep.subr.mxu0 %v6732
  %6842 = vmatpush1.msra.mxu0 %v6731
  %6843 = vmatprep.subr.mxu0 %v6736
  %6844 = vmatpush1.msra.mxu0 %v6735
  %6845 = vmatprep.subr.mxu0 %v6740
  %6846 = vmatpush1.msra.mxu0 %v6739
  %6847 = vmatprep.subr.mxu0 %v6744
  %6848 = vmatpush1.msra.mxu0 %v6743
  %6849 = vmatprep.subr.mxu0 %v6748
  %6850 = vmatpush1.msra.mxu0 %v6747
  %6851 = vmatprep.subr.mxu0 %v6752
  %6852 = vmatpush1.msra.mxu0 %v6751
  %6853 = vmatprep.subr.mxu0 %v6756
  %6854 = vmatpush1.msra.mxu0 %v6755
  %6855 = vmatprep.subr.mxu0 %v6760
  %6856 = vmatpush1.msra.mxu0 %v6759
  %6857 = vmatprep.subr.mxu0 %v6764
  %6858 = vmatpush1.msra.mxu0 %v6763
  %6859 = vmatprep.subr.mxu0 %v6768
  %6860 = vmatpush1.msra.mxu0 %v6767
  %6861 = vmatprep.subr.mxu0 %v6772
  %6862 = vmatpush1.msra.mxu0 %v6771
  %6863 = vmatprep.subr.mxu0 %v6776
  %6864 = vmatpush1.msra.mxu0 %v6775
  %6865 = vmatprep.mubr.f32.mxu0 %v6650
  %6866 = vmatmul.mubr.f32.gmra.mrb[0].mxu0 %v6647
  %v6867 = vpop.f32.mrb[0].mxu0
  %v6868 = vadd.f32 %v6784, %v6867
  %v6869 = vpop.f32.mrb[0].mxu0
  %v6870 = vadd.f32 %v6788, %v6869
  %6871 = vdwg.mxu0
  %6872 = vmatprep.subr.mxu0 %v6654
  %6873 = vmatpush1.msra.mxu0 %v6653
  %6874 = vmatprep.subr.mxu0 %v6658
  %6875 = vmatpush1.msra.mxu0 %v6657
  %6876 = vmatprep.subr.mxu0 %v6662
  %6877 = vmatpush1.msra.mxu0 %v6661
  %6878 = vmatprep.subr.mxu0 %v6666
  %6879 = vmatpush1.msra.mxu0 %v6665
  %6880 = vmatprep.subr.mxu0 %v6670
  %6881 = vmatpush1.msra.mxu0 %v6669
  %6882 = vmatprep.subr.mxu0 %v6674
  %6883 = vmatpush1.msra.mxu0 %v6673
  %6884 = vmatprep.subr.mxu0 %v6678
  %6885 = vmatpush1.msra.mxu0 %v6677
  %6886 = vmatprep.subr.mxu0 %v6682
  %6887 = vmatpush1.msra.mxu0 %v6681
  %6888 = vmatprep.subr.mxu0 %v6686
  %6889 = vmatpush1.msra.mxu0 %v6685
  %6890 = vmatprep.subr.mxu0 %v6690
  %6891 = vmatpush1.msra.mxu0 %v6689
  %6892 = vmatprep.subr.mxu0 %v6694
  %6893 = vmatpush1.msra.mxu0 %v6693
  %6894 = vmatprep.subr.mxu0 %v6698
  %6895 = vmatpush1.msra.mxu0 %v6697
  %6896 = vmatprep.subr.mxu0 %v6702
  %6897 = vmatpush1.msra.mxu0 %v6701
  %6898 = vmatprep.subr.mxu0 %v6706
  %6899 = vmatpush1.msra.mxu0 %v6705
  %6900 = vmatprep.subr.mxu0 %v6710
  %6901 = vmatpush1.msra.mxu0 %v6709
  %6902 = vmatprep.subr.mxu0 %v6714
  %6903 = vmatpush1.msra.mxu0 %v6713
  %6904 = vmatprep.subr.mxu0 %v6718
  %6905 = vmatpush1.msra.mxu0 %v6717
  %6906 = vmatprep.subr.mxu0 %v6722
  %6907 = vmatpush1.msra.mxu0 %v6721
  %6908 = vmatprep.subr.mxu0 %v6726
  %6909 = vmatpush1.msra.mxu0 %v6725
  %6910 = vmatprep.subr.mxu0 %v6730
  %6911 = vmatpush1.msra.mxu0 %v6729
  %6912 = vmatprep.subr.mxu0 %v6734
  %6913 = vmatpush1.msra.mxu0 %v6733
  %6914 = vmatprep.subr.mxu0 %v6738
  %6915 = vmatpush1.msra.mxu0 %v6737
  %6916 = vmatprep.subr.mxu0 %v6742
  %6917 = vmatpush1.msra.mxu0 %v6741
  %6918 = vmatprep.subr.mxu0 %v6746
  %6919 = vmatpush1.msra.mxu0 %v6745
  %6920 = vmatprep.subr.mxu0 %v6750
  %6921 = vmatpush1.msra.mxu0 %v6749
  %6922 = vmatprep.subr.mxu0 %v6754
  %6923 = vmatpush1.msra.mxu0 %v6753
  %6924 = vmatprep.subr.mxu0 %v6758
  %6925 = vmatpush1.msra.mxu0 %v6757
  %6926 = vmatprep.subr.mxu0 %v6762
  %6927 = vmatpush1.msra.mxu0 %v6761
  %6928 = vmatprep.subr.mxu0 %v6766
  %6929 = vmatpush1.msra.mxu0 %v6765
  %6930 = vmatprep.subr.mxu0 %v6770
  %6931 = vmatpush1.msra.mxu0 %v6769
  %6932 = vmatprep.subr.mxu0 %v6774
  %6933 = vmatpush1.msra.mxu0 %v6773
  %6934 = vmatprep.subr.mxu0 %v6778
  %6935 = vmatpush1.msra.mxu0 %v6777
  %6936 = vmatprep.mubr.f32.mxu0 %v6650
  %6937 = vmatmul.mubr.f32.gmra.mrb[0].mxu0 %v6647
  %v6938 = vpop.f32.mrb[0].mxu0
  %v6939 = vadd.f32 %v6792, %v6938
  %v6940 = vpop.f32.mrb[0].mxu0
  %v6941 = vadd.f32 %v6796, %v6940
  %6942 = vdwg.mxu0
  %v6943 = vld [vmem:[%s1473] sm:$0xff]
  %v6944 = vxor.u32 %v6868, 2147483648
  %v6945 = vmul.f32 %v6944, 1.442695
  %v6946 = vpow.pop %v6945
  %v6947 = vadd.f32 %v6946, 1.0
  %v6948 = vrcp.pop %v6947
  %v6949 = vmul.f32 1.0, %v6948
  %v6950 = vxor.u32 %v6870, 2147483648
  %v6951 = vmul.f32 %v6950, 1.442695
  %v6952 = vpow.pop %v6951
  %v6953 = vadd.f32 %v6952, 1.0
  %v6954 = vrcp.pop %v6953
  %v6955 = vmul.f32 1.0, %v6954
  %v6956 = vtanh.pop %v6939
  %v6957 = vxor.u32 %v6941, 2147483648
  %v6958 = vmul.f32 %v6957, 1.442695
  %v6959 = vpow.pop %v6958
  %v6960 = vadd.f32 %v6959, 1.0
  %v6961 = vrcp.pop %v6960
  %v6962 = vmul.f32 1.0, %v6961
  %v6963 = vmul.f32 %v6955, %v6943
  %v6964 = vmul.f32 %v6949, %v6956
  %v6965 = vadd.f32 %v6963, %v6964
  %v6966 = vtanh.pop %v6965
  %v6967 = vmul.f32 %v6962, %v6966
  %6968 = vst [vmem:[%s1178] sm:$0xff] %v6967
  %6969 = vst [vmem:[%s1473] sm:$0xff] %v6965
  %v6970 = vld [vmem:[%s1501] sm:$0xff]
  %v6971 = vld [vmem:[%s1503] sm:$0xff]
  %v6972 = vld [vmem:[%s1503 + $0x8] sm:$0xff]
  %v6973 = vld [vmem:[%s1503 + $0x10] sm:$0xff]
  %v6974 = vld [vmem:[%s1503 + $0x18] sm:$0xff]
  %v6975 = vld [vmem:[%s1503 + $0x20] sm:$0xff]
  %v6976 = vld [vmem:[%s1503 + $0x28] sm:$0xff]
  %v6977 = vld [vmem:[%s1503 + $0x30] sm:$0xff]
  %v6978 = vld [vmem:[%s1503 + $0x38] sm:$0xff]
  %v6979 = vld [vmem:[%s1503 + $0x40] sm:$0xff]
  %v6980 = vld [vmem:[%s1503 + $0x48] sm:$0xff]
  %v6981 = vld [vmem:[%s1503 + $0x50] sm:$0xff]
  %v6982 = vld [vmem:[%s1503 + $0x58] sm:$0xff]
  %v6983 = vld [vmem:[%s1503 + $0x60] sm:$0xff]
  %v6984 = vld [vmem:[%s1503 + $0x68] sm:$0xff]
  %v6985 = vld [vmem:[%s1503 + $0x70] sm:$0xff]
  %v6986 = vld [vmem:[%s1503 + $0x78] sm:$0xff]
  %v6987 = vld [vmem:[%s1503 + $0x80] sm:$0xff]
  %v6988 = vld [vmem:[%s1503 + $0x88] sm:$0xff]
  %v6989 = vld [vmem:[%s1503 + $0x90] sm:$0xff]
  %v6990 = vld [vmem:[%s1503 + $0x98] sm:$0xff]
  %v6991 = vld [vmem:[%s1503 + $0xa0] sm:$0xff]
  %v6992 = vld [vmem:[%s1503 + $0xa8] sm:$0xff]
  %v6993 = vld [vmem:[%s1503 + $0xb0] sm:$0xff]
  %v6994 = vld [vmem:[%s1503 + $0xb8] sm:$0xff]
  %v6995 = vld [vmem:[%s1503 + $0xc0] sm:$0xff]
  %v6996 = vld [vmem:[%s1503 + $0xc8] sm:$0xff]
  %v6997 = vld [vmem:[%s1503 + $0xd0] sm:$0xff]
  %v6998 = vld [vmem:[%s1503 + $0xd8] sm:$0xff]
  %v6999 = vld [vmem:[%s1503 + $0xe0] sm:$0xff]
  %v7000 = vld [vmem:[%s1503 + $0xe8] sm:$0xff]
  %v7001 = vld [vmem:[%s1503 + $0xf0] sm:$0xff]
  %v7002 = vld [vmem:[%s1503 + $0xf8] sm:$0xff]
  %v7003 = vld [vmem:[%s1503 + $0x100] sm:$0xff]
  %v7004 = vld [vmem:[%s1503 + $0x108] sm:$0xff]
  %v7005 = vld [vmem:[%s1503 + $0x110] sm:$0xff]
  %v7006 = vld [vmem:[%s1503 + $0x118] sm:$0xff]
  %v7007 = vld [vmem:[%s1503 + $0x120] sm:$0xff]
  %v7008 = vld [vmem:[%s1503 + $0x128] sm:$0xff]
  %v7009 = vld [vmem:[%s1503 + $0x130] sm:$0xff]
  %v7010 = vld [vmem:[%s1503 + $0x138] sm:$0xff]
  %v7011 = vld [vmem:[%s1503 + $0x140] sm:$0xff]
  %v7012 = vld [vmem:[%s1503 + $0x148] sm:$0xff]
  %v7013 = vld [vmem:[%s1503 + $0x150] sm:$0xff]
  %v7014 = vld [vmem:[%s1503 + $0x158] sm:$0xff]
  %v7015 = vld [vmem:[%s1503 + $0x160] sm:$0xff]
  %v7016 = vld [vmem:[%s1503 + $0x168] sm:$0xff]
  %v7017 = vld [vmem:[%s1503 + $0x170] sm:$0xff]
  %v7018 = vld [vmem:[%s1503 + $0x178] sm:$0xff]
  %v7019 = vld [vmem:[%s1503 + $0x180] sm:$0xff]
  %v7020 = vld [vmem:[%s1503 + $0x188] sm:$0xff]
  %v7021 = vld [vmem:[%s1503 + $0x190] sm:$0xff]
  %v7022 = vld [vmem:[%s1503 + $0x198] sm:$0xff]
  %v7023 = vld [vmem:[%s1503 + $0x1a0] sm:$0xff]
  %v7024 = vld [vmem:[%s1503 + $0x1a8] sm:$0xff]
  %v7025 = vld [vmem:[%s1503 + $0x1b0] sm:$0xff]
  %v7026 = vld [vmem:[%s1503 + $0x1b8] sm:$0xff]
  %v7027 = vld [vmem:[%s1503 + $0x1c0] sm:$0xff]
  %v7028 = vld [vmem:[%s1503 + $0x1c8] sm:$0xff]
  %v7029 = vld [vmem:[%s1503 + $0x1d0] sm:$0xff]
  %v7030 = vld [vmem:[%s1503 + $0x1d8] sm:$0xff]
  %v7031 = vld [vmem:[%s1503 + $0x1e0] sm:$0xff]
  %v7032 = vld [vmem:[%s1503 + $0x1e8] sm:$0xff]
  %v7033 = vld [vmem:[%s1503 + $0x1f0] sm:$0xff]
  %v7034 = vld [vmem:[%s1503 + $0x1f8] sm:$0xff]
  %v7035 = vld [vmem:[%s1503 + $0x200] sm:$0xff]
  %v7036 = vld [vmem:[%s1503 + $0x208] sm:$0xff]
  %v7037 = vld [vmem:[%s1503 + $0x210] sm:$0xff]
  %v7038 = vld [vmem:[%s1503 + $0x218] sm:$0xff]
  %v7039 = vld [vmem:[%s1503 + $0x220] sm:$0xff]
  %v7040 = vld [vmem:[%s1503 + $0x228] sm:$0xff]
  %v7041 = vld [vmem:[%s1503 + $0x230] sm:$0xff]
  %v7042 = vld [vmem:[%s1503 + $0x238] sm:$0xff]
  %v7043 = vld [vmem:[%s1503 + $0x240] sm:$0xff]
  %v7044 = vld [vmem:[%s1503 + $0x248] sm:$0xff]
  %v7045 = vld [vmem:[%s1503 + $0x250] sm:$0xff]
  %v7046 = vld [vmem:[%s1503 + $0x258] sm:$0xff]
  %v7047 = vld [vmem:[%s1503 + $0x260] sm:$0xff]
  %v7048 = vld [vmem:[%s1503 + $0x268] sm:$0xff]
  %v7049 = vld [vmem:[%s1503 + $0x270] sm:$0xff]
  %v7050 = vld [vmem:[%s1503 + $0x278] sm:$0xff]
  %v7051 = vld [vmem:[%s1503 + $0x280] sm:$0xff]
  %v7052 = vld [vmem:[%s1503 + $0x288] sm:$0xff]
  %v7053 = vld [vmem:[%s1503 + $0x290] sm:$0xff]
  %v7054 = vld [vmem:[%s1503 + $0x298] sm:$0xff]
  %v7055 = vld [vmem:[%s1503 + $0x2a0] sm:$0xff]
  %v7056 = vld [vmem:[%s1503 + $0x2a8] sm:$0xff]
  %v7057 = vld [vmem:[%s1503 + $0x2b0] sm:$0xff]
  %v7058 = vld [vmem:[%s1503 + $0x2b8] sm:$0xff]
  %v7059 = vld [vmem:[%s1503 + $0x2c0] sm:$0xff]
  %v7060 = vld [vmem:[%s1503 + $0x2c8] sm:$0xff]
  %v7061 = vld [vmem:[%s1503 + $0x2d0] sm:$0xff]
  %v7062 = vld [vmem:[%s1503 + $0x2d8] sm:$0xff]
  %v7063 = vld [vmem:[%s1503 + $0x2e0] sm:$0xff]
  %v7064 = vld [vmem:[%s1503 + $0x2e8] sm:$0xff]
  %v7065 = vld [vmem:[%s1503 + $0x2f0] sm:$0xff]
  %v7066 = vld [vmem:[%s1503 + $0x2f8] sm:$0xff]
  %v7067 = vld [vmem:[%s1503 + $0x300] sm:$0xff]
  %v7068 = vld [vmem:[%s1503 + $0x308] sm:$0xff]
  %v7069 = vld [vmem:[%s1503 + $0x310] sm:$0xff]
  %v7070 = vld [vmem:[%s1503 + $0x318] sm:$0xff]
  %v7071 = vld [vmem:[%s1503 + $0x320] sm:$0xff]
  %v7072 = vld [vmem:[%s1503 + $0x328] sm:$0xff]
  %v7073 = vld [vmem:[%s1503 + $0x330] sm:$0xff]
  %v7074 = vld [vmem:[%s1503 + $0x338] sm:$0xff]
  %v7075 = vld [vmem:[%s1503 + $0x340] sm:$0xff]
  %v7076 = vld [vmem:[%s1503 + $0x348] sm:$0xff]
  %v7077 = vld [vmem:[%s1503 + $0x350] sm:$0xff]
  %v7078 = vld [vmem:[%s1503 + $0x358] sm:$0xff]
  %v7079 = vld [vmem:[%s1503 + $0x360] sm:$0xff]
  %v7080 = vld [vmem:[%s1503 + $0x368] sm:$0xff]
  %v7081 = vld [vmem:[%s1503 + $0x370] sm:$0xff]
  %v7082 = vld [vmem:[%s1503 + $0x378] sm:$0xff]
  %v7083 = vld [vmem:[%s1503 + $0x380] sm:$0xff]
  %v7084 = vld [vmem:[%s1503 + $0x388] sm:$0xff]
  %v7085 = vld [vmem:[%s1503 + $0x390] sm:$0xff]
  %v7086 = vld [vmem:[%s1503 + $0x398] sm:$0xff]
  %v7087 = vld [vmem:[%s1503 + $0x3a0] sm:$0xff]
  %v7088 = vld [vmem:[%s1503 + $0x3a8] sm:$0xff]
  %v7089 = vld [vmem:[%s1503 + $0x3b0] sm:$0xff]
  %v7090 = vld [vmem:[%s1503 + $0x3b8] sm:$0xff]
  %v7091 = vld [vmem:[%s1503 + $0x3c0] sm:$0xff]
  %v7092 = vld [vmem:[%s1503 + $0x3c8] sm:$0xff]
  %v7093 = vld [vmem:[%s1503 + $0x3d0] sm:$0xff]
  %v7094 = vld [vmem:[%s1503 + $0x3d8] sm:$0xff]
  %v7095 = vld [vmem:[%s1503 + $0x3e0] sm:$0xff]
  %v7096 = vld [vmem:[%s1503 + $0x3e8] sm:$0xff]
  %v7097 = vld [vmem:[%s1503 + $0x3f0] sm:$0xff]
  %v7098 = vld [vmem:[%s1503 + $0x3f8] sm:$0xff]
  %v7099 = vld [vmem:[%s1632] sm:$0xf]
  %v7101 = vlaneseq
  %v7102 = vshrl.u32 %v7101, 7
  %v7103 = vsub.s32 0, %v7102
  %v7104 = vrot.slane %v7099, %v7103
  %v7105 = vlaneseq
  %v7106 = vshrl.u32 %v7105, 7
  %v7107 = vsub.s32 1, %v7106
  %v7108 = vrot.slane %v7099, %v7107
  %v7109 = vlaneseq
  %v7110 = vshrl.u32 %v7109, 7
  %v7111 = vsub.s32 2, %v7110
  %v7112 = vrot.slane %v7099, %v7111
  %v7113 = vlaneseq
  %v7114 = vshrl.u32 %v7113, 7
  %v7115 = vsub.s32 3, %v7114
  %v7116 = vrot.slane %v7099, %v7115
  %7121 = vmatprep.subr.mxu0 %v6972
  %7122 = vmatpush1.msra.mxu0 %v6971
  %7123 = vmatprep.subr.mxu0 %v6976
  %7124 = vmatpush1.msra.mxu0 %v6975
  %7125 = vmatprep.subr.mxu0 %v6980
  %7126 = vmatpush1.msra.mxu0 %v6979
  %7127 = vmatprep.subr.mxu0 %v6984
  %7128 = vmatpush1.msra.mxu0 %v6983
  %7129 = vmatprep.subr.mxu0 %v6988
  %7130 = vmatpush1.msra.mxu0 %v6987
  %7131 = vmatprep.subr.mxu0 %v6992
  %7132 = vmatpush1.msra.mxu0 %v6991
  %7133 = vmatprep.subr.mxu0 %v6996
  %7134 = vmatpush1.msra.mxu0 %v6995
  %7135 = vmatprep.subr.mxu0 %v7000
  %7136 = vmatpush1.msra.mxu0 %v6999
  %7137 = vmatprep.subr.mxu0 %v7004
  %7138 = vmatpush1.msra.mxu0 %v7003
  %7139 = vmatprep.subr.mxu0 %v7008
  %7140 = vmatpush1.msra.mxu0 %v7007
  %7141 = vmatprep.subr.mxu0 %v7012
  %7142 = vmatpush1.msra.mxu0 %v7011
  %7143 = vmatprep.subr.mxu0 %v7016
  %7144 = vmatpush1.msra.mxu0 %v7015
  %7145 = vmatprep.subr.mxu0 %v7020
  %7146 = vmatpush1.msra.mxu0 %v7019
  %7147 = vmatprep.subr.mxu0 %v7024
  %7148 = vmatpush1.msra.mxu0 %v7023
  %7149 = vmatprep.subr.mxu0 %v7028
  %7150 = vmatpush1.msra.mxu0 %v7027
  %7151 = vmatprep.subr.mxu0 %v7032
  %7152 = vmatpush1.msra.mxu0 %v7031
  %7153 = vmatprep.subr.mxu0 %v7036
  %7154 = vmatpush1.msra.mxu0 %v7035
  %7155 = vmatprep.subr.mxu0 %v7040
  %7156 = vmatpush1.msra.mxu0 %v7039
  %7157 = vmatprep.subr.mxu0 %v7044
  %7158 = vmatpush1.msra.mxu0 %v7043
  %7159 = vmatprep.subr.mxu0 %v7048
  %7160 = vmatpush1.msra.mxu0 %v7047
  %7161 = vmatprep.subr.mxu0 %v7052
  %7162 = vmatpush1.msra.mxu0 %v7051
  %7163 = vmatprep.subr.mxu0 %v7056
  %7164 = vmatpush1.msra.mxu0 %v7055
  %7165 = vmatprep.subr.mxu0 %v7060
  %7166 = vmatpush1.msra.mxu0 %v7059
  %7167 = vmatprep.subr.mxu0 %v7064
  %7168 = vmatpush1.msra.mxu0 %v7063
  %7169 = vmatprep.subr.mxu0 %v7068
  %7170 = vmatpush1.msra.mxu0 %v7067
  %7171 = vmatprep.subr.mxu0 %v7072
  %7172 = vmatpush1.msra.mxu0 %v7071
  %7173 = vmatprep.subr.mxu0 %v7076
  %7174 = vmatpush1.msra.mxu0 %v7075
  %7175 = vmatprep.subr.mxu0 %v7080
  %7176 = vmatpush1.msra.mxu0 %v7079
  %7177 = vmatprep.subr.mxu0 %v7084
  %7178 = vmatpush1.msra.mxu0 %v7083
  %7179 = vmatprep.subr.mxu0 %v7088
  %7180 = vmatpush1.msra.mxu0 %v7087
  %7181 = vmatprep.subr.mxu0 %v7092
  %7182 = vmatpush1.msra.mxu0 %v7091
  %7183 = vmatprep.subr.mxu0 %v7096
  %7184 = vmatpush1.msra.mxu0 %v7095
  %7185 = vmatprep.mubr.f32.mxu0 %v6970
  %7186 = vmatmul.mubr.f32.gmra.mrb[0].mxu0 %v6967
  %v7187 = vpop.f32.mrb[0].mxu0
  %v7188 = vadd.f32 %v7104, %v7187
  %v7189 = vpop.f32.mrb[0].mxu0
  %v7190 = vadd.f32 %v7108, %v7189
  %7191 = vdwg.mxu0
  %7192 = vmatprep.subr.mxu0 %v6974
  %7193 = vmatpush1.msra.mxu0 %v6973
  %7194 = vmatprep.subr.mxu0 %v6978
  %7195 = vmatpush1.msra.mxu0 %v6977
  %7196 = vmatprep.subr.mxu0 %v6982
  %7197 = vmatpush1.msra.mxu0 %v6981
  %7198 = vmatprep.subr.mxu0 %v6986
  %7199 = vmatpush1.msra.mxu0 %v6985
  %7200 = vmatprep.subr.mxu0 %v6990
  %7201 = vmatpush1.msra.mxu0 %v6989
  %7202 = vmatprep.subr.mxu0 %v6994
  %7203 = vmatpush1.msra.mxu0 %v6993
  %7204 = vmatprep.subr.mxu0 %v6998
  %7205 = vmatpush1.msra.mxu0 %v6997
  %7206 = vmatprep.subr.mxu0 %v7002
  %7207 = vmatpush1.msra.mxu0 %v7001
  %7208 = vmatprep.subr.mxu0 %v7006
  %7209 = vmatpush1.msra.mxu0 %v7005
  %7210 = vmatprep.subr.mxu0 %v7010
  %7211 = vmatpush1.msra.mxu0 %v7009
  %7212 = vmatprep.subr.mxu0 %v7014
  %7213 = vmatpush1.msra.mxu0 %v7013
  %7214 = vmatprep.subr.mxu0 %v7018
  %7215 = vmatpush1.msra.mxu0 %v7017
  %7216 = vmatprep.subr.mxu0 %v7022
  %7217 = vmatpush1.msra.mxu0 %v7021
  %7218 = vmatprep.subr.mxu0 %v7026
  %7219 = vmatpush1.msra.mxu0 %v7025
  %7220 = vmatprep.subr.mxu0 %v7030
  %7221 = vmatpush1.msra.mxu0 %v7029
  %7222 = vmatprep.subr.mxu0 %v7034
  %7223 = vmatpush1.msra.mxu0 %v7033
  %7224 = vmatprep.subr.mxu0 %v7038
  %7225 = vmatpush1.msra.mxu0 %v7037
  %7226 = vmatprep.subr.mxu0 %v7042
  %7227 = vmatpush1.msra.mxu0 %v7041
  %7228 = vmatprep.subr.mxu0 %v7046
  %7229 = vmatpush1.msra.mxu0 %v7045
  %7230 = vmatprep.subr.mxu0 %v7050
  %7231 = vmatpush1.msra.mxu0 %v7049
  %7232 = vmatprep.subr.mxu0 %v7054
  %7233 = vmatpush1.msra.mxu0 %v7053
  %7234 = vmatprep.subr.mxu0 %v7058
  %7235 = vmatpush1.msra.mxu0 %v7057
  %7236 = vmatprep.subr.mxu0 %v7062
  %7237 = vmatpush1.msra.mxu0 %v7061
  %7238 = vmatprep.subr.mxu0 %v7066
  %7239 = vmatpush1.msra.mxu0 %v7065
  %7240 = vmatprep.subr.mxu0 %v7070
  %7241 = vmatpush1.msra.mxu0 %v7069
  %7242 = vmatprep.subr.mxu0 %v7074
  %7243 = vmatpush1.msra.mxu0 %v7073
  %7244 = vmatprep.subr.mxu0 %v7078
  %7245 = vmatpush1.msra.mxu0 %v7077
  %7246 = vmatprep.subr.mxu0 %v7082
  %7247 = vmatpush1.msra.mxu0 %v7081
  %7248 = vmatprep.subr.mxu0 %v7086
  %7249 = vmatpush1.msra.mxu0 %v7085
  %7250 = vmatprep.subr.mxu0 %v7090
  %7251 = vmatpush1.msra.mxu0 %v7089
  %7252 = vmatprep.subr.mxu0 %v7094
  %7253 = vmatpush1.msra.mxu0 %v7093
  %7254 = vmatprep.subr.mxu0 %v7098
  %7255 = vmatpush1.msra.mxu0 %v7097
  %7256 = vmatprep.mubr.f32.mxu0 %v6970
  %7257 = vmatmul.mubr.f32.gmra.mrb[0].mxu0 %v6967
  %v7258 = vpop.f32.mrb[0].mxu0
  %v7259 = vadd.f32 %v7112, %v7258
  %v7260 = vpop.f32.mrb[0].mxu0
  %v7261 = vadd.f32 %v7116, %v7260
  %7262 = vdwg.mxu0
  %v7263 = vld [vmem:[%s1797] sm:$0xff]
  %v7264 = vxor.u32 %v7188, 2147483648
  %v7265 = vmul.f32 %v7264, 1.442695
  %v7266 = vpow.pop %v7265
  %v7267 = vadd.f32 %v7266, 1.0
  %v7268 = vrcp.pop %v7267
  %v7269 = vmul.f32 1.0, %v7268
  %v7270 = vxor.u32 %v7190, 2147483648
  %v7271 = vmul.f32 %v7270, 1.442695
  %v7272 = vpow.pop %v7271
  %v7273 = vadd.f32 %v7272, 1.0
  %v7274 = vrcp.pop %v7273
  %v7275 = vmul.f32 1.0, %v7274
  %v7276 = vtanh.pop %v7259
  %v7277 = vxor.u32 %v7261, 2147483648
  %v7278 = vmul.f32 %v7277, 1.442695
  %v7279 = vpow.pop %v7278
  %v7280 = vadd.f32 %v7279, 1.0
  %v7281 = vrcp.pop %v7280
  %v7282 = vmul.f32 1.0, %v7281
  %v7283 = vmul.f32 %v7275, %v7263
  %v7284 = vmul.f32 %v7269, %v7276
  %v7285 = vadd.f32 %v7283, %v7284
  %v7286 = vtanh.pop %v7285
  %v7287 = vmul.f32 %v7282, %v7286
  %7288 = vst [vmem:[%s1501] sm:$0xff] %v7287
  %7289 = vst [vmem:[%s1797] sm:$0xff] %v7285
  %s7290 = scalar_lea.vmem [#allocation3], 48
  %7291 = vst [vmem:[%s7290] sm:$0xff] %v7287
  %s7292 = scalar_lea.vmem [#allocation2], 224
  %v7293 = vld [vmem:[%s7292] sm:$0xff]
  %v7294 = vld [vmem:[%s7292 + $0x8] sm:$0xff]
  %v7295 = vld [vmem:[%s7292 + $0x10] sm:$0xff]
  %v7296 = vld [vmem:[%s7292 + $0x18] sm:$0xff]
  %v7297 = vld [vmem:[%s10] sm:$0xff]
  %v7298 = vld [vmem:[%s2] sm:$0xff]
  %v7299 = vld [vmem:[%s2 + $0x8] sm:$0xff]
  %v7300 = vld [vmem:[%s2 + $0x10] sm:$0xff]
  %v7301 = vld [vmem:[%s2 + $0x18] sm:$0xff]
  %v7302 = vld [vmem:[%s2 + $0x20] sm:$0xff]
  %v7303 = vld [vmem:[%s2 + $0x28] sm:$0xff]
  %v7304 = vld [vmem:[%s2 + $0x30] sm:$0xff]
  %v7305 = vld [vmem:[%s2 + $0x38] sm:$0xff]
  %v7306 = vld [vmem:[%s2 + $0x40] sm:$0xff]
  %v7307 = vld [vmem:[%s2 + $0x48] sm:$0xff]
  %v7308 = vld [vmem:[%s2 + $0x50] sm:$0xff]
  %v7309 = vld [vmem:[%s2 + $0x58] sm:$0xff]
  %v7310 = vld [vmem:[%s2 + $0x60] sm:$0xff]
  %v7311 = vld [vmem:[%s2 + $0x68] sm:$0xff]
  %v7312 = vld [vmem:[%s2 + $0x70] sm:$0xff]
  %v7313 = vld [vmem:[%s2 + $0x78] sm:$0xff]
  %v7314 = vld [vmem:[%s2 + $0x80] sm:$0xff]
  %v7315 = vld [vmem:[%s2 + $0x88] sm:$0xff]
  %v7316 = vld [vmem:[%s2 + $0x90] sm:$0xff]
  %v7317 = vld [vmem:[%s2 + $0x98] sm:$0xff]
  %v7318 = vld [vmem:[%s2 + $0xa0] sm:$0xff]
  %v7319 = vld [vmem:[%s2 + $0xa8] sm:$0xff]
  %v7320 = vld [vmem:[%s2 + $0xb0] sm:$0xff]
  %v7321 = vld [vmem:[%s2 + $0xb8] sm:$0xff]
  %v7322 = vld [vmem:[%s2 + $0xc0] sm:$0xff]
  %v7323 = vld [vmem:[%s2 + $0xc8] sm:$0xff]
  %v7324 = vld [vmem:[%s2 + $0xd0] sm:$0xff]
  %v7325 = vld [vmem:[%s2 + $0xd8] sm:$0xff]
  %v7326 = vld [vmem:[%s2 + $0xe0] sm:$0xff]
  %v7327 = vld [vmem:[%s2 + $0xe8] sm:$0xff]
  %v7328 = vld [vmem:[%s2 + $0xf0] sm:$0xff]
  %v7329 = vld [vmem:[%s2 + $0xf8] sm:$0xff]
  %v7330 = vld [vmem:[%s2 + $0x100] sm:$0xff]
  %v7331 = vld [vmem:[%s2 + $0x108] sm:$0xff]
  %v7332 = vld [vmem:[%s2 + $0x110] sm:$0xff]
  %v7333 = vld [vmem:[%s2 + $0x118] sm:$0xff]
  %v7334 = vld [vmem:[%s2 + $0x120] sm:$0xff]
  %v7335 = vld [vmem:[%s2 + $0x128] sm:$0xff]
  %v7336 = vld [vmem:[%s2 + $0x130] sm:$0xff]
  %v7337 = vld [vmem:[%s2 + $0x138] sm:$0xff]
  %v7338 = vld [vmem:[%s2 + $0x140] sm:$0xff]
  %v7339 = vld [vmem:[%s2 + $0x148] sm:$0xff]
  %v7340 = vld [vmem:[%s2 + $0x150] sm:$0xff]
  %v7341 = vld [vmem:[%s2 + $0x158] sm:$0xff]
  %v7342 = vld [vmem:[%s2 + $0x160] sm:$0xff]
  %v7343 = vld [vmem:[%s2 + $0x168] sm:$0xff]
  %v7344 = vld [vmem:[%s2 + $0x170] sm:$0xff]
  %v7345 = vld [vmem:[%s2 + $0x178] sm:$0xff]
  %v7346 = vld [vmem:[%s2 + $0x180] sm:$0xff]
  %v7347 = vld [vmem:[%s2 + $0x188] sm:$0xff]
  %v7348 = vld [vmem:[%s2 + $0x190] sm:$0xff]
  %v7349 = vld [vmem:[%s2 + $0x198] sm:$0xff]
  %v7350 = vld [vmem:[%s2 + $0x1a0] sm:$0xff]
  %v7351 = vld [vmem:[%s2 + $0x1a8] sm:$0xff]
  %v7352 = vld [vmem:[%s2 + $0x1b0] sm:$0xff]
  %v7353 = vld [vmem:[%s2 + $0x1b8] sm:$0xff]
  %v7354 = vld [vmem:[%s2 + $0x1c0] sm:$0xff]
  %v7355 = vld [vmem:[%s2 + $0x1c8] sm:$0xff]
  %v7356 = vld [vmem:[%s2 + $0x1d0] sm:$0xff]
  %v7357 = vld [vmem:[%s2 + $0x1d8] sm:$0xff]
  %v7358 = vld [vmem:[%s2 + $0x1e0] sm:$0xff]
  %v7359 = vld [vmem:[%s2 + $0x1e8] sm:$0xff]
  %v7360 = vld [vmem:[%s2 + $0x1f0] sm:$0xff]
  %v7361 = vld [vmem:[%s2 + $0x1f8] sm:$0xff]
  %7362 = vmatprep.subr.mxu0 %v7299
  %7363 = vmatpush1.msra.mxu0 %v7298
  %7364 = vmatprep.subr.mxu0 %v7303
  %7365 = vmatpush1.msra.mxu0 %v7302
  %7366 = vmatprep.subr.mxu0 %v7307
  %7367 = vmatpush1.msra.mxu0 %v7306
  %7368 = vmatprep.subr.mxu0 %v7311
  %7369 = vmatpush1.msra.mxu0 %v7310
  %7370 = vmatprep.subr.mxu0 %v7315
  %7371 = vmatpush1.msra.mxu0 %v7314
  %7372 = vmatprep.subr.mxu0 %v7319
  %7373 = vmatpush1.msra.mxu0 %v7318
  %7374 = vmatprep.subr.mxu0 %v7323
  %7375 = vmatpush1.msra.mxu0 %v7322
  %7376 = vmatprep.subr.mxu0 %v7327
  %7377 = vmatpush1.msra.mxu0 %v7326
  %7378 = vmatprep.subr.mxu0 %v7331
  %7379 = vmatpush1.msra.mxu0 %v7330
  %7380 = vmatprep.subr.mxu0 %v7335
  %7381 = vmatpush1.msra.mxu0 %v7334
  %7382 = vmatprep.subr.mxu0 %v7339
  %7383 = vmatpush1.msra.mxu0 %v7338
  %7384 = vmatprep.subr.mxu0 %v7343
  %7385 = vmatpush1.msra.mxu0 %v7342
  %7386 = vmatprep.subr.mxu0 %v7347
  %7387 = vmatpush1.msra.mxu0 %v7346
  %7388 = vmatprep.subr.mxu0 %v7351
  %7389 = vmatpush1.msra.mxu0 %v7350
  %7390 = vmatprep.subr.mxu0 %v7355
  %7391 = vmatpush1.msra.mxu0 %v7354
  %7392 = vmatprep.subr.mxu0 %v7359
  %7393 = vmatpush1.msra.mxu0 %v7358
  %7394 = vmatprep.subr.mxu0 0.0
  %7395 = vmatpush1.msra.mxu0 0.0
  %7396 = vmatprep.subr.mxu0 0.0
  %7397 = vmatpush1.msra.mxu0 0.0
  %7398 = vmatprep.subr.mxu0 0.0
  %7399 = vmatpush1.msra.mxu0 0.0
  %7400 = vmatprep.subr.mxu0 0.0
  %7401 = vmatpush1.msra.mxu0 0.0
  %7402 = vmatprep.subr.mxu0 0.0
  %7403 = vmatpush1.msra.mxu0 0.0
  %7404 = vmatprep.subr.mxu0 0.0
  %7405 = vmatpush1.msra.mxu0 0.0
  %7406 = vmatprep.subr.mxu0 0.0
  %7407 = vmatpush1.msra.mxu0 0.0
  %7408 = vmatprep.subr.mxu0 0.0
  %7409 = vmatpush1.msra.mxu0 0.0
  %7410 = vmatprep.subr.mxu0 0.0
  %7411 = vmatpush1.msra.mxu0 0.0
  %7412 = vmatprep.subr.mxu0 0.0
  %7413 = vmatpush1.msra.mxu0 0.0
  %7414 = vmatprep.subr.mxu0 0.0
  %7415 = vmatpush1.msra.mxu0 0.0
  %7416 = vmatprep.subr.mxu0 0.0
  %7417 = vmatpush1.msra.mxu0 0.0
  %7418 = vmatprep.subr.mxu0 0.0
  %7419 = vmatpush1.msra.mxu0 0.0
  %7420 = vmatprep.subr.mxu0 0.0
  %7421 = vmatpush1.msra.mxu0 0.0
  %7422 = vmatprep.subr.mxu0 0.0
  %7423 = vmatpush1.msra.mxu0 0.0
  %7424 = vmatprep.subr.mxu0 0.0
  %7425 = vmatpush1.msra.mxu0 0.0
  %7426 = vmatprep.mubr.f32.mxu0 0.0
  %7427 = vmatmul.mubr.f32.gmra.mrb[0].mxu0 %v7297
  %v7428 = vpop.f32.mrb[0].mxu0
  %v7429 = vadd.f32 0.0, %v7428
  %v7430 = vpop.f32.mrb[0].mxu0
  %v7431 = vadd.f32 0.0, %v7430
  %7432 = vdwg.mxu0
  %7433 = vmatprep.subr.mxu0 %v7301
  %7434 = vmatpush1.msra.mxu0 %v7300
  %7435 = vmatprep.subr.mxu0 %v7305
  %7436 = vmatpush1.msra.mxu0 %v7304
  %7437 = vmatprep.subr.mxu0 %v7309
  %7438 = vmatpush1.msra.mxu0 %v7308
  %7439 = vmatprep.subr.mxu0 %v7313
  %7440 = vmatpush1.msra.mxu0 %v7312
  %7441 = vmatprep.subr.mxu0 %v7317
  %7442 = vmatpush1.msra.mxu0 %v7316
  %7443 = vmatprep.subr.mxu0 %v7321
  %7444 = vmatpush1.msra.mxu0 %v7320
  %7445 = vmatprep.subr.mxu0 %v7325
  %7446 = vmatpush1.msra.mxu0 %v7324
  %7447 = vmatprep.subr.mxu0 %v7329
  %7448 = vmatpush1.msra.mxu0 %v7328
  %7449 = vmatprep.subr.mxu0 %v7333
  %7450 = vmatpush1.msra.mxu0 %v7332
  %7451 = vmatprep.subr.mxu0 %v7337
  %7452 = vmatpush1.msra.mxu0 %v7336
  %7453 = vmatprep.subr.mxu0 %v7341
  %7454 = vmatpush1.msra.mxu0 %v7340
  %7455 = vmatprep.subr.mxu0 %v7345
  %7456 = vmatpush1.msra.mxu0 %v7344
  %7457 = vmatprep.subr.mxu0 %v7349
  %7458 = vmatpush1.msra.mxu0 %v7348
  %7459 = vmatprep.subr.mxu0 %v7353
  %7460 = vmatpush1.msra.mxu0 %v7352
  %7461 = vmatprep.subr.mxu0 %v7357
  %7462 = vmatpush1.msra.mxu0 %v7356
  %7463 = vmatprep.subr.mxu0 %v7361
  %7464 = vmatpush1.msra.mxu0 %v7360
  %7465 = vmatprep.subr.mxu0 0.0
  %7466 = vmatpush1.msra.mxu0 0.0
  %7467 = vmatprep.subr.mxu0 0.0
  %7468 = vmatpush1.msra.mxu0 0.0
  %7469 = vmatprep.subr.mxu0 0.0
  %7470 = vmatpush1.msra.mxu0 0.0
  %7471 = vmatprep.subr.mxu0 0.0
  %7472 = vmatpush1.msra.mxu0 0.0
  %7473 = vmatprep.subr.mxu0 0.0
  %7474 = vmatpush1.msra.mxu0 0.0
  %7475 = vmatprep.subr.mxu0 0.0
  %7476 = vmatpush1.msra.mxu0 0.0
  %7477 = vmatprep.subr.mxu0 0.0
  %7478 = vmatpush1.msra.mxu0 0.0
  %7479 = vmatprep.subr.mxu0 0.0
  %7480 = vmatpush1.msra.mxu0 0.0
  %7481 = vmatprep.subr.mxu0 0.0
  %7482 = vmatpush1.msra.mxu0 0.0
  %7483 = vmatprep.subr.mxu0 0.0
  %7484 = vmatpush1.msra.mxu0 0.0
  %7485 = vmatprep.subr.mxu0 0.0
  %7486 = vmatpush1.msra.mxu0 0.0
  %7487 = vmatprep.subr.mxu0 0.0
  %7488 = vmatpush1.msra.mxu0 0.0
  %7489 = vmatprep.subr.mxu0 0.0
  %7490 = vmatpush1.msra.mxu0 0.0
  %7491 = vmatprep.subr.mxu0 0.0
  %7492 = vmatpush1.msra.mxu0 0.0
  %7493 = vmatprep.subr.mxu0 0.0
  %7494 = vmatpush1.msra.mxu0 0.0
  %7495 = vmatprep.subr.mxu0 0.0
  %7496 = vmatpush1.msra.mxu0 0.0
  %7497 = vmatprep.mubr.f32.mxu0 0.0
  %7498 = vmatmul.mubr.f32.gmra.mrb[0].mxu0 %v7297
  %v7499 = vpop.f32.mrb[0].mxu0
  %v7500 = vadd.f32 0.0, %v7499
  %v7501 = vpop.f32.mrb[0].mxu0
  %v7502 = vadd.f32 0.0, %v7501
  %7503 = vdwg.mxu0
  %v7504 = vadd.f32 %v7293, %v7429
  %v7505 = vadd.f32 %v7294, %v7431
  %v7506 = vadd.f32 %v7295, %v7500
  %v7507 = vadd.f32 %v7296, %v7502
  %v7508 = vld [vmem:[%s4] sm:$0xf]
  %v7510 = vlaneseq
  %v7511 = vshrl.u32 %v7510, 7
  %v7512 = vsub.s32 0, %v7511
  %v7513 = vrot.slane %v7508, %v7512
  %v7514 = vlaneseq
  %v7515 = vshrl.u32 %v7514, 7
  %v7516 = vsub.s32 1, %v7515
  %v7517 = vrot.slane %v7508, %v7516
  %v7518 = vlaneseq
  %v7519 = vshrl.u32 %v7518, 7
  %v7520 = vsub.s32 2, %v7519
  %v7521 = vrot.slane %v7508, %v7520
  %v7522 = vlaneseq
  %v7523 = vshrl.u32 %v7522, 7
  %v7524 = vsub.s32 3, %v7523
  %v7525 = vrot.slane %v7508, %v7524
  %v7530 = vadd.f32 %v7504, %v7513
  %v7531 = vadd.f32 %v7505, %v7517
  %v7532 = vadd.f32 %v7506, %v7521
  %v7533 = vadd.f32 %v7507, %v7525
  %v7534 = vld [vmem:[%s11] sm:$0xff]
  %v7535 = vxor.u32 %v7530, 2147483648
  %v7536 = vmul.f32 %v7535, 1.442695
  %v7537 = vpow.pop %v7536
  %v7538 = vadd.f32 %v7537, 1.0
  %v7539 = vrcp.pop %v7538
  %v7540 = vmul.f32 1.0, %v7539
  %v7541 = vxor.u32 %v7531, 2147483648
  %v7542 = vmul.f32 %v7541, 1.442695
  %v7543 = vpow.pop %v7542
  %v7544 = vadd.f32 %v7543, 1.0
  %v7545 = vrcp.pop %v7544
  %v7546 = vmul.f32 1.0, %v7545
  %v7547 = vtanh.pop %v7532
  %v7548 = vxor.u32 %v7533, 2147483648
  %v7549 = vmul.f32 %v7548, 1.442695
  %v7550 = vpow.pop %v7549
  %v7551 = vadd.f32 %v7550, 1.0
  %v7552 = vrcp.pop %v7551
  %v7553 = vmul.f32 1.0, %v7552
  %v7554 = vmul.f32 %v7546, %v7534
  %v7555 = vmul.f32 %v7540, %v7547
  %v7556 = vadd.f32 %v7554, %v7555
  %v7557 = vtanh.pop %v7556
  %v7558 = vmul.f32 %v7553, %v7557
  %7559 = vst [vmem:[%s10] sm:$0xff] %v7558
  %7560 = vst [vmem:[%s11] sm:$0xff] %v7556
  %v7561 = vld [vmem:[%s1178] sm:$0xff]
  %v7562 = vld [vmem:[%s3] sm:$0xff]
  %v7563 = vld [vmem:[%s3 + $0x8] sm:$0xff]
  %v7564 = vld [vmem:[%s3 + $0x10] sm:$0xff]
  %v7565 = vld [vmem:[%s3 + $0x18] sm:$0xff]
  %v7566 = vld [vmem:[%s3 + $0x20] sm:$0xff]
  %v7567 = vld [vmem:[%s3 + $0x28] sm:$0xff]
  %v7568 = vld [vmem:[%s3 + $0x30] sm:$0xff]
  %v7569 = vld [vmem:[%s3 + $0x38] sm:$0xff]
  %v7570 = vld [vmem:[%s3 + $0x40] sm:$0xff]
  %v7571 = vld [vmem:[%s3 + $0x48] sm:$0xff]
  %v7572 = vld [vmem:[%s3 + $0x50] sm:$0xff]
  %v7573 = vld [vmem:[%s3 + $0x58] sm:$0xff]
  %v7574 = vld [vmem:[%s3 + $0x60] sm:$0xff]
  %v7575 = vld [vmem:[%s3 + $0x68] sm:$0xff]
  %v7576 = vld [vmem:[%s3 + $0x70] sm:$0xff]
  %v7577 = vld [vmem:[%s3 + $0x78] sm:$0xff]
  %v7578 = vld [vmem:[%s3 + $0x80] sm:$0xff]
  %v7579 = vld [vmem:[%s3 + $0x88] sm:$0xff]
  %v7580 = vld [vmem:[%s3 + $0x90] sm:$0xff]
  %v7581 = vld [vmem:[%s3 + $0x98] sm:$0xff]
  %v7582 = vld [vmem:[%s3 + $0xa0] sm:$0xff]
  %v7583 = vld [vmem:[%s3 + $0xa8] sm:$0xff]
  %v7584 = vld [vmem:[%s3 + $0xb0] sm:$0xff]
  %v7585 = vld [vmem:[%s3 + $0xb8] sm:$0xff]
  %v7586 = vld [vmem:[%s3 + $0xc0] sm:$0xff]
  %v7587 = vld [vmem:[%s3 + $0xc8] sm:$0xff]
  %v7588 = vld [vmem:[%s3 + $0xd0] sm:$0xff]
  %v7589 = vld [vmem:[%s3 + $0xd8] sm:$0xff]
  %v7590 = vld [vmem:[%s3 + $0xe0] sm:$0xff]
  %v7591 = vld [vmem:[%s3 + $0xe8] sm:$0xff]
  %v7592 = vld [vmem:[%s3 + $0xf0] sm:$0xff]
  %v7593 = vld [vmem:[%s3 + $0xf8] sm:$0xff]
  %v7594 = vld [vmem:[%s3 + $0x100] sm:$0xff]
  %v7595 = vld [vmem:[%s3 + $0x108] sm:$0xff]
  %v7596 = vld [vmem:[%s3 + $0x110] sm:$0xff]
  %v7597 = vld [vmem:[%s3 + $0x118] sm:$0xff]
  %v7598 = vld [vmem:[%s3 + $0x120] sm:$0xff]
  %v7599 = vld [vmem:[%s3 + $0x128] sm:$0xff]
  %v7600 = vld [vmem:[%s3 + $0x130] sm:$0xff]
  %v7601 = vld [vmem:[%s3 + $0x138] sm:$0xff]
  %v7602 = vld [vmem:[%s3 + $0x140] sm:$0xff]
  %v7603 = vld [vmem:[%s3 + $0x148] sm:$0xff]
  %v7604 = vld [vmem:[%s3 + $0x150] sm:$0xff]
  %v7605 = vld [vmem:[%s3 + $0x158] sm:$0xff]
  %v7606 = vld [vmem:[%s3 + $0x160] sm:$0xff]
  %v7607 = vld [vmem:[%s3 + $0x168] sm:$0xff]
  %v7608 = vld [vmem:[%s3 + $0x170] sm:$0xff]
  %v7609 = vld [vmem:[%s3 + $0x178] sm:$0xff]
  %v7610 = vld [vmem:[%s3 + $0x180] sm:$0xff]
  %v7611 = vld [vmem:[%s3 + $0x188] sm:$0xff]
  %v7612 = vld [vmem:[%s3 + $0x190] sm:$0xff]
  %v7613 = vld [vmem:[%s3 + $0x198] sm:$0xff]
  %v7614 = vld [vmem:[%s3 + $0x1a0] sm:$0xff]
  %v7615 = vld [vmem:[%s3 + $0x1a8] sm:$0xff]
  %v7616 = vld [vmem:[%s3 + $0x1b0] sm:$0xff]
  %v7617 = vld [vmem:[%s3 + $0x1b8] sm:$0xff]
  %v7618 = vld [vmem:[%s3 + $0x1c0] sm:$0xff]
  %v7619 = vld [vmem:[%s3 + $0x1c8] sm:$0xff]
  %v7620 = vld [vmem:[%s3 + $0x1d0] sm:$0xff]
  %v7621 = vld [vmem:[%s3 + $0x1d8] sm:$0xff]
  %v7622 = vld [vmem:[%s3 + $0x1e0] sm:$0xff]
  %v7623 = vld [vmem:[%s3 + $0x1e8] sm:$0xff]
  %v7624 = vld [vmem:[%s3 + $0x1f0] sm:$0xff]
  %v7625 = vld [vmem:[%s3 + $0x1f8] sm:$0xff]
  %v7626 = vld [vmem:[%s3 + $0x200] sm:$0xff]
  %v7627 = vld [vmem:[%s3 + $0x208] sm:$0xff]
  %v7628 = vld [vmem:[%s3 + $0x210] sm:$0xff]
  %v7629 = vld [vmem:[%s3 + $0x218] sm:$0xff]
  %v7630 = vld [vmem:[%s3 + $0x220] sm:$0xff]
  %v7631 = vld [vmem:[%s3 + $0x228] sm:$0xff]
  %v7632 = vld [vmem:[%s3 + $0x230] sm:$0xff]
  %v7633 = vld [vmem:[%s3 + $0x238] sm:$0xff]
  %v7634 = vld [vmem:[%s3 + $0x240] sm:$0xff]
  %v7635 = vld [vmem:[%s3 + $0x248] sm:$0xff]
  %v7636 = vld [vmem:[%s3 + $0x250] sm:$0xff]
  %v7637 = vld [vmem:[%s3 + $0x258] sm:$0xff]
  %v7638 = vld [vmem:[%s3 + $0x260] sm:$0xff]
  %v7639 = vld [vmem:[%s3 + $0x268] sm:$0xff]
  %v7640 = vld [vmem:[%s3 + $0x270] sm:$0xff]
  %v7641 = vld [vmem:[%s3 + $0x278] sm:$0xff]
  %v7642 = vld [vmem:[%s3 + $0x280] sm:$0xff]
  %v7643 = vld [vmem:[%s3 + $0x288] sm:$0xff]
  %v7644 = vld [vmem:[%s3 + $0x290] sm:$0xff]
  %v7645 = vld [vmem:[%s3 + $0x298] sm:$0xff]
  %v7646 = vld [vmem:[%s3 + $0x2a0] sm:$0xff]
  %v7647 = vld [vmem:[%s3 + $0x2a8] sm:$0xff]
  %v7648 = vld [vmem:[%s3 + $0x2b0] sm:$0xff]
  %v7649 = vld [vmem:[%s3 + $0x2b8] sm:$0xff]
  %v7650 = vld [vmem:[%s3 + $0x2c0] sm:$0xff]
  %v7651 = vld [vmem:[%s3 + $0x2c8] sm:$0xff]
  %v7652 = vld [vmem:[%s3 + $0x2d0] sm:$0xff]
  %v7653 = vld [vmem:[%s3 + $0x2d8] sm:$0xff]
  %v7654 = vld [vmem:[%s3 + $0x2e0] sm:$0xff]
  %v7655 = vld [vmem:[%s3 + $0x2e8] sm:$0xff]
  %v7656 = vld [vmem:[%s3 + $0x2f0] sm:$0xff]
  %v7657 = vld [vmem:[%s3 + $0x2f8] sm:$0xff]
  %v7658 = vld [vmem:[%s3 + $0x300] sm:$0xff]
  %v7659 = vld [vmem:[%s3 + $0x308] sm:$0xff]
  %v7660 = vld [vmem:[%s3 + $0x310] sm:$0xff]
  %v7661 = vld [vmem:[%s3 + $0x318] sm:$0xff]
  %v7662 = vld [vmem:[%s3 + $0x320] sm:$0xff]
  %v7663 = vld [vmem:[%s3 + $0x328] sm:$0xff]
  %v7664 = vld [vmem:[%s3 + $0x330] sm:$0xff]
  %v7665 = vld [vmem:[%s3 + $0x338] sm:$0xff]
  %v7666 = vld [vmem:[%s3 + $0x340] sm:$0xff]
  %v7667 = vld [vmem:[%s3 + $0x348] sm:$0xff]
  %v7668 = vld [vmem:[%s3 + $0x350] sm:$0xff]
  %v7669 = vld [vmem:[%s3 + $0x358] sm:$0xff]
  %v7670 = vld [vmem:[%s3 + $0x360] sm:$0xff]
  %v7671 = vld [vmem:[%s3 + $0x368] sm:$0xff]
  %v7672 = vld [vmem:[%s3 + $0x370] sm:$0xff]
  %v7673 = vld [vmem:[%s3 + $0x378] sm:$0xff]
  %v7674 = vld [vmem:[%s3 + $0x380] sm:$0xff]
  %v7675 = vld [vmem:[%s3 + $0x388] sm:$0xff]
  %v7676 = vld [vmem:[%s3 + $0x390] sm:$0xff]
  %v7677 = vld [vmem:[%s3 + $0x398] sm:$0xff]
  %v7678 = vld [vmem:[%s3 + $0x3a0] sm:$0xff]
  %v7679 = vld [vmem:[%s3 + $0x3a8] sm:$0xff]
  %v7680 = vld [vmem:[%s3 + $0x3b0] sm:$0xff]
  %v7681 = vld [vmem:[%s3 + $0x3b8] sm:$0xff]
  %v7682 = vld [vmem:[%s3 + $0x3c0] sm:$0xff]
  %v7683 = vld [vmem:[%s3 + $0x3c8] sm:$0xff]
  %v7684 = vld [vmem:[%s3 + $0x3d0] sm:$0xff]
  %v7685 = vld [vmem:[%s3 + $0x3d8] sm:$0xff]
  %v7686 = vld [vmem:[%s3 + $0x3e0] sm:$0xff]
  %v7687 = vld [vmem:[%s3 + $0x3e8] sm:$0xff]
  %v7688 = vld [vmem:[%s3 + $0x3f0] sm:$0xff]
  %v7689 = vld [vmem:[%s3 + $0x3f8] sm:$0xff]
  %v7690 = vld [vmem:[%s1308] sm:$0xf]
  %v7692 = vlaneseq
  %v7693 = vshrl.u32 %v7692, 7
  %v7694 = vsub.s32 0, %v7693
  %v7695 = vrot.slane %v7690, %v7694
  %v7696 = vlaneseq
  %v7697 = vshrl.u32 %v7696, 7
  %v7698 = vsub.s32 1, %v7697
  %v7699 = vrot.slane %v7690, %v7698
  %v7700 = vlaneseq
  %v7701 = vshrl.u32 %v7700, 7
  %v7702 = vsub.s32 2, %v7701
  %v7703 = vrot.slane %v7690, %v7702
  %v7704 = vlaneseq
  %v7705 = vshrl.u32 %v7704, 7
  %v7706 = vsub.s32 3, %v7705
  %v7707 = vrot.slane %v7690, %v7706
  %7712 = vmatprep.subr.mxu0 %v7563
  %7713 = vmatpush1.msra.mxu0 %v7562
  %7714 = vmatprep.subr.mxu0 %v7567
  %7715 = vmatpush1.msra.mxu0 %v7566
  %7716 = vmatprep.subr.mxu0 %v7571
  %7717 = vmatpush1.msra.mxu0 %v7570
  %7718 = vmatprep.subr.mxu0 %v7575
  %7719 = vmatpush1.msra.mxu0 %v7574
  %7720 = vmatprep.subr.mxu0 %v7579
  %7721 = vmatpush1.msra.mxu0 %v7578
  %7722 = vmatprep.subr.mxu0 %v7583
  %7723 = vmatpush1.msra.mxu0 %v7582
  %7724 = vmatprep.subr.mxu0 %v7587
  %7725 = vmatpush1.msra.mxu0 %v7586
  %7726 = vmatprep.subr.mxu0 %v7591
  %7727 = vmatpush1.msra.mxu0 %v7590
  %7728 = vmatprep.subr.mxu0 %v7595
  %7729 = vmatpush1.msra.mxu0 %v7594
  %7730 = vmatprep.subr.mxu0 %v7599
  %7731 = vmatpush1.msra.mxu0 %v7598
  %7732 = vmatprep.subr.mxu0 %v7603
  %7733 = vmatpush1.msra.mxu0 %v7602
  %7734 = vmatprep.subr.mxu0 %v7607
  %7735 = vmatpush1.msra.mxu0 %v7606
  %7736 = vmatprep.subr.mxu0 %v7611
  %7737 = vmatpush1.msra.mxu0 %v7610
  %7738 = vmatprep.subr.mxu0 %v7615
  %7739 = vmatpush1.msra.mxu0 %v7614
  %7740 = vmatprep.subr.mxu0 %v7619
  %7741 = vmatpush1.msra.mxu0 %v7618
  %7742 = vmatprep.subr.mxu0 %v7623
  %7743 = vmatpush1.msra.mxu0 %v7622
  %7744 = vmatprep.subr.mxu0 %v7627
  %7745 = vmatpush1.msra.mxu0 %v7626
  %7746 = vmatprep.subr.mxu0 %v7631
  %7747 = vmatpush1.msra.mxu0 %v7630
  %7748 = vmatprep.subr.mxu0 %v7635
  %7749 = vmatpush1.msra.mxu0 %v7634
  %7750 = vmatprep.subr.mxu0 %v7639
  %7751 = vmatpush1.msra.mxu0 %v7638
  %7752 = vmatprep.subr.mxu0 %v7643
  %7753 = vmatpush1.msra.mxu0 %v7642
  %7754 = vmatprep.subr.mxu0 %v7647
  %7755 = vmatpush1.msra.mxu0 %v7646
  %7756 = vmatprep.subr.mxu0 %v7651
  %7757 = vmatpush1.msra.mxu0 %v7650
  %7758 = vmatprep.subr.mxu0 %v7655
  %7759 = vmatpush1.msra.mxu0 %v7654
  %7760 = vmatprep.subr.mxu0 %v7659
  %7761 = vmatpush1.msra.mxu0 %v7658
  %7762 = vmatprep.subr.mxu0 %v7663
  %7763 = vmatpush1.msra.mxu0 %v7662
  %7764 = vmatprep.subr.mxu0 %v7667
  %7765 = vmatpush1.msra.mxu0 %v7666
  %7766 = vmatprep.subr.mxu0 %v7671
  %7767 = vmatpush1.msra.mxu0 %v7670
  %7768 = vmatprep.subr.mxu0 %v7675
  %7769 = vmatpush1.msra.mxu0 %v7674
  %7770 = vmatprep.subr.mxu0 %v7679
  %7771 = vmatpush1.msra.mxu0 %v7678
  %7772 = vmatprep.subr.mxu0 %v7683
  %7773 = vmatpush1.msra.mxu0 %v7682
  %7774 = vmatprep.subr.mxu0 %v7687
  %7775 = vmatpush1.msra.mxu0 %v7686
  %7776 = vmatprep.mubr.f32.mxu0 %v7561
  %7777 = vmatmul.mubr.f32.gmra.mrb[0].mxu0 %v7558
  %v7778 = vpop.f32.mrb[0].mxu0
  %v7779 = vadd.f32 %v7695, %v7778
  %v7780 = vpop.f32.mrb[0].mxu0
  %v7781 = vadd.f32 %v7699, %v7780
  %7782 = vdwg.mxu0
  %7783 = vmatprep.subr.mxu0 %v7565
  %7784 = vmatpush1.msra.mxu0 %v7564
  %7785 = vmatprep.subr.mxu0 %v7569
  %7786 = vmatpush1.msra.mxu0 %v7568
  %7787 = vmatprep.subr.mxu0 %v7573
  %7788 = vmatpush1.msra.mxu0 %v7572
  %7789 = vmatprep.subr.mxu0 %v7577
  %7790 = vmatpush1.msra.mxu0 %v7576
  %7791 = vmatprep.subr.mxu0 %v7581
  %7792 = vmatpush1.msra.mxu0 %v7580
  %7793 = vmatprep.subr.mxu0 %v7585
  %7794 = vmatpush1.msra.mxu0 %v7584
  %7795 = vmatprep.subr.mxu0 %v7589
  %7796 = vmatpush1.msra.mxu0 %v7588
  %7797 = vmatprep.subr.mxu0 %v7593
  %7798 = vmatpush1.msra.mxu0 %v7592
  %7799 = vmatprep.subr.mxu0 %v7597
  %7800 = vmatpush1.msra.mxu0 %v7596
  %7801 = vmatprep.subr.mxu0 %v7601
  %7802 = vmatpush1.msra.mxu0 %v7600
  %7803 = vmatprep.subr.mxu0 %v7605
  %7804 = vmatpush1.msra.mxu0 %v7604
  %7805 = vmatprep.subr.mxu0 %v7609
  %7806 = vmatpush1.msra.mxu0 %v7608
  %7807 = vmatprep.subr.mxu0 %v7613
  %7808 = vmatpush1.msra.mxu0 %v7612
  %7809 = vmatprep.subr.mxu0 %v7617
  %7810 = vmatpush1.msra.mxu0 %v7616
  %7811 = vmatprep.subr.mxu0 %v7621
  %7812 = vmatpush1.msra.mxu0 %v7620
  %7813 = vmatprep.subr.mxu0 %v7625
  %7814 = vmatpush1.msra.mxu0 %v7624
  %7815 = vmatprep.subr.mxu0 %v7629
  %7816 = vmatpush1.msra.mxu0 %v7628
  %7817 = vmatprep.subr.mxu0 %v7633
  %7818 = vmatpush1.msra.mxu0 %v7632
  %7819 = vmatprep.subr.mxu0 %v7637
  %7820 = vmatpush1.msra.mxu0 %v7636
  %7821 = vmatprep.subr.mxu0 %v7641
  %7822 = vmatpush1.msra.mxu0 %v7640
  %7823 = vmatprep.subr.mxu0 %v7645
  %7824 = vmatpush1.msra.mxu0 %v7644
  %7825 = vmatprep.subr.mxu0 %v7649
  %7826 = vmatpush1.msra.mxu0 %v7648
  %7827 = vmatprep.subr.mxu0 %v7653
  %7828 = vmatpush1.msra.mxu0 %v7652
  %7829 = vmatprep.subr.mxu0 %v7657
  %7830 = vmatpush1.msra.mxu0 %v7656
  %7831 = vmatprep.subr.mxu0 %v7661
  %7832 = vmatpush1.msra.mxu0 %v7660
  %7833 = vmatprep.subr.mxu0 %v7665
  %7834 = vmatpush1.msra.mxu0 %v7664
  %7835 = vmatprep.subr.mxu0 %v7669
  %7836 = vmatpush1.msra.mxu0 %v7668
  %7837 = vmatprep.subr.mxu0 %v7673
  %7838 = vmatpush1.msra.mxu0 %v7672
  %7839 = vmatprep.subr.mxu0 %v7677
  %7840 = vmatpush1.msra.mxu0 %v7676
  %7841 = vmatprep.subr.mxu0 %v7681
  %7842 = vmatpush1.msra.mxu0 %v7680
  %7843 = vmatprep.subr.mxu0 %v7685
  %7844 = vmatpush1.msra.mxu0 %v7684
  %7845 = vmatprep.subr.mxu0 %v7689
  %7846 = vmatpush1.msra.mxu0 %v7688
  %7847 = vmatprep.mubr.f32.mxu0 %v7561
  %7848 = vmatmul.mubr.f32.gmra.mrb[0].mxu0 %v7558
  %v7849 = vpop.f32.mrb[0].mxu0
  %v7850 = vadd.f32 %v7703, %v7849
  %v7851 = vpop.f32.mrb[0].mxu0
  %v7852 = vadd.f32 %v7707, %v7851
  %7853 = vdwg.mxu0
  %v7854 = vld [vmem:[%s1473] sm:$0xff]
  %v7855 = vxor.u32 %v7779, 2147483648
  %v7856 = vmul.f32 %v7855, 1.442695
  %v7857 = vpow.pop %v7856
  %v7858 = vadd.f32 %v7857, 1.0
  %v7859 = vrcp.pop %v7858
  %v7860 = vmul.f32 1.0, %v7859
  %v7861 = vxor.u32 %v7781, 2147483648
  %v7862 = vmul.f32 %v7861, 1.442695
  %v7863 = vpow.pop %v7862
  %v7864 = vadd.f32 %v7863, 1.0
  %v7865 = vrcp.pop %v7864
  %v7866 = vmul.f32 1.0, %v7865
  %v7867 = vtanh.pop %v7850
  %v7868 = vxor.u32 %v7852, 2147483648
  %v7869 = vmul.f32 %v7868, 1.442695
  %v7870 = vpow.pop %v7869
  %v7871 = vadd.f32 %v7870, 1.0
  %v7872 = vrcp.pop %v7871
  %v7873 = vmul.f32 1.0, %v7872
  %v7874 = vmul.f32 %v7866, %v7854
  %v7875 = vmul.f32 %v7860, %v7867
  %v7876 = vadd.f32 %v7874, %v7875
  %v7877 = vtanh.pop %v7876
  %v7878 = vmul.f32 %v7873, %v7877
  %7879 = vst [vmem:[%s1178] sm:$0xff] %v7878
  %7880 = vst [vmem:[%s1473] sm:$0xff] %v7876
  %v7881 = vld [vmem:[%s1501] sm:$0xff]
  %v7882 = vld [vmem:[%s1503] sm:$0xff]
  %v7883 = vld [vmem:[%s1503 + $0x8] sm:$0xff]
  %v7884 = vld [vmem:[%s1503 + $0x10] sm:$0xff]
  %v7885 = vld [vmem:[%s1503 + $0x18] sm:$0xff]
  %v7886 = vld [vmem:[%s1503 + $0x20] sm:$0xff]
  %v7887 = vld [vmem:[%s1503 + $0x28] sm:$0xff]
  %v7888 = vld [vmem:[%s1503 + $0x30] sm:$0xff]
  %v7889 = vld [vmem:[%s1503 + $0x38] sm:$0xff]
  %v7890 = vld [vmem:[%s1503 + $0x40] sm:$0xff]
  %v7891 = vld [vmem:[%s1503 + $0x48] sm:$0xff]
  %v7892 = vld [vmem:[%s1503 + $0x50] sm:$0xff]
  %v7893 = vld [vmem:[%s1503 + $0x58] sm:$0xff]
  %v7894 = vld [vmem:[%s1503 + $0x60] sm:$0xff]
  %v7895 = vld [vmem:[%s1503 + $0x68] sm:$0xff]
  %v7896 = vld [vmem:[%s1503 + $0x70] sm:$0xff]
  %v7897 = vld [vmem:[%s1503 + $0x78] sm:$0xff]
  %v7898 = vld [vmem:[%s1503 + $0x80] sm:$0xff]
  %v7899 = vld [vmem:[%s1503 + $0x88] sm:$0xff]
  %v7900 = vld [vmem:[%s1503 + $0x90] sm:$0xff]
  %v7901 = vld [vmem:[%s1503 + $0x98] sm:$0xff]
  %v7902 = vld [vmem:[%s1503 + $0xa0] sm:$0xff]
  %v7903 = vld [vmem:[%s1503 + $0xa8] sm:$0xff]
  %v7904 = vld [vmem:[%s1503 + $0xb0] sm:$0xff]
  %v7905 = vld [vmem:[%s1503 + $0xb8] sm:$0xff]
  %v7906 = vld [vmem:[%s1503 + $0xc0] sm:$0xff]
  %v7907 = vld [vmem:[%s1503 + $0xc8] sm:$0xff]
  %v7908 = vld [vmem:[%s1503 + $0xd0] sm:$0xff]
  %v7909 = vld [vmem:[%s1503 + $0xd8] sm:$0xff]
  %v7910 = vld [vmem:[%s1503 + $0xe0] sm:$0xff]
  %v7911 = vld [vmem:[%s1503 + $0xe8] sm:$0xff]
  %v7912 = vld [vmem:[%s1503 + $0xf0] sm:$0xff]
  %v7913 = vld [vmem:[%s1503 + $0xf8] sm:$0xff]
  %v7914 = vld [vmem:[%s1503 + $0x100] sm:$0xff]
  %v7915 = vld [vmem:[%s1503 + $0x108] sm:$0xff]
  %v7916 = vld [vmem:[%s1503 + $0x110] sm:$0xff]
  %v7917 = vld [vmem:[%s1503 + $0x118] sm:$0xff]
  %v7918 = vld [vmem:[%s1503 + $0x120] sm:$0xff]
  %v7919 = vld [vmem:[%s1503 + $0x128] sm:$0xff]
  %v7920 = vld [vmem:[%s1503 + $0x130] sm:$0xff]
  %v7921 = vld [vmem:[%s1503 + $0x138] sm:$0xff]
  %v7922 = vld [vmem:[%s1503 + $0x140] sm:$0xff]
  %v7923 = vld [vmem:[%s1503 + $0x148] sm:$0xff]
  %v7924 = vld [vmem:[%s1503 + $0x150] sm:$0xff]
  %v7925 = vld [vmem:[%s1503 + $0x158] sm:$0xff]
  %v7926 = vld [vmem:[%s1503 + $0x160] sm:$0xff]
  %v7927 = vld [vmem:[%s1503 + $0x168] sm:$0xff]
  %v7928 = vld [vmem:[%s1503 + $0x170] sm:$0xff]
  %v7929 = vld [vmem:[%s1503 + $0x178] sm:$0xff]
  %v7930 = vld [vmem:[%s1503 + $0x180] sm:$0xff]
  %v7931 = vld [vmem:[%s1503 + $0x188] sm:$0xff]
  %v7932 = vld [vmem:[%s1503 + $0x190] sm:$0xff]
  %v7933 = vld [vmem:[%s1503 + $0x198] sm:$0xff]
  %v7934 = vld [vmem:[%s1503 + $0x1a0] sm:$0xff]
  %v7935 = vld [vmem:[%s1503 + $0x1a8] sm:$0xff]
  %v7936 = vld [vmem:[%s1503 + $0x1b0] sm:$0xff]
  %v7937 = vld [vmem:[%s1503 + $0x1b8] sm:$0xff]
  %v7938 = vld [vmem:[%s1503 + $0x1c0] sm:$0xff]
  %v7939 = vld [vmem:[%s1503 + $0x1c8] sm:$0xff]
  %v7940 = vld [vmem:[%s1503 + $0x1d0] sm:$0xff]
  %v7941 = vld [vmem:[%s1503 + $0x1d8] sm:$0xff]
  %v7942 = vld [vmem:[%s1503 + $0x1e0] sm:$0xff]
  %v7943 = vld [vmem:[%s1503 + $0x1e8] sm:$0xff]
  %v7944 = vld [vmem:[%s1503 + $0x1f0] sm:$0xff]
  %v7945 = vld [vmem:[%s1503 + $0x1f8] sm:$0xff]
  %v7946 = vld [vmem:[%s1503 + $0x200] sm:$0xff]
  %v7947 = vld [vmem:[%s1503 + $0x208] sm:$0xff]
  %v7948 = vld [vmem:[%s1503 + $0x210] sm:$0xff]
  %v7949 = vld [vmem:[%s1503 + $0x218] sm:$0xff]
  %v7950 = vld [vmem:[%s1503 + $0x220] sm:$0xff]
  %v7951 = vld [vmem:[%s1503 + $0x228] sm:$0xff]
  %v7952 = vld [vmem:[%s1503 + $0x230] sm:$0xff]
  %v7953 = vld [vmem:[%s1503 + $0x238] sm:$0xff]
  %v7954 = vld [vmem:[%s1503 + $0x240] sm:$0xff]
  %v7955 = vld [vmem:[%s1503 + $0x248] sm:$0xff]
  %v7956 = vld [vmem:[%s1503 + $0x250] sm:$0xff]
  %v7957 = vld [vmem:[%s1503 + $0x258] sm:$0xff]
  %v7958 = vld [vmem:[%s1503 + $0x260] sm:$0xff]
  %v7959 = vld [vmem:[%s1503 + $0x268] sm:$0xff]
  %v7960 = vld [vmem:[%s1503 + $0x270] sm:$0xff]
  %v7961 = vld [vmem:[%s1503 + $0x278] sm:$0xff]
  %v7962 = vld [vmem:[%s1503 + $0x280] sm:$0xff]
  %v7963 = vld [vmem:[%s1503 + $0x288] sm:$0xff]
  %v7964 = vld [vmem:[%s1503 + $0x290] sm:$0xff]
  %v7965 = vld [vmem:[%s1503 + $0x298] sm:$0xff]
  %v7966 = vld [vmem:[%s1503 + $0x2a0] sm:$0xff]
  %v7967 = vld [vmem:[%s1503 + $0x2a8] sm:$0xff]
  %v7968 = vld [vmem:[%s1503 + $0x2b0] sm:$0xff]
  %v7969 = vld [vmem:[%s1503 + $0x2b8] sm:$0xff]
  %v7970 = vld [vmem:[%s1503 + $0x2c0] sm:$0xff]
  %v7971 = vld [vmem:[%s1503 + $0x2c8] sm:$0xff]
  %v7972 = vld [vmem:[%s1503 + $0x2d0] sm:$0xff]
  %v7973 = vld [vmem:[%s1503 + $0x2d8] sm:$0xff]
  %v7974 = vld [vmem:[%s1503 + $0x2e0] sm:$0xff]
  %v7975 = vld [vmem:[%s1503 + $0x2e8] sm:$0xff]
  %v7976 = vld [vmem:[%s1503 + $0x2f0] sm:$0xff]
  %v7977 = vld [vmem:[%s1503 + $0x2f8] sm:$0xff]
  %v7978 = vld [vmem:[%s1503 + $0x300] sm:$0xff]
  %v7979 = vld [vmem:[%s1503 + $0x308] sm:$0xff]
  %v7980 = vld [vmem:[%s1503 + $0x310] sm:$0xff]
  %v7981 = vld [vmem:[%s1503 + $0x318] sm:$0xff]
  %v7982 = vld [vmem:[%s1503 + $0x320] sm:$0xff]
  %v7983 = vld [vmem:[%s1503 + $0x328] sm:$0xff]
  %v7984 = vld [vmem:[%s1503 + $0x330] sm:$0xff]
  %v7985 = vld [vmem:[%s1503 + $0x338] sm:$0xff]
  %v7986 = vld [vmem:[%s1503 + $0x340] sm:$0xff]
  %v7987 = vld [vmem:[%s1503 + $0x348] sm:$0xff]
  %v7988 = vld [vmem:[%s1503 + $0x350] sm:$0xff]
  %v7989 = vld [vmem:[%s1503 + $0x358] sm:$0xff]
  %v7990 = vld [vmem:[%s1503 + $0x360] sm:$0xff]
  %v7991 = vld [vmem:[%s1503 + $0x368] sm:$0xff]
  %v7992 = vld [vmem:[%s1503 + $0x370] sm:$0xff]
  %v7993 = vld [vmem:[%s1503 + $0x378] sm:$0xff]
  %v7994 = vld [vmem:[%s1503 + $0x380] sm:$0xff]
  %v7995 = vld [vmem:[%s1503 + $0x388] sm:$0xff]
  %v7996 = vld [vmem:[%s1503 + $0x390] sm:$0xff]
  %v7997 = vld [vmem:[%s1503 + $0x398] sm:$0xff]
  %v7998 = vld [vmem:[%s1503 + $0x3a0] sm:$0xff]
  %v7999 = vld [vmem:[%s1503 + $0x3a8] sm:$0xff]
  %v8000 = vld [vmem:[%s1503 + $0x3b0] sm:$0xff]
  %v8001 = vld [vmem:[%s1503 + $0x3b8] sm:$0xff]
  %v8002 = vld [vmem:[%s1503 + $0x3c0] sm:$0xff]
  %v8003 = vld [vmem:[%s1503 + $0x3c8] sm:$0xff]
  %v8004 = vld [vmem:[%s1503 + $0x3d0] sm:$0xff]
  %v8005 = vld [vmem:[%s1503 + $0x3d8] sm:$0xff]
  %v8006 = vld [vmem:[%s1503 + $0x3e0] sm:$0xff]
  %v8007 = vld [vmem:[%s1503 + $0x3e8] sm:$0xff]
  %v8008 = vld [vmem:[%s1503 + $0x3f0] sm:$0xff]
  %v8009 = vld [vmem:[%s1503 + $0x3f8] sm:$0xff]
  %v8010 = vld [vmem:[%s1632] sm:$0xf]
  %v8012 = vlaneseq
  %v8013 = vshrl.u32 %v8012, 7
  %v8014 = vsub.s32 0, %v8013
  %v8015 = vrot.slane %v8010, %v8014
  %v8016 = vlaneseq
  %v8017 = vshrl.u32 %v8016, 7
  %v8018 = vsub.s32 1, %v8017
  %v8019 = vrot.slane %v8010, %v8018
  %v8020 = vlaneseq
  %v8021 = vshrl.u32 %v8020, 7
  %v8022 = vsub.s32 2, %v8021
  %v8023 = vrot.slane %v8010, %v8022
  %v8024 = vlaneseq
  %v8025 = vshrl.u32 %v8024, 7
  %v8026 = vsub.s32 3, %v8025
  %v8027 = vrot.slane %v8010, %v8026
  %8032 = vmatprep.subr.mxu0 %v7883
  %8033 = vmatpush1.msra.mxu0 %v7882
  %8034 = vmatprep.subr.mxu0 %v7887
  %8035 = vmatpush1.msra.mxu0 %v7886
  %8036 = vmatprep.subr.mxu0 %v7891
  %8037 = vmatpush1.msra.mxu0 %v7890
  %8038 = vmatprep.subr.mxu0 %v7895
  %8039 = vmatpush1.msra.mxu0 %v7894
  %8040 = vmatprep.subr.mxu0 %v7899
  %8041 = vmatpush1.msra.mxu0 %v7898
  %8042 = vmatprep.subr.mxu0 %v7903
  %8043 = vmatpush1.msra.mxu0 %v7902
  %8044 = vmatprep.subr.mxu0 %v7907
  %8045 = vmatpush1.msra.mxu0 %v7906
  %8046 = vmatprep.subr.mxu0 %v7911
  %8047 = vmatpush1.msra.mxu0 %v7910
  %8048 = vmatprep.subr.mxu0 %v7915
  %8049 = vmatpush1.msra.mxu0 %v7914
  %8050 = vmatprep.subr.mxu0 %v7919
  %8051 = vmatpush1.msra.mxu0 %v7918
  %8052 = vmatprep.subr.mxu0 %v7923
  %8053 = vmatpush1.msra.mxu0 %v7922
  %8054 = vmatprep.subr.mxu0 %v7927
  %8055 = vmatpush1.msra.mxu0 %v7926
  %8056 = vmatprep.subr.mxu0 %v7931
  %8057 = vmatpush1.msra.mxu0 %v7930
  %8058 = vmatprep.subr.mxu0 %v7935
  %8059 = vmatpush1.msra.mxu0 %v7934
  %8060 = vmatprep.subr.mxu0 %v7939
  %8061 = vmatpush1.msra.mxu0 %v7938
  %8062 = vmatprep.subr.mxu0 %v7943
  %8063 = vmatpush1.msra.mxu0 %v7942
  %8064 = vmatprep.subr.mxu0 %v7947
  %8065 = vmatpush1.msra.mxu0 %v7946
  %8066 = vmatprep.subr.mxu0 %v7951
  %8067 = vmatpush1.msra.mxu0 %v7950
  %8068 = vmatprep.subr.mxu0 %v7955
  %8069 = vmatpush1.msra.mxu0 %v7954
  %8070 = vmatprep.subr.mxu0 %v7959
  %8071 = vmatpush1.msra.mxu0 %v7958
  %8072 = vmatprep.subr.mxu0 %v7963
  %8073 = vmatpush1.msra.mxu0 %v7962
  %8074 = vmatprep.subr.mxu0 %v7967
  %8075 = vmatpush1.msra.mxu0 %v7966
  %8076 = vmatprep.subr.mxu0 %v7971
  %8077 = vmatpush1.msra.mxu0 %v7970
  %8078 = vmatprep.subr.mxu0 %v7975
  %8079 = vmatpush1.msra.mxu0 %v7974
  %8080 = vmatprep.subr.mxu0 %v7979
  %8081 = vmatpush1.msra.mxu0 %v7978
  %8082 = vmatprep.subr.mxu0 %v7983
  %8083 = vmatpush1.msra.mxu0 %v7982
  %8084 = vmatprep.subr.mxu0 %v7987
  %8085 = vmatpush1.msra.mxu0 %v7986
  %8086 = vmatprep.subr.mxu0 %v7991
  %8087 = vmatpush1.msra.mxu0 %v7990
  %8088 = vmatprep.subr.mxu0 %v7995
  %8089 = vmatpush1.msra.mxu0 %v7994
  %8090 = vmatprep.subr.mxu0 %v7999
  %8091 = vmatpush1.msra.mxu0 %v7998
  %8092 = vmatprep.subr.mxu0 %v8003
  %8093 = vmatpush1.msra.mxu0 %v8002
  %8094 = vmatprep.subr.mxu0 %v8007
  %8095 = vmatpush1.msra.mxu0 %v8006
  %8096 = vmatprep.mubr.f32.mxu0 %v7881
  %8097 = vmatmul.mubr.f32.gmra.mrb[0].mxu0 %v7878
  %v8098 = vpop.f32.mrb[0].mxu0
  %v8099 = vadd.f32 %v8015, %v8098
  %v8100 = vpop.f32.mrb[0].mxu0
  %v8101 = vadd.f32 %v8019, %v8100
  %8102 = vdwg.mxu0
  %8103 = vmatprep.subr.mxu0 %v7885
  %8104 = vmatpush1.msra.mxu0 %v7884
  %8105 = vmatprep.subr.mxu0 %v7889
  %8106 = vmatpush1.msra.mxu0 %v7888
  %8107 = vmatprep.subr.mxu0 %v7893
  %8108 = vmatpush1.msra.mxu0 %v7892
  %8109 = vmatprep.subr.mxu0 %v7897
  %8110 = vmatpush1.msra.mxu0 %v7896
  %8111 = vmatprep.subr.mxu0 %v7901
  %8112 = vmatpush1.msra.mxu0 %v7900
  %8113 = vmatprep.subr.mxu0 %v7905
  %8114 = vmatpush1.msra.mxu0 %v7904
  %8115 = vmatprep.subr.mxu0 %v7909
  %8116 = vmatpush1.msra.mxu0 %v7908
  %8117 = vmatprep.subr.mxu0 %v7913
  %8118 = vmatpush1.msra.mxu0 %v7912
  %8119 = vmatprep.subr.mxu0 %v7917
  %8120 = vmatpush1.msra.mxu0 %v7916
  %8121 = vmatprep.subr.mxu0 %v7921
  %8122 = vmatpush1.msra.mxu0 %v7920
  %8123 = vmatprep.subr.mxu0 %v7925
  %8124 = vmatpush1.msra.mxu0 %v7924
  %8125 = vmatprep.subr.mxu0 %v7929
  %8126 = vmatpush1.msra.mxu0 %v7928
  %8127 = vmatprep.subr.mxu0 %v7933
  %8128 = vmatpush1.msra.mxu0 %v7932
  %8129 = vmatprep.subr.mxu0 %v7937
  %8130 = vmatpush1.msra.mxu0 %v7936
  %8131 = vmatprep.subr.mxu0 %v7941
  %8132 = vmatpush1.msra.mxu0 %v7940
  %8133 = vmatprep.subr.mxu0 %v7945
  %8134 = vmatpush1.msra.mxu0 %v7944
  %8135 = vmatprep.subr.mxu0 %v7949
  %8136 = vmatpush1.msra.mxu0 %v7948
  %8137 = vmatprep.subr.mxu0 %v7953
  %8138 = vmatpush1.msra.mxu0 %v7952
  %8139 = vmatprep.subr.mxu0 %v7957
  %8140 = vmatpush1.msra.mxu0 %v7956
  %8141 = vmatprep.subr.mxu0 %v7961
  %8142 = vmatpush1.msra.mxu0 %v7960
  %8143 = vmatprep.subr.mxu0 %v7965
  %8144 = vmatpush1.msra.mxu0 %v7964
  %8145 = vmatprep.subr.mxu0 %v7969
  %8146 = vmatpush1.msra.mxu0 %v7968
  %8147 = vmatprep.subr.mxu0 %v7973
  %8148 = vmatpush1.msra.mxu0 %v7972
  %8149 = vmatprep.subr.mxu0 %v7977
  %8150 = vmatpush1.msra.mxu0 %v7976
  %8151 = vmatprep.subr.mxu0 %v7981
  %8152 = vmatpush1.msra.mxu0 %v7980
  %8153 = vmatprep.subr.mxu0 %v7985
  %8154 = vmatpush1.msra.mxu0 %v7984
  %8155 = vmatprep.subr.mxu0 %v7989
  %8156 = vmatpush1.msra.mxu0 %v7988
  %8157 = vmatprep.subr.mxu0 %v7993
  %8158 = vmatpush1.msra.mxu0 %v7992
  %8159 = vmatprep.subr.mxu0 %v7997
  %8160 = vmatpush1.msra.mxu0 %v7996
  %8161 = vmatprep.subr.mxu0 %v8001
  %8162 = vmatpush1.msra.mxu0 %v8000
  %8163 = vmatprep.subr.mxu0 %v8005
  %8164 = vmatpush1.msra.mxu0 %v8004
  %8165 = vmatprep.subr.mxu0 %v8009
  %8166 = vmatpush1.msra.mxu0 %v8008
  %8167 = vmatprep.mubr.f32.mxu0 %v7881
  %8168 = vmatmul.mubr.f32.gmra.mrb[0].mxu0 %v7878
  %v8169 = vpop.f32.mrb[0].mxu0
  %v8170 = vadd.f32 %v8023, %v8169
  %v8171 = vpop.f32.mrb[0].mxu0
  %v8172 = vadd.f32 %v8027, %v8171
  %8173 = vdwg.mxu0
  %v8174 = vld [vmem:[%s1797] sm:$0xff]
  %v8175 = vxor.u32 %v8099, 2147483648
  %v8176 = vmul.f32 %v8175, 1.442695
  %v8177 = vpow.pop %v8176
  %v8178 = vadd.f32 %v8177, 1.0
  %v8179 = vrcp.pop %v8178
  %v8180 = vmul.f32 1.0, %v8179
  %v8181 = vxor.u32 %v8101, 2147483648
  %v8182 = vmul.f32 %v8181, 1.442695
  %v8183 = vpow.pop %v8182
  %v8184 = vadd.f32 %v8183, 1.0
  %v8185 = vrcp.pop %v8184
  %v8186 = vmul.f32 1.0, %v8185
  %v8187 = vtanh.pop %v8170
  %v8188 = vxor.u32 %v8172, 2147483648
  %v8189 = vmul.f32 %v8188, 1.442695
  %v8190 = vpow.pop %v8189
  %v8191 = vadd.f32 %v8190, 1.0
  %v8192 = vrcp.pop %v8191
  %v8193 = vmul.f32 1.0, %v8192
  %v8194 = vmul.f32 %v8186, %v8174
  %v8195 = vmul.f32 %v8180, %v8187
  %v8196 = vadd.f32 %v8194, %v8195
  %v8197 = vtanh.pop %v8196
  %v8198 = vmul.f32 %v8193, %v8197
  %8199 = vst [vmem:[%s1501] sm:$0xff] %v8198
  %8200 = vst [vmem:[%s1797] sm:$0xff] %v8196
  %s8201 = scalar_lea.vmem [#allocation3], 56
  %8202 = vst [vmem:[%s8201] sm:$0xff] %v8198
  %v8203 = vld [vmem:[#allocation3] sm:$0xff]
  %v8204 = vld [vmem:[#allocation3 + $0x8] sm:$0xff]
  %v8205 = vld [vmem:[#allocation3 + $0x10] sm:$0xff]
  %v8206 = vld [vmem:[#allocation3 + $0x18] sm:$0xff]
  %v8207 = vld [vmem:[#allocation3 + $0x20] sm:$0xff]
  %v8208 = vld [vmem:[#allocation3 + $0x28] sm:$0xff]
  %v8209 = vld [vmem:[#allocation3 + $0x30] sm:$0xff]
  %v8210 = vld [vmem:[#allocation3 + $0x38] sm:$0xff]
  %v8211 = vcombine.low %v8203, %v8205
  %v8212 = vcombine.high %v8203, %v8205
  %v8214 = vunpack.c.l.s4 1983009808
  %v8215 = vunpack.c.0.s8 %v8214
  %v8216 = vlaneseq
  %v8217 = vshrl.u32 %v8216, 7
  %v8218 = vsub.s32 %v8215, %v8217
  %v8219 = vrot.slane %v8211, %v8218
  %v8221 = vunpack.c.l.s4 1983009808
  %v8222 = vunpack.c.0.s8 %v8221
  %v8223 = vlaneseq
  %v8224 = vshrl.u32 %v8223, 7
  %v8225 = vsub.s32 %v8222, %v8224
  %v8226 = vrot.slane %v8212, %v8225
  %v8227 = vcombine.low %v8204, %v8206
  %v8228 = vcombine.high %v8204, %v8206
  %v8230 = vunpack.c.l.s4 1983009808
  %v8231 = vunpack.c.0.s8 %v8230
  %v8232 = vlaneseq
  %v8233 = vshrl.u32 %v8232, 7
  %v8234 = vsub.s32 %v8231, %v8233
  %v8235 = vrot.slane %v8227, %v8234
  %v8237 = vunpack.c.l.s4 1983009808
  %v8238 = vunpack.c.0.s8 %v8237
  %v8239 = vlaneseq
  %v8240 = vshrl.u32 %v8239, 7
  %v8241 = vsub.s32 %v8238, %v8240
  %v8242 = vrot.slane %v8228, %v8241
  %v8243 = vcombine.low %v8207, %v8209
  %v8244 = vcombine.high %v8207, %v8209
  %v8246 = vunpack.c.l.s4 1983009808
  %v8247 = vunpack.c.0.s8 %v8246
  %v8248 = vlaneseq
  %v8249 = vshrl.u32 %v8248, 7
  %v8250 = vsub.s32 %v8247, %v8249
  %v8251 = vrot.slane %v8243, %v8250
  %v8253 = vunpack.c.l.s4 1983009808
  %v8254 = vunpack.c.0.s8 %v8253
  %v8255 = vlaneseq
  %v8256 = vshrl.u32 %v8255, 7
  %v8257 = vsub.s32 %v8254, %v8256
  %v8258 = vrot.slane %v8244, %v8257
  %v8259 = vcombine.low %v8208, %v8210
  %v8260 = vcombine.high %v8208, %v8210
  %v8262 = vunpack.c.l.s4 1983009808
  %v8263 = vunpack.c.0.s8 %v8262
  %v8264 = vlaneseq
  %v8265 = vshrl.u32 %v8264, 7
  %v8266 = vsub.s32 %v8263, %v8265
  %v8267 = vrot.slane %v8259, %v8266
  %v8269 = vunpack.c.l.s4 1983009808
  %v8270 = vunpack.c.0.s8 %v8269
  %v8271 = vlaneseq
  %v8272 = vshrl.u32 %v8271, 7
  %v8273 = vsub.s32 %v8270, %v8272
  %v8274 = vrot.slane %v8260, %v8273
  %v8275 = vcombine.low %v8219, %v8235
  %v8276 = vcombine.high %v8219, %v8235
  %v8278 = vunpack.c.l.s4 1934713408
  %v8279 = vunpack.c.0.s8 %v8278
  %v8280 = vlaneseq
  %v8281 = vshrl.u32 %v8280, 7
  %v8282 = vsub.s32 %v8279, %v8281
  %v8283 = vrot.slane %v8275, %v8282
  %v8285 = vunpack.c.l.s4 1934713408
  %v8286 = vunpack.c.0.s8 %v8285
  %v8287 = vlaneseq
  %v8288 = vshrl.u32 %v8287, 7
  %v8289 = vsub.s32 %v8286, %v8288
  %v8290 = vrot.slane %v8276, %v8289
  %v8291 = vcombine.low %v8226, %v8242
  %v8292 = vcombine.high %v8226, %v8242
  %v8294 = vunpack.c.l.s4 1934713408
  %v8295 = vunpack.c.0.s8 %v8294
  %v8296 = vlaneseq
  %v8297 = vshrl.u32 %v8296, 7
  %v8298 = vsub.s32 %v8295, %v8297
  %v8299 = vrot.slane %v8291, %v8298
  %v8301 = vunpack.c.l.s4 1934713408
  %v8302 = vunpack.c.0.s8 %v8301
  %v8303 = vlaneseq
  %v8304 = vshrl.u32 %v8303, 7
  %v8305 = vsub.s32 %v8302, %v8304
  %v8306 = vrot.slane %v8292, %v8305
  %v8307 = vcombine.low %v8251, %v8267
  %v8308 = vcombine.high %v8251, %v8267
  %v8310 = vunpack.c.l.s4 1934713408
  %v8311 = vunpack.c.0.s8 %v8310
  %v8312 = vlaneseq
  %v8313 = vshrl.u32 %v8312, 7
  %v8314 = vsub.s32 %v8311, %v8313
  %v8315 = vrot.slane %v8307, %v8314
  %v8317 = vunpack.c.l.s4 1934713408
  %v8318 = vunpack.c.0.s8 %v8317
  %v8319 = vlaneseq
  %v8320 = vshrl.u32 %v8319, 7
  %v8321 = vsub.s32 %v8318, %v8320
  %v8322 = vrot.slane %v8308, %v8321
  %v8323 = vcombine.low %v8258, %v8274
  %v8324 = vcombine.high %v8258, %v8274
  %v8326 = vunpack.c.l.s4 1934713408
  %v8327 = vunpack.c.0.s8 %v8326
  %v8328 = vlaneseq
  %v8329 = vshrl.u32 %v8328, 7
  %v8330 = vsub.s32 %v8327, %v8329
  %v8331 = vrot.slane %v8323, %v8330
  %v8333 = vunpack.c.l.s4 1934713408
  %v8334 = vunpack.c.0.s8 %v8333
  %v8335 = vlaneseq
  %v8336 = vshrl.u32 %v8335, 7
  %v8337 = vsub.s32 %v8334, %v8336
  %v8338 = vrot.slane %v8324, %v8337
  %v8339 = vcombine.low %v8283, %v8315
  %v8340 = vcombine.high %v8283, %v8315
  %v8341 = vcombine.low %v8290, %v8322
  %v8342 = vcombine.high %v8290, %v8322
  %v8343 = vcombine.low %v8299, %v8331
  %v8344 = vcombine.high %v8299, %v8331
  %v8345 = vcombine.low %v8306, %v8338
  %v8346 = vcombine.high %v8306, %v8338
  %v8347 = vld [vmem:[%s5] sm:$0xff]
  %v8348 = vld [vmem:[%s5 + $0x8] sm:$0xff]
  %v8349 = vld [vmem:[%s5 + $0x10] sm:$0xff]
  %v8350 = vld [vmem:[%s5 + $0x18] sm:$0xff]
  %v8351 = vld [vmem:[%s5 + $0x20] sm:$0xff]
  %v8352 = vld [vmem:[%s5 + $0x28] sm:$0xff]
  %v8353 = vld [vmem:[%s5 + $0x30] sm:$0xff]
  %v8354 = vld [vmem:[%s5 + $0x38] sm:$0xff]
  %v8355 = vld [vmem:[%s5 + $0x40] sm:$0xff]
  %v8356 = vld [vmem:[%s5 + $0x48] sm:$0xff]
  %v8357 = vld [vmem:[%s5 + $0x50] sm:$0xff]
  %v8358 = vld [vmem:[%s5 + $0x58] sm:$0xff]
  %v8359 = vld [vmem:[%s5 + $0x60] sm:$0xff]
  %v8360 = vld [vmem:[%s5 + $0x68] sm:$0xff]
  %v8361 = vld [vmem:[%s5 + $0x70] sm:$0xff]
  %v8362 = vld [vmem:[%s5 + $0x78] sm:$0xff]
  %v8363 = vld [vmem:[%s6] sm:$0x1]
  %v8365 = vlaneseq
  %v8366 = vshrl.u32 %v8365, 7
  %v8367 = vsub.s32 0, %v8366
  %v8368 = vrot.slane %v8363, %v8367
  %8370 = vmatprep.subr.mxu0 0.0
  %8371 = vmatpush1.msra.mxu0 %v8347
  %8372 = vmatprep.subr.mxu0 0.0
  %8373 = vmatpush1.msra.mxu0 %v8348
  %8374 = vmatprep.subr.mxu0 0.0
  %8375 = vmatpush1.msra.mxu0 %v8349
  %8376 = vmatprep.subr.mxu0 0.0
  %8377 = vmatpush1.msra.mxu0 %v8350
  %8378 = vmatprep.subr.mxu0 0.0
  %8379 = vmatpush1.msra.mxu0 %v8351
  %8380 = vmatprep.subr.mxu0 0.0
  %8381 = vmatpush1.msra.mxu0 %v8352
  %8382 = vmatprep.subr.mxu0 0.0
  %8383 = vmatpush1.msra.mxu0 %v8353
  %8384 = vmatprep.subr.mxu0 0.0
  %8385 = vmatpush1.msra.mxu0 %v8354
  %8386 = vmatprep.subr.mxu0 0.0
  %8387 = vmatpush1.msra.mxu0 %v8355
  %8388 = vmatprep.subr.mxu0 0.0
  %8389 = vmatpush1.msra.mxu0 %v8356
  %8390 = vmatprep.subr.mxu0 0.0
  %8391 = vmatpush1.msra.mxu0 %v8357
  %8392 = vmatprep.subr.mxu0 0.0
  %8393 = vmatpush1.msra.mxu0 %v8358
  %8394 = vmatprep.subr.mxu0 0.0
  %8395 = vmatpush1.msra.mxu0 %v8359
  %8396 = vmatprep.subr.mxu0 0.0
  %8397 = vmatpush1.msra.mxu0 %v8360
  %8398 = vmatprep.subr.mxu0 0.0
  %8399 = vmatpush1.msra.mxu0 %v8361
  %8400 = vmatprep.subr.mxu0 0.0
  %8401 = vmatpush1.msra.mxu0 %v8362
  %8402 = vmatprep.subr.mxu0 0.0
  %8403 = vmatpush1.msra.mxu0 0.0
  %8404 = vmatprep.subr.mxu0 0.0
  %8405 = vmatpush1.msra.mxu0 0.0
  %8406 = vmatprep.subr.mxu0 0.0
  %8407 = vmatpush1.msra.mxu0 0.0
  %8408 = vmatprep.subr.mxu0 0.0
  %8409 = vmatpush1.msra.mxu0 0.0
  %8410 = vmatprep.subr.mxu0 0.0
  %8411 = vmatpush1.msra.mxu0 0.0
  %8412 = vmatprep.subr.mxu0 0.0
  %8413 = vmatpush1.msra.mxu0 0.0
  %8414 = vmatprep.subr.mxu0 0.0
  %8415 = vmatpush1.msra.mxu0 0.0
  %8416 = vmatprep.subr.mxu0 0.0
  %8417 = vmatpush1.msra.mxu0 0.0
  %8418 = vmatprep.subr.mxu0 0.0
  %8419 = vmatpush1.msra.mxu0 0.0
  %8420 = vmatprep.subr.mxu0 0.0
  %8421 = vmatpush1.msra.mxu0 0.0
  %8422 = vmatprep.subr.mxu0 0.0
  %8423 = vmatpush1.msra.mxu0 0.0
  %8424 = vmatprep.subr.mxu0 0.0
  %8425 = vmatpush1.msra.mxu0 0.0
  %8426 = vmatprep.subr.mxu0 0.0
  %8427 = vmatpush1.msra.mxu0 0.0
  %8428 = vmatprep.subr.mxu0 0.0
  %8429 = vmatpush1.msra.mxu0 0.0
  %8430 = vmatprep.subr.mxu0 0.0
  %8431 = vmatpush1.msra.mxu0 0.0
  %8432 = vmatprep.subr.mxu0 0.0
  %8433 = vmatpush1.msra.mxu0 0.0
  %8434 = vmatprep.mubr.f32.mxu0 0.0
  %8435 = vmatmul.mubr.f32.gmra.mrb[0].mxu0 %v8339
  %v8436 = vpop.f32.mrb[0].mxu0
  %v8437 = vadd.f32 %v8368, %v8436
  %v8438 = vpop.f32.mrb[0].mxu0
  %8439 = vmatprep.mubr.f32.mxu0 0.0
  %8440 = vmatmul.mubr.f32.gmra.mrb[0].mxu0 %v8340
  %v8441 = vpop.f32.mrb[0].mxu0
  %v8442 = vadd.f32 %v8368, %v8441
  %v8443 = vpop.f32.mrb[0].mxu0
  %8444 = vmatprep.mubr.f32.mxu0 0.0
  %8445 = vmatmul.mubr.f32.gmra.mrb[0].mxu0 %v8341
  %v8446 = vpop.f32.mrb[0].mxu0
  %v8447 = vadd.f32 %v8368, %v8446
  %v8448 = vpop.f32.mrb[0].mxu0
  %8449 = vmatprep.mubr.f32.mxu0 0.0
  %8450 = vmatmul.mubr.f32.gmra.mrb[0].mxu0 %v8342
  %v8451 = vpop.f32.mrb[0].mxu0
  %v8452 = vadd.f32 %v8368, %v8451
  %v8453 = vpop.f32.mrb[0].mxu0
  %8454 = vmatprep.mubr.f32.mxu0 0.0
  %8455 = vmatmul.mubr.f32.gmra.mrb[0].mxu0 %v8343
  %v8456 = vpop.f32.mrb[0].mxu0
  %v8457 = vadd.f32 %v8368, %v8456
  %v8458 = vpop.f32.mrb[0].mxu0
  %8459 = vmatprep.mubr.f32.mxu0 0.0
  %8460 = vmatmul.mubr.f32.gmra.mrb[0].mxu0 %v8344
  %v8461 = vpop.f32.mrb[0].mxu0
  %v8462 = vadd.f32 %v8368, %v8461
  %v8463 = vpop.f32.mrb[0].mxu0
  %8464 = vmatprep.mubr.f32.mxu0 0.0
  %8465 = vmatmul.mubr.f32.gmra.mrb[0].mxu0 %v8345
  %v8466 = vpop.f32.mrb[0].mxu0
  %v8467 = vadd.f32 %v8368, %v8466
  %v8468 = vpop.f32.mrb[0].mxu0
  %8469 = vmatprep.mubr.f32.mxu0 0.0
  %8470 = vmatmul.mubr.f32.gmra.mrb[0].mxu0 %v8346
  %v8471 = vpop.f32.mrb[0].mxu0
  %v8472 = vadd.f32 %v8368, %v8471
  %v8473 = vpop.f32.mrb[0].mxu0
  %8474 = vdwg.mxu0
  %v8475 = vmax.f32 %v8437, 0.0
  %v8476 = vmax.f32 %v8442, 0.0
  %v8477 = vmax.f32 %v8447, 0.0
  %v8478 = vmax.f32 %v8452, 0.0
  %v8479 = vmax.f32 %v8457, 0.0
  %v8480 = vmax.f32 %v8462, 0.0
  %v8481 = vmax.f32 %v8467, 0.0
  %v8482 = vmax.f32 %v8472, 0.0
  %v8483 = vld [vmem:[%s7] sm:$0x1]
  %v8485 = vlaneseq
  %v8486 = vshrl.u32 %v8485, 7
  %v8487 = vsub.s32 0, %v8486
  %v8488 = vrot.slane %v8483, %v8487
  %v8490 = vmul.f32 %v8475, %v8488
  %v8491 = vmul.f32 %v8476, %v8488
  %v8492 = vmul.f32 %v8477, %v8488
  %v8493 = vmul.f32 %v8478, %v8488
  %v8494 = vmul.f32 %v8479, %v8488
  %v8495 = vmul.f32 %v8480, %v8488
  %v8496 = vmul.f32 %v8481, %v8488
  %v8497 = vmul.f32 %v8482, %v8488
  %8498 = vadd.xlane.f32.xlu0 %v8490
  %v8499 = vpop.xlane.xlu0 %8498
  %8500 = vadd.xlane.f32.xlu0 %v8491
  %v8501 = vpop.xlane.xlu0 %8500
  %8502 = vadd.xlane.f32.xlu0 %v8492
  %v8503 = vpop.xlane.xlu0 %8502
  %8504 = vadd.xlane.f32.xlu0 %v8493
  %v8505 = vpop.xlane.xlu0 %8504
  %8506 = vadd.xlane.f32.xlu0 %v8494
  %v8507 = vpop.xlane.xlu0 %8506
  %8508 = vadd.xlane.f32.xlu0 %v8495
  %v8509 = vpop.xlane.xlu0 %8508
  %8510 = vadd.xlane.f32.xlu0 %v8496
  %v8511 = vpop.xlane.xlu0 %8510
  %8512 = vadd.xlane.f32.xlu0 %v8497
  %v8513 = vpop.xlane.xlu0 %8512
  %v8514 = vld [vmem:[#allocation4] sm:$0x1]
  %v8516 = vlaneseq
  %v8517 = vshrl.u32 %v8516, 7
  %v8518 = vsub.s32 0, %v8517
  %v8519 = vrot.slane %v8514, %v8518
  %v8521 = vadd.f32 %v8499, %v8519
  %v8522 = vadd.f32 %v8501, %v8519
  %v8523 = vadd.f32 %v8503, %v8519
  %v8524 = vadd.f32 %v8505, %v8519
  %v8525 = vadd.f32 %v8507, %v8519
  %v8526 = vadd.f32 %v8509, %v8519
  %v8527 = vadd.f32 %v8511, %v8519
  %v8528 = vadd.f32 %v8513, %v8519
  %vm8529 = vcmask 7168
  %8530 = vst.msk [vmem:[%s9] sm:$0xff] %vm8529, %v8521
  %8531 = vst.msk [vmem:[%s9 + $0x8] sm:$0xff] %vm8529, %v8522
  %8532 = vst.msk [vmem:[%s9 + $0x10] sm:$0xff] %vm8529, %v8523
  %8533 = vst.msk [vmem:[%s9 + $0x18] sm:$0xff] %vm8529, %v8524
  %8534 = vst.msk [vmem:[%s9 + $0x20] sm:$0xff] %vm8529, %v8525
  %8535 = vst.msk [vmem:[%s9 + $0x28] sm:$0xff] %vm8529, %v8526
  %8536 = vst.msk [vmem:[%s9 + $0x30] sm:$0xff] %vm8529, %v8527
  %8537 = vst.msk [vmem:[%s9 + $0x38] sm:$0xff] %vm8529, %v8528
  // Predicated region
  $region38: #{decoder_rnn_forward.1} parent=0 // pred_check
    _
  $region39: #{decoder_rnn_forward.1} parent=0 // pred_check_branch
    %8539 = sbr.rel (0) target = $region41
  $region40: #{decoder_rnn_forward.1} parent=0 // pred_region
    _
  $region41: #{decoder_rnn_forward.1} parent=0 // pred_fallthru
    _
  // Predicated region
  $region42: #{decoder_rnn_forward.1} parent=0 // pred_check
    _
  $region43: #{decoder_rnn_forward.1} parent=0 // pred_check_branch
    %8541 = sbr.rel (0) target = $region45
  $region44: #{decoder_rnn_forward.1} parent=0 // pred_region
    _
  $region45: #{decoder_rnn_forward.1} parent=0 // pred_fallthru
    _
  // Predicated region
  $region46: #{decoder_rnn_forward.1} parent=0 // pred_check
    _
  $region47: #{decoder_rnn_forward.1} parent=0 // pred_check_branch
    %8543 = sbr.rel (0) target = $region49
  $region48: #{decoder_rnn_forward.1} parent=0 // pred_region
    _
  $region49: #{decoder_rnn_forward.1} parent=0 // pred_fallthru
    _
  // Predicated region
  $region50: #{decoder_rnn_forward.1} parent=0 // pred_check
    _
  $region51: #{decoder_rnn_forward.1} parent=0 // pred_check_branch
    %8545 = sbr.rel (0) target = $region53
  $region52: #{decoder_rnn_forward.1} parent=0 // pred_region
    _
  $region53: #{decoder_rnn_forward.1} parent=0 // pred_fallthru
    _
  // Predicated region
  $region54: #{decoder_rnn_forward.1} parent=0 // pred_check
    _
  $region55: #{decoder_rnn_forward.1} parent=0 // pred_check_branch
    %8547 = sbr.rel (0) target = $region57
  $region56: #{decoder_rnn_forward.1} parent=0 // pred_region
    _
  $region57: #{decoder_rnn_forward.1} parent=0 // pred_fallthru
    _
  // Predicated region
  $region58: #{decoder_rnn_forward.1} parent=0 // pred_check
    _
  $region59: #{decoder_rnn_forward.1} parent=0 // pred_check_branch
    %8549 = sbr.rel (0) target = $region61
  $region60: #{decoder_rnn_forward.1} parent=0 // pred_region
    _
  $region61: #{decoder_rnn_forward.1} parent=0 // pred_fallthru
    _

</llo_original>
